<compile_context>
chip_gen: v7x
topology: tpu7x:2x2x1
jax: 0.10.0
libtpu: 0.0.40
codegen_flags: <defaults>
</compile_context>

<pallas_src>
import math
import functools

import jax
import jax.numpy as jnp
from jax.experimental import pallas as pl
from jax.experimental.pallas import tpu as pltpu


# ----------------------------------------------------------------------------
# in-kernel helpers (pure values; nothing here touches HBM)
# ----------------------------------------------------------------------------
def _ln(y, g, b, eps=1e-5):
    """LayerNorm over the last axis, f32 math, (1, E) gamma/beta broadcast."""
    mu = jnp.mean(y, axis=-1, keepdims=True)
    var = jnp.mean(jnp.square(y - mu), axis=-1, keepdims=True)
    return (y - mu) * jax.lax.rsqrt(var + eps) * g + b


def _linear(x, w, b):
    """x @ W + b with bf16 MXU inputs and f32 accumulation."""
    return jnp.dot(x.astype(jnp.bfloat16), w,
                   preferred_element_type=jnp.float32) + b


def _mha(xq, xkv, wq, bq, wk, bk, wv, bv, wo_heads, bo, num_heads, causal):
    """Multi-head attention for one batch element.

    xq: (Sq, E) f32, xkv: (Sk, E) f32 -> (Sq, E) f32.
    Q/K/V are projected once (separate 2-D outputs, no (S,3E) lane slicing),
    cast to bf16 once, and the per-head slice of the output projection
    Wo_h: (Dh, E) is fused into the head loop so no lane-axis concatenate /
    relayout is needed."""
    Sq, E = xq.shape
    Sk = xkv.shape[0]
    Dh = E // num_heads
    scale = 1.0 / math.sqrt(Dh)

    xqb = xq.astype(jnp.bfloat16)
    xkb = xqb if xkv is xq else xkv.astype(jnp.bfloat16)
    q = (jnp.dot(xqb, wq, preferred_element_type=jnp.float32) + bq).astype(jnp.bfloat16)
    k = (jnp.dot(xkb, wk, preferred_element_type=jnp.float32) + bk).astype(jnp.bfloat16)
    v = (jnp.dot(xkb, wv, preferred_element_type=jnp.float32) + bv).astype(jnp.bfloat16)

    neg = None
    if causal:
        row = jax.lax.broadcasted_iota(jnp.int32, (Sq, Sk), 0)
        col = jax.lax.broadcasted_iota(jnp.int32, (Sq, Sk), 1)
        neg = jnp.where(col > row, jnp.float32(-1e9), jnp.float32(0.0))

    out = jnp.zeros((Sq, E), jnp.float32)
    for h in range(num_heads):
        sl = slice(h * Dh, (h + 1) * Dh)
        s = jax.lax.dot_general(q[:, sl], k[:, sl], (((1,), (1,)), ((), ())),
                                preferred_element_type=jnp.float32) * scale
        if causal:
            s = s + neg
        s = s - jnp.max(s, axis=-1, keepdims=True)
        p = jnp.exp(s)
        p = p * pl.reciprocal(jnp.sum(p, axis=-1, keepdims=True), approx=True)
        hv = jnp.dot(p.astype(jnp.bfloat16), v[:, sl],
                     preferred_element_type=jnp.float32)
        out = out + jnp.dot(hv.astype(jnp.bfloat16), wo_heads[h],
                            preferred_element_type=jnp.float32)
    return out + bo


# ----------------------------------------------------------------------------
# the single fused kernel (one grid step per batch element)
# ----------------------------------------------------------------------------
def _fused_forward_kernel(feat_ref, tgt_ref, w_ref, p_ref, o_ref, *,
                          num_heads, num_layers, woff, poff):
    """Entire forward pass for one batch element; everything stays on-chip."""

    def W(name):                      # bf16 matmul-weight slice (static view)
        off, r, c = woff[name]
        return w_ref[off:off + r, :c]

    def P(name):                      # f32 bias / LN / pos-emb slice
        off, r, c = poff[name]
        return p_ref[off:off + r, :c]

    def Wo(prefix):                   # per-head output-projection slices
        return [W(f"{prefix}wo_h{h}") for h in range(num_heads)]

    def attn(prefix, xq, xkv, causal):
        return _mha(xq, xkv,
                    W(prefix + "wq"), P(prefix + "bq"),
                    W(prefix + "wk"), P(prefix + "bk"),
                    W(prefix + "wv"), P(prefix + "bv"),
                    Wo(prefix), P(prefix + "bo"), num_heads, causal)

    def ffn(prefix, x):
        h = jnp.maximum(_linear(x, W(prefix + "w1"), P(prefix + "b1")), 0.0)
        return _linear(h, W(prefix + "w2"), P(prefix + "b2"))

    # --- memory = 1-layer encoder over (LN(Linear(features)) + image pos) ---
    feat = feat_ref[0]                                            # (T, F)
    m = _ln(_linear(feat, W("fp_w"), P("fp_b")),
            P("fp_ln_g"), P("fp_ln_b")) + P("img_pos")
    m = _ln(m + attn("enc_", m, m, causal=False), P("enc_ln1_g"), P("enc_ln1_b"))
    m = _ln(m + ffn("enc_", m), P("enc_ln2_g"), P("enc_ln2_b"))

    # --- stacked nn.TransformerDecoderLayer's (post-norm, relu) ---
    x = tgt_ref[0]                                                # (S, E)
    for l in range(num_layers):
        pre = f"d{l}_"
        x = _ln(x + attn(pre + "sa_", x, x, causal=True),
                P(pre + "ln1_g"), P(pre + "ln1_b"))
        x = _ln(x + attn(pre + "ca_", x, m, causal=False),
                P(pre + "ln2_g"), P(pre + "ln2_b"))
        x = _ln(x + ffn(pre, x), P(pre + "ln3_g"), P(pre + "ln3_b"))

    # --- final LayerNorm + vocab projection (only HBM store, lane-dense V) ---
    x = _ln(x, P("final_ln_g"), P("final_ln_b"))
    o_ref[0] = _linear(x, W("out_w"), P("out_b"))


def fused_forward(features, tgt_embedded, w_packed, p_packed, *, cfg, layout):
    B, T, F = features.shape
    S, E = tgt_embedded.shape[1], tgt_embedded.shape[2]
    V = cfg["vocab_size"]
    kernel = functools.partial(
        _fused_forward_kernel,
        num_heads=cfg["num_heads"], num_layers=cfg["num_layers"],
        woff=layout["woff"], poff=layout["poff"])
    return pl.pallas_call(
        kernel,
        out_shape=jax.ShapeDtypeStruct((B, S, V), jnp.float32),
        grid=(B,),
        in_specs=[
            pl.BlockSpec((1, T, F), lambda b: (b, 0, 0)),
            pl.BlockSpec((1, S, E), lambda b: (b, 0, 0)),
            pl.BlockSpec(w_packed.shape, lambda b: (0, 0)),   # resident weights
            pl.BlockSpec(p_packed.shape, lambda b: (0, 0)),   # resident biases/LN
        ],
        out_specs=pl.BlockSpec((1, S, V), lambda b: (b, 0, 0)),
        compiler_params=pltpu.CompilerParams(
            dimension_semantics=("parallel",)),   # one batch elem per TC on v7x
    )(features, tgt_embedded, w_packed, p_packed)


# ----------------------------------------------------------------------------
# parameter construction: pack everything into two kernel-resident buffers
# ----------------------------------------------------------------------------
def _pack(entries, dtype, row_align):
    """Pack 2-D arrays into one (R, lane) buffer, each padded to row_align rows.

    Returns (buffer, offsets) with offsets[name] = (row_off, rows, cols)."""
    max_cols = max(int(a.shape[1]) for _, a in entries)
    lane = ((max_cols + 127) // 128) * 128
    blocks, offsets, off = [], {}, 0
    for name, a in entries:
        a = jnp.asarray(a).astype(dtype)
        r, c = a.shape
        rp = ((r + row_align - 1) // row_align) * row_align
        blk = jnp.zeros((rp, lane), dtype).at[:r, :c].set(a)
        blocks.append(blk)
        offsets[name] = (off, r, c)
        off += rp
    return jnp.concatenate(blocks, axis=0), offsets


def _add_linear(kit, wentries, pentries, wname, bname, d_in, d_out, scale=0.02):
    kw, kb = jax.random.split(next(kit))
    wentries.append((wname, scale * jax.random.normal(kw, (d_in, d_out), jnp.float32)))
    pentries.append((bname, scale * jax.random.normal(kb, (1, d_out), jnp.float32)))


def _add_ln(pentries, gname, bname, dim):
    pentries.append((gname, jnp.ones((1, dim), jnp.float32)))
    pentries.append((bname, jnp.zeros((1, dim), jnp.float32)))


def _add_attn(kit, wentries, pentries, prefix, E, H, scale=0.02):
    Dh = E // H
    _add_linear(kit, wentries, pentries, prefix + "wq", prefix + "bq", E, E)
    _add_linear(kit, wentries, pentries, prefix + "wk", prefix + "bk", E, E)
    _add_linear(kit, wentries, pentries, prefix + "wv", prefix + "bv", E, E)
    kw, kb = jax.random.split(next(kit))
    wo = scale * jax.random.normal(kw, (E, E), jnp.float32)
    for h in range(H):                       # per-head slices of the out proj
        wentries.append((f"{prefix}wo_h{h}", wo[h * Dh:(h + 1) * Dh, :]))
    pentries.append((prefix + "bo", scale * jax.random.normal(kb, (1, E), jnp.float32)))


def _positional_encoding(max_len, d_model):
    position = jnp.arange(max_len, dtype=jnp.float32)[:, None]
    div_term = jnp.exp(jnp.arange(0, d_model, 2, dtype=jnp.float32)
                       * (-math.log(10000.0) / d_model))
    pe = jnp.zeros((max_len, d_model), jnp.float32)
    pe = pe.at[:, 0::2].set(jnp.sin(position * div_term))
    pe = pe.at[:, 1::2].set(jnp.cos(position * div_term))
    return pe[None]  # (1, max_len, d_model)


def init_params(key, cfg):
    E, Hd, V, F = (cfg["embed_dim"], cfg["hidden_dim"],
                   cfg["vocab_size"], cfg["feature_dim"])
    T, L, H = cfg["num_image_tokens"], cfg["num_layers"], cfg["num_heads"]
    kit = iter(jax.random.split(key, 256))

    wentries, pentries = [], []

    # feature_proj: Linear(F, E) + LayerNorm(E); image positional embedding
    _add_linear(kit, wentries, pentries, "fp_w", "fp_b", F, E)
    _add_ln(pentries, "fp_ln_g", "fp_ln_b", E)
    pentries.append(("img_pos",
                     0.02 * jax.random.normal(next(kit), (T, E), jnp.float32)))

    # 1-layer image-feature TransformerEncoder (post-norm, relu)
    _add_attn(kit, wentries, pentries, "enc_", E, H)
    _add_ln(pentries, "enc_ln1_g", "enc_ln1_b", E)
    _add_linear(kit, wentries, pentries, "enc_w1", "enc_b1", E, Hd)
    _add_linear(kit, wentries, pentries, "enc_w2", "enc_b2", Hd, E)
    _add_ln(pentries, "enc_ln2_g", "enc_ln2_b", E)

    # stacked decoder layers
    for l in range(L):
        pre = f"d{l}_"
        _add_attn(kit, wentries, pentries, pre + "sa_", E, H)
        _add_ln(pentries, pre + "ln1_g", pre + "ln1_b", E)
        _add_attn(kit, wentries, pentries, pre + "ca_", E, H)
        _add_ln(pentries, pre + "ln2_g", pre + "ln2_b", E)
        _add_linear(kit, wentries, pentries, pre + "w1", pre + "b1", E, Hd)
        _add_linear(kit, wentries, pentries, pre + "w2", pre + "b2", Hd, E)
        _add_ln(pentries, pre + "ln3_g", pre + "ln3_b", E)

    # final LayerNorm + vocab projection
    _add_ln(pentries, "final_ln_g", "final_ln_b", E)
    _add_linear(kit, wentries, pentries, "out_w", "out_b", E, V)

    # bf16 weights padded to 16 rows (native bf16 sublane tiling); f32 to 8.
    w_packed, woff = _pack(wentries, jnp.bfloat16, row_align=16)
    p_packed, poff = _pack(pentries, jnp.float32, row_align=8)

    params = {
        "embedding": 0.02 * jax.random.normal(next(kit), (V, E), jnp.float32),
        "pos_enc": _positional_encoding(cfg["max_length"], E),
        "w_packed": w_packed,
        "p_packed": p_packed,
    }
    layout = {"woff": woff, "poff": poff}
    return params, layout


# ----------------------------------------------------------------------------
# Full forward pass (mirrors TransformerDecoder.forward)
# ----------------------------------------------------------------------------
def transformer_decoder_forward(params, encoder_features, tgt_input, *, cfg, layout):
    E = cfg["embed_dim"]
    S = tgt_input.shape[1]
    # TODO(synk): token-embedding gather + sinusoidal pos-enc add stay in JAX.
    tgt = jnp.take(params["embedding"], tgt_input, axis=0) * math.sqrt(E)
    tgt = tgt + params["pos_enc"][:, :S, :]
    # TODO(synk): dropout is identity (inference semantics).
    return fused_forward(encoder_features, tgt, params["w_packed"],
                         params["p_packed"], cfg=cfg, layout=layout)


# ----------------------------------------------------------------------------
if __name__ == "__main__":
    cfg = dict(
        embed_dim=32,
        num_heads=4,
        hidden_dim=64,
        vocab_size=128,
        num_layers=2,
        max_length=16,
        feature_dim=64,
        dropout=0.1,           # inactive at inference
        num_image_tokens=49,
    )
    batch, tgt_seq_len = 2, 8

    key = jax.random.PRNGKey(0)
    k_feat, k_tok, k_param = jax.random.split(key, 3)

    encoder_features = jax.random.normal(
        k_feat, (batch, cfg["num_image_tokens"], cfg["feature_dim"]), jnp.float32)
    tgt_input = jax.random.randint(
        k_tok, (batch, tgt_seq_len), 0, cfg["vocab_size"], dtype=jnp.int32)

    params, layout = init_params(k_param, cfg)

    fwd = jax.jit(functools.partial(transformer_decoder_forward,
                                    cfg=cfg, layout=layout))
    logits = fwd(params, encoder_features, tgt_input)
    logits = jax.block_until_ready(logits)

    assert logits.shape == (batch, tgt_seq_len, cfg["vocab_size"])
    assert bool(jnp.all(jnp.isfinite(logits)))
    print("KERNEL_OK")
</pallas_src>

<mosaic_0001>
module attributes {stable_mosaic.version = 11 : i64} {
  func.func @_fused_forward_kernel(%arg0: i32, %arg1: memref<1x49x64xf32, #tpu.memory_space<vmem>>, %arg2: memref<1x8x32xf32, #tpu.memory_space<vmem>>, %arg3: memref<1184x128xbf16, #tpu.memory_space<vmem>>, %arg4: memref<440x128xf32, #tpu.memory_space<vmem>>, %arg5: memref<1x8x128xf32, #tpu.memory_space<vmem>>) attributes {dimension_semantics = [#tpu.dimension_semantics<parallel>], iteration_bounds = array<i64: 2>, scalar_prefetch = 0 : i64, scratch_operands = 0 : i64, tpu.core_type = #tpu.core_type<tc>, window_params = [{transform_indices = @transform_0, window_bounds = array<i64: 1, 49, 64>}, {transform_indices = @transform_1, window_bounds = array<i64: 1, 8, 32>}, {pipeline_mode = #tpu.pipeline_mode<synchronous>, transform_indices = @transform_2, window_bounds = array<i64: 1184, 128>}, {pipeline_mode = #tpu.pipeline_mode<synchronous>, transform_indices = @transform_3, window_bounds = array<i64: 440, 128>}, {transform_indices = @transform_4, window_bounds = array<i64: 1, 8, 128>}]} {
    %c0 = arith.constant 0 : index
    %c0_0 = arith.constant 0 : index
    %c0_1 = arith.constant 0 : index
    %0 = vector.load %arg1[%c0, %c0_0, %c0_1] : memref<1x49x64xf32, #tpu.memory_space<vmem>>, vector<1x49x64xf32>
    %1 = vector.shape_cast %0 : vector<1x49x64xf32> to vector<49x64xf32>
    %c0_2 = arith.constant 0 : index
    %c0_3 = arith.constant 0 : index
    %2 = vector.load %arg3[%c0_2, %c0_3] : memref<1184x128xbf16, #tpu.memory_space<vmem>>, vector<64x32xbf16>
    %c0_4 = arith.constant 0 : index
    %c0_5 = arith.constant 0 : index
    %3 = vector.load %arg4[%c0_4, %c0_5] : memref<440x128xf32, #tpu.memory_space<vmem>>, vector<1x32xf32>
    %4 = arith.truncf %1 : vector<49x64xf32> to vector<49x64xbf16>
    %cst = arith.constant dense<0.000000e+00> : vector<49x32xf32>
    %5 = tpu.matmul %4, %2, %cst {dimension_numbers = #tpu.dot_dimension_numbers<[1], [0], [0], [1], [0, 0, 1, 1], [], []>} : vector<49x64xbf16>, vector<64x32xbf16>, vector<49x32xf32> -> vector<49x32xf32>
    %6 = vector.broadcast %3 : vector<1x32xf32> to vector<49x32xf32>
    %7 = arith.addf %5, %6 : vector<49x32xf32>
    %c8 = arith.constant 8 : index
    %c0_6 = arith.constant 0 : index
    %8 = vector.load %arg4[%c8, %c0_6] : memref<440x128xf32, #tpu.memory_space<vmem>>, vector<1x32xf32>
    %c16 = arith.constant 16 : index
    %c0_7 = arith.constant 0 : index
    %9 = vector.load %arg4[%c16, %c0_7] : memref<440x128xf32, #tpu.memory_space<vmem>>, vector<1x32xf32>
    %cst_8 = arith.constant dense<0.000000e+00> : vector<49xf32>
    %10 = vector.multi_reduction <add>, %7, %cst_8 [1] : vector<49x32xf32> to vector<49xf32>
    %11 = vector.shape_cast %10 : vector<49xf32> to vector<49x1xf32>
    %cst_9 = arith.constant 3.200000e+01 : f32
    %12 = vector.broadcast %cst_9 : f32 to vector<49x1xf32>
    %13 = arith.divf %11, %12 : vector<49x1xf32>
    %14 = vector.broadcast %13 : vector<49x1xf32> to vector<49x32xf32>
    %15 = arith.subf %7, %14 : vector<49x32xf32>
    %16 = arith.mulf %15, %15 : vector<49x32xf32>
    %cst_10 = arith.constant dense<0.000000e+00> : vector<49xf32>
    %17 = vector.multi_reduction <add>, %16, %cst_10 [1] : vector<49x32xf32> to vector<49xf32>
    %18 = vector.shape_cast %17 : vector<49xf32> to vector<49x1xf32>
    %cst_11 = arith.constant 3.200000e+01 : f32
    %19 = vector.broadcast %cst_11 : f32 to vector<49x1xf32>
    %20 = arith.divf %18, %19 : vector<49x1xf32>
    %21 = vector.broadcast %13 : vector<49x1xf32> to vector<49x32xf32>
    %22 = arith.subf %7, %21 : vector<49x32xf32>
    %cst_12 = arith.constant 9.99999974E-6 : f32
    %23 = vector.broadcast %cst_12 : f32 to vector<49x1xf32>
    %24 = arith.addf %20, %23 : vector<49x1xf32>
    %25 = math.rsqrt %24 : vector<49x1xf32>
    %26 = vector.broadcast %25 : vector<49x1xf32> to vector<49x32xf32>
    %27 = arith.mulf %22, %26 : vector<49x32xf32>
    %28 = vector.broadcast %8 : vector<1x32xf32> to vector<49x32xf32>
    %29 = arith.mulf %27, %28 : vector<49x32xf32>
    %30 = vector.broadcast %9 : vector<1x32xf32> to vector<49x32xf32>
    %31 = arith.addf %29, %30 : vector<49x32xf32>
    %c24 = arith.constant 24 : index
    %c0_13 = arith.constant 0 : index
    %32 = vector.load %arg4[%c24, %c0_13] : memref<440x128xf32, #tpu.memory_space<vmem>>, vector<49x32xf32>
    %33 = arith.addf %31, %32 : vector<49x32xf32>
    %c64 = arith.constant 64 : index
    %c0_14 = arith.constant 0 : index
    %34 = vector.load %arg3[%c64, %c0_14] : memref<1184x128xbf16, #tpu.memory_space<vmem>>, vector<32x32xbf16>
    %c80 = arith.constant 80 : index
    %c0_15 = arith.constant 0 : index
    %35 = vector.load %arg4[%c80, %c0_15] : memref<440x128xf32, #tpu.memory_space<vmem>>, vector<1x32xf32>
    %c96 = arith.constant 96 : index
    %c0_16 = arith.constant 0 : index
    %36 = vector.load %arg3[%c96, %c0_16] : memref<1184x128xbf16, #tpu.memory_space<vmem>>, vector<32x32xbf16>
    %c88 = arith.constant 88 : index
    %c0_17 = arith.constant 0 : index
    %37 = vector.load %arg4[%c88, %c0_17] : memref<440x128xf32, #tpu.memory_space<vmem>>, vector<1x32xf32>
    %c128 = arith.constant 128 : index
    %c0_18 = arith.constant 0 : index
    %38 = vector.load %arg3[%c128, %c0_18] : memref<1184x128xbf16, #tpu.memory_space<vmem>>, vector<32x32xbf16>
    %c96_19 = arith.constant 96 : index
    %c0_20 = arith.constant 0 : index
    %39 = vector.load %arg4[%c96_19, %c0_20] : memref<440x128xf32, #tpu.memory_space<vmem>>, vector<1x32xf32>
    %c160 = arith.constant 160 : index
    %c0_21 = arith.constant 0 : index
    %40 = vector.load %arg3[%c160, %c0_21] : memref<1184x128xbf16, #tpu.memory_space<vmem>>, vector<8x32xbf16>
    %c176 = arith.constant 176 : index
    %c0_22 = arith.constant 0 : index
    %41 = vector.load %arg3[%c176, %c0_22] : memref<1184x128xbf16, #tpu.memory_space<vmem>>, vector<8x32xbf16>
    %c192 = arith.constant 192 : index
    %c0_23 = arith.constant 0 : index
    %42 = vector.load %arg3[%c192, %c0_23] : memref<1184x128xbf16, #tpu.memory_space<vmem>>, vector<8x32xbf16>
    %c208 = arith.constant 208 : index
    %c0_24 = arith.constant 0 : index
    %43 = vector.load %arg3[%c208, %c0_24] : memref<1184x128xbf16, #tpu.memory_space<vmem>>, vector<8x32xbf16>
    %c104 = arith.constant 104 : index
    %c0_25 = arith.constant 0 : index
    %44 = vector.load %arg4[%c104, %c0_25] : memref<440x128xf32, #tpu.memory_space<vmem>>, vector<1x32xf32>
    %45 = arith.truncf %33 : vector<49x32xf32> to vector<49x32xbf16>
    %cst_26 = arith.constant dense<0.000000e+00> : vector<49x32xf32>
    %46 = tpu.matmul %45, %34, %cst_26 {dimension_numbers = #tpu.dot_dimension_numbers<[1], [0], [0], [1], [0, 0, 1, 1], [], []>} : vector<49x32xbf16>, vector<32x32xbf16>, vector<49x32xf32> -> vector<49x32xf32>
    %47 = vector.broadcast %35 : vector<1x32xf32> to vector<49x32xf32>
    %48 = arith.addf %46, %47 : vector<49x32xf32>
    %49 = arith.truncf %48 : vector<49x32xf32> to vector<49x32xbf16>
    %cst_27 = arith.constant dense<0.000000e+00> : vector<49x32xf32>
    %50 = tpu.matmul %45, %36, %cst_27 {dimension_numbers = #tpu.dot_dimension_numbers<[1], [0], [0], [1], [0, 0, 1, 1], [], []>} : vector<49x32xbf16>, vector<32x32xbf16>, vector<49x32xf32> -> vector<49x32xf32>
    %51 = vector.broadcast %37 : vector<1x32xf32> to vector<49x32xf32>
    %52 = arith.addf %50, %51 : vector<49x32xf32>
    %53 = arith.truncf %52 : vector<49x32xf32> to vector<49x32xbf16>
    %cst_28 = arith.constant dense<0.000000e+00> : vector<49x32xf32>
    %54 = tpu.matmul %45, %38, %cst_28 {dimension_numbers = #tpu.dot_dimension_numbers<[1], [0], [0], [1], [0, 0, 1, 1], [], []>} : vector<49x32xbf16>, vector<32x32xbf16>, vector<49x32xf32> -> vector<49x32xf32>
    %55 = vector.broadcast %39 : vector<1x32xf32> to vector<49x32xf32>
    %56 = arith.addf %54, %55 : vector<49x32xf32>
    %57 = arith.truncf %56 : vector<49x32xf32> to vector<49x32xbf16>
    %cst_29 = arith.constant 0.000000e+00 : f32
    %58 = vector.broadcast %cst_29 : f32 to vector<49x32xf32>
    %59 = vector.extract_strided_slice %49 {offsets = [0, 0], sizes = [49, 8], strides = [1, 1]} : vector<49x32xbf16> to vector<49x8xbf16>
    %60 = vector.extract_strided_slice %53 {offsets = [0, 0], sizes = [49, 8], strides = [1, 1]} : vector<49x32xbf16> to vector<49x8xbf16>
    %cst_30 = arith.constant dense<0.000000e+00> : vector<49x49xf32>
    %61 = tpu.matmul %59, %60, %cst_30 {dimension_numbers = #tpu.dot_dimension_numbers<[1], [1], [0], [0], [0, 0, 1, 0], [], []>} : vector<49x8xbf16>, vector<49x8xbf16>, vector<49x49xf32> -> vector<49x49xf32>
    %cst_31 = arith.constant 0.353553385 : f32
    %62 = vector.broadcast %cst_31 : f32 to vector<49x49xf32>
    %63 = arith.mulf %61, %62 : vector<49x49xf32>
    %cst_32 = arith.constant dense<0xFF800000> : vector<49xf32>
    %64 = vector.multi_reduction <maximumf>, %63, %cst_32 [1] : vector<49x49xf32> to vector<49xf32>
    %65 = vector.shape_cast %64 : vector<49xf32> to vector<49x1xf32>
    %66 = vector.broadcast %65 : vector<49x1xf32> to vector<49x49xf32>
    %67 = arith.subf %63, %66 : vector<49x49xf32>
    %68 = math.exp %67 : vector<49x49xf32>
    %cst_33 = arith.constant dense<0.000000e+00> : vector<49xf32>
    %69 = vector.multi_reduction <add>, %68, %cst_33 [1] : vector<49x49xf32> to vector<49xf32>
    %70 = vector.shape_cast %69 : vector<49xf32> to vector<49x1xf32>
    %71 = tpu.reciprocal %70 {approx = true} : vector<49x1xf32> -> vector<49x1xf32>
    %72 = vector.broadcast %71 : vector<49x1xf32> to vector<49x49xf32>
    %73 = arith.mulf %68, %72 : vector<49x49xf32>
    %74 = arith.truncf %73 : vector<49x49xf32> to vector<49x49xbf16>
    %75 = vector.extract_strided_slice %57 {offsets = [0, 0], sizes = [49, 8], strides = [1, 1]} : vector<49x32xbf16> to vector<49x8xbf16>
    %cst_34 = arith.constant dense<0.000000e+00> : vector<49x8xf32>
    %76 = tpu.matmul %74, %75, %cst_34 {dimension_numbers = #tpu.dot_dimension_numbers<[1], [0], [0], [1], [0, 0, 1, 1], [], []>} : vector<49x49xbf16>, vector<49x8xbf16>, vector<49x8xf32> -> vector<49x8xf32>
    %77 = arith.truncf %76 : vector<49x8xf32> to vector<49x8xbf16>
    %cst_35 = arith.constant dense<0.000000e+00> : vector<49x32xf32>
    %78 = tpu.matmul %77, %40, %cst_35 {dimension_numbers = #tpu.dot_dimension_numbers<[1], [0], [0], [1], [0, 0, 1, 1], [], []>} : vector<49x8xbf16>, vector<8x32xbf16>, vector<49x32xf32> -> vector<49x32xf32>
    %79 = arith.addf %58, %78 : vector<49x32xf32>
    %80 = vector.extract_strided_slice %49 {offsets = [0, 8], sizes = [49, 8], strides = [1, 1]} : vector<49x32xbf16> to vector<49x8xbf16>
    %81 = vector.extract_strided_slice %53 {offsets = [0, 8], sizes = [49, 8], strides = [1, 1]} : vector<49x32xbf16> to vector<49x8xbf16>
    %cst_36 = arith.constant dense<0.000000e+00> : vector<49x49xf32>
    %82 = tpu.matmul %80, %81, %cst_36 {dimension_numbers = #tpu.dot_dimension_numbers<[1], [1], [0], [0], [0, 0, 1, 0], [], []>} : vector<49x8xbf16>, vector<49x8xbf16>, vector<49x49xf32> -> vector<49x49xf32>
    %cst_37 = arith.constant 0.353553385 : f32
    %83 = vector.broadcast %cst_37 : f32 to vector<49x49xf32>
    %84 = arith.mulf %82, %83 : vector<49x49xf32>
    %cst_38 = arith.constant dense<0xFF800000> : vector<49xf32>
    %85 = vector.multi_reduction <maximumf>, %84, %cst_38 [1] : vector<49x49xf32> to vector<49xf32>
    %86 = vector.shape_cast %85 : vector<49xf32> to vector<49x1xf32>
    %87 = vector.broadcast %86 : vector<49x1xf32> to vector<49x49xf32>
    %88 = arith.subf %84, %87 : vector<49x49xf32>
    %89 = math.exp %88 : vector<49x49xf32>
    %cst_39 = arith.constant dense<0.000000e+00> : vector<49xf32>
    %90 = vector.multi_reduction <add>, %89, %cst_39 [1] : vector<49x49xf32> to vector<49xf32>
    %91 = vector.shape_cast %90 : vector<49xf32> to vector<49x1xf32>
    %92 = tpu.reciprocal %91 {approx = true} : vector<49x1xf32> -> vector<49x1xf32>
    %93 = vector.broadcast %92 : vector<49x1xf32> to vector<49x49xf32>
    %94 = arith.mulf %89, %93 : vector<49x49xf32>
    %95 = arith.truncf %94 : vector<49x49xf32> to vector<49x49xbf16>
    %96 = vector.extract_strided_slice %57 {offsets = [0, 8], sizes = [49, 8], strides = [1, 1]} : vector<49x32xbf16> to vector<49x8xbf16>
    %cst_40 = arith.constant dense<0.000000e+00> : vector<49x8xf32>
    %97 = tpu.matmul %95, %96, %cst_40 {dimension_numbers = #tpu.dot_dimension_numbers<[1], [0], [0], [1], [0, 0, 1, 1], [], []>} : vector<49x49xbf16>, vector<49x8xbf16>, vector<49x8xf32> -> vector<49x8xf32>
    %98 = arith.truncf %97 : vector<49x8xf32> to vector<49x8xbf16>
    %cst_41 = arith.constant dense<0.000000e+00> : vector<49x32xf32>
    %99 = tpu.matmul %98, %41, %cst_41 {dimension_numbers = #tpu.dot_dimension_numbers<[1], [0], [0], [1], [0, 0, 1, 1], [], []>} : vector<49x8xbf16>, vector<8x32xbf16>, vector<49x32xf32> -> vector<49x32xf32>
    %100 = arith.addf %79, %99 : vector<49x32xf32>
    %101 = vector.extract_strided_slice %49 {offsets = [0, 16], sizes = [49, 8], strides = [1, 1]} : vector<49x32xbf16> to vector<49x8xbf16>
    %102 = vector.extract_strided_slice %53 {offsets = [0, 16], sizes = [49, 8], strides = [1, 1]} : vector<49x32xbf16> to vector<49x8xbf16>
    %cst_42 = arith.constant dense<0.000000e+00> : vector<49x49xf32>
    %103 = tpu.matmul %101, %102, %cst_42 {dimension_numbers = #tpu.dot_dimension_numbers<[1], [1], [0], [0], [0, 0, 1, 0], [], []>} : vector<49x8xbf16>, vector<49x8xbf16>, vector<49x49xf32> -> vector<49x49xf32>
    %cst_43 = arith.constant 0.353553385 : f32
    %104 = vector.broadcast %cst_43 : f32 to vector<49x49xf32>
    %105 = arith.mulf %103, %104 : vector<49x49xf32>
    %cst_44 = arith.constant dense<0xFF800000> : vector<49xf32>
    %106 = vector.multi_reduction <maximumf>, %105, %cst_44 [1] : vector<49x49xf32> to vector<49xf32>
    %107 = vector.shape_cast %106 : vector<49xf32> to vector<49x1xf32>
    %108 = vector.broadcast %107 : vector<49x1xf32> to vector<49x49xf32>
    %109 = arith.subf %105, %108 : vector<49x49xf32>
    %110 = math.exp %109 : vector<49x49xf32>
    %cst_45 = arith.constant dense<0.000000e+00> : vector<49xf32>
    %111 = vector.multi_reduction <add>, %110, %cst_45 [1] : vector<49x49xf32> to vector<49xf32>
    %112 = vector.shape_cast %111 : vector<49xf32> to vector<49x1xf32>
    %113 = tpu.reciprocal %112 {approx = true} : vector<49x1xf32> -> vector<49x1xf32>
    %114 = vector.broadcast %113 : vector<49x1xf32> to vector<49x49xf32>
    %115 = arith.mulf %110, %114 : vector<49x49xf32>
    %116 = arith.truncf %115 : vector<49x49xf32> to vector<49x49xbf16>
    %117 = vector.extract_strided_slice %57 {offsets = [0, 16], sizes = [49, 8], strides = [1, 1]} : vector<49x32xbf16> to vector<49x8xbf16>
    %cst_46 = arith.constant dense<0.000000e+00> : vector<49x8xf32>
    %118 = tpu.matmul %116, %117, %cst_46 {dimension_numbers = #tpu.dot_dimension_numbers<[1], [0], [0], [1], [0, 0, 1, 1], [], []>} : vector<49x49xbf16>, vector<49x8xbf16>, vector<49x8xf32> -> vector<49x8xf32>
    %119 = arith.truncf %118 : vector<49x8xf32> to vector<49x8xbf16>
    %cst_47 = arith.constant dense<0.000000e+00> : vector<49x32xf32>
    %120 = tpu.matmul %119, %42, %cst_47 {dimension_numbers = #tpu.dot_dimension_numbers<[1], [0], [0], [1], [0, 0, 1, 1], [], []>} : vector<49x8xbf16>, vector<8x32xbf16>, vector<49x32xf32> -> vector<49x32xf32>
    %121 = arith.addf %100, %120 : vector<49x32xf32>
    %122 = vector.extract_strided_slice %49 {offsets = [0, 24], sizes = [49, 8], strides = [1, 1]} : vector<49x32xbf16> to vector<49x8xbf16>
    %123 = vector.extract_strided_slice %53 {offsets = [0, 24], sizes = [49, 8], strides = [1, 1]} : vector<49x32xbf16> to vector<49x8xbf16>
    %cst_48 = arith.constant dense<0.000000e+00> : vector<49x49xf32>
    %124 = tpu.matmul %122, %123, %cst_48 {dimension_numbers = #tpu.dot_dimension_numbers<[1], [1], [0], [0], [0, 0, 1, 0], [], []>} : vector<49x8xbf16>, vector<49x8xbf16>, vector<49x49xf32> -> vector<49x49xf32>
    %cst_49 = arith.constant 0.353553385 : f32
    %125 = vector.broadcast %cst_49 : f32 to vector<49x49xf32>
    %126 = arith.mulf %124, %125 : vector<49x49xf32>
    %cst_50 = arith.constant dense<0xFF800000> : vector<49xf32>
    %127 = vector.multi_reduction <maximumf>, %126, %cst_50 [1] : vector<49x49xf32> to vector<49xf32>
    %128 = vector.shape_cast %127 : vector<49xf32> to vector<49x1xf32>
    %129 = vector.broadcast %128 : vector<49x1xf32> to vector<49x49xf32>
    %130 = arith.subf %126, %129 : vector<49x49xf32>
    %131 = math.exp %130 : vector<49x49xf32>
    %cst_51 = arith.constant dense<0.000000e+00> : vector<49xf32>
    %132 = vector.multi_reduction <add>, %131, %cst_51 [1] : vector<49x49xf32> to vector<49xf32>
    %133 = vector.shape_cast %132 : vector<49xf32> to vector<49x1xf32>
    %134 = tpu.reciprocal %133 {approx = true} : vector<49x1xf32> -> vector<49x1xf32>
    %135 = vector.broadcast %134 : vector<49x1xf32> to vector<49x49xf32>
    %136 = arith.mulf %131, %135 : vector<49x49xf32>
    %137 = arith.truncf %136 : vector<49x49xf32> to vector<49x49xbf16>
    %138 = vector.extract_strided_slice %57 {offsets = [0, 24], sizes = [49, 8], strides = [1, 1]} : vector<49x32xbf16> to vector<49x8xbf16>
    %cst_52 = arith.constant dense<0.000000e+00> : vector<49x8xf32>
    %139 = tpu.matmul %137, %138, %cst_52 {dimension_numbers = #tpu.dot_dimension_numbers<[1], [0], [0], [1], [0, 0, 1, 1], [], []>} : vector<49x49xbf16>, vector<49x8xbf16>, vector<49x8xf32> -> vector<49x8xf32>
    %140 = arith.truncf %139 : vector<49x8xf32> to vector<49x8xbf16>
    %cst_53 = arith.constant dense<0.000000e+00> : vector<49x32xf32>
    %141 = tpu.matmul %140, %43, %cst_53 {dimension_numbers = #tpu.dot_dimension_numbers<[1], [0], [0], [1], [0, 0, 1, 1], [], []>} : vector<49x8xbf16>, vector<8x32xbf16>, vector<49x32xf32> -> vector<49x32xf32>
    %142 = arith.addf %121, %141 : vector<49x32xf32>
    %143 = vector.broadcast %44 : vector<1x32xf32> to vector<49x32xf32>
    %144 = arith.addf %142, %143 : vector<49x32xf32>
    %145 = arith.addf %33, %144 : vector<49x32xf32>
    %c112 = arith.constant 112 : index
    %c0_54 = arith.constant 0 : index
    %146 = vector.load %arg4[%c112, %c0_54] : memref<440x128xf32, #tpu.memory_space<vmem>>, vector<1x32xf32>
    %c120 = arith.constant 120 : index
    %c0_55 = arith.constant 0 : index
    %147 = vector.load %arg4[%c120, %c0_55] : memref<440x128xf32, #tpu.memory_space<vmem>>, vector<1x32xf32>
    %cst_56 = arith.constant dense<0.000000e+00> : vector<49xf32>
    %148 = vector.multi_reduction <add>, %145, %cst_56 [1] : vector<49x32xf32> to vector<49xf32>
    %149 = vector.shape_cast %148 : vector<49xf32> to vector<49x1xf32>
    %cst_57 = arith.constant 3.200000e+01 : f32
    %150 = vector.broadcast %cst_57 : f32 to vector<49x1xf32>
    %151 = arith.divf %149, %150 : vector<49x1xf32>
    %152 = vector.broadcast %151 : vector<49x1xf32> to vector<49x32xf32>
    %153 = arith.subf %145, %152 : vector<49x32xf32>
    %154 = arith.mulf %153, %153 : vector<49x32xf32>
    %cst_58 = arith.constant dense<0.000000e+00> : vector<49xf32>
    %155 = vector.multi_reduction <add>, %154, %cst_58 [1] : vector<49x32xf32> to vector<49xf32>
    %156 = vector.shape_cast %155 : vector<49xf32> to vector<49x1xf32>
    %cst_59 = arith.constant 3.200000e+01 : f32
    %157 = vector.broadcast %cst_59 : f32 to vector<49x1xf32>
    %158 = arith.divf %156, %157 : vector<49x1xf32>
    %159 = vector.broadcast %151 : vector<49x1xf32> to vector<49x32xf32>
    %160 = arith.subf %145, %159 : vector<49x32xf32>
    %cst_60 = arith.constant 9.99999974E-6 : f32
    %161 = vector.broadcast %cst_60 : f32 to vector<49x1xf32>
    %162 = arith.addf %158, %161 : vector<49x1xf32>
    %163 = math.rsqrt %162 : vector<49x1xf32>
    %164 = vector.broadcast %163 : vector<49x1xf32> to vector<49x32xf32>
    %165 = arith.mulf %160, %164 : vector<49x32xf32>
    %166 = vector.broadcast %146 : vector<1x32xf32> to vector<49x32xf32>
    %167 = arith.mulf %165, %166 : vector<49x32xf32>
    %168 = vector.broadcast %147 : vector<1x32xf32> to vector<49x32xf32>
    %169 = arith.addf %167, %168 : vector<49x32xf32>
    %c224 = arith.constant 224 : index
    %c0_61 = arith.constant 0 : index
    %170 = vector.load %arg3[%c224, %c0_61] : memref<1184x128xbf16, #tpu.memory_space<vmem>>, vector<32x64xbf16>
    %c128_62 = arith.constant 128 : index
    %c0_63 = arith.constant 0 : index
    %171 = vector.load %arg4[%c128_62, %c0_63] : memref<440x128xf32, #tpu.memory_space<vmem>>, vector<1x64xf32>
    %172 = arith.truncf %169 : vector<49x32xf32> to vector<49x32xbf16>
    %cst_64 = arith.constant dense<0.000000e+00> : vector<49x64xf32>
    %173 = tpu.matmul %172, %170, %cst_64 {dimension_numbers = #tpu.dot_dimension_numbers<[1], [0], [0], [1], [0, 0, 1, 1], [], []>} : vector<49x32xbf16>, vector<32x64xbf16>, vector<49x64xf32> -> vector<49x64xf32>
    %174 = vector.broadcast %171 : vector<1x64xf32> to vector<49x64xf32>
    %175 = arith.addf %173, %174 : vector<49x64xf32>
    %cst_65 = arith.constant 0.000000e+00 : f32
    %176 = vector.broadcast %cst_65 : f32 to vector<49x64xf32>
    %177 = arith.maximumf %175, %176 : vector<49x64xf32>
    %c256 = arith.constant 256 : index
    %c0_66 = arith.constant 0 : index
    %178 = vector.load %arg3[%c256, %c0_66] : memref<1184x128xbf16, #tpu.memory_space<vmem>>, vector<64x32xbf16>
    %c136 = arith.constant 136 : index
    %c0_67 = arith.constant 0 : index
    %179 = vector.load %arg4[%c136, %c0_67] : memref<440x128xf32, #tpu.memory_space<vmem>>, vector<1x32xf32>
    %180 = arith.truncf %177 : vector<49x64xf32> to vector<49x64xbf16>
    %cst_68 = arith.constant dense<0.000000e+00> : vector<49x32xf32>
    %181 = tpu.matmul %180, %178, %cst_68 {dimension_numbers = #tpu.dot_dimension_numbers<[1], [0], [0], [1], [0, 0, 1, 1], [], []>} : vector<49x64xbf16>, vector<64x32xbf16>, vector<49x32xf32> -> vector<49x32xf32>
    %182 = vector.broadcast %179 : vector<1x32xf32> to vector<49x32xf32>
    %183 = arith.addf %181, %182 : vector<49x32xf32>
    %184 = arith.addf %169, %183 : vector<49x32xf32>
    %c144 = arith.constant 144 : index
    %c0_69 = arith.constant 0 : index
    %185 = vector.load %arg4[%c144, %c0_69] : memref<440x128xf32, #tpu.memory_space<vmem>>, vector<1x32xf32>
    %c152 = arith.constant 152 : index
    %c0_70 = arith.constant 0 : index
    %186 = vector.load %arg4[%c152, %c0_70] : memref<440x128xf32, #tpu.memory_space<vmem>>, vector<1x32xf32>
    %cst_71 = arith.constant dense<0.000000e+00> : vector<49xf32>
    %187 = vector.multi_reduction <add>, %184, %cst_71 [1] : vector<49x32xf32> to vector<49xf32>
    %188 = vector.shape_cast %187 : vector<49xf32> to vector<49x1xf32>
    %cst_72 = arith.constant 3.200000e+01 : f32
    %189 = vector.broadcast %cst_72 : f32 to vector<49x1xf32>
    %190 = arith.divf %188, %189 : vector<49x1xf32>
    %191 = vector.broadcast %190 : vector<49x1xf32> to vector<49x32xf32>
    %192 = arith.subf %184, %191 : vector<49x32xf32>
    %193 = arith.mulf %192, %192 : vector<49x32xf32>
    %cst_73 = arith.constant dense<0.000000e+00> : vector<49xf32>
    %194 = vector.multi_reduction <add>, %193, %cst_73 [1] : vector<49x32xf32> to vector<49xf32>
    %195 = vector.shape_cast %194 : vector<49xf32> to vector<49x1xf32>
    %cst_74 = arith.constant 3.200000e+01 : f32
    %196 = vector.broadcast %cst_74 : f32 to vector<49x1xf32>
    %197 = arith.divf %195, %196 : vector<49x1xf32>
    %198 = vector.broadcast %190 : vector<49x1xf32> to vector<49x32xf32>
    %199 = arith.subf %184, %198 : vector<49x32xf32>
    %cst_75 = arith.constant 9.99999974E-6 : f32
    %200 = vector.broadcast %cst_75 : f32 to vector<49x1xf32>
    %201 = arith.addf %197, %200 : vector<49x1xf32>
    %202 = math.rsqrt %201 : vector<49x1xf32>
    %203 = vector.broadcast %202 : vector<49x1xf32> to vector<49x32xf32>
    %204 = arith.mulf %199, %203 : vector<49x32xf32>
    %205 = vector.broadcast %185 : vector<1x32xf32> to vector<49x32xf32>
    %206 = arith.mulf %204, %205 : vector<49x32xf32>
    %207 = vector.broadcast %186 : vector<1x32xf32> to vector<49x32xf32>
    %208 = arith.addf %206, %207 : vector<49x32xf32>
    %c0_76 = arith.constant 0 : index
    %c0_77 = arith.constant 0 : index
    %c0_78 = arith.constant 0 : index
    %209 = vector.load %arg2[%c0_76, %c0_77, %c0_78] : memref<1x8x32xf32, #tpu.memory_space<vmem>>, vector<1x8x32xf32>
    %210 = vector.shape_cast %209 : vector<1x8x32xf32> to vector<8x32xf32>
    %c320 = arith.constant 320 : index
    %c0_79 = arith.constant 0 : index
    %211 = vector.load %arg3[%c320, %c0_79] : memref<1184x128xbf16, #tpu.memory_space<vmem>>, vector<32x32xbf16>
    %c160_80 = arith.constant 160 : index
    %c0_81 = arith.constant 0 : index
    %212 = vector.load %arg4[%c160_80, %c0_81] : memref<440x128xf32, #tpu.memory_space<vmem>>, vector<1x32xf32>
    %c352 = arith.constant 352 : index
    %c0_82 = arith.constant 0 : index
    %213 = vector.load %arg3[%c352, %c0_82] : memref<1184x128xbf16, #tpu.memory_space<vmem>>, vector<32x32xbf16>
    %c168 = arith.constant 168 : index
    %c0_83 = arith.constant 0 : index
    %214 = vector.load %arg4[%c168, %c0_83] : memref<440x128xf32, #tpu.memory_space<vmem>>, vector<1x32xf32>
    %c384 = arith.constant 384 : index
    %c0_84 = arith.constant 0 : index
    %215 = vector.load %arg3[%c384, %c0_84] : memref<1184x128xbf16, #tpu.memory_space<vmem>>, vector<32x32xbf16>
    %c176_85 = arith.constant 176 : index
    %c0_86 = arith.constant 0 : index
    %216 = vector.load %arg4[%c176_85, %c0_86] : memref<440x128xf32, #tpu.memory_space<vmem>>, vector<1x32xf32>
    %c416 = arith.constant 416 : index
    %c0_87 = arith.constant 0 : index
    %217 = vector.load %arg3[%c416, %c0_87] : memref<1184x128xbf16, #tpu.memory_space<vmem>>, vector<8x32xbf16>
    %c432 = arith.constant 432 : index
    %c0_88 = arith.constant 0 : index
    %218 = vector.load %arg3[%c432, %c0_88] : memref<1184x128xbf16, #tpu.memory_space<vmem>>, vector<8x32xbf16>
    %c448 = arith.constant 448 : index
    %c0_89 = arith.constant 0 : index
    %219 = vector.load %arg3[%c448, %c0_89] : memref<1184x128xbf16, #tpu.memory_space<vmem>>, vector<8x32xbf16>
    %c464 = arith.constant 464 : index
    %c0_90 = arith.constant 0 : index
    %220 = vector.load %arg3[%c464, %c0_90] : memref<1184x128xbf16, #tpu.memory_space<vmem>>, vector<8x32xbf16>
    %c184 = arith.constant 184 : index
    %c0_91 = arith.constant 0 : index
    %221 = vector.load %arg4[%c184, %c0_91] : memref<440x128xf32, #tpu.memory_space<vmem>>, vector<1x32xf32>
    %222 = arith.truncf %210 : vector<8x32xf32> to vector<8x32xbf16>
    %cst_92 = arith.constant dense<0.000000e+00> : vector<8x32xf32>
    %223 = tpu.matmul %222, %211, %cst_92 {dimension_numbers = #tpu.dot_dimension_numbers<[1], [0], [0], [1], [0, 0, 1, 1], [], []>} : vector<8x32xbf16>, vector<32x32xbf16>, vector<8x32xf32> -> vector<8x32xf32>
    %224 = vector.broadcast %212 : vector<1x32xf32> to vector<8x32xf32>
    %225 = arith.addf %223, %224 : vector<8x32xf32>
    %226 = arith.truncf %225 : vector<8x32xf32> to vector<8x32xbf16>
    %cst_93 = arith.constant dense<0.000000e+00> : vector<8x32xf32>
    %227 = tpu.matmul %222, %213, %cst_93 {dimension_numbers = #tpu.dot_dimension_numbers<[1], [0], [0], [1], [0, 0, 1, 1], [], []>} : vector<8x32xbf16>, vector<32x32xbf16>, vector<8x32xf32> -> vector<8x32xf32>
    %228 = vector.broadcast %214 : vector<1x32xf32> to vector<8x32xf32>
    %229 = arith.addf %227, %228 : vector<8x32xf32>
    %230 = arith.truncf %229 : vector<8x32xf32> to vector<8x32xbf16>
    %cst_94 = arith.constant dense<0.000000e+00> : vector<8x32xf32>
    %231 = tpu.matmul %222, %215, %cst_94 {dimension_numbers = #tpu.dot_dimension_numbers<[1], [0], [0], [1], [0, 0, 1, 1], [], []>} : vector<8x32xbf16>, vector<32x32xbf16>, vector<8x32xf32> -> vector<8x32xf32>
    %232 = vector.broadcast %216 : vector<1x32xf32> to vector<8x32xf32>
    %233 = arith.addf %231, %232 : vector<8x32xf32>
    %234 = arith.truncf %233 : vector<8x32xf32> to vector<8x32xbf16>
    %235 = tpu.iota {dimensions = array<i32: 0>} : vector<8x8xi32>
    %236 = tpu.iota {dimensions = array<i32: 1>} : vector<8x8xi32>
    %237 = arith.cmpi sgt, %236, %235 : vector<8x8xi32>
    %cst_95 = arith.constant -1.000000e+09 : f32
    %cst_96 = arith.constant 0.000000e+00 : f32
    %238 = vector.broadcast %cst_95 : f32 to vector<8x8xf32>
    %239 = vector.broadcast %cst_96 : f32 to vector<8x8xf32>
    %240 = arith.select %237, %238, %239 : vector<8x8xi1>, vector<8x8xf32>
    %cst_97 = arith.constant 0.000000e+00 : f32
    %241 = vector.broadcast %cst_97 : f32 to vector<8x32xf32>
    %242 = vector.extract_strided_slice %226 {offsets = [0, 0], sizes = [8, 8], strides = [1, 1]} : vector<8x32xbf16> to vector<8x8xbf16>
    %243 = vector.extract_strided_slice %230 {offsets = [0, 0], sizes = [8, 8], strides = [1, 1]} : vector<8x32xbf16> to vector<8x8xbf16>
    %cst_98 = arith.constant dense<0.000000e+00> : vector<8x8xf32>
    %244 = tpu.matmul %242, %243, %cst_98 {dimension_numbers = #tpu.dot_dimension_numbers<[1], [1], [0], [0], [0, 0, 1, 0], [], []>} : vector<8x8xbf16>, vector<8x8xbf16>, vector<8x8xf32> -> vector<8x8xf32>
    %cst_99 = arith.constant 0.353553385 : f32
    %245 = vector.broadcast %cst_99 : f32 to vector<8x8xf32>
    %246 = arith.mulf %244, %245 : vector<8x8xf32>
    %247 = arith.addf %246, %240 : vector<8x8xf32>
    %cst_100 = arith.constant dense<0xFF800000> : vector<8xf32>
    %248 = vector.multi_reduction <maximumf>, %247, %cst_100 [1] : vector<8x8xf32> to vector<8xf32>
    %249 = vector.shape_cast %248 : vector<8xf32> to vector<8x1xf32>
    %250 = vector.broadcast %249 : vector<8x1xf32> to vector<8x8xf32>
    %251 = arith.subf %247, %250 : vector<8x8xf32>
    %252 = math.exp %251 : vector<8x8xf32>
    %cst_101 = arith.constant dense<0.000000e+00> : vector<8xf32>
    %253 = vector.multi_reduction <add>, %252, %cst_101 [1] : vector<8x8xf32> to vector<8xf32>
    %254 = vector.shape_cast %253 : vector<8xf32> to vector<8x1xf32>
    %255 = tpu.reciprocal %254 {approx = true} : vector<8x1xf32> -> vector<8x1xf32>
    %256 = vector.broadcast %255 : vector<8x1xf32> to vector<8x8xf32>
    %257 = arith.mulf %252, %256 : vector<8x8xf32>
    %258 = arith.truncf %257 : vector<8x8xf32> to vector<8x8xbf16>
    %259 = vector.extract_strided_slice %234 {offsets = [0, 0], sizes = [8, 8], strides = [1, 1]} : vector<8x32xbf16> to vector<8x8xbf16>
    %cst_102 = arith.constant dense<0.000000e+00> : vector<8x8xf32>
    %260 = tpu.matmul %258, %259, %cst_102 {dimension_numbers = #tpu.dot_dimension_numbers<[1], [0], [0], [1], [0, 0, 1, 1], [], []>} : vector<8x8xbf16>, vector<8x8xbf16>, vector<8x8xf32> -> vector<8x8xf32>
    %261 = arith.truncf %260 : vector<8x8xf32> to vector<8x8xbf16>
    %cst_103 = arith.constant dense<0.000000e+00> : vector<8x32xf32>
    %262 = tpu.matmul %261, %217, %cst_103 {dimension_numbers = #tpu.dot_dimension_numbers<[1], [0], [0], [1], [0, 0, 1, 1], [], []>} : vector<8x8xbf16>, vector<8x32xbf16>, vector<8x32xf32> -> vector<8x32xf32>
    %263 = arith.addf %241, %262 : vector<8x32xf32>
    %264 = vector.extract_strided_slice %226 {offsets = [0, 8], sizes = [8, 8], strides = [1, 1]} : vector<8x32xbf16> to vector<8x8xbf16>
    %265 = vector.extract_strided_slice %230 {offsets = [0, 8], sizes = [8, 8], strides = [1, 1]} : vector<8x32xbf16> to vector<8x8xbf16>
    %cst_104 = arith.constant dense<0.000000e+00> : vector<8x8xf32>
    %266 = tpu.matmul %264, %265, %cst_104 {dimension_numbers = #tpu.dot_dimension_numbers<[1], [1], [0], [0], [0, 0, 1, 0], [], []>} : vector<8x8xbf16>, vector<8x8xbf16>, vector<8x8xf32> -> vector<8x8xf32>
    %cst_105 = arith.constant 0.353553385 : f32
    %267 = vector.broadcast %cst_105 : f32 to vector<8x8xf32>
    %268 = arith.mulf %266, %267 : vector<8x8xf32>
    %269 = arith.addf %268, %240 : vector<8x8xf32>
    %cst_106 = arith.constant dense<0xFF800000> : vector<8xf32>
    %270 = vector.multi_reduction <maximumf>, %269, %cst_106 [1] : vector<8x8xf32> to vector<8xf32>
    %271 = vector.shape_cast %270 : vector<8xf32> to vector<8x1xf32>
    %272 = vector.broadcast %271 : vector<8x1xf32> to vector<8x8xf32>
    %273 = arith.subf %269, %272 : vector<8x8xf32>
    %274 = math.exp %273 : vector<8x8xf32>
    %cst_107 = arith.constant dense<0.000000e+00> : vector<8xf32>
    %275 = vector.multi_reduction <add>, %274, %cst_107 [1] : vector<8x8xf32> to vector<8xf32>
    %276 = vector.shape_cast %275 : vector<8xf32> to vector<8x1xf32>
    %277 = tpu.reciprocal %276 {approx = true} : vector<8x1xf32> -> vector<8x1xf32>
    %278 = vector.broadcast %277 : vector<8x1xf32> to vector<8x8xf32>
    %279 = arith.mulf %274, %278 : vector<8x8xf32>
    %280 = arith.truncf %279 : vector<8x8xf32> to vector<8x8xbf16>
    %281 = vector.extract_strided_slice %234 {offsets = [0, 8], sizes = [8, 8], strides = [1, 1]} : vector<8x32xbf16> to vector<8x8xbf16>
    %cst_108 = arith.constant dense<0.000000e+00> : vector<8x8xf32>
    %282 = tpu.matmul %280, %281, %cst_108 {dimension_numbers = #tpu.dot_dimension_numbers<[1], [0], [0], [1], [0, 0, 1, 1], [], []>} : vector<8x8xbf16>, vector<8x8xbf16>, vector<8x8xf32> -> vector<8x8xf32>
    %283 = arith.truncf %282 : vector<8x8xf32> to vector<8x8xbf16>
    %cst_109 = arith.constant dense<0.000000e+00> : vector<8x32xf32>
    %284 = tpu.matmul %283, %218, %cst_109 {dimension_numbers = #tpu.dot_dimension_numbers<[1], [0], [0], [1], [0, 0, 1, 1], [], []>} : vector<8x8xbf16>, vector<8x32xbf16>, vector<8x32xf32> -> vector<8x32xf32>
    %285 = arith.addf %263, %284 : vector<8x32xf32>
    %286 = vector.extract_strided_slice %226 {offsets = [0, 16], sizes = [8, 8], strides = [1, 1]} : vector<8x32xbf16> to vector<8x8xbf16>
    %287 = vector.extract_strided_slice %230 {offsets = [0, 16], sizes = [8, 8], strides = [1, 1]} : vector<8x32xbf16> to vector<8x8xbf16>
    %cst_110 = arith.constant dense<0.000000e+00> : vector<8x8xf32>
    %288 = tpu.matmul %286, %287, %cst_110 {dimension_numbers = #tpu.dot_dimension_numbers<[1], [1], [0], [0], [0, 0, 1, 0], [], []>} : vector<8x8xbf16>, vector<8x8xbf16>, vector<8x8xf32> -> vector<8x8xf32>
    %cst_111 = arith.constant 0.353553385 : f32
    %289 = vector.broadcast %cst_111 : f32 to vector<8x8xf32>
    %290 = arith.mulf %288, %289 : vector<8x8xf32>
    %291 = arith.addf %290, %240 : vector<8x8xf32>
    %cst_112 = arith.constant dense<0xFF800000> : vector<8xf32>
    %292 = vector.multi_reduction <maximumf>, %291, %cst_112 [1] : vector<8x8xf32> to vector<8xf32>
    %293 = vector.shape_cast %292 : vector<8xf32> to vector<8x1xf32>
    %294 = vector.broadcast %293 : vector<8x1xf32> to vector<8x8xf32>
    %295 = arith.subf %291, %294 : vector<8x8xf32>
    %296 = math.exp %295 : vector<8x8xf32>
    %cst_113 = arith.constant dense<0.000000e+00> : vector<8xf32>
    %297 = vector.multi_reduction <add>, %296, %cst_113 [1] : vector<8x8xf32> to vector<8xf32>
    %298 = vector.shape_cast %297 : vector<8xf32> to vector<8x1xf32>
    %299 = tpu.reciprocal %298 {approx = true} : vector<8x1xf32> -> vector<8x1xf32>
    %300 = vector.broadcast %299 : vector<8x1xf32> to vector<8x8xf32>
    %301 = arith.mulf %296, %300 : vector<8x8xf32>
    %302 = arith.truncf %301 : vector<8x8xf32> to vector<8x8xbf16>
    %303 = vector.extract_strided_slice %234 {offsets = [0, 16], sizes = [8, 8], strides = [1, 1]} : vector<8x32xbf16> to vector<8x8xbf16>
    %cst_114 = arith.constant dense<0.000000e+00> : vector<8x8xf32>
    %304 = tpu.matmul %302, %303, %cst_114 {dimension_numbers = #tpu.dot_dimension_numbers<[1], [0], [0], [1], [0, 0, 1, 1], [], []>} : vector<8x8xbf16>, vector<8x8xbf16>, vector<8x8xf32> -> vector<8x8xf32>
    %305 = arith.truncf %304 : vector<8x8xf32> to vector<8x8xbf16>
    %cst_115 = arith.constant dense<0.000000e+00> : vector<8x32xf32>
    %306 = tpu.matmul %305, %219, %cst_115 {dimension_numbers = #tpu.dot_dimension_numbers<[1], [0], [0], [1], [0, 0, 1, 1], [], []>} : vector<8x8xbf16>, vector<8x32xbf16>, vector<8x32xf32> -> vector<8x32xf32>
    %307 = arith.addf %285, %306 : vector<8x32xf32>
    %308 = vector.extract_strided_slice %226 {offsets = [0, 24], sizes = [8, 8], strides = [1, 1]} : vector<8x32xbf16> to vector<8x8xbf16>
    %309 = vector.extract_strided_slice %230 {offsets = [0, 24], sizes = [8, 8], strides = [1, 1]} : vector<8x32xbf16> to vector<8x8xbf16>
    %cst_116 = arith.constant dense<0.000000e+00> : vector<8x8xf32>
    %310 = tpu.matmul %308, %309, %cst_116 {dimension_numbers = #tpu.dot_dimension_numbers<[1], [1], [0], [0], [0, 0, 1, 0], [], []>} : vector<8x8xbf16>, vector<8x8xbf16>, vector<8x8xf32> -> vector<8x8xf32>
    %cst_117 = arith.constant 0.353553385 : f32
    %311 = vector.broadcast %cst_117 : f32 to vector<8x8xf32>
    %312 = arith.mulf %310, %311 : vector<8x8xf32>
    %313 = arith.addf %312, %240 : vector<8x8xf32>
    %cst_118 = arith.constant dense<0xFF800000> : vector<8xf32>
    %314 = vector.multi_reduction <maximumf>, %313, %cst_118 [1] : vector<8x8xf32> to vector<8xf32>
    %315 = vector.shape_cast %314 : vector<8xf32> to vector<8x1xf32>
    %316 = vector.broadcast %315 : vector<8x1xf32> to vector<8x8xf32>
    %317 = arith.subf %313, %316 : vector<8x8xf32>
    %318 = math.exp %317 : vector<8x8xf32>
    %cst_119 = arith.constant dense<0.000000e+00> : vector<8xf32>
    %319 = vector.multi_reduction <add>, %318, %cst_119 [1] : vector<8x8xf32> to vector<8xf32>
    %320 = vector.shape_cast %319 : vector<8xf32> to vector<8x1xf32>
    %321 = tpu.reciprocal %320 {approx = true} : vector<8x1xf32> -> vector<8x1xf32>
    %322 = vector.broadcast %321 : vector<8x1xf32> to vector<8x8xf32>
    %323 = arith.mulf %318, %322 : vector<8x8xf32>
    %324 = arith.truncf %323 : vector<8x8xf32> to vector<8x8xbf16>
    %325 = vector.extract_strided_slice %234 {offsets = [0, 24], sizes = [8, 8], strides = [1, 1]} : vector<8x32xbf16> to vector<8x8xbf16>
    %cst_120 = arith.constant dense<0.000000e+00> : vector<8x8xf32>
    %326 = tpu.matmul %324, %325, %cst_120 {dimension_numbers = #tpu.dot_dimension_numbers<[1], [0], [0], [1], [0, 0, 1, 1], [], []>} : vector<8x8xbf16>, vector<8x8xbf16>, vector<8x8xf32> -> vector<8x8xf32>
    %327 = arith.truncf %326 : vector<8x8xf32> to vector<8x8xbf16>
    %cst_121 = arith.constant dense<0.000000e+00> : vector<8x32xf32>
    %328 = tpu.matmul %327, %220, %cst_121 {dimension_numbers = #tpu.dot_dimension_numbers<[1], [0], [0], [1], [0, 0, 1, 1], [], []>} : vector<8x8xbf16>, vector<8x32xbf16>, vector<8x32xf32> -> vector<8x32xf32>
    %329 = arith.addf %307, %328 : vector<8x32xf32>
    %330 = vector.broadcast %221 : vector<1x32xf32> to vector<8x32xf32>
    %331 = arith.addf %329, %330 : vector<8x32xf32>
    %332 = arith.addf %210, %331 : vector<8x32xf32>
    %c192_122 = arith.constant 192 : index
    %c0_123 = arith.constant 0 : index
    %333 = vector.load %arg4[%c192_122, %c0_123] : memref<440x128xf32, #tpu.memory_space<vmem>>, vector<1x32xf32>
    %c200 = arith.constant 200 : index
    %c0_124 = arith.constant 0 : index
    %334 = vector.load %arg4[%c200, %c0_124] : memref<440x128xf32, #tpu.memory_space<vmem>>, vector<1x32xf32>
    %cst_125 = arith.constant dense<0.000000e+00> : vector<8xf32>
    %335 = vector.multi_reduction <add>, %332, %cst_125 [1] : vector<8x32xf32> to vector<8xf32>
    %336 = vector.shape_cast %335 : vector<8xf32> to vector<8x1xf32>
    %cst_126 = arith.constant 3.200000e+01 : f32
    %337 = vector.broadcast %cst_126 : f32 to vector<8x1xf32>
    %338 = arith.divf %336, %337 : vector<8x1xf32>
    %339 = vector.broadcast %338 : vector<8x1xf32> to vector<8x32xf32>
    %340 = arith.subf %332, %339 : vector<8x32xf32>
    %341 = arith.mulf %340, %340 : vector<8x32xf32>
    %cst_127 = arith.constant dense<0.000000e+00> : vector<8xf32>
    %342 = vector.multi_reduction <add>, %341, %cst_127 [1] : vector<8x32xf32> to vector<8xf32>
    %343 = vector.shape_cast %342 : vector<8xf32> to vector<8x1xf32>
    %cst_128 = arith.constant 3.200000e+01 : f32
    %344 = vector.broadcast %cst_128 : f32 to vector<8x1xf32>
    %345 = arith.divf %343, %344 : vector<8x1xf32>
    %346 = vector.broadcast %338 : vector<8x1xf32> to vector<8x32xf32>
    %347 = arith.subf %332, %346 : vector<8x32xf32>
    %cst_129 = arith.constant 9.99999974E-6 : f32
    %348 = vector.broadcast %cst_129 : f32 to vector<8x1xf32>
    %349 = arith.addf %345, %348 : vector<8x1xf32>
    %350 = math.rsqrt %349 : vector<8x1xf32>
    %351 = vector.broadcast %350 : vector<8x1xf32> to vector<8x32xf32>
    %352 = arith.mulf %347, %351 : vector<8x32xf32>
    %353 = vector.broadcast %333 : vector<1x32xf32> to vector<8x32xf32>
    %354 = arith.mulf %352, %353 : vector<8x32xf32>
    %355 = vector.broadcast %334 : vector<1x32xf32> to vector<8x32xf32>
    %356 = arith.addf %354, %355 : vector<8x32xf32>
    %c480 = arith.constant 480 : index
    %c0_130 = arith.constant 0 : index
    %357 = vector.load %arg3[%c480, %c0_130] : memref<1184x128xbf16, #tpu.memory_space<vmem>>, vector<32x32xbf16>
    %c208_131 = arith.constant 208 : index
    %c0_132 = arith.constant 0 : index
    %358 = vector.load %arg4[%c208_131, %c0_132] : memref<440x128xf32, #tpu.memory_space<vmem>>, vector<1x32xf32>
    %c512 = arith.constant 512 : index
    %c0_133 = arith.constant 0 : index
    %359 = vector.load %arg3[%c512, %c0_133] : memref<1184x128xbf16, #tpu.memory_space<vmem>>, vector<32x32xbf16>
    %c216 = arith.constant 216 : index
    %c0_134 = arith.constant 0 : index
    %360 = vector.load %arg4[%c216, %c0_134] : memref<440x128xf32, #tpu.memory_space<vmem>>, vector<1x32xf32>
    %c544 = arith.constant 544 : index
    %c0_135 = arith.constant 0 : index
    %361 = vector.load %arg3[%c544, %c0_135] : memref<1184x128xbf16, #tpu.memory_space<vmem>>, vector<32x32xbf16>
    %c224_136 = arith.constant 224 : index
    %c0_137 = arith.constant 0 : index
    %362 = vector.load %arg4[%c224_136, %c0_137] : memref<440x128xf32, #tpu.memory_space<vmem>>, vector<1x32xf32>
    %c576 = arith.constant 576 : index
    %c0_138 = arith.constant 0 : index
    %363 = vector.load %arg3[%c576, %c0_138] : memref<1184x128xbf16, #tpu.memory_space<vmem>>, vector<8x32xbf16>
    %c592 = arith.constant 592 : index
    %c0_139 = arith.constant 0 : index
    %364 = vector.load %arg3[%c592, %c0_139] : memref<1184x128xbf16, #tpu.memory_space<vmem>>, vector<8x32xbf16>
    %c608 = arith.constant 608 : index
    %c0_140 = arith.constant 0 : index
    %365 = vector.load %arg3[%c608, %c0_140] : memref<1184x128xbf16, #tpu.memory_space<vmem>>, vector<8x32xbf16>
    %c624 = arith.constant 624 : index
    %c0_141 = arith.constant 0 : index
    %366 = vector.load %arg3[%c624, %c0_141] : memref<1184x128xbf16, #tpu.memory_space<vmem>>, vector<8x32xbf16>
    %c232 = arith.constant 232 : index
    %c0_142 = arith.constant 0 : index
    %367 = vector.load %arg4[%c232, %c0_142] : memref<440x128xf32, #tpu.memory_space<vmem>>, vector<1x32xf32>
    %368 = arith.truncf %356 : vector<8x32xf32> to vector<8x32xbf16>
    %369 = arith.truncf %208 : vector<49x32xf32> to vector<49x32xbf16>
    %cst_143 = arith.constant dense<0.000000e+00> : vector<8x32xf32>
    %370 = tpu.matmul %368, %357, %cst_143 {dimension_numbers = #tpu.dot_dimension_numbers<[1], [0], [0], [1], [0, 0, 1, 1], [], []>} : vector<8x32xbf16>, vector<32x32xbf16>, vector<8x32xf32> -> vector<8x32xf32>
    %371 = vector.broadcast %358 : vector<1x32xf32> to vector<8x32xf32>
    %372 = arith.addf %370, %371 : vector<8x32xf32>
    %373 = arith.truncf %372 : vector<8x32xf32> to vector<8x32xbf16>
    %cst_144 = arith.constant dense<0.000000e+00> : vector<49x32xf32>
    %374 = tpu.matmul %369, %359, %cst_144 {dimension_numbers = #tpu.dot_dimension_numbers<[1], [0], [0], [1], [0, 0, 1, 1], [], []>} : vector<49x32xbf16>, vector<32x32xbf16>, vector<49x32xf32> -> vector<49x32xf32>
    %375 = vector.broadcast %360 : vector<1x32xf32> to vector<49x32xf32>
    %376 = arith.addf %374, %375 : vector<49x32xf32>
    %377 = arith.truncf %376 : vector<49x32xf32> to vector<49x32xbf16>
    %cst_145 = arith.constant dense<0.000000e+00> : vector<49x32xf32>
    %378 = tpu.matmul %369, %361, %cst_145 {dimension_numbers = #tpu.dot_dimension_numbers<[1], [0], [0], [1], [0, 0, 1, 1], [], []>} : vector<49x32xbf16>, vector<32x32xbf16>, vector<49x32xf32> -> vector<49x32xf32>
    %379 = vector.broadcast %362 : vector<1x32xf32> to vector<49x32xf32>
    %380 = arith.addf %378, %379 : vector<49x32xf32>
    %381 = arith.truncf %380 : vector<49x32xf32> to vector<49x32xbf16>
    %cst_146 = arith.constant 0.000000e+00 : f32
    %382 = vector.broadcast %cst_146 : f32 to vector<8x32xf32>
    %383 = vector.extract_strided_slice %373 {offsets = [0, 0], sizes = [8, 8], strides = [1, 1]} : vector<8x32xbf16> to vector<8x8xbf16>
    %384 = vector.extract_strided_slice %377 {offsets = [0, 0], sizes = [49, 8], strides = [1, 1]} : vector<49x32xbf16> to vector<49x8xbf16>
    %cst_147 = arith.constant dense<0.000000e+00> : vector<8x49xf32>
    %385 = tpu.matmul %383, %384, %cst_147 {dimension_numbers = #tpu.dot_dimension_numbers<[1], [1], [0], [0], [0, 0, 1, 0], [], []>} : vector<8x8xbf16>, vector<49x8xbf16>, vector<8x49xf32> -> vector<8x49xf32>
    %cst_148 = arith.constant 0.353553385 : f32
    %386 = vector.broadcast %cst_148 : f32 to vector<8x49xf32>
    %387 = arith.mulf %385, %386 : vector<8x49xf32>
    %cst_149 = arith.constant dense<0xFF800000> : vector<8xf32>
    %388 = vector.multi_reduction <maximumf>, %387, %cst_149 [1] : vector<8x49xf32> to vector<8xf32>
    %389 = vector.shape_cast %388 : vector<8xf32> to vector<8x1xf32>
    %390 = vector.broadcast %389 : vector<8x1xf32> to vector<8x49xf32>
    %391 = arith.subf %387, %390 : vector<8x49xf32>
    %392 = math.exp %391 : vector<8x49xf32>
    %cst_150 = arith.constant dense<0.000000e+00> : vector<8xf32>
    %393 = vector.multi_reduction <add>, %392, %cst_150 [1] : vector<8x49xf32> to vector<8xf32>
    %394 = vector.shape_cast %393 : vector<8xf32> to vector<8x1xf32>
    %395 = tpu.reciprocal %394 {approx = true} : vector<8x1xf32> -> vector<8x1xf32>
    %396 = vector.broadcast %395 : vector<8x1xf32> to vector<8x49xf32>
    %397 = arith.mulf %392, %396 : vector<8x49xf32>
    %398 = arith.truncf %397 : vector<8x49xf32> to vector<8x49xbf16>
    %399 = vector.extract_strided_slice %381 {offsets = [0, 0], sizes = [49, 8], strides = [1, 1]} : vector<49x32xbf16> to vector<49x8xbf16>
    %cst_151 = arith.constant dense<0.000000e+00> : vector<8x8xf32>
    %400 = tpu.matmul %398, %399, %cst_151 {dimension_numbers = #tpu.dot_dimension_numbers<[1], [0], [0], [1], [0, 0, 1, 1], [], []>} : vector<8x49xbf16>, vector<49x8xbf16>, vector<8x8xf32> -> vector<8x8xf32>
    %401 = arith.truncf %400 : vector<8x8xf32> to vector<8x8xbf16>
    %cst_152 = arith.constant dense<0.000000e+00> : vector<8x32xf32>
    %402 = tpu.matmul %401, %363, %cst_152 {dimension_numbers = #tpu.dot_dimension_numbers<[1], [0], [0], [1], [0, 0, 1, 1], [], []>} : vector<8x8xbf16>, vector<8x32xbf16>, vector<8x32xf32> -> vector<8x32xf32>
    %403 = arith.addf %382, %402 : vector<8x32xf32>
    %404 = vector.extract_strided_slice %373 {offsets = [0, 8], sizes = [8, 8], strides = [1, 1]} : vector<8x32xbf16> to vector<8x8xbf16>
    %405 = vector.extract_strided_slice %377 {offsets = [0, 8], sizes = [49, 8], strides = [1, 1]} : vector<49x32xbf16> to vector<49x8xbf16>
    %cst_153 = arith.constant dense<0.000000e+00> : vector<8x49xf32>
    %406 = tpu.matmul %404, %405, %cst_153 {dimension_numbers = #tpu.dot_dimension_numbers<[1], [1], [0], [0], [0, 0, 1, 0], [], []>} : vector<8x8xbf16>, vector<49x8xbf16>, vector<8x49xf32> -> vector<8x49xf32>
    %cst_154 = arith.constant 0.353553385 : f32
    %407 = vector.broadcast %cst_154 : f32 to vector<8x49xf32>
    %408 = arith.mulf %406, %407 : vector<8x49xf32>
    %cst_155 = arith.constant dense<0xFF800000> : vector<8xf32>
    %409 = vector.multi_reduction <maximumf>, %408, %cst_155 [1] : vector<8x49xf32> to vector<8xf32>
    %410 = vector.shape_cast %409 : vector<8xf32> to vector<8x1xf32>
    %411 = vector.broadcast %410 : vector<8x1xf32> to vector<8x49xf32>
    %412 = arith.subf %408, %411 : vector<8x49xf32>
    %413 = math.exp %412 : vector<8x49xf32>
    %cst_156 = arith.constant dense<0.000000e+00> : vector<8xf32>
    %414 = vector.multi_reduction <add>, %413, %cst_156 [1] : vector<8x49xf32> to vector<8xf32>
    %415 = vector.shape_cast %414 : vector<8xf32> to vector<8x1xf32>
    %416 = tpu.reciprocal %415 {approx = true} : vector<8x1xf32> -> vector<8x1xf32>
    %417 = vector.broadcast %416 : vector<8x1xf32> to vector<8x49xf32>
    %418 = arith.mulf %413, %417 : vector<8x49xf32>
    %419 = arith.truncf %418 : vector<8x49xf32> to vector<8x49xbf16>
    %420 = vector.extract_strided_slice %381 {offsets = [0, 8], sizes = [49, 8], strides = [1, 1]} : vector<49x32xbf16> to vector<49x8xbf16>
    %cst_157 = arith.constant dense<0.000000e+00> : vector<8x8xf32>
    %421 = tpu.matmul %419, %420, %cst_157 {dimension_numbers = #tpu.dot_dimension_numbers<[1], [0], [0], [1], [0, 0, 1, 1], [], []>} : vector<8x49xbf16>, vector<49x8xbf16>, vector<8x8xf32> -> vector<8x8xf32>
    %422 = arith.truncf %421 : vector<8x8xf32> to vector<8x8xbf16>
    %cst_158 = arith.constant dense<0.000000e+00> : vector<8x32xf32>
    %423 = tpu.matmul %422, %364, %cst_158 {dimension_numbers = #tpu.dot_dimension_numbers<[1], [0], [0], [1], [0, 0, 1, 1], [], []>} : vector<8x8xbf16>, vector<8x32xbf16>, vector<8x32xf32> -> vector<8x32xf32>
    %424 = arith.addf %403, %423 : vector<8x32xf32>
    %425 = vector.extract_strided_slice %373 {offsets = [0, 16], sizes = [8, 8], strides = [1, 1]} : vector<8x32xbf16> to vector<8x8xbf16>
    %426 = vector.extract_strided_slice %377 {offsets = [0, 16], sizes = [49, 8], strides = [1, 1]} : vector<49x32xbf16> to vector<49x8xbf16>
    %cst_159 = arith.constant dense<0.000000e+00> : vector<8x49xf32>
    %427 = tpu.matmul %425, %426, %cst_159 {dimension_numbers = #tpu.dot_dimension_numbers<[1], [1], [0], [0], [0, 0, 1, 0], [], []>} : vector<8x8xbf16>, vector<49x8xbf16>, vector<8x49xf32> -> vector<8x49xf32>
    %cst_160 = arith.constant 0.353553385 : f32
    %428 = vector.broadcast %cst_160 : f32 to vector<8x49xf32>
    %429 = arith.mulf %427, %428 : vector<8x49xf32>
    %cst_161 = arith.constant dense<0xFF800000> : vector<8xf32>
    %430 = vector.multi_reduction <maximumf>, %429, %cst_161 [1] : vector<8x49xf32> to vector<8xf32>
    %431 = vector.shape_cast %430 : vector<8xf32> to vector<8x1xf32>
    %432 = vector.broadcast %431 : vector<8x1xf32> to vector<8x49xf32>
    %433 = arith.subf %429, %432 : vector<8x49xf32>
    %434 = math.exp %433 : vector<8x49xf32>
    %cst_162 = arith.constant dense<0.000000e+00> : vector<8xf32>
    %435 = vector.multi_reduction <add>, %434, %cst_162 [1] : vector<8x49xf32> to vector<8xf32>
    %436 = vector.shape_cast %435 : vector<8xf32> to vector<8x1xf32>
    %437 = tpu.reciprocal %436 {approx = true} : vector<8x1xf32> -> vector<8x1xf32>
    %438 = vector.broadcast %437 : vector<8x1xf32> to vector<8x49xf32>
    %439 = arith.mulf %434, %438 : vector<8x49xf32>
    %440 = arith.truncf %439 : vector<8x49xf32> to vector<8x49xbf16>
    %441 = vector.extract_strided_slice %381 {offsets = [0, 16], sizes = [49, 8], strides = [1, 1]} : vector<49x32xbf16> to vector<49x8xbf16>
    %cst_163 = arith.constant dense<0.000000e+00> : vector<8x8xf32>
    %442 = tpu.matmul %440, %441, %cst_163 {dimension_numbers = #tpu.dot_dimension_numbers<[1], [0], [0], [1], [0, 0, 1, 1], [], []>} : vector<8x49xbf16>, vector<49x8xbf16>, vector<8x8xf32> -> vector<8x8xf32>
    %443 = arith.truncf %442 : vector<8x8xf32> to vector<8x8xbf16>
    %cst_164 = arith.constant dense<0.000000e+00> : vector<8x32xf32>
    %444 = tpu.matmul %443, %365, %cst_164 {dimension_numbers = #tpu.dot_dimension_numbers<[1], [0], [0], [1], [0, 0, 1, 1], [], []>} : vector<8x8xbf16>, vector<8x32xbf16>, vector<8x32xf32> -> vector<8x32xf32>
    %445 = arith.addf %424, %444 : vector<8x32xf32>
    %446 = vector.extract_strided_slice %373 {offsets = [0, 24], sizes = [8, 8], strides = [1, 1]} : vector<8x32xbf16> to vector<8x8xbf16>
    %447 = vector.extract_strided_slice %377 {offsets = [0, 24], sizes = [49, 8], strides = [1, 1]} : vector<49x32xbf16> to vector<49x8xbf16>
    %cst_165 = arith.constant dense<0.000000e+00> : vector<8x49xf32>
    %448 = tpu.matmul %446, %447, %cst_165 {dimension_numbers = #tpu.dot_dimension_numbers<[1], [1], [0], [0], [0, 0, 1, 0], [], []>} : vector<8x8xbf16>, vector<49x8xbf16>, vector<8x49xf32> -> vector<8x49xf32>
    %cst_166 = arith.constant 0.353553385 : f32
    %449 = vector.broadcast %cst_166 : f32 to vector<8x49xf32>
    %450 = arith.mulf %448, %449 : vector<8x49xf32>
    %cst_167 = arith.constant dense<0xFF800000> : vector<8xf32>
    %451 = vector.multi_reduction <maximumf>, %450, %cst_167 [1] : vector<8x49xf32> to vector<8xf32>
    %452 = vector.shape_cast %451 : vector<8xf32> to vector<8x1xf32>
    %453 = vector.broadcast %452 : vector<8x1xf32> to vector<8x49xf32>
    %454 = arith.subf %450, %453 : vector<8x49xf32>
    %455 = math.exp %454 : vector<8x49xf32>
    %cst_168 = arith.constant dense<0.000000e+00> : vector<8xf32>
    %456 = vector.multi_reduction <add>, %455, %cst_168 [1] : vector<8x49xf32> to vector<8xf32>
    %457 = vector.shape_cast %456 : vector<8xf32> to vector<8x1xf32>
    %458 = tpu.reciprocal %457 {approx = true} : vector<8x1xf32> -> vector<8x1xf32>
    %459 = vector.broadcast %458 : vector<8x1xf32> to vector<8x49xf32>
    %460 = arith.mulf %455, %459 : vector<8x49xf32>
    %461 = arith.truncf %460 : vector<8x49xf32> to vector<8x49xbf16>
    %462 = vector.extract_strided_slice %381 {offsets = [0, 24], sizes = [49, 8], strides = [1, 1]} : vector<49x32xbf16> to vector<49x8xbf16>
    %cst_169 = arith.constant dense<0.000000e+00> : vector<8x8xf32>
    %463 = tpu.matmul %461, %462, %cst_169 {dimension_numbers = #tpu.dot_dimension_numbers<[1], [0], [0], [1], [0, 0, 1, 1], [], []>} : vector<8x49xbf16>, vector<49x8xbf16>, vector<8x8xf32> -> vector<8x8xf32>
    %464 = arith.truncf %463 : vector<8x8xf32> to vector<8x8xbf16>
    %cst_170 = arith.constant dense<0.000000e+00> : vector<8x32xf32>
    %465 = tpu.matmul %464, %366, %cst_170 {dimension_numbers = #tpu.dot_dimension_numbers<[1], [0], [0], [1], [0, 0, 1, 1], [], []>} : vector<8x8xbf16>, vector<8x32xbf16>, vector<8x32xf32> -> vector<8x32xf32>
    %466 = arith.addf %445, %465 : vector<8x32xf32>
    %467 = vector.broadcast %367 : vector<1x32xf32> to vector<8x32xf32>
    %468 = arith.addf %466, %467 : vector<8x32xf32>
    %469 = arith.addf %356, %468 : vector<8x32xf32>
    %c240 = arith.constant 240 : index
    %c0_171 = arith.constant 0 : index
    %470 = vector.load %arg4[%c240, %c0_171] : memref<440x128xf32, #tpu.memory_space<vmem>>, vector<1x32xf32>
    %c248 = arith.constant 248 : index
    %c0_172 = arith.constant 0 : index
    %471 = vector.load %arg4[%c248, %c0_172] : memref<440x128xf32, #tpu.memory_space<vmem>>, vector<1x32xf32>
    %cst_173 = arith.constant dense<0.000000e+00> : vector<8xf32>
    %472 = vector.multi_reduction <add>, %469, %cst_173 [1] : vector<8x32xf32> to vector<8xf32>
    %473 = vector.shape_cast %472 : vector<8xf32> to vector<8x1xf32>
    %cst_174 = arith.constant 3.200000e+01 : f32
    %474 = vector.broadcast %cst_174 : f32 to vector<8x1xf32>
    %475 = arith.divf %473, %474 : vector<8x1xf32>
    %476 = vector.broadcast %475 : vector<8x1xf32> to vector<8x32xf32>
    %477 = arith.subf %469, %476 : vector<8x32xf32>
    %478 = arith.mulf %477, %477 : vector<8x32xf32>
    %cst_175 = arith.constant dense<0.000000e+00> : vector<8xf32>
    %479 = vector.multi_reduction <add>, %478, %cst_175 [1] : vector<8x32xf32> to vector<8xf32>
    %480 = vector.shape_cast %479 : vector<8xf32> to vector<8x1xf32>
    %cst_176 = arith.constant 3.200000e+01 : f32
    %481 = vector.broadcast %cst_176 : f32 to vector<8x1xf32>
    %482 = arith.divf %480, %481 : vector<8x1xf32>
    %483 = vector.broadcast %475 : vector<8x1xf32> to vector<8x32xf32>
    %484 = arith.subf %469, %483 : vector<8x32xf32>
    %cst_177 = arith.constant 9.99999974E-6 : f32
    %485 = vector.broadcast %cst_177 : f32 to vector<8x1xf32>
    %486 = arith.addf %482, %485 : vector<8x1xf32>
    %487 = math.rsqrt %486 : vector<8x1xf32>
    %488 = vector.broadcast %487 : vector<8x1xf32> to vector<8x32xf32>
    %489 = arith.mulf %484, %488 : vector<8x32xf32>
    %490 = vector.broadcast %470 : vector<1x32xf32> to vector<8x32xf32>
    %491 = arith.mulf %489, %490 : vector<8x32xf32>
    %492 = vector.broadcast %471 : vector<1x32xf32> to vector<8x32xf32>
    %493 = arith.addf %491, %492 : vector<8x32xf32>
    %c640 = arith.constant 640 : index
    %c0_178 = arith.constant 0 : index
    %494 = vector.load %arg3[%c640, %c0_178] : memref<1184x128xbf16, #tpu.memory_space<vmem>>, vector<32x64xbf16>
    %c256_179 = arith.constant 256 : index
    %c0_180 = arith.constant 0 : index
    %495 = vector.load %arg4[%c256_179, %c0_180] : memref<440x128xf32, #tpu.memory_space<vmem>>, vector<1x64xf32>
    %496 = arith.truncf %493 : vector<8x32xf32> to vector<8x32xbf16>
    %cst_181 = arith.constant dense<0.000000e+00> : vector<8x64xf32>
    %497 = tpu.matmul %496, %494, %cst_181 {dimension_numbers = #tpu.dot_dimension_numbers<[1], [0], [0], [1], [0, 0, 1, 1], [], []>} : vector<8x32xbf16>, vector<32x64xbf16>, vector<8x64xf32> -> vector<8x64xf32>
    %498 = vector.broadcast %495 : vector<1x64xf32> to vector<8x64xf32>
    %499 = arith.addf %497, %498 : vector<8x64xf32>
    %cst_182 = arith.constant 0.000000e+00 : f32
    %500 = vector.broadcast %cst_182 : f32 to vector<8x64xf32>
    %501 = arith.maximumf %499, %500 : vector<8x64xf32>
    %c672 = arith.constant 672 : index
    %c0_183 = arith.constant 0 : index
    %502 = vector.load %arg3[%c672, %c0_183] : memref<1184x128xbf16, #tpu.memory_space<vmem>>, vector<64x32xbf16>
    %c264 = arith.constant 264 : index
    %c0_184 = arith.constant 0 : index
    %503 = vector.load %arg4[%c264, %c0_184] : memref<440x128xf32, #tpu.memory_space<vmem>>, vector<1x32xf32>
    %504 = arith.truncf %501 : vector<8x64xf32> to vector<8x64xbf16>
    %cst_185 = arith.constant dense<0.000000e+00> : vector<8x32xf32>
    %505 = tpu.matmul %504, %502, %cst_185 {dimension_numbers = #tpu.dot_dimension_numbers<[1], [0], [0], [1], [0, 0, 1, 1], [], []>} : vector<8x64xbf16>, vector<64x32xbf16>, vector<8x32xf32> -> vector<8x32xf32>
    %506 = vector.broadcast %503 : vector<1x32xf32> to vector<8x32xf32>
    %507 = arith.addf %505, %506 : vector<8x32xf32>
    %508 = arith.addf %493, %507 : vector<8x32xf32>
    %c272 = arith.constant 272 : index
    %c0_186 = arith.constant 0 : index
    %509 = vector.load %arg4[%c272, %c0_186] : memref<440x128xf32, #tpu.memory_space<vmem>>, vector<1x32xf32>
    %c280 = arith.constant 280 : index
    %c0_187 = arith.constant 0 : index
    %510 = vector.load %arg4[%c280, %c0_187] : memref<440x128xf32, #tpu.memory_space<vmem>>, vector<1x32xf32>
    %cst_188 = arith.constant dense<0.000000e+00> : vector<8xf32>
    %511 = vector.multi_reduction <add>, %508, %cst_188 [1] : vector<8x32xf32> to vector<8xf32>
    %512 = vector.shape_cast %511 : vector<8xf32> to vector<8x1xf32>
    %cst_189 = arith.constant 3.200000e+01 : f32
    %513 = vector.broadcast %cst_189 : f32 to vector<8x1xf32>
    %514 = arith.divf %512, %513 : vector<8x1xf32>
    %515 = vector.broadcast %514 : vector<8x1xf32> to vector<8x32xf32>
    %516 = arith.subf %508, %515 : vector<8x32xf32>
    %517 = arith.mulf %516, %516 : vector<8x32xf32>
    %cst_190 = arith.constant dense<0.000000e+00> : vector<8xf32>
    %518 = vector.multi_reduction <add>, %517, %cst_190 [1] : vector<8x32xf32> to vector<8xf32>
    %519 = vector.shape_cast %518 : vector<8xf32> to vector<8x1xf32>
    %cst_191 = arith.constant 3.200000e+01 : f32
    %520 = vector.broadcast %cst_191 : f32 to vector<8x1xf32>
    %521 = arith.divf %519, %520 : vector<8x1xf32>
    %522 = vector.broadcast %514 : vector<8x1xf32> to vector<8x32xf32>
    %523 = arith.subf %508, %522 : vector<8x32xf32>
    %cst_192 = arith.constant 9.99999974E-6 : f32
    %524 = vector.broadcast %cst_192 : f32 to vector<8x1xf32>
    %525 = arith.addf %521, %524 : vector<8x1xf32>
    %526 = math.rsqrt %525 : vector<8x1xf32>
    %527 = vector.broadcast %526 : vector<8x1xf32> to vector<8x32xf32>
    %528 = arith.mulf %523, %527 : vector<8x32xf32>
    %529 = vector.broadcast %509 : vector<1x32xf32> to vector<8x32xf32>
    %530 = arith.mulf %528, %529 : vector<8x32xf32>
    %531 = vector.broadcast %510 : vector<1x32xf32> to vector<8x32xf32>
    %532 = arith.addf %530, %531 : vector<8x32xf32>
    %c736 = arith.constant 736 : index
    %c0_193 = arith.constant 0 : index
    %533 = vector.load %arg3[%c736, %c0_193] : memref<1184x128xbf16, #tpu.memory_space<vmem>>, vector<32x32xbf16>
    %c288 = arith.constant 288 : index
    %c0_194 = arith.constant 0 : index
    %534 = vector.load %arg4[%c288, %c0_194] : memref<440x128xf32, #tpu.memory_space<vmem>>, vector<1x32xf32>
    %c768 = arith.constant 768 : index
    %c0_195 = arith.constant 0 : index
    %535 = vector.load %arg3[%c768, %c0_195] : memref<1184x128xbf16, #tpu.memory_space<vmem>>, vector<32x32xbf16>
    %c296 = arith.constant 296 : index
    %c0_196 = arith.constant 0 : index
    %536 = vector.load %arg4[%c296, %c0_196] : memref<440x128xf32, #tpu.memory_space<vmem>>, vector<1x32xf32>
    %c800 = arith.constant 800 : index
    %c0_197 = arith.constant 0 : index
    %537 = vector.load %arg3[%c800, %c0_197] : memref<1184x128xbf16, #tpu.memory_space<vmem>>, vector<32x32xbf16>
    %c304 = arith.constant 304 : index
    %c0_198 = arith.constant 0 : index
    %538 = vector.load %arg4[%c304, %c0_198] : memref<440x128xf32, #tpu.memory_space<vmem>>, vector<1x32xf32>
    %c832 = arith.constant 832 : index
    %c0_199 = arith.constant 0 : index
    %539 = vector.load %arg3[%c832, %c0_199] : memref<1184x128xbf16, #tpu.memory_space<vmem>>, vector<8x32xbf16>
    %c848 = arith.constant 848 : index
    %c0_200 = arith.constant 0 : index
    %540 = vector.load %arg3[%c848, %c0_200] : memref<1184x128xbf16, #tpu.memory_space<vmem>>, vector<8x32xbf16>
    %c864 = arith.constant 864 : index
    %c0_201 = arith.constant 0 : index
    %541 = vector.load %arg3[%c864, %c0_201] : memref<1184x128xbf16, #tpu.memory_space<vmem>>, vector<8x32xbf16>
    %c880 = arith.constant 880 : index
    %c0_202 = arith.constant 0 : index
    %542 = vector.load %arg3[%c880, %c0_202] : memref<1184x128xbf16, #tpu.memory_space<vmem>>, vector<8x32xbf16>
    %c312 = arith.constant 312 : index
    %c0_203 = arith.constant 0 : index
    %543 = vector.load %arg4[%c312, %c0_203] : memref<440x128xf32, #tpu.memory_space<vmem>>, vector<1x32xf32>
    %544 = arith.truncf %532 : vector<8x32xf32> to vector<8x32xbf16>
    %cst_204 = arith.constant dense<0.000000e+00> : vector<8x32xf32>
    %545 = tpu.matmul %544, %533, %cst_204 {dimension_numbers = #tpu.dot_dimension_numbers<[1], [0], [0], [1], [0, 0, 1, 1], [], []>} : vector<8x32xbf16>, vector<32x32xbf16>, vector<8x32xf32> -> vector<8x32xf32>
    %546 = vector.broadcast %534 : vector<1x32xf32> to vector<8x32xf32>
    %547 = arith.addf %545, %546 : vector<8x32xf32>
    %548 = arith.truncf %547 : vector<8x32xf32> to vector<8x32xbf16>
    %cst_205 = arith.constant dense<0.000000e+00> : vector<8x32xf32>
    %549 = tpu.matmul %544, %535, %cst_205 {dimension_numbers = #tpu.dot_dimension_numbers<[1], [0], [0], [1], [0, 0, 1, 1], [], []>} : vector<8x32xbf16>, vector<32x32xbf16>, vector<8x32xf32> -> vector<8x32xf32>
    %550 = vector.broadcast %536 : vector<1x32xf32> to vector<8x32xf32>
    %551 = arith.addf %549, %550 : vector<8x32xf32>
    %552 = arith.truncf %551 : vector<8x32xf32> to vector<8x32xbf16>
    %cst_206 = arith.constant dense<0.000000e+00> : vector<8x32xf32>
    %553 = tpu.matmul %544, %537, %cst_206 {dimension_numbers = #tpu.dot_dimension_numbers<[1], [0], [0], [1], [0, 0, 1, 1], [], []>} : vector<8x32xbf16>, vector<32x32xbf16>, vector<8x32xf32> -> vector<8x32xf32>
    %554 = vector.broadcast %538 : vector<1x32xf32> to vector<8x32xf32>
    %555 = arith.addf %553, %554 : vector<8x32xf32>
    %556 = arith.truncf %555 : vector<8x32xf32> to vector<8x32xbf16>
    %557 = tpu.iota {dimensions = array<i32: 0>} : vector<8x8xi32>
    %558 = tpu.iota {dimensions = array<i32: 1>} : vector<8x8xi32>
    %559 = arith.cmpi sgt, %558, %557 : vector<8x8xi32>
    %cst_207 = arith.constant -1.000000e+09 : f32
    %cst_208 = arith.constant 0.000000e+00 : f32
    %560 = vector.broadcast %cst_207 : f32 to vector<8x8xf32>
    %561 = vector.broadcast %cst_208 : f32 to vector<8x8xf32>
    %562 = arith.select %559, %560, %561 : vector<8x8xi1>, vector<8x8xf32>
    %cst_209 = arith.constant 0.000000e+00 : f32
    %563 = vector.broadcast %cst_209 : f32 to vector<8x32xf32>
    %564 = vector.extract_strided_slice %548 {offsets = [0, 0], sizes = [8, 8], strides = [1, 1]} : vector<8x32xbf16> to vector<8x8xbf16>
    %565 = vector.extract_strided_slice %552 {offsets = [0, 0], sizes = [8, 8], strides = [1, 1]} : vector<8x32xbf16> to vector<8x8xbf16>
    %cst_210 = arith.constant dense<0.000000e+00> : vector<8x8xf32>
    %566 = tpu.matmul %564, %565, %cst_210 {dimension_numbers = #tpu.dot_dimension_numbers<[1], [1], [0], [0], [0, 0, 1, 0], [], []>} : vector<8x8xbf16>, vector<8x8xbf16>, vector<8x8xf32> -> vector<8x8xf32>
    %cst_211 = arith.constant 0.353553385 : f32
    %567 = vector.broadcast %cst_211 : f32 to vector<8x8xf32>
    %568 = arith.mulf %566, %567 : vector<8x8xf32>
    %569 = arith.addf %568, %562 : vector<8x8xf32>
    %cst_212 = arith.constant dense<0xFF800000> : vector<8xf32>
    %570 = vector.multi_reduction <maximumf>, %569, %cst_212 [1] : vector<8x8xf32> to vector<8xf32>
    %571 = vector.shape_cast %570 : vector<8xf32> to vector<8x1xf32>
    %572 = vector.broadcast %571 : vector<8x1xf32> to vector<8x8xf32>
    %573 = arith.subf %569, %572 : vector<8x8xf32>
    %574 = math.exp %573 : vector<8x8xf32>
    %cst_213 = arith.constant dense<0.000000e+00> : vector<8xf32>
    %575 = vector.multi_reduction <add>, %574, %cst_213 [1] : vector<8x8xf32> to vector<8xf32>
    %576 = vector.shape_cast %575 : vector<8xf32> to vector<8x1xf32>
    %577 = tpu.reciprocal %576 {approx = true} : vector<8x1xf32> -> vector<8x1xf32>
    %578 = vector.broadcast %577 : vector<8x1xf32> to vector<8x8xf32>
    %579 = arith.mulf %574, %578 : vector<8x8xf32>
    %580 = arith.truncf %579 : vector<8x8xf32> to vector<8x8xbf16>
    %581 = vector.extract_strided_slice %556 {offsets = [0, 0], sizes = [8, 8], strides = [1, 1]} : vector<8x32xbf16> to vector<8x8xbf16>
    %cst_214 = arith.constant dense<0.000000e+00> : vector<8x8xf32>
    %582 = tpu.matmul %580, %581, %cst_214 {dimension_numbers = #tpu.dot_dimension_numbers<[1], [0], [0], [1], [0, 0, 1, 1], [], []>} : vector<8x8xbf16>, vector<8x8xbf16>, vector<8x8xf32> -> vector<8x8xf32>
    %583 = arith.truncf %582 : vector<8x8xf32> to vector<8x8xbf16>
    %cst_215 = arith.constant dense<0.000000e+00> : vector<8x32xf32>
    %584 = tpu.matmul %583, %539, %cst_215 {dimension_numbers = #tpu.dot_dimension_numbers<[1], [0], [0], [1], [0, 0, 1, 1], [], []>} : vector<8x8xbf16>, vector<8x32xbf16>, vector<8x32xf32> -> vector<8x32xf32>
    %585 = arith.addf %563, %584 : vector<8x32xf32>
    %586 = vector.extract_strided_slice %548 {offsets = [0, 8], sizes = [8, 8], strides = [1, 1]} : vector<8x32xbf16> to vector<8x8xbf16>
    %587 = vector.extract_strided_slice %552 {offsets = [0, 8], sizes = [8, 8], strides = [1, 1]} : vector<8x32xbf16> to vector<8x8xbf16>
    %cst_216 = arith.constant dense<0.000000e+00> : vector<8x8xf32>
    %588 = tpu.matmul %586, %587, %cst_216 {dimension_numbers = #tpu.dot_dimension_numbers<[1], [1], [0], [0], [0, 0, 1, 0], [], []>} : vector<8x8xbf16>, vector<8x8xbf16>, vector<8x8xf32> -> vector<8x8xf32>
    %cst_217 = arith.constant 0.353553385 : f32
    %589 = vector.broadcast %cst_217 : f32 to vector<8x8xf32>
    %590 = arith.mulf %588, %589 : vector<8x8xf32>
    %591 = arith.addf %590, %562 : vector<8x8xf32>
    %cst_218 = arith.constant dense<0xFF800000> : vector<8xf32>
    %592 = vector.multi_reduction <maximumf>, %591, %cst_218 [1] : vector<8x8xf32> to vector<8xf32>
    %593 = vector.shape_cast %592 : vector<8xf32> to vector<8x1xf32>
    %594 = vector.broadcast %593 : vector<8x1xf32> to vector<8x8xf32>
    %595 = arith.subf %591, %594 : vector<8x8xf32>
    %596 = math.exp %595 : vector<8x8xf32>
    %cst_219 = arith.constant dense<0.000000e+00> : vector<8xf32>
    %597 = vector.multi_reduction <add>, %596, %cst_219 [1] : vector<8x8xf32> to vector<8xf32>
    %598 = vector.shape_cast %597 : vector<8xf32> to vector<8x1xf32>
    %599 = tpu.reciprocal %598 {approx = true} : vector<8x1xf32> -> vector<8x1xf32>
    %600 = vector.broadcast %599 : vector<8x1xf32> to vector<8x8xf32>
    %601 = arith.mulf %596, %600 : vector<8x8xf32>
    %602 = arith.truncf %601 : vector<8x8xf32> to vector<8x8xbf16>
    %603 = vector.extract_strided_slice %556 {offsets = [0, 8], sizes = [8, 8], strides = [1, 1]} : vector<8x32xbf16> to vector<8x8xbf16>
    %cst_220 = arith.constant dense<0.000000e+00> : vector<8x8xf32>
    %604 = tpu.matmul %602, %603, %cst_220 {dimension_numbers = #tpu.dot_dimension_numbers<[1], [0], [0], [1], [0, 0, 1, 1], [], []>} : vector<8x8xbf16>, vector<8x8xbf16>, vector<8x8xf32> -> vector<8x8xf32>
    %605 = arith.truncf %604 : vector<8x8xf32> to vector<8x8xbf16>
    %cst_221 = arith.constant dense<0.000000e+00> : vector<8x32xf32>
    %606 = tpu.matmul %605, %540, %cst_221 {dimension_numbers = #tpu.dot_dimension_numbers<[1], [0], [0], [1], [0, 0, 1, 1], [], []>} : vector<8x8xbf16>, vector<8x32xbf16>, vector<8x32xf32> -> vector<8x32xf32>
    %607 = arith.addf %585, %606 : vector<8x32xf32>
    %608 = vector.extract_strided_slice %548 {offsets = [0, 16], sizes = [8, 8], strides = [1, 1]} : vector<8x32xbf16> to vector<8x8xbf16>
    %609 = vector.extract_strided_slice %552 {offsets = [0, 16], sizes = [8, 8], strides = [1, 1]} : vector<8x32xbf16> to vector<8x8xbf16>
    %cst_222 = arith.constant dense<0.000000e+00> : vector<8x8xf32>
    %610 = tpu.matmul %608, %609, %cst_222 {dimension_numbers = #tpu.dot_dimension_numbers<[1], [1], [0], [0], [0, 0, 1, 0], [], []>} : vector<8x8xbf16>, vector<8x8xbf16>, vector<8x8xf32> -> vector<8x8xf32>
    %cst_223 = arith.constant 0.353553385 : f32
    %611 = vector.broadcast %cst_223 : f32 to vector<8x8xf32>
    %612 = arith.mulf %610, %611 : vector<8x8xf32>
    %613 = arith.addf %612, %562 : vector<8x8xf32>
    %cst_224 = arith.constant dense<0xFF800000> : vector<8xf32>
    %614 = vector.multi_reduction <maximumf>, %613, %cst_224 [1] : vector<8x8xf32> to vector<8xf32>
    %615 = vector.shape_cast %614 : vector<8xf32> to vector<8x1xf32>
    %616 = vector.broadcast %615 : vector<8x1xf32> to vector<8x8xf32>
    %617 = arith.subf %613, %616 : vector<8x8xf32>
    %618 = math.exp %617 : vector<8x8xf32>
    %cst_225 = arith.constant dense<0.000000e+00> : vector<8xf32>
    %619 = vector.multi_reduction <add>, %618, %cst_225 [1] : vector<8x8xf32> to vector<8xf32>
    %620 = vector.shape_cast %619 : vector<8xf32> to vector<8x1xf32>
    %621 = tpu.reciprocal %620 {approx = true} : vector<8x1xf32> -> vector<8x1xf32>
    %622 = vector.broadcast %621 : vector<8x1xf32> to vector<8x8xf32>
    %623 = arith.mulf %618, %622 : vector<8x8xf32>
    %624 = arith.truncf %623 : vector<8x8xf32> to vector<8x8xbf16>
    %625 = vector.extract_strided_slice %556 {offsets = [0, 16], sizes = [8, 8], strides = [1, 1]} : vector<8x32xbf16> to vector<8x8xbf16>
    %cst_226 = arith.constant dense<0.000000e+00> : vector<8x8xf32>
    %626 = tpu.matmul %624, %625, %cst_226 {dimension_numbers = #tpu.dot_dimension_numbers<[1], [0], [0], [1], [0, 0, 1, 1], [], []>} : vector<8x8xbf16>, vector<8x8xbf16>, vector<8x8xf32> -> vector<8x8xf32>
    %627 = arith.truncf %626 : vector<8x8xf32> to vector<8x8xbf16>
    %cst_227 = arith.constant dense<0.000000e+00> : vector<8x32xf32>
    %628 = tpu.matmul %627, %541, %cst_227 {dimension_numbers = #tpu.dot_dimension_numbers<[1], [0], [0], [1], [0, 0, 1, 1], [], []>} : vector<8x8xbf16>, vector<8x32xbf16>, vector<8x32xf32> -> vector<8x32xf32>
    %629 = arith.addf %607, %628 : vector<8x32xf32>
    %630 = vector.extract_strided_slice %548 {offsets = [0, 24], sizes = [8, 8], strides = [1, 1]} : vector<8x32xbf16> to vector<8x8xbf16>
    %631 = vector.extract_strided_slice %552 {offsets = [0, 24], sizes = [8, 8], strides = [1, 1]} : vector<8x32xbf16> to vector<8x8xbf16>
    %cst_228 = arith.constant dense<0.000000e+00> : vector<8x8xf32>
    %632 = tpu.matmul %630, %631, %cst_228 {dimension_numbers = #tpu.dot_dimension_numbers<[1], [1], [0], [0], [0, 0, 1, 0], [], []>} : vector<8x8xbf16>, vector<8x8xbf16>, vector<8x8xf32> -> vector<8x8xf32>
    %cst_229 = arith.constant 0.353553385 : f32
    %633 = vector.broadcast %cst_229 : f32 to vector<8x8xf32>
    %634 = arith.mulf %632, %633 : vector<8x8xf32>
    %635 = arith.addf %634, %562 : vector<8x8xf32>
    %cst_230 = arith.constant dense<0xFF800000> : vector<8xf32>
    %636 = vector.multi_reduction <maximumf>, %635, %cst_230 [1] : vector<8x8xf32> to vector<8xf32>
    %637 = vector.shape_cast %636 : vector<8xf32> to vector<8x1xf32>
    %638 = vector.broadcast %637 : vector<8x1xf32> to vector<8x8xf32>
    %639 = arith.subf %635, %638 : vector<8x8xf32>
    %640 = math.exp %639 : vector<8x8xf32>
    %cst_231 = arith.constant dense<0.000000e+00> : vector<8xf32>
    %641 = vector.multi_reduction <add>, %640, %cst_231 [1] : vector<8x8xf32> to vector<8xf32>
    %642 = vector.shape_cast %641 : vector<8xf32> to vector<8x1xf32>
    %643 = tpu.reciprocal %642 {approx = true} : vector<8x1xf32> -> vector<8x1xf32>
    %644 = vector.broadcast %643 : vector<8x1xf32> to vector<8x8xf32>
    %645 = arith.mulf %640, %644 : vector<8x8xf32>
    %646 = arith.truncf %645 : vector<8x8xf32> to vector<8x8xbf16>
    %647 = vector.extract_strided_slice %556 {offsets = [0, 24], sizes = [8, 8], strides = [1, 1]} : vector<8x32xbf16> to vector<8x8xbf16>
    %cst_232 = arith.constant dense<0.000000e+00> : vector<8x8xf32>
    %648 = tpu.matmul %646, %647, %cst_232 {dimension_numbers = #tpu.dot_dimension_numbers<[1], [0], [0], [1], [0, 0, 1, 1], [], []>} : vector<8x8xbf16>, vector<8x8xbf16>, vector<8x8xf32> -> vector<8x8xf32>
    %649 = arith.truncf %648 : vector<8x8xf32> to vector<8x8xbf16>
    %cst_233 = arith.constant dense<0.000000e+00> : vector<8x32xf32>
    %650 = tpu.matmul %649, %542, %cst_233 {dimension_numbers = #tpu.dot_dimension_numbers<[1], [0], [0], [1], [0, 0, 1, 1], [], []>} : vector<8x8xbf16>, vector<8x32xbf16>, vector<8x32xf32> -> vector<8x32xf32>
    %651 = arith.addf %629, %650 : vector<8x32xf32>
    %652 = vector.broadcast %543 : vector<1x32xf32> to vector<8x32xf32>
    %653 = arith.addf %651, %652 : vector<8x32xf32>
    %654 = arith.addf %532, %653 : vector<8x32xf32>
    %c320_234 = arith.constant 320 : index
    %c0_235 = arith.constant 0 : index
    %655 = vector.load %arg4[%c320_234, %c0_235] : memref<440x128xf32, #tpu.memory_space<vmem>>, vector<1x32xf32>
    %c328 = arith.constant 328 : index
    %c0_236 = arith.constant 0 : index
    %656 = vector.load %arg4[%c328, %c0_236] : memref<440x128xf32, #tpu.memory_space<vmem>>, vector<1x32xf32>
    %cst_237 = arith.constant dense<0.000000e+00> : vector<8xf32>
    %657 = vector.multi_reduction <add>, %654, %cst_237 [1] : vector<8x32xf32> to vector<8xf32>
    %658 = vector.shape_cast %657 : vector<8xf32> to vector<8x1xf32>
    %cst_238 = arith.constant 3.200000e+01 : f32
    %659 = vector.broadcast %cst_238 : f32 to vector<8x1xf32>
    %660 = arith.divf %658, %659 : vector<8x1xf32>
    %661 = vector.broadcast %660 : vector<8x1xf32> to vector<8x32xf32>
    %662 = arith.subf %654, %661 : vector<8x32xf32>
    %663 = arith.mulf %662, %662 : vector<8x32xf32>
    %cst_239 = arith.constant dense<0.000000e+00> : vector<8xf32>
    %664 = vector.multi_reduction <add>, %663, %cst_239 [1] : vector<8x32xf32> to vector<8xf32>
    %665 = vector.shape_cast %664 : vector<8xf32> to vector<8x1xf32>
    %cst_240 = arith.constant 3.200000e+01 : f32
    %666 = vector.broadcast %cst_240 : f32 to vector<8x1xf32>
    %667 = arith.divf %665, %666 : vector<8x1xf32>
    %668 = vector.broadcast %660 : vector<8x1xf32> to vector<8x32xf32>
    %669 = arith.subf %654, %668 : vector<8x32xf32>
    %cst_241 = arith.constant 9.99999974E-6 : f32
    %670 = vector.broadcast %cst_241 : f32 to vector<8x1xf32>
    %671 = arith.addf %667, %670 : vector<8x1xf32>
    %672 = math.rsqrt %671 : vector<8x1xf32>
    %673 = vector.broadcast %672 : vector<8x1xf32> to vector<8x32xf32>
    %674 = arith.mulf %669, %673 : vector<8x32xf32>
    %675 = vector.broadcast %655 : vector<1x32xf32> to vector<8x32xf32>
    %676 = arith.mulf %674, %675 : vector<8x32xf32>
    %677 = vector.broadcast %656 : vector<1x32xf32> to vector<8x32xf32>
    %678 = arith.addf %676, %677 : vector<8x32xf32>
    %c896 = arith.constant 896 : index
    %c0_242 = arith.constant 0 : index
    %679 = vector.load %arg3[%c896, %c0_242] : memref<1184x128xbf16, #tpu.memory_space<vmem>>, vector<32x32xbf16>
    %c336 = arith.constant 336 : index
    %c0_243 = arith.constant 0 : index
    %680 = vector.load %arg4[%c336, %c0_243] : memref<440x128xf32, #tpu.memory_space<vmem>>, vector<1x32xf32>
    %c928 = arith.constant 928 : index
    %c0_244 = arith.constant 0 : index
    %681 = vector.load %arg3[%c928, %c0_244] : memref<1184x128xbf16, #tpu.memory_space<vmem>>, vector<32x32xbf16>
    %c344 = arith.constant 344 : index
    %c0_245 = arith.constant 0 : index
    %682 = vector.load %arg4[%c344, %c0_245] : memref<440x128xf32, #tpu.memory_space<vmem>>, vector<1x32xf32>
    %c960 = arith.constant 960 : index
    %c0_246 = arith.constant 0 : index
    %683 = vector.load %arg3[%c960, %c0_246] : memref<1184x128xbf16, #tpu.memory_space<vmem>>, vector<32x32xbf16>
    %c352_247 = arith.constant 352 : index
    %c0_248 = arith.constant 0 : index
    %684 = vector.load %arg4[%c352_247, %c0_248] : memref<440x128xf32, #tpu.memory_space<vmem>>, vector<1x32xf32>
    %c992 = arith.constant 992 : index
    %c0_249 = arith.constant 0 : index
    %685 = vector.load %arg3[%c992, %c0_249] : memref<1184x128xbf16, #tpu.memory_space<vmem>>, vector<8x32xbf16>
    %c1008 = arith.constant 1008 : index
    %c0_250 = arith.constant 0 : index
    %686 = vector.load %arg3[%c1008, %c0_250] : memref<1184x128xbf16, #tpu.memory_space<vmem>>, vector<8x32xbf16>
    %c1024 = arith.constant 1024 : index
    %c0_251 = arith.constant 0 : index
    %687 = vector.load %arg3[%c1024, %c0_251] : memref<1184x128xbf16, #tpu.memory_space<vmem>>, vector<8x32xbf16>
    %c1040 = arith.constant 1040 : index
    %c0_252 = arith.constant 0 : index
    %688 = vector.load %arg3[%c1040, %c0_252] : memref<1184x128xbf16, #tpu.memory_space<vmem>>, vector<8x32xbf16>
    %c360 = arith.constant 360 : index
    %c0_253 = arith.constant 0 : index
    %689 = vector.load %arg4[%c360, %c0_253] : memref<440x128xf32, #tpu.memory_space<vmem>>, vector<1x32xf32>
    %690 = arith.truncf %678 : vector<8x32xf32> to vector<8x32xbf16>
    %691 = arith.truncf %208 : vector<49x32xf32> to vector<49x32xbf16>
    %cst_254 = arith.constant dense<0.000000e+00> : vector<8x32xf32>
    %692 = tpu.matmul %690, %679, %cst_254 {dimension_numbers = #tpu.dot_dimension_numbers<[1], [0], [0], [1], [0, 0, 1, 1], [], []>} : vector<8x32xbf16>, vector<32x32xbf16>, vector<8x32xf32> -> vector<8x32xf32>
    %693 = vector.broadcast %680 : vector<1x32xf32> to vector<8x32xf32>
    %694 = arith.addf %692, %693 : vector<8x32xf32>
    %695 = arith.truncf %694 : vector<8x32xf32> to vector<8x32xbf16>
    %cst_255 = arith.constant dense<0.000000e+00> : vector<49x32xf32>
    %696 = tpu.matmul %691, %681, %cst_255 {dimension_numbers = #tpu.dot_dimension_numbers<[1], [0], [0], [1], [0, 0, 1, 1], [], []>} : vector<49x32xbf16>, vector<32x32xbf16>, vector<49x32xf32> -> vector<49x32xf32>
    %697 = vector.broadcast %682 : vector<1x32xf32> to vector<49x32xf32>
    %698 = arith.addf %696, %697 : vector<49x32xf32>
    %699 = arith.truncf %698 : vector<49x32xf32> to vector<49x32xbf16>
    %cst_256 = arith.constant dense<0.000000e+00> : vector<49x32xf32>
    %700 = tpu.matmul %691, %683, %cst_256 {dimension_numbers = #tpu.dot_dimension_numbers<[1], [0], [0], [1], [0, 0, 1, 1], [], []>} : vector<49x32xbf16>, vector<32x32xbf16>, vector<49x32xf32> -> vector<49x32xf32>
    %701 = vector.broadcast %684 : vector<1x32xf32> to vector<49x32xf32>
    %702 = arith.addf %700, %701 : vector<49x32xf32>
    %703 = arith.truncf %702 : vector<49x32xf32> to vector<49x32xbf16>
    %cst_257 = arith.constant 0.000000e+00 : f32
    %704 = vector.broadcast %cst_257 : f32 to vector<8x32xf32>
    %705 = vector.extract_strided_slice %695 {offsets = [0, 0], sizes = [8, 8], strides = [1, 1]} : vector<8x32xbf16> to vector<8x8xbf16>
    %706 = vector.extract_strided_slice %699 {offsets = [0, 0], sizes = [49, 8], strides = [1, 1]} : vector<49x32xbf16> to vector<49x8xbf16>
    %cst_258 = arith.constant dense<0.000000e+00> : vector<8x49xf32>
    %707 = tpu.matmul %705, %706, %cst_258 {dimension_numbers = #tpu.dot_dimension_numbers<[1], [1], [0], [0], [0, 0, 1, 0], [], []>} : vector<8x8xbf16>, vector<49x8xbf16>, vector<8x49xf32> -> vector<8x49xf32>
    %cst_259 = arith.constant 0.353553385 : f32
    %708 = vector.broadcast %cst_259 : f32 to vector<8x49xf32>
    %709 = arith.mulf %707, %708 : vector<8x49xf32>
    %cst_260 = arith.constant dense<0xFF800000> : vector<8xf32>
    %710 = vector.multi_reduction <maximumf>, %709, %cst_260 [1] : vector<8x49xf32> to vector<8xf32>
    %711 = vector.shape_cast %710 : vector<8xf32> to vector<8x1xf32>
    %712 = vector.broadcast %711 : vector<8x1xf32> to vector<8x49xf32>
    %713 = arith.subf %709, %712 : vector<8x49xf32>
    %714 = math.exp %713 : vector<8x49xf32>
    %cst_261 = arith.constant dense<0.000000e+00> : vector<8xf32>
    %715 = vector.multi_reduction <add>, %714, %cst_261 [1] : vector<8x49xf32> to vector<8xf32>
    %716 = vector.shape_cast %715 : vector<8xf32> to vector<8x1xf32>
    %717 = tpu.reciprocal %716 {approx = true} : vector<8x1xf32> -> vector<8x1xf32>
    %718 = vector.broadcast %717 : vector<8x1xf32> to vector<8x49xf32>
    %719 = arith.mulf %714, %718 : vector<8x49xf32>
    %720 = arith.truncf %719 : vector<8x49xf32> to vector<8x49xbf16>
    %721 = vector.extract_strided_slice %703 {offsets = [0, 0], sizes = [49, 8], strides = [1, 1]} : vector<49x32xbf16> to vector<49x8xbf16>
    %cst_262 = arith.constant dense<0.000000e+00> : vector<8x8xf32>
    %722 = tpu.matmul %720, %721, %cst_262 {dimension_numbers = #tpu.dot_dimension_numbers<[1], [0], [0], [1], [0, 0, 1, 1], [], []>} : vector<8x49xbf16>, vector<49x8xbf16>, vector<8x8xf32> -> vector<8x8xf32>
    %723 = arith.truncf %722 : vector<8x8xf32> to vector<8x8xbf16>
    %cst_263 = arith.constant dense<0.000000e+00> : vector<8x32xf32>
    %724 = tpu.matmul %723, %685, %cst_263 {dimension_numbers = #tpu.dot_dimension_numbers<[1], [0], [0], [1], [0, 0, 1, 1], [], []>} : vector<8x8xbf16>, vector<8x32xbf16>, vector<8x32xf32> -> vector<8x32xf32>
    %725 = arith.addf %704, %724 : vector<8x32xf32>
    %726 = vector.extract_strided_slice %695 {offsets = [0, 8], sizes = [8, 8], strides = [1, 1]} : vector<8x32xbf16> to vector<8x8xbf16>
    %727 = vector.extract_strided_slice %699 {offsets = [0, 8], sizes = [49, 8], strides = [1, 1]} : vector<49x32xbf16> to vector<49x8xbf16>
    %cst_264 = arith.constant dense<0.000000e+00> : vector<8x49xf32>
    %728 = tpu.matmul %726, %727, %cst_264 {dimension_numbers = #tpu.dot_dimension_numbers<[1], [1], [0], [0], [0, 0, 1, 0], [], []>} : vector<8x8xbf16>, vector<49x8xbf16>, vector<8x49xf32> -> vector<8x49xf32>
    %cst_265 = arith.constant 0.353553385 : f32
    %729 = vector.broadcast %cst_265 : f32 to vector<8x49xf32>
    %730 = arith.mulf %728, %729 : vector<8x49xf32>
    %cst_266 = arith.constant dense<0xFF800000> : vector<8xf32>
    %731 = vector.multi_reduction <maximumf>, %730, %cst_266 [1] : vector<8x49xf32> to vector<8xf32>
    %732 = vector.shape_cast %731 : vector<8xf32> to vector<8x1xf32>
    %733 = vector.broadcast %732 : vector<8x1xf32> to vector<8x49xf32>
    %734 = arith.subf %730, %733 : vector<8x49xf32>
    %735 = math.exp %734 : vector<8x49xf32>
    %cst_267 = arith.constant dense<0.000000e+00> : vector<8xf32>
    %736 = vector.multi_reduction <add>, %735, %cst_267 [1] : vector<8x49xf32> to vector<8xf32>
    %737 = vector.shape_cast %736 : vector<8xf32> to vector<8x1xf32>
    %738 = tpu.reciprocal %737 {approx = true} : vector<8x1xf32> -> vector<8x1xf32>
    %739 = vector.broadcast %738 : vector<8x1xf32> to vector<8x49xf32>
    %740 = arith.mulf %735, %739 : vector<8x49xf32>
    %741 = arith.truncf %740 : vector<8x49xf32> to vector<8x49xbf16>
    %742 = vector.extract_strided_slice %703 {offsets = [0, 8], sizes = [49, 8], strides = [1, 1]} : vector<49x32xbf16> to vector<49x8xbf16>
    %cst_268 = arith.constant dense<0.000000e+00> : vector<8x8xf32>
    %743 = tpu.matmul %741, %742, %cst_268 {dimension_numbers = #tpu.dot_dimension_numbers<[1], [0], [0], [1], [0, 0, 1, 1], [], []>} : vector<8x49xbf16>, vector<49x8xbf16>, vector<8x8xf32> -> vector<8x8xf32>
    %744 = arith.truncf %743 : vector<8x8xf32> to vector<8x8xbf16>
    %cst_269 = arith.constant dense<0.000000e+00> : vector<8x32xf32>
    %745 = tpu.matmul %744, %686, %cst_269 {dimension_numbers = #tpu.dot_dimension_numbers<[1], [0], [0], [1], [0, 0, 1, 1], [], []>} : vector<8x8xbf16>, vector<8x32xbf16>, vector<8x32xf32> -> vector<8x32xf32>
    %746 = arith.addf %725, %745 : vector<8x32xf32>
    %747 = vector.extract_strided_slice %695 {offsets = [0, 16], sizes = [8, 8], strides = [1, 1]} : vector<8x32xbf16> to vector<8x8xbf16>
    %748 = vector.extract_strided_slice %699 {offsets = [0, 16], sizes = [49, 8], strides = [1, 1]} : vector<49x32xbf16> to vector<49x8xbf16>
    %cst_270 = arith.constant dense<0.000000e+00> : vector<8x49xf32>
    %749 = tpu.matmul %747, %748, %cst_270 {dimension_numbers = #tpu.dot_dimension_numbers<[1], [1], [0], [0], [0, 0, 1, 0], [], []>} : vector<8x8xbf16>, vector<49x8xbf16>, vector<8x49xf32> -> vector<8x49xf32>
    %cst_271 = arith.constant 0.353553385 : f32
    %750 = vector.broadcast %cst_271 : f32 to vector<8x49xf32>
    %751 = arith.mulf %749, %750 : vector<8x49xf32>
    %cst_272 = arith.constant dense<0xFF800000> : vector<8xf32>
    %752 = vector.multi_reduction <maximumf>, %751, %cst_272 [1] : vector<8x49xf32> to vector<8xf32>
    %753 = vector.shape_cast %752 : vector<8xf32> to vector<8x1xf32>
    %754 = vector.broadcast %753 : vector<8x1xf32> to vector<8x49xf32>
    %755 = arith.subf %751, %754 : vector<8x49xf32>
    %756 = math.exp %755 : vector<8x49xf32>
    %cst_273 = arith.constant dense<0.000000e+00> : vector<8xf32>
    %757 = vector.multi_reduction <add>, %756, %cst_273 [1] : vector<8x49xf32> to vector<8xf32>
    %758 = vector.shape_cast %757 : vector<8xf32> to vector<8x1xf32>
    %759 = tpu.reciprocal %758 {approx = true} : vector<8x1xf32> -> vector<8x1xf32>
    %760 = vector.broadcast %759 : vector<8x1xf32> to vector<8x49xf32>
    %761 = arith.mulf %756, %760 : vector<8x49xf32>
    %762 = arith.truncf %761 : vector<8x49xf32> to vector<8x49xbf16>
    %763 = vector.extract_strided_slice %703 {offsets = [0, 16], sizes = [49, 8], strides = [1, 1]} : vector<49x32xbf16> to vector<49x8xbf16>
    %cst_274 = arith.constant dense<0.000000e+00> : vector<8x8xf32>
    %764 = tpu.matmul %762, %763, %cst_274 {dimension_numbers = #tpu.dot_dimension_numbers<[1], [0], [0], [1], [0, 0, 1, 1], [], []>} : vector<8x49xbf16>, vector<49x8xbf16>, vector<8x8xf32> -> vector<8x8xf32>
    %765 = arith.truncf %764 : vector<8x8xf32> to vector<8x8xbf16>
    %cst_275 = arith.constant dense<0.000000e+00> : vector<8x32xf32>
    %766 = tpu.matmul %765, %687, %cst_275 {dimension_numbers = #tpu.dot_dimension_numbers<[1], [0], [0], [1], [0, 0, 1, 1], [], []>} : vector<8x8xbf16>, vector<8x32xbf16>, vector<8x32xf32> -> vector<8x32xf32>
    %767 = arith.addf %746, %766 : vector<8x32xf32>
    %768 = vector.extract_strided_slice %695 {offsets = [0, 24], sizes = [8, 8], strides = [1, 1]} : vector<8x32xbf16> to vector<8x8xbf16>
    %769 = vector.extract_strided_slice %699 {offsets = [0, 24], sizes = [49, 8], strides = [1, 1]} : vector<49x32xbf16> to vector<49x8xbf16>
    %cst_276 = arith.constant dense<0.000000e+00> : vector<8x49xf32>
    %770 = tpu.matmul %768, %769, %cst_276 {dimension_numbers = #tpu.dot_dimension_numbers<[1], [1], [0], [0], [0, 0, 1, 0], [], []>} : vector<8x8xbf16>, vector<49x8xbf16>, vector<8x49xf32> -> vector<8x49xf32>
    %cst_277 = arith.constant 0.353553385 : f32
    %771 = vector.broadcast %cst_277 : f32 to vector<8x49xf32>
    %772 = arith.mulf %770, %771 : vector<8x49xf32>
    %cst_278 = arith.constant dense<0xFF800000> : vector<8xf32>
    %773 = vector.multi_reduction <maximumf>, %772, %cst_278 [1] : vector<8x49xf32> to vector<8xf32>
    %774 = vector.shape_cast %773 : vector<8xf32> to vector<8x1xf32>
    %775 = vector.broadcast %774 : vector<8x1xf32> to vector<8x49xf32>
    %776 = arith.subf %772, %775 : vector<8x49xf32>
    %777 = math.exp %776 : vector<8x49xf32>
    %cst_279 = arith.constant dense<0.000000e+00> : vector<8xf32>
    %778 = vector.multi_reduction <add>, %777, %cst_279 [1] : vector<8x49xf32> to vector<8xf32>
    %779 = vector.shape_cast %778 : vector<8xf32> to vector<8x1xf32>
    %780 = tpu.reciprocal %779 {approx = true} : vector<8x1xf32> -> vector<8x1xf32>
    %781 = vector.broadcast %780 : vector<8x1xf32> to vector<8x49xf32>
    %782 = arith.mulf %777, %781 : vector<8x49xf32>
    %783 = arith.truncf %782 : vector<8x49xf32> to vector<8x49xbf16>
    %784 = vector.extract_strided_slice %703 {offsets = [0, 24], sizes = [49, 8], strides = [1, 1]} : vector<49x32xbf16> to vector<49x8xbf16>
    %cst_280 = arith.constant dense<0.000000e+00> : vector<8x8xf32>
    %785 = tpu.matmul %783, %784, %cst_280 {dimension_numbers = #tpu.dot_dimension_numbers<[1], [0], [0], [1], [0, 0, 1, 1], [], []>} : vector<8x49xbf16>, vector<49x8xbf16>, vector<8x8xf32> -> vector<8x8xf32>
    %786 = arith.truncf %785 : vector<8x8xf32> to vector<8x8xbf16>
    %cst_281 = arith.constant dense<0.000000e+00> : vector<8x32xf32>
    %787 = tpu.matmul %786, %688, %cst_281 {dimension_numbers = #tpu.dot_dimension_numbers<[1], [0], [0], [1], [0, 0, 1, 1], [], []>} : vector<8x8xbf16>, vector<8x32xbf16>, vector<8x32xf32> -> vector<8x32xf32>
    %788 = arith.addf %767, %787 : vector<8x32xf32>
    %789 = vector.broadcast %689 : vector<1x32xf32> to vector<8x32xf32>
    %790 = arith.addf %788, %789 : vector<8x32xf32>
    %791 = arith.addf %678, %790 : vector<8x32xf32>
    %c368 = arith.constant 368 : index
    %c0_282 = arith.constant 0 : index
    %792 = vector.load %arg4[%c368, %c0_282] : memref<440x128xf32, #tpu.memory_space<vmem>>, vector<1x32xf32>
    %c376 = arith.constant 376 : index
    %c0_283 = arith.constant 0 : index
    %793 = vector.load %arg4[%c376, %c0_283] : memref<440x128xf32, #tpu.memory_space<vmem>>, vector<1x32xf32>
    %cst_284 = arith.constant dense<0.000000e+00> : vector<8xf32>
    %794 = vector.multi_reduction <add>, %791, %cst_284 [1] : vector<8x32xf32> to vector<8xf32>
    %795 = vector.shape_cast %794 : vector<8xf32> to vector<8x1xf32>
    %cst_285 = arith.constant 3.200000e+01 : f32
    %796 = vector.broadcast %cst_285 : f32 to vector<8x1xf32>
    %797 = arith.divf %795, %796 : vector<8x1xf32>
    %798 = vector.broadcast %797 : vector<8x1xf32> to vector<8x32xf32>
    %799 = arith.subf %791, %798 : vector<8x32xf32>
    %800 = arith.mulf %799, %799 : vector<8x32xf32>
    %cst_286 = arith.constant dense<0.000000e+00> : vector<8xf32>
    %801 = vector.multi_reduction <add>, %800, %cst_286 [1] : vector<8x32xf32> to vector<8xf32>
    %802 = vector.shape_cast %801 : vector<8xf32> to vector<8x1xf32>
    %cst_287 = arith.constant 3.200000e+01 : f32
    %803 = vector.broadcast %cst_287 : f32 to vector<8x1xf32>
    %804 = arith.divf %802, %803 : vector<8x1xf32>
    %805 = vector.broadcast %797 : vector<8x1xf32> to vector<8x32xf32>
    %806 = arith.subf %791, %805 : vector<8x32xf32>
    %cst_288 = arith.constant 9.99999974E-6 : f32
    %807 = vector.broadcast %cst_288 : f32 to vector<8x1xf32>
    %808 = arith.addf %804, %807 : vector<8x1xf32>
    %809 = math.rsqrt %808 : vector<8x1xf32>
    %810 = vector.broadcast %809 : vector<8x1xf32> to vector<8x32xf32>
    %811 = arith.mulf %806, %810 : vector<8x32xf32>
    %812 = vector.broadcast %792 : vector<1x32xf32> to vector<8x32xf32>
    %813 = arith.mulf %811, %812 : vector<8x32xf32>
    %814 = vector.broadcast %793 : vector<1x32xf32> to vector<8x32xf32>
    %815 = arith.addf %813, %814 : vector<8x32xf32>
    %c1056 = arith.constant 1056 : index
    %c0_289 = arith.constant 0 : index
    %816 = vector.load %arg3[%c1056, %c0_289] : memref<1184x128xbf16, #tpu.memory_space<vmem>>, vector<32x64xbf16>
    %c384_290 = arith.constant 384 : index
    %c0_291 = arith.constant 0 : index
    %817 = vector.load %arg4[%c384_290, %c0_291] : memref<440x128xf32, #tpu.memory_space<vmem>>, vector<1x64xf32>
    %818 = arith.truncf %815 : vector<8x32xf32> to vector<8x32xbf16>
    %cst_292 = arith.constant dense<0.000000e+00> : vector<8x64xf32>
    %819 = tpu.matmul %818, %816, %cst_292 {dimension_numbers = #tpu.dot_dimension_numbers<[1], [0], [0], [1], [0, 0, 1, 1], [], []>} : vector<8x32xbf16>, vector<32x64xbf16>, vector<8x64xf32> -> vector<8x64xf32>
    %820 = vector.broadcast %817 : vector<1x64xf32> to vector<8x64xf32>
    %821 = arith.addf %819, %820 : vector<8x64xf32>
    %cst_293 = arith.constant 0.000000e+00 : f32
    %822 = vector.broadcast %cst_293 : f32 to vector<8x64xf32>
    %823 = arith.maximumf %821, %822 : vector<8x64xf32>
    %c1088 = arith.constant 1088 : index
    %c0_294 = arith.constant 0 : index
    %824 = vector.load %arg3[%c1088, %c0_294] : memref<1184x128xbf16, #tpu.memory_space<vmem>>, vector<64x32xbf16>
    %c392 = arith.constant 392 : index
    %c0_295 = arith.constant 0 : index
    %825 = vector.load %arg4[%c392, %c0_295] : memref<440x128xf32, #tpu.memory_space<vmem>>, vector<1x32xf32>
    %826 = arith.truncf %823 : vector<8x64xf32> to vector<8x64xbf16>
    %cst_296 = arith.constant dense<0.000000e+00> : vector<8x32xf32>
    %827 = tpu.matmul %826, %824, %cst_296 {dimension_numbers = #tpu.dot_dimension_numbers<[1], [0], [0], [1], [0, 0, 1, 1], [], []>} : vector<8x64xbf16>, vector<64x32xbf16>, vector<8x32xf32> -> vector<8x32xf32>
    %828 = vector.broadcast %825 : vector<1x32xf32> to vector<8x32xf32>
    %829 = arith.addf %827, %828 : vector<8x32xf32>
    %830 = arith.addf %815, %829 : vector<8x32xf32>
    %c400 = arith.constant 400 : index
    %c0_297 = arith.constant 0 : index
    %831 = vector.load %arg4[%c400, %c0_297] : memref<440x128xf32, #tpu.memory_space<vmem>>, vector<1x32xf32>
    %c408 = arith.constant 408 : index
    %c0_298 = arith.constant 0 : index
    %832 = vector.load %arg4[%c408, %c0_298] : memref<440x128xf32, #tpu.memory_space<vmem>>, vector<1x32xf32>
    %cst_299 = arith.constant dense<0.000000e+00> : vector<8xf32>
    %833 = vector.multi_reduction <add>, %830, %cst_299 [1] : vector<8x32xf32> to vector<8xf32>
    %834 = vector.shape_cast %833 : vector<8xf32> to vector<8x1xf32>
    %cst_300 = arith.constant 3.200000e+01 : f32
    %835 = vector.broadcast %cst_300 : f32 to vector<8x1xf32>
    %836 = arith.divf %834, %835 : vector<8x1xf32>
    %837 = vector.broadcast %836 : vector<8x1xf32> to vector<8x32xf32>
    %838 = arith.subf %830, %837 : vector<8x32xf32>
    %839 = arith.mulf %838, %838 : vector<8x32xf32>
    %cst_301 = arith.constant dense<0.000000e+00> : vector<8xf32>
    %840 = vector.multi_reduction <add>, %839, %cst_301 [1] : vector<8x32xf32> to vector<8xf32>
    %841 = vector.shape_cast %840 : vector<8xf32> to vector<8x1xf32>
    %cst_302 = arith.constant 3.200000e+01 : f32
    %842 = vector.broadcast %cst_302 : f32 to vector<8x1xf32>
    %843 = arith.divf %841, %842 : vector<8x1xf32>
    %844 = vector.broadcast %836 : vector<8x1xf32> to vector<8x32xf32>
    %845 = arith.subf %830, %844 : vector<8x32xf32>
    %cst_303 = arith.constant 9.99999974E-6 : f32
    %846 = vector.broadcast %cst_303 : f32 to vector<8x1xf32>
    %847 = arith.addf %843, %846 : vector<8x1xf32>
    %848 = math.rsqrt %847 : vector<8x1xf32>
    %849 = vector.broadcast %848 : vector<8x1xf32> to vector<8x32xf32>
    %850 = arith.mulf %845, %849 : vector<8x32xf32>
    %851 = vector.broadcast %831 : vector<1x32xf32> to vector<8x32xf32>
    %852 = arith.mulf %850, %851 : vector<8x32xf32>
    %853 = vector.broadcast %832 : vector<1x32xf32> to vector<8x32xf32>
    %854 = arith.addf %852, %853 : vector<8x32xf32>
    %c416_304 = arith.constant 416 : index
    %c0_305 = arith.constant 0 : index
    %855 = vector.load %arg4[%c416_304, %c0_305] : memref<440x128xf32, #tpu.memory_space<vmem>>, vector<1x32xf32>
    %c424 = arith.constant 424 : index
    %c0_306 = arith.constant 0 : index
    %856 = vector.load %arg4[%c424, %c0_306] : memref<440x128xf32, #tpu.memory_space<vmem>>, vector<1x32xf32>
    %cst_307 = arith.constant dense<0.000000e+00> : vector<8xf32>
    %857 = vector.multi_reduction <add>, %854, %cst_307 [1] : vector<8x32xf32> to vector<8xf32>
    %858 = vector.shape_cast %857 : vector<8xf32> to vector<8x1xf32>
    %cst_308 = arith.constant 3.200000e+01 : f32
    %859 = vector.broadcast %cst_308 : f32 to vector<8x1xf32>
    %860 = arith.divf %858, %859 : vector<8x1xf32>
    %861 = vector.broadcast %860 : vector<8x1xf32> to vector<8x32xf32>
    %862 = arith.subf %854, %861 : vector<8x32xf32>
    %863 = arith.mulf %862, %862 : vector<8x32xf32>
    %cst_309 = arith.constant dense<0.000000e+00> : vector<8xf32>
    %864 = vector.multi_reduction <add>, %863, %cst_309 [1] : vector<8x32xf32> to vector<8xf32>
    %865 = vector.shape_cast %864 : vector<8xf32> to vector<8x1xf32>
    %cst_310 = arith.constant 3.200000e+01 : f32
    %866 = vector.broadcast %cst_310 : f32 to vector<8x1xf32>
    %867 = arith.divf %865, %866 : vector<8x1xf32>
    %868 = vector.broadcast %860 : vector<8x1xf32> to vector<8x32xf32>
    %869 = arith.subf %854, %868 : vector<8x32xf32>
    %cst_311 = arith.constant 9.99999974E-6 : f32
    %870 = vector.broadcast %cst_311 : f32 to vector<8x1xf32>
    %871 = arith.addf %867, %870 : vector<8x1xf32>
    %872 = math.rsqrt %871 : vector<8x1xf32>
    %873 = vector.broadcast %872 : vector<8x1xf32> to vector<8x32xf32>
    %874 = arith.mulf %869, %873 : vector<8x32xf32>
    %875 = vector.broadcast %855 : vector<1x32xf32> to vector<8x32xf32>
    %876 = arith.mulf %874, %875 : vector<8x32xf32>
    %877 = vector.broadcast %856 : vector<1x32xf32> to vector<8x32xf32>
    %878 = arith.addf %876, %877 : vector<8x32xf32>
    %c1152 = arith.constant 1152 : index
    %c0_312 = arith.constant 0 : index
    %879 = vector.load %arg3[%c1152, %c0_312] : memref<1184x128xbf16, #tpu.memory_space<vmem>>, vector<32x128xbf16>
    %c432_313 = arith.constant 432 : index
    %c0_314 = arith.constant 0 : index
    %880 = vector.load %arg4[%c432_313, %c0_314] : memref<440x128xf32, #tpu.memory_space<vmem>>, vector<1x128xf32>
    %881 = arith.truncf %878 : vector<8x32xf32> to vector<8x32xbf16>
    %cst_315 = arith.constant dense<0.000000e+00> : vector<8x128xf32>
    %882 = tpu.matmul %881, %879, %cst_315 {dimension_numbers = #tpu.dot_dimension_numbers<[1], [0], [0], [1], [0, 0, 1, 1], [], []>} : vector<8x32xbf16>, vector<32x128xbf16>, vector<8x128xf32> -> vector<8x128xf32>
    %883 = vector.broadcast %880 : vector<1x128xf32> to vector<8x128xf32>
    %884 = arith.addf %882, %883 : vector<8x128xf32>
    %c0_316 = arith.constant 0 : index
    %c0_317 = arith.constant 0 : index
    %c0_318 = arith.constant 0 : index
    %885 = vector.load %arg5[%c0_316, %c0_317, %c0_318] : memref<1x8x128xf32, #tpu.memory_space<vmem>>, vector<1x8x128xf32>
    %886 = vector.shape_cast %885 : vector<1x8x128xf32> to vector<8x128xf32>
    %887 = vector.shape_cast %884 : vector<8x128xf32> to vector<1x8x128xf32>
    tpu.vector_store %arg5[%c0_316, %c0_317, %c0_318], %887 {strides = array<i32>} : memref<1x8x128xf32, #tpu.memory_space<vmem>>, vector<1x8x128xf32>,
    return
  }
  func.func @transform_0(%arg0: i32) -> (i32, i32, i32) {
    %c0_i32 = arith.constant 0 : i32
    %c0_i32_0 = arith.constant 0 : i32
    %c0_i32_1 = arith.constant 0 : i32
    return %arg0, %c0_i32, %c0_i32_0 : i32, i32, i32
  }
  func.func @transform_1(%arg0: i32) -> (i32, i32, i32) {
    %c0_i32 = arith.constant 0 : i32
    %c0_i32_0 = arith.constant 0 : i32
    %c0_i32_1 = arith.constant 0 : i32
    return %arg0, %c0_i32, %c0_i32_0 : i32, i32, i32
  }
  func.func @transform_2(%arg0: i32) -> (i32, i32) {
    %c0_i32 = arith.constant 0 : i32
    %c0_i32_0 = arith.constant 0 : i32
    %c0_i32_1 = arith.constant 0 : i32
    return %c0_i32, %c0_i32_0 : i32, i32
  }
  func.func @transform_3(%arg0: i32) -> (i32, i32) {
    %c0_i32 = arith.constant 0 : i32
    %c0_i32_0 = arith.constant 0 : i32
    %c0_i32_1 = arith.constant 0 : i32
    return %c0_i32, %c0_i32_0 : i32, i32
  }
  func.func @transform_4(%arg0: i32) -> (i32, i32, i32) {
    %c0_i32 = arith.constant 0 : i32
    %c0_i32_0 = arith.constant 0 : i32
    %c0_i32_1 = arith.constant 0 : i32
    return %arg0, %c0_i32, %c0_i32_0 : i32, i32, i32
  }
}

</mosaic_0001>

<llo_original>
// kernel: transformer_decoder_forward.1
$region0: #{transformer_decoder_forward.1}
  #allocation0 [shape = 'u32[]', space=smem, size = 0x4, offset = 0x4, fixed_abs, tag = 'smem constant byte address 0x4 - core index']
  #allocation1 [shape = 'u32[144,128]{1,0:T(1,128)}', space=vmem, size = 0x12000, scoped, tag = 'internal scratch']
  %s0 = inlined_call_operand.vmem [shape: f32[2,49,64], index: 0, kind: input, shape index: {}]
  %s1 = inlined_call_operand.vmem [shape: f32[2,8,32], index: 1, kind: input, shape index: {}]
  %s2 = inlined_call_operand.vmem [shape: bf16[1184,128], index: 2, kind: input, shape index: {}]
  %s3 = inlined_call_operand.hbm [shape: f32[440,128], index: 3, kind: input, shape index: {}]
  %s4 = inlined_call_operand.hbm [shape: f32[2,8,128], index: 4, kind: output, shape index: {}]
  %s5 = sld [smem:[#allocation0]]
  $region53: #{transformer_decoder_forward.1} parent=0
    _
  %s7 = ssub.s32 1, %s5
  %s8 = scalar_select 0, %s7, %s5
  $region1: #{transformer_decoder_forward.1} parent=0
    #allocation2 [shape = 'u8[225280]{0}', space=vmem, size = 0x37000, scoped, tag = 'input window, operand 3, single buffered']
    #allocation3 [shape = 's32[2]{0}', space=sflag, size = 0x8, scoped, tag = 'scoped memory for transformer_decoder_forward.1']
    #allocation4 [shape = 's32[2]{0}', space=sflag, size = 0x8, scoped, tag = 'scoped memory for transformer_decoder_forward.1']
    #allocation5 [shape = 'u8[8192]{0}', space=vmem, size = 0x2000, scoped, tag = 'output window, operand 0']
    %9 = vsyncpa [#allocation3], 0
    %10 = vsyncpa [#allocation4], 0
    %s11 = scalar_lea.sflag [#allocation4], 1
    %12 = vsyncpa %s11, 0
    loop: start=0, step=1, limit=4
    $region2: #{transformer_decoder_forward.1} parent=1 // loop_pre_header
      _
    $region3: #{transformer_decoder_forward.1} parent=1 // loop_header
      %s14 = sphi 0, %s18
      %p15 = scmp.ge.s32.totalorder %s14, 4
      %s24 = sphi 0, %s26
      %s27 = sphi 0, %s24
      %s28 = sphi 0, %s27
      %s44 = sphi 0, %s28
      %s50 = sphi 0, %s52
      %s53 = sphi 0, %s50
      %s54 = sphi 0, %s53
      %s70 = sphi 0, %s54
      %s74 = sphi 0, %s74
      %s76 = sphi 0, %s74
      %s77 = sphi 0, %s76
      %s91 = sphi 0, %s77
      %s95 = sphi 0, %s95
      %s97 = sphi 0, %s95
      %s98 = sphi 0, %s97
      %s112 = sphi 0, %s98
      %s118 = sphi 0, %s120
      %s121 = sphi 0, %s118
      %s122 = sphi 0, %s121
      %s138 = sphi 0, %s122
    $region4: #{transformer_decoder_forward.1} parent=1 // loop_header_branch
      %17 = sbr.rel (%p15) target = $region8
    $region5: #{transformer_decoder_forward.1} parent=1 // loop_body
      %s19 = ssub.s32 %s14, 1
      %s20 = ssub.s32 %s14, 2
      %s21 = sadd.s32 %s14, 1
      %s22 = ssub.s32 %s14, %s21
      %p23 = scmp.eq.s32.totalorder %s22, 0
      %s25 = sadd.s32 %s24, 1
      %s26 = scalar_select %p23, %s24, %s25
      %p29 = pneg %p23
      %p30 = scmp.eq.s32.totalorder %s14, 1
      %p31 = por %p29, %p30
      %p32 = scmp.ne.s32.totalorder %s24, %s27
      %p33 = scmp.eq.s32.totalorder %s14, 0
      %p34 = por %p32, %p33
      %p35 = scmp.ne.s32.totalorder %s24, %s27
      %p36 = scmp.eq.s32.totalorder %s19, 1
      %p37 = por %p35, %p36
      %p38 = scmp.ne.s32.totalorder %s27, %s28
      %p39 = scmp.eq.s32.totalorder %s19, 0
      %p40 = por %p38, %p39
      %p41 = scmp.ne.s32.totalorder %s27, %s28
      %p42 = scmp.eq.s32.totalorder %s20, 1
      %p43 = por %p41, %p42
      %p45 = scmp.ne.s32.totalorder %s28, %s44
      %p46 = scmp.eq.s32.totalorder %s20, 0
      %p47 = por %p45, %p46
      %s48 = ssub.s32 %s14, %s21
      %p49 = scmp.eq.s32.totalorder %s48, 0
      %s51 = sadd.s32 %s50, 1
      %s52 = scalar_select %p49, %s50, %s51
      %p55 = pneg %p49
      %p56 = scmp.eq.s32.totalorder %s14, 1
      %p57 = por %p55, %p56
      %p58 = scmp.ne.s32.totalorder %s50, %s53
      %p59 = scmp.eq.s32.totalorder %s14, 0
      %p60 = por %p58, %p59
      %p61 = scmp.ne.s32.totalorder %s50, %s53
      %p62 = scmp.eq.s32.totalorder %s19, 1
      %p63 = por %p61, %p62
      %p64 = scmp.ne.s32.totalorder %s53, %s54
      %p65 = scmp.eq.s32.totalorder %s19, 0
      %p66 = por %p64, %p65
      %p67 = scmp.ne.s32.totalorder %s53, %s54
      %p68 = scmp.eq.s32.totalorder %s20, 1
      %p69 = por %p67, %p68
      %p71 = scmp.ne.s32.totalorder %s54, %s70
      %p72 = scmp.eq.s32.totalorder %s20, 0
      %p73 = por %p71, %p72
      %s75 = sadd.s32 %s74, 1
      %p78 = scmp.eq.s32.totalorder %s14, 1
      %p79 = scmp.ne.s32.totalorder %s74, %s76
      %p80 = scmp.eq.s32.totalorder %s14, 0
      %p81 = por %p79, %p80
      %p82 = scmp.ne.s32.totalorder %s74, %s76
      %p83 = scmp.eq.s32.totalorder %s19, 1
      %p84 = por %p82, %p83
      %p85 = scmp.ne.s32.totalorder %s76, %s77
      %p86 = scmp.eq.s32.totalorder %s19, 0
      %p87 = por %p85, %p86
      %p88 = scmp.ne.s32.totalorder %s76, %s77
      %p89 = scmp.eq.s32.totalorder %s20, 1
      %p90 = por %p88, %p89
      %p92 = scmp.ne.s32.totalorder %s77, %s91
      %p93 = scmp.eq.s32.totalorder %s20, 0
      %p94 = por %p92, %p93
      %s96 = sadd.s32 %s95, 1
      %p99 = scmp.eq.s32.totalorder %s14, 1
      %p100 = scmp.ne.s32.totalorder %s95, %s97
      %p101 = scmp.eq.s32.totalorder %s14, 0
      %p102 = por %p100, %p101
      %p103 = scmp.ne.s32.totalorder %s95, %s97
      %p104 = scmp.eq.s32.totalorder %s19, 1
      %p105 = por %p103, %p104
      %p106 = scmp.ne.s32.totalorder %s97, %s98
      %p107 = scmp.eq.s32.totalorder %s19, 0
      %p108 = por %p106, %p107
      %p109 = scmp.ne.s32.totalorder %s97, %s98
      %p110 = scmp.eq.s32.totalorder %s20, 1
      %p111 = por %p109, %p110
      %p113 = scmp.ne.s32.totalorder %s98, %s112
      %p114 = scmp.eq.s32.totalorder %s20, 0
      %p115 = por %p113, %p114
      %s116 = ssub.s32 %s14, %s21
      %p117 = scmp.eq.s32.totalorder %s116, 0
      %s119 = sadd.s32 %s118, 1
      %s120 = scalar_select %p117, %s118, %s119
      %p123 = pneg %p117
      %p124 = scmp.eq.s32.totalorder %s14, 1
      %p125 = por %p123, %p124
      %p126 = scmp.ne.s32.totalorder %s118, %s121
      %p127 = scmp.eq.s32.totalorder %s14, 0
      %p128 = por %p126, %p127
      %p129 = scmp.ne.s32.totalorder %s118, %s121
      %p130 = scmp.eq.s32.totalorder %s19, 1
      %p131 = por %p129, %p130
      %p132 = scmp.ne.s32.totalorder %s121, %s122
      %p133 = scmp.eq.s32.totalorder %s19, 0
      %p134 = por %p132, %p133
      %p135 = scmp.ne.s32.totalorder %s121, %s122
      %p136 = scmp.eq.s32.totalorder %s20, 1
      %p137 = por %p135, %p136
      %p139 = scmp.ne.s32.totalorder %s122, %s138
      %p140 = scmp.eq.s32.totalorder %s20, 0
      %p141 = por %p139, %p140
      %p142 = scmp.le.s32.totalorder 1, %s14
      %p143 = scmp.lt.s32.totalorder %s14, 3
      %p144 = pnand %p142, %p143
      %p145 = pneg %p144
      // Predicated region
      $region9: #{transformer_decoder_forward.1} parent=5 // pred_check
        _
      $region10: #{transformer_decoder_forward.1} parent=5 // pred_check_branch
        %147 = sbr.rel (%p144) target = $region12
      $region11: #{transformer_decoder_forward.1} parent=5 // pred_region
        %s148 = ssub.s32 %s14, 1
        // Predicated region
        $region13: #{transformer_decoder_forward.1} parent=11 // pred_check
          %p149 = pneg %p87
        $region14: #{transformer_decoder_forward.1} parent=11 // pred_check_branch
          %151 = sbr.rel (%p149) target = $region16
        $region15: #{transformer_decoder_forward.1} parent=11 // pred_region
          _
        $region16: #{transformer_decoder_forward.1} parent=11 // pred_fallthru
          _
        // Predicated region
        $region17: #{transformer_decoder_forward.1} parent=11 // pred_check
          %p152 = pneg %p108
        $region18: #{transformer_decoder_forward.1} parent=11 // pred_check_branch
          %154 = sbr.rel (%p152) target = $region20
        $region19: #{transformer_decoder_forward.1} parent=11 // pred_region
          %s156 = ssub.s32 7040, 7040
          %157 = vsyncadd [#allocation3], %s156
          %s158 = sshll.u32 [#allocation2], 4
          %s159 = int_to_ptr.vmem [resolvable:$true] %s158
          %164 = dma.hbm_to_vmem [thread:$0]  %s3, 7040, %s159, [#allocation3], 128, 128, 8
        $region20: #{transformer_decoder_forward.1} parent=11 // pred_fallthru
          _
      $region12: #{transformer_decoder_forward.1} parent=5 // pred_fallthru
        _
      %p165 = scmp.lt.s32.totalorder %s14, 2
      // Predicated region
      $region21: #{transformer_decoder_forward.1} parent=5 // pred_check
        %p166 = pneg %p165
      $region22: #{transformer_decoder_forward.1} parent=5 // pred_check_branch
        %168 = sbr.rel (%p166) target = $region24
      $region23: #{transformer_decoder_forward.1} parent=5 // pred_region
        // Predicated region
        $region25: #{transformer_decoder_forward.1} parent=23 // pred_check
          %p169 = pneg %p34
        $region26: #{transformer_decoder_forward.1} parent=23 // pred_check_branch
          %171 = sbr.rel (%p169) target = $region28
        $region27: #{transformer_decoder_forward.1} parent=23 // pred_region
          %p172 = scmp.lt.s32.totalorder %s14, 1
          %s173 = scalar_select %p172, %s14, 1
          %s174 = smul.addr %s173, 7
          %s175 = smul.addr %s174, 8
          %s176 = scalar_lea.vmem %s0, %s175
        $region28: #{transformer_decoder_forward.1} parent=23 // pred_fallthru
          _
        // Predicated region
        $region29: #{transformer_decoder_forward.1} parent=23 // pred_check
          %p177 = pneg %p60
        $region30: #{transformer_decoder_forward.1} parent=23 // pred_check_branch
          %179 = sbr.rel (%p177) target = $region32
        $region31: #{transformer_decoder_forward.1} parent=23 // pred_region
          %p180 = scmp.lt.s32.totalorder %s14, 1
          %s181 = scalar_select %p180, %s14, 1
          %s182 = smul.addr %s181, 8
          %s183 = scalar_lea.vmem %s1, %s182
        $region32: #{transformer_decoder_forward.1} parent=23 // pred_fallthru
          _
      $region24: #{transformer_decoder_forward.1} parent=5 // pred_fallthru
        _
      %p184 = scmp.le.s32.totalorder 1, %s14
      %p185 = scmp.lt.s32.totalorder %s14, 3
      %p186 = pnand %p184, %p185
      %p187 = pneg %p186
      // Predicated region
      $region33: #{transformer_decoder_forward.1} parent=5 // pred_check
        _
      $region34: #{transformer_decoder_forward.1} parent=5 // pred_check_branch
        %189 = sbr.rel (%p186) target = $region36
      $region35: #{transformer_decoder_forward.1} parent=5 // pred_region
        %s190 = ssub.s32 %s14, 1
        // Predicated region
        $region37: #{transformer_decoder_forward.1} parent=35 // pred_check
          %p191 = pneg %p108
        $region38: #{transformer_decoder_forward.1} parent=35 // pred_check_branch
          %193 = sbr.rel (%p191) target = $region40
        $region39: #{transformer_decoder_forward.1} parent=35 // pred_region
          %194 = dma.done [#allocation3], 7040
        $region40: #{transformer_decoder_forward.1} parent=35 // pred_fallthru
          _
        %p195 = scmp.lt.s32.totalorder %s19, 1
        %s196 = scalar_select %p195, %s19, 1
        %s197 = smul.addr %s196, 7
        %s198 = smul.addr %s197, 8
        %s199 = scalar_lea.vmem %s0, %s198
        %p200 = pneg %p40
        %p201 = pneg %p37
        %p202 = scmp.lt.s32.totalorder %s19, 1
        %s203 = scalar_select %p202, %s19, 1
        %s204 = smul.addr %s203, 8
        %s205 = scalar_lea.vmem %s1, %s204
        %p206 = pneg %p66
        %p207 = pneg %p63
        %p208 = pneg %p87
        %p209 = pneg %p84
        %p210 = pneg %p108
        %p211 = pneg %p105
        %p212 = pneg %p134
        %p213 = pneg %p131
        %s214 = sand.u32 %s121, 1
        %s215 = scalar_lea.sflag [#allocation4], %s214
        %s216 = sand.u32 %s121, 1
        %s217 = smul.addr %s216, 8
        %s218 = scalar_lea.vmem [#allocation5], %s217
        %p219 = scmp.lt.s32.totalorder %s19, 1
        %s220 = scalar_select %p219, %s19, 1
        %s221 = smul.addr %s220, 7
        %s222 = smul.addr %s221, 8
        %s223 = scalar_lea.vmem %s0, %s222
        %p224 = scmp.lt.s32.totalorder %s19, 1
        %s225 = scalar_select %p224, %s19, 1
        %s226 = smul.addr %s225, 8
        %s227 = scalar_lea.vmem %s1, %s226
        %v229 = vld [vmem:[%s223] sm:$0xff]
        %v230 = vld [vmem:[%s223 + $0x8] sm:$0xff]
        %v231 = vld [vmem:[%s223 + $0x10] sm:$0xff]
        %v232 = vld [vmem:[%s223 + $0x18] sm:$0xff]
        %v233 = vld [vmem:[%s223 + $0x20] sm:$0xff]
        %v234 = vld [vmem:[%s223 + $0x28] sm:$0xff]
        %v235 = vld [vmem:[%s223 + $0x30] sm:$0x1]
        %v236 = vld [vmem:[%s2] sm:$0xf]
        %v237 = vld [vmem:[%s2 + $0x4] sm:$0xf]
        %v238 = vld [vmem:[%s2 + $0x8] sm:$0xf]
        %v239 = vld [vmem:[%s2 + $0xc] sm:$0xf]
        %v240 = vld [vmem:[%s2 + $0x10] sm:$0xf]
        %v241 = vld [vmem:[%s2 + $0x14] sm:$0xf]
        %v242 = vld [vmem:[%s2 + $0x18] sm:$0xf]
        %v243 = vld [vmem:[%s2 + $0x1c] sm:$0xf]
        %v244 = vld [vmem:[#allocation2] sm:$0x1]
        %v245 = vpack.c.bf16 %v230, %v229
        %v246 = vpack.c.bf16 %v232, %v231
        %v247 = vpack.c.bf16 %v234, %v233
        %v248 = vpack.c.bf16 %v235, %v235
        %v249 = vlaneseq
        %v250 = vshrl.u32 %v249, 7
        %v251 = vsub.s32 0, %v250
        %v252 = vrot.slane %v244, %v251
        %v261 = vunpack.c.l.b16 %v236
        %v262 = vunpack.c.l.b16 %v237
        %v263 = vunpack.c.l.b16 %v238
        %v264 = vunpack.c.l.b16 %v239
        %v265 = vunpack.c.l.b16 %v240
        %v266 = vunpack.c.l.b16 %v241
        %v267 = vunpack.c.l.b16 %v242
        %v268 = vunpack.c.l.b16 %v243
        %v269 = vpack.c.b16 %v262, %v261
        %v270 = vpack.c.b16 %v264, %v263
        %v271 = vpack.c.b16 %v266, %v265
        %v272 = vpack.c.b16 %v268, %v267
        %vm277 = vcmask 523264
        %v279 = vsel %vm277, %v245, 0
        %v282 = vsel %vm277, %v246, 0
        %v285 = vsel %vm277, %v247, 0
        %v288 = vsel %vm277, %v248, 0
        %290 = vmatprep.subr.bf16.mxu0 0
        %291 = vmatpush1.bf16.msra.mxu0 %v269
        %292 = vmatprep.subr.bf16.mxu0 0
        %293 = vmatpush1.bf16.msra.mxu0 %v270
        %294 = vmatprep.subr.bf16.mxu0 0
        %295 = vmatpush1.bf16.msra.mxu0 %v271
        %296 = vmatprep.subr.bf16.mxu0 0
        %297 = vmatpush1.bf16.msra.mxu0 %v272
        %298 = vmatprep.subr.bf16.mxu0 0
        %299 = vmatpush1.bf16.msra.mxu0 0
        %300 = vmatprep.subr.bf16.mxu0 0
        %301 = vmatpush1.bf16.msra.mxu0 0
        %302 = vmatprep.subr.bf16.mxu0 0
        %303 = vmatpush1.bf16.msra.mxu0 0
        %304 = vmatprep.subr.bf16.mxu0 0
        %305 = vmatpush1.bf16.msra.mxu0 0
        %306 = vmatprep.subr.bf16.mxu0 0
        %307 = vmatpush1.bf16.msra.mxu0 0
        %308 = vmatprep.subr.bf16.mxu0 0
        %309 = vmatpush1.bf16.msra.mxu0 0
        %310 = vmatprep.subr.bf16.mxu0 0
        %311 = vmatpush1.bf16.msra.mxu0 0
        %312 = vmatprep.subr.bf16.mxu0 0
        %313 = vmatpush1.bf16.msra.mxu0 0
        %314 = vmatprep.subr.bf16.mxu0 0
        %315 = vmatpush1.bf16.msra.mxu0 0
        %316 = vmatprep.subr.bf16.mxu0 0
        %317 = vmatpush1.bf16.msra.mxu0 0
        %318 = vmatprep.subr.bf16.mxu0 0
        %319 = vmatpush1.bf16.msra.mxu0 0
        %320 = vmatprep.subr.bf16.mxu0 0
        %321 = vmatpush1.bf16.msra.mxu0 0
        %322 = vmatprep.mubr.bf16.mxu0 0
        %323 = vmatmul.mubr.bf16.gmra.mrb[0].mxu0 %v279
        %v324 = vpop.f32.mrb[0].mxu0
        %v325 = vadd.f32 %v252, %v324
        %v326 = vpop.f32.mrb[0].mxu0
        %v327 = vpop.f32.mrb[0].mxu0
        %v328 = vadd.f32 %v252, %v327
        %v329 = vpop.f32.mrb[0].mxu0
        %330 = vmatprep.mubr.bf16.mxu0 0
        %331 = vmatmul.mubr.bf16.gmra.mrb[0].mxu0 %v282
        %v332 = vpop.f32.mrb[0].mxu0
        %v333 = vadd.f32 %v252, %v332
        %v334 = vpop.f32.mrb[0].mxu0
        %v335 = vpop.f32.mrb[0].mxu0
        %v336 = vadd.f32 %v252, %v335
        %v337 = vpop.f32.mrb[0].mxu0
        %338 = vmatprep.mubr.bf16.mxu0 0
        %339 = vmatmul.mubr.bf16.gmra.mrb[0].mxu0 %v285
        %v340 = vpop.f32.mrb[0].mxu0
        %v341 = vadd.f32 %v252, %v340
        %v342 = vpop.f32.mrb[0].mxu0
        %v343 = vpop.f32.mrb[0].mxu0
        %v344 = vadd.f32 %v252, %v343
        %v345 = vpop.f32.mrb[0].mxu0
        %346 = vmatprep.mubr.bf16.mxu0 0
        %347 = vmatmul.mubr.bf16.gmra.mrb[0].mxu0 %v288
        %v348 = vpop.f32.mrb[0].mxu0
        %v349 = vadd.f32 %v252, %v348
        %v350 = vpop.f32.mrb[0].mxu0
        %v351 = vpop.f32.mrb[0].mxu0
        %v352 = vpop.f32.mrb[0].mxu0
        %353 = vdwg.mxu0
        %v354 = vld [vmem:[#allocation2 + $0x8] sm:$0x1]
        %v355 = vld [vmem:[#allocation2 + $0x10] sm:$0x1]
        %vm356 = vcmask 261120
        %v357 = vsel %vm356, %v325, 0.0
        %358 = vadd.xlane.f32.xlu0 %v357
        %v359 = vpop.xlane.xlu0 %358
        %v360 = vsel %vm356, %v328, 0.0
        %361 = vadd.xlane.f32.xlu0 %v360
        %v362 = vpop.xlane.xlu0 %361
        %v363 = vsel %vm356, %v333, 0.0
        %364 = vadd.xlane.f32.xlu0 %v363
        %v365 = vpop.xlane.xlu0 %364
        %v366 = vsel %vm356, %v336, 0.0
        %367 = vadd.xlane.f32.xlu0 %v366
        %v368 = vpop.xlane.xlu0 %367
        %v369 = vsel %vm356, %v341, 0.0
        %370 = vadd.xlane.f32.xlu0 %v369
        %v371 = vpop.xlane.xlu0 %370
        %v372 = vsel %vm356, %v344, 0.0
        %373 = vadd.xlane.f32.xlu0 %v372
        %v374 = vpop.xlane.xlu0 %373
        %vm375 = vcmask 253952
        %v376 = vsel %vm375, %v349, 0.0
        %377 = vadd.xlane.f32.xlu0 %v376
        %v378 = vpop.xlane.xlu0 %377
        %v379 = vrcp.pop 32.0
        %v380 = vmul.f32 %v359, %v379
        %v381 = vmul.f32 %v362, %v379
        %v382 = vmul.f32 %v365, %v379
        %v383 = vmul.f32 %v368, %v379
        %v384 = vmul.f32 %v371, %v379
        %v385 = vmul.f32 %v374, %v379
        %v386 = vmul.f32 %v378, %v379
        %v387 = vsub.f32 %v325, %v380
        %v388 = vsub.f32 %v328, %v381
        %v389 = vsub.f32 %v333, %v382
        %v390 = vsub.f32 %v336, %v383
        %v391 = vsub.f32 %v341, %v384
        %v392 = vsub.f32 %v344, %v385
        %v393 = vsub.f32 %v349, %v386
        %v394 = vmul.f32 %v387, %v387
        %v395 = vmul.f32 %v388, %v388
        %v396 = vmul.f32 %v389, %v389
        %v397 = vmul.f32 %v390, %v390
        %v398 = vmul.f32 %v391, %v391
        %v399 = vmul.f32 %v392, %v392
        %v400 = vmul.f32 %v393, %v393
        %v401 = vsel %vm356, %v394, 0.0
        %402 = vadd.xlane.f32.xlu0 %v401
        %v403 = vpop.xlane.xlu0 %402
        %v404 = vsel %vm356, %v395, 0.0
        %405 = vadd.xlane.f32.xlu0 %v404
        %v406 = vpop.xlane.xlu0 %405
        %v407 = vsel %vm356, %v396, 0.0
        %408 = vadd.xlane.f32.xlu0 %v407
        %v409 = vpop.xlane.xlu0 %408
        %v410 = vsel %vm356, %v397, 0.0
        %411 = vadd.xlane.f32.xlu0 %v410
        %v412 = vpop.xlane.xlu0 %411
        %v413 = vsel %vm356, %v398, 0.0
        %414 = vadd.xlane.f32.xlu0 %v413
        %v415 = vpop.xlane.xlu0 %414
        %v416 = vsel %vm356, %v399, 0.0
        %417 = vadd.xlane.f32.xlu0 %v416
        %v418 = vpop.xlane.xlu0 %417
        %v419 = vsel %vm375, %v400, 0.0
        %420 = vadd.xlane.f32.xlu0 %v419
        %v421 = vpop.xlane.xlu0 %420
        %v422 = vmul.f32 %v403, %v379
        %v423 = vmul.f32 %v406, %v379
        %v424 = vmul.f32 %v409, %v379
        %v425 = vmul.f32 %v412, %v379
        %v426 = vmul.f32 %v415, %v379
        %v427 = vmul.f32 %v418, %v379
        %v428 = vmul.f32 %v421, %v379
        %v429 = vadd.f32 %v422, 1e-05
        %v430 = vadd.f32 %v423, 1e-05
        %v431 = vadd.f32 %v424, 1e-05
        %v432 = vadd.f32 %v425, 1e-05
        %v433 = vadd.f32 %v426, 1e-05
        %v434 = vadd.f32 %v427, 1e-05
        %v435 = vadd.f32 %v428, 1e-05
        %v436 = vrsqrt.pop %v429
        %v437 = vrsqrt.pop %v430
        %v438 = vrsqrt.pop %v431
        %v439 = vrsqrt.pop %v432
        %v440 = vrsqrt.pop %v433
        %v441 = vrsqrt.pop %v434
        %v442 = vrsqrt.pop %v435
        %v443 = vmul.f32 %v387, %v436
        %v444 = vmul.f32 %v388, %v437
        %v445 = vmul.f32 %v389, %v438
        %v446 = vmul.f32 %v390, %v439
        %v447 = vmul.f32 %v391, %v440
        %v448 = vmul.f32 %v392, %v441
        %v449 = vmul.f32 %v393, %v442
        %v450 = vlaneseq
        %v451 = vshrl.u32 %v450, 7
        %v452 = vsub.s32 0, %v451
        %v453 = vrot.slane %v354, %v452
        %v454 = vmul.f32 %v443, %v453
        %v455 = vmul.f32 %v444, %v453
        %v456 = vmul.f32 %v445, %v453
        %v457 = vmul.f32 %v446, %v453
        %v458 = vmul.f32 %v447, %v453
        %v459 = vmul.f32 %v448, %v453
        %v460 = vmul.f32 %v449, %v453
        %v461 = vlaneseq
        %v462 = vshrl.u32 %v461, 7
        %v463 = vsub.s32 0, %v462
        %v464 = vrot.slane %v355, %v463
        %v465 = vadd.f32 %v454, %v464
        %v466 = vadd.f32 %v455, %v464
        %v467 = vadd.f32 %v456, %v464
        %v468 = vadd.f32 %v457, %v464
        %v469 = vadd.f32 %v458, %v464
        %v470 = vadd.f32 %v459, %v464
        %v471 = vadd.f32 %v460, %v464
        %v472 = vld [vmem:[#allocation2 + $0x18] sm:$0xff]
        %v473 = vld [vmem:[#allocation2 + $0x20] sm:$0xff]
        %v474 = vld [vmem:[#allocation2 + $0x28] sm:$0xff]
        %v475 = vld [vmem:[#allocation2 + $0x30] sm:$0xff]
        %v476 = vld [vmem:[#allocation2 + $0x38] sm:$0xff]
        %v477 = vld [vmem:[#allocation2 + $0x40] sm:$0xff]
        %v478 = vld [vmem:[#allocation2 + $0x48] sm:$0x1]
        %v479 = vadd.f32 %v465, %v472
        %v480 = vadd.f32 %v466, %v473
        %v481 = vadd.f32 %v467, %v474
        %v482 = vadd.f32 %v468, %v475
        %v483 = vadd.f32 %v469, %v476
        %v484 = vadd.f32 %v470, %v477
        %v485 = vadd.f32 %v471, %v478
        %v486 = vld [vmem:[%s2 + $0x20] sm:$0xf]
        %v487 = vld [vmem:[%s2 + $0x24] sm:$0xf]
        %v488 = vld [vmem:[%s2 + $0x28] sm:$0xf]
        %v489 = vld [vmem:[%s2 + $0x2c] sm:$0xf]
        %v490 = vld [vmem:[#allocation2 + $0x50] sm:$0x1]
        %v491 = vld [vmem:[%s2 + $0x30] sm:$0xf]
        %v492 = vld [vmem:[%s2 + $0x34] sm:$0xf]
        %v493 = vld [vmem:[%s2 + $0x38] sm:$0xf]
        %v494 = vld [vmem:[%s2 + $0x3c] sm:$0xf]
        %v495 = vld [vmem:[#allocation2 + $0x58] sm:$0x1]
        %v496 = vld [vmem:[%s2 + $0x40] sm:$0xf]
        %v497 = vld [vmem:[%s2 + $0x44] sm:$0xf]
        %v498 = vld [vmem:[%s2 + $0x48] sm:$0xf]
        %v499 = vld [vmem:[%s2 + $0x4c] sm:$0xf]
        %v500 = vld [vmem:[#allocation2 + $0x60] sm:$0x1]
        %v501 = vld [vmem:[%s2 + $0x50] sm:$0xf]
        %v502 = vld [vmem:[%s2 + $0x58] sm:$0xf]
        %v503 = vld [vmem:[%s2 + $0x60] sm:$0xf]
        %v504 = vld [vmem:[%s2 + $0x68] sm:$0xf]
        %v505 = vld [vmem:[#allocation2 + $0x68] sm:$0x1]
        %v506 = vpack.c.bf16 %v480, %v479
        %v507 = vpack.c.bf16 %v482, %v481
        %v508 = vpack.c.bf16 %v484, %v483
        %v509 = vpack.c.bf16 %v485, %v485
        %v510 = vlaneseq
        %v511 = vshrl.u32 %v510, 7
        %v512 = vsub.s32 0, %v511
        %v513 = vrot.slane %v490, %v512
        %v518 = vunpack.c.l.b16 %v486
        %v519 = vunpack.c.l.b16 %v487
        %v520 = vunpack.c.l.b16 %v488
        %v521 = vunpack.c.l.b16 %v489
        %v522 = vpack.c.b16 %v519, %v518
        %v523 = vpack.c.b16 %v521, %v520
        %v527 = vsel %vm356, %v506, 0
        %v530 = vsel %vm356, %v507, 0
        %v533 = vsel %vm356, %v508, 0
        %v536 = vsel %vm356, %v509, 0
        %538 = vmatprep.subr.bf16.mxu0 0
        %539 = vmatpush1.bf16.msra.mxu0 %v522
        %540 = vmatprep.subr.bf16.mxu0 0
        %541 = vmatpush1.bf16.msra.mxu0 %v523
        %542 = vmatprep.subr.bf16.mxu0 0
        %543 = vmatpush1.bf16.msra.mxu0 0
        %544 = vmatprep.subr.bf16.mxu0 0
        %545 = vmatpush1.bf16.msra.mxu0 0
        %546 = vmatprep.subr.bf16.mxu0 0
        %547 = vmatpush1.bf16.msra.mxu0 0
        %548 = vmatprep.subr.bf16.mxu0 0
        %549 = vmatpush1.bf16.msra.mxu0 0
        %550 = vmatprep.subr.bf16.mxu0 0
        %551 = vmatpush1.bf16.msra.mxu0 0
        %552 = vmatprep.subr.bf16.mxu0 0
        %553 = vmatpush1.bf16.msra.mxu0 0
        %554 = vmatprep.subr.bf16.mxu0 0
        %555 = vmatpush1.bf16.msra.mxu0 0
        %556 = vmatprep.subr.bf16.mxu0 0
        %557 = vmatpush1.bf16.msra.mxu0 0
        %558 = vmatprep.subr.bf16.mxu0 0
        %559 = vmatpush1.bf16.msra.mxu0 0
        %560 = vmatprep.subr.bf16.mxu0 0
        %561 = vmatpush1.bf16.msra.mxu0 0
        %562 = vmatprep.subr.bf16.mxu0 0
        %563 = vmatpush1.bf16.msra.mxu0 0
        %564 = vmatprep.subr.bf16.mxu0 0
        %565 = vmatpush1.bf16.msra.mxu0 0
        %566 = vmatprep.subr.bf16.mxu0 0
        %567 = vmatpush1.bf16.msra.mxu0 0
        %568 = vmatprep.subr.bf16.mxu0 0
        %569 = vmatpush1.bf16.msra.mxu0 0
        %570 = vmatprep.mubr.bf16.mxu0 0
        %571 = vmatmul.mubr.bf16.gmra.mrb[0].mxu0 %v527
        %v572 = vpop.f32.mrb[0].mxu0
        %v573 = vadd.f32 %v513, %v572
        %v574 = vpop.f32.mrb[0].mxu0
        %v575 = vpop.f32.mrb[0].mxu0
        %v576 = vadd.f32 %v513, %v575
        %v577 = vpop.f32.mrb[0].mxu0
        %578 = vmatprep.mubr.bf16.mxu0 0
        %579 = vmatmul.mubr.bf16.gmra.mrb[0].mxu0 %v530
        %v580 = vpop.f32.mrb[0].mxu0
        %v581 = vadd.f32 %v513, %v580
        %v582 = vpop.f32.mrb[0].mxu0
        %v583 = vpop.f32.mrb[0].mxu0
        %v584 = vadd.f32 %v513, %v583
        %v585 = vpop.f32.mrb[0].mxu0
        %586 = vmatprep.mubr.bf16.mxu0 0
        %587 = vmatmul.mubr.bf16.gmra.mrb[0].mxu0 %v533
        %v588 = vpop.f32.mrb[0].mxu0
        %v589 = vadd.f32 %v513, %v588
        %v590 = vpop.f32.mrb[0].mxu0
        %v591 = vpop.f32.mrb[0].mxu0
        %v592 = vadd.f32 %v513, %v591
        %v593 = vpop.f32.mrb[0].mxu0
        %594 = vmatprep.mubr.bf16.mxu0 0
        %595 = vmatmul.mubr.bf16.gmra.mrb[0].mxu0 %v536
        %v596 = vpop.f32.mrb[0].mxu0
        %v597 = vadd.f32 %v513, %v596
        %v598 = vpop.f32.mrb[0].mxu0
        %v599 = vpop.f32.mrb[0].mxu0
        %v600 = vpop.f32.mrb[0].mxu0
        %601 = vdwg.mxu0
        %v602 = vpack.c.bf16 %v576, %v573
        %v603 = vpack.c.bf16 %v584, %v581
        %v604 = vpack.c.bf16 %v592, %v589
        %v605 = vpack.c.bf16 %v597, %v597
        %v606 = vlaneseq
        %v607 = vshrl.u32 %v606, 7
        %v608 = vsub.s32 0, %v607
        %v609 = vrot.slane %v495, %v608
        %v614 = vunpack.c.l.b16 %v491
        %v615 = vunpack.c.l.b16 %v492
        %v616 = vunpack.c.l.b16 %v493
        %v617 = vunpack.c.l.b16 %v494
        %v618 = vpack.c.b16 %v615, %v614
        %v619 = vpack.c.b16 %v617, %v616
        %622 = vmatprep.subr.bf16.mxu0 0
        %623 = vmatpush1.bf16.msra.mxu0 %v618
        %624 = vmatprep.subr.bf16.mxu0 0
        %625 = vmatpush1.bf16.msra.mxu0 %v619
        %626 = vmatprep.subr.bf16.mxu0 0
        %627 = vmatpush1.bf16.msra.mxu0 0
        %628 = vmatprep.subr.bf16.mxu0 0
        %629 = vmatpush1.bf16.msra.mxu0 0
        %630 = vmatprep.subr.bf16.mxu0 0
        %631 = vmatpush1.bf16.msra.mxu0 0
        %632 = vmatprep.subr.bf16.mxu0 0
        %633 = vmatpush1.bf16.msra.mxu0 0
        %634 = vmatprep.subr.bf16.mxu0 0
        %635 = vmatpush1.bf16.msra.mxu0 0
        %636 = vmatprep.subr.bf16.mxu0 0
        %637 = vmatpush1.bf16.msra.mxu0 0
        %638 = vmatprep.subr.bf16.mxu0 0
        %639 = vmatpush1.bf16.msra.mxu0 0
        %640 = vmatprep.subr.bf16.mxu0 0
        %641 = vmatpush1.bf16.msra.mxu0 0
        %642 = vmatprep.subr.bf16.mxu0 0
        %643 = vmatpush1.bf16.msra.mxu0 0
        %644 = vmatprep.subr.bf16.mxu0 0
        %645 = vmatpush1.bf16.msra.mxu0 0
        %646 = vmatprep.subr.bf16.mxu0 0
        %647 = vmatpush1.bf16.msra.mxu0 0
        %648 = vmatprep.subr.bf16.mxu0 0
        %649 = vmatpush1.bf16.msra.mxu0 0
        %650 = vmatprep.subr.bf16.mxu0 0
        %651 = vmatpush1.bf16.msra.mxu0 0
        %652 = vmatprep.subr.bf16.mxu0 0
        %653 = vmatpush1.bf16.msra.mxu0 0
        %654 = vmatprep.mubr.bf16.mxu0 0
        %655 = vmatmul.mubr.bf16.gmra.mrb[0].mxu0 %v527
        %v656 = vpop.f32.mrb[0].mxu0
        %v657 = vadd.f32 %v609, %v656
        %v658 = vpop.f32.mrb[0].mxu0
        %v659 = vpop.f32.mrb[0].mxu0
        %v660 = vadd.f32 %v609, %v659
        %v661 = vpop.f32.mrb[0].mxu0
        %662 = vmatprep.mubr.bf16.mxu0 0
        %663 = vmatmul.mubr.bf16.gmra.mrb[0].mxu0 %v530
        %v664 = vpop.f32.mrb[0].mxu0
        %v665 = vadd.f32 %v609, %v664
        %v666 = vpop.f32.mrb[0].mxu0
        %v667 = vpop.f32.mrb[0].mxu0
        %v668 = vadd.f32 %v609, %v667
        %v669 = vpop.f32.mrb[0].mxu0
        %670 = vmatprep.mubr.bf16.mxu0 0
        %671 = vmatmul.mubr.bf16.gmra.mrb[0].mxu0 %v533
        %v672 = vpop.f32.mrb[0].mxu0
        %v673 = vadd.f32 %v609, %v672
        %v674 = vpop.f32.mrb[0].mxu0
        %v675 = vpop.f32.mrb[0].mxu0
        %v676 = vadd.f32 %v609, %v675
        %v677 = vpop.f32.mrb[0].mxu0
        %678 = vmatprep.mubr.bf16.mxu0 0
        %679 = vmatmul.mubr.bf16.gmra.mrb[0].mxu0 %v536
        %v680 = vpop.f32.mrb[0].mxu0
        %v681 = vadd.f32 %v609, %v680
        %v682 = vpop.f32.mrb[0].mxu0
        %v683 = vpop.f32.mrb[0].mxu0
        %v684 = vpop.f32.mrb[0].mxu0
        %685 = vdwg.mxu0
        %v686 = vpack.c.bf16 %v660, %v657
        %v687 = vpack.c.bf16 %v668, %v665
        %v688 = vpack.c.bf16 %v676, %v673
        %v689 = vpack.c.bf16 %v681, %v681
        %v690 = vlaneseq
        %v691 = vshrl.u32 %v690, 7
        %v692 = vsub.s32 0, %v691
        %v693 = vrot.slane %v500, %v692
        %v698 = vunpack.c.l.b16 %v496
        %v699 = vunpack.c.l.b16 %v497
        %v700 = vunpack.c.l.b16 %v498
        %v701 = vunpack.c.l.b16 %v499
        %v702 = vpack.c.b16 %v699, %v698
        %v703 = vpack.c.b16 %v701, %v700
        %706 = vmatprep.subr.bf16.mxu0 0
        %707 = vmatpush1.bf16.msra.mxu0 %v702
        %708 = vmatprep.subr.bf16.mxu0 0
        %709 = vmatpush1.bf16.msra.mxu0 %v703
        %710 = vmatprep.subr.bf16.mxu0 0
        %711 = vmatpush1.bf16.msra.mxu0 0
        %712 = vmatprep.subr.bf16.mxu0 0
        %713 = vmatpush1.bf16.msra.mxu0 0
        %714 = vmatprep.subr.bf16.mxu0 0
        %715 = vmatpush1.bf16.msra.mxu0 0
        %716 = vmatprep.subr.bf16.mxu0 0
        %717 = vmatpush1.bf16.msra.mxu0 0
        %718 = vmatprep.subr.bf16.mxu0 0
        %719 = vmatpush1.bf16.msra.mxu0 0
        %720 = vmatprep.subr.bf16.mxu0 0
        %721 = vmatpush1.bf16.msra.mxu0 0
        %722 = vmatprep.subr.bf16.mxu0 0
        %723 = vmatpush1.bf16.msra.mxu0 0
        %724 = vmatprep.subr.bf16.mxu0 0
        %725 = vmatpush1.bf16.msra.mxu0 0
        %726 = vmatprep.subr.bf16.mxu0 0
        %727 = vmatpush1.bf16.msra.mxu0 0
        %728 = vmatprep.subr.bf16.mxu0 0
        %729 = vmatpush1.bf16.msra.mxu0 0
        %730 = vmatprep.subr.bf16.mxu0 0
        %731 = vmatpush1.bf16.msra.mxu0 0
        %732 = vmatprep.subr.bf16.mxu0 0
        %733 = vmatpush1.bf16.msra.mxu0 0
        %734 = vmatprep.subr.bf16.mxu0 0
        %735 = vmatpush1.bf16.msra.mxu0 0
        %736 = vmatprep.subr.bf16.mxu0 0
        %737 = vmatpush1.bf16.msra.mxu0 0
        %738 = vmatprep.mubr.bf16.mxu0 0
        %739 = vmatmul.mubr.bf16.gmra.mrb[0].mxu0 %v527
        %v740 = vpop.f32.mrb[0].mxu0
        %v741 = vadd.f32 %v693, %v740
        %v742 = vpop.f32.mrb[0].mxu0
        %v743 = vpop.f32.mrb[0].mxu0
        %v744 = vadd.f32 %v693, %v743
        %v745 = vpop.f32.mrb[0].mxu0
        %746 = vmatprep.mubr.bf16.mxu0 0
        %747 = vmatmul.mubr.bf16.gmra.mrb[0].mxu0 %v530
        %v748 = vpop.f32.mrb[0].mxu0
        %v749 = vadd.f32 %v693, %v748
        %v750 = vpop.f32.mrb[0].mxu0
        %v751 = vpop.f32.mrb[0].mxu0
        %v752 = vadd.f32 %v693, %v751
        %v753 = vpop.f32.mrb[0].mxu0
        %754 = vmatprep.mubr.bf16.mxu0 0
        %755 = vmatmul.mubr.bf16.gmra.mrb[0].mxu0 %v533
        %v756 = vpop.f32.mrb[0].mxu0
        %v757 = vadd.f32 %v693, %v756
        %v758 = vpop.f32.mrb[0].mxu0
        %v759 = vpop.f32.mrb[0].mxu0
        %v760 = vadd.f32 %v693, %v759
        %v761 = vpop.f32.mrb[0].mxu0
        %762 = vmatprep.mubr.bf16.mxu0 0
        %763 = vmatmul.mubr.bf16.gmra.mrb[0].mxu0 %v536
        %v764 = vpop.f32.mrb[0].mxu0
        %v765 = vadd.f32 %v693, %v764
        %v766 = vpop.f32.mrb[0].mxu0
        %v767 = vpop.f32.mrb[0].mxu0
        %v768 = vpop.f32.mrb[0].mxu0
        %769 = vdwg.mxu0
        %v770 = vpack.c.bf16 %v744, %v741
        %v771 = vpack.c.bf16 %v752, %v749
        %v772 = vpack.c.bf16 %v760, %v757
        %v773 = vpack.c.bf16 %v765, %v765
        %vm774 = vcmask 64512
        %v776 = vsel %vm774, %v602, 0
        %v779 = vsel %vm774, %v603, 0
        %v782 = vsel %vm774, %v604, 0
        %v785 = vsel %vm774, %v605, 0
        %v788 = vsel %vm774, %v686, 0
        %v791 = vsel %vm774, %v687, 0
        %v794 = vsel %vm774, %v688, 0
        %v797 = vsel %vm774, %v689, 0
        %799 = vmatprep.subr.bf16.mxu0 0
        %800 = vmatpush1.bf16.xpose.msra.mxu0 %v788
        %801 = vmatprep.subr.bf16.mxu0 0
        %802 = vmatpush1.bf16.xpose.msra.mxu0 %v791
        %803 = vmatprep.subr.bf16.mxu0 0
        %804 = vmatpush1.bf16.xpose.msra.mxu0 %v794
        %805 = vmatprep.subr.bf16.mxu0 0
        %806 = vmatpush1.bf16.xpose.msra.mxu0 %v797
        %807 = vmatprep.subr.bf16.mxu0 0
        %808 = vmatpush1.bf16.xpose.msra.mxu0 0
        %809 = vmatprep.subr.bf16.mxu0 0
        %810 = vmatpush1.bf16.xpose.msra.mxu0 0
        %811 = vmatprep.subr.bf16.mxu0 0
        %812 = vmatpush1.bf16.xpose.msra.mxu0 0
        %813 = vmatprep.subr.bf16.mxu0 0
        %814 = vmatpush1.bf16.xpose.msra.mxu0 0
        %815 = vmatprep.subr.bf16.mxu0 0
        %816 = vmatpush1.bf16.xpose.msra.mxu0 0
        %817 = vmatprep.subr.bf16.mxu0 0
        %818 = vmatpush1.bf16.xpose.msra.mxu0 0
        %819 = vmatprep.subr.bf16.mxu0 0
        %820 = vmatpush1.bf16.xpose.msra.mxu0 0
        %821 = vmatprep.subr.bf16.mxu0 0
        %822 = vmatpush1.bf16.xpose.msra.mxu0 0
        %823 = vmatprep.subr.bf16.mxu0 0
        %824 = vmatpush1.bf16.xpose.msra.mxu0 0
        %825 = vmatprep.subr.bf16.mxu0 0
        %826 = vmatpush1.bf16.xpose.msra.mxu0 0
        %827 = vmatprep.subr.bf16.mxu0 0
        %828 = vmatpush1.bf16.xpose.msra.mxu0 0
        %829 = vmatprep.subr.bf16.mxu0 0
        %830 = vmatpush1.bf16.xpose.msra.mxu0 0
        %831 = vmatprep.mubr.bf16.mxu0 0
        %832 = vmatmul.mubr.bf16.gmra.mrb[0].mxu0 %v776
        %v833 = vpop.f32.mrb[0].mxu0
        %v834 = vadd.f32 0.0, %v833
        %v835 = vpop.f32.mrb[0].mxu0
        %v836 = vpop.f32.mrb[0].mxu0
        %v837 = vadd.f32 0.0, %v836
        %v838 = vpop.f32.mrb[0].mxu0
        %839 = vmatprep.mubr.bf16.mxu0 0
        %840 = vmatmul.mubr.bf16.gmra.mrb[0].mxu0 %v779
        %v841 = vpop.f32.mrb[0].mxu0
        %v842 = vadd.f32 0.0, %v841
        %v843 = vpop.f32.mrb[0].mxu0
        %v844 = vpop.f32.mrb[0].mxu0
        %v845 = vadd.f32 0.0, %v844
        %v846 = vpop.f32.mrb[0].mxu0
        %847 = vmatprep.mubr.bf16.mxu0 0
        %848 = vmatmul.mubr.bf16.gmra.mrb[0].mxu0 %v782
        %v849 = vpop.f32.mrb[0].mxu0
        %v850 = vadd.f32 0.0, %v849
        %v851 = vpop.f32.mrb[0].mxu0
        %v852 = vpop.f32.mrb[0].mxu0
        %v853 = vadd.f32 0.0, %v852
        %v854 = vpop.f32.mrb[0].mxu0
        %855 = vmatprep.mubr.bf16.mxu0 0
        %856 = vmatmul.mubr.bf16.gmra.mrb[0].mxu0 %v785
        %v857 = vpop.f32.mrb[0].mxu0
        %v858 = vadd.f32 0.0, %v857
        %v859 = vpop.f32.mrb[0].mxu0
        %v860 = vpop.f32.mrb[0].mxu0
        %v861 = vpop.f32.mrb[0].mxu0
        %862 = vdwg.mxu0
        %v863 = vmul.f32 %v834, 0.35355338
        %v864 = vmul.f32 %v837, 0.35355338
        %v865 = vmul.f32 %v842, 0.35355338
        %v866 = vmul.f32 %v845, 0.35355338
        %v867 = vmul.f32 %v850, 0.35355338
        %v868 = vmul.f32 %v853, 0.35355338
        %v869 = vmul.f32 %v858, 0.35355338
        %vm870 = vcmask 400384
        %v871 = vsel %vm870, %v863, -inf
        %872 = vmax.xlane.f32.xlu0 %v871
        %v873 = vpop.xlane.xlu0 %872
        %v874 = vsel %vm870, %v864, -inf
        %875 = vmax.xlane.f32.xlu0 %v874
        %v876 = vpop.xlane.xlu0 %875
        %v877 = vsel %vm870, %v865, -inf
        %878 = vmax.xlane.f32.xlu0 %v877
        %v879 = vpop.xlane.xlu0 %878
        %v880 = vsel %vm870, %v866, -inf
        %881 = vmax.xlane.f32.xlu0 %v880
        %v882 = vpop.xlane.xlu0 %881
        %v883 = vsel %vm870, %v867, -inf
        %884 = vmax.xlane.f32.xlu0 %v883
        %v885 = vpop.xlane.xlu0 %884
        %v886 = vsel %vm870, %v868, -inf
        %887 = vmax.xlane.f32.xlu0 %v886
        %v888 = vpop.xlane.xlu0 %887
        %vm889 = vcmask 393216
        %v890 = vsel %vm889, %v869, -inf
        %891 = vmax.xlane.f32.xlu0 %v890
        %v892 = vpop.xlane.xlu0 %891
        %v893 = vsub.f32 %v863, %v873
        %v894 = vsub.f32 %v864, %v876
        %v895 = vsub.f32 %v865, %v879
        %v896 = vsub.f32 %v866, %v882
        %v897 = vsub.f32 %v867, %v885
        %v898 = vsub.f32 %v868, %v888
        %v899 = vsub.f32 %v869, %v892
        %v900 = vmul.f32 %v893, 1.442695
        %v901 = vpow.pop %v900
        %v902 = vmul.f32 %v894, 1.442695
        %v903 = vpow.pop %v902
        %v904 = vmul.f32 %v895, 1.442695
        %v905 = vpow.pop %v904
        %v906 = vmul.f32 %v896, 1.442695
        %v907 = vpow.pop %v906
        %v908 = vmul.f32 %v897, 1.442695
        %v909 = vpow.pop %v908
        %v910 = vmul.f32 %v898, 1.442695
        %v911 = vpow.pop %v910
        %v912 = vmul.f32 %v899, 1.442695
        %v913 = vpow.pop %v912
        %v914 = vsel %vm870, %v901, 0.0
        %915 = vadd.xlane.f32.xlu0 %v914
        %v916 = vpop.xlane.xlu0 %915
        %v917 = vsel %vm870, %v903, 0.0
        %918 = vadd.xlane.f32.xlu0 %v917
        %v919 = vpop.xlane.xlu0 %918
        %v920 = vsel %vm870, %v905, 0.0
        %921 = vadd.xlane.f32.xlu0 %v920
        %v922 = vpop.xlane.xlu0 %921
        %v923 = vsel %vm870, %v907, 0.0
        %924 = vadd.xlane.f32.xlu0 %v923
        %v925 = vpop.xlane.xlu0 %924
        %v926 = vsel %vm870, %v909, 0.0
        %927 = vadd.xlane.f32.xlu0 %v926
        %v928 = vpop.xlane.xlu0 %927
        %v929 = vsel %vm870, %v911, 0.0
        %930 = vadd.xlane.f32.xlu0 %v929
        %v931 = vpop.xlane.xlu0 %930
        %v932 = vsel %vm889, %v913, 0.0
        %933 = vadd.xlane.f32.xlu0 %v932
        %v934 = vpop.xlane.xlu0 %933
        %v935 = vrcp.pop %v916
        %v936 = vrcp.pop %v919
        %v937 = vrcp.pop %v922
        %v938 = vrcp.pop %v925
        %v939 = vrcp.pop %v928
        %v940 = vrcp.pop %v931
        %v941 = vrcp.pop %v934
        %v942 = vmul.f32 %v901, %v935
        %v943 = vmul.f32 %v903, %v936
        %v944 = vmul.f32 %v905, %v937
        %v945 = vmul.f32 %v907, %v938
        %v946 = vmul.f32 %v909, %v939
        %v947 = vmul.f32 %v911, %v940
        %v948 = vmul.f32 %v913, %v941
        %v949 = vpack.c.bf16 %v943, %v942
        %v950 = vpack.c.bf16 %v945, %v944
        %v951 = vpack.c.bf16 %v947, %v946
        %v952 = vpack.c.bf16 %v948, %v948
        %v954 = vsel %vm870, %v949, 0
        %v957 = vsel %vm870, %v950, 0
        %v960 = vsel %vm870, %v951, 0
        %v963 = vsel %vm870, %v952, 0
        %vm965 = vcmask 1040384
        %v966 = vsel 0, 4294967295, 65535
        %v967 = vsel %vm965, %v966, 0
        %v969 = vand.u32 %v773, %v967
        %971 = vmatprep.subr.bf16.mxu0 0
        %972 = vmatpush1.bf16.msra.mxu0 %v770
        %973 = vmatprep.subr.bf16.mxu0 0
        %974 = vmatpush1.bf16.msra.mxu0 %v771
        %975 = vmatprep.subr.bf16.mxu0 0
        %976 = vmatpush1.bf16.msra.mxu0 %v772
        %977 = vmatprep.subr.bf16.mxu0 0
        %978 = vmatpush1.bf16.msra.mxu0 %v969
        %979 = vmatprep.subr.bf16.mxu0 0
        %980 = vmatpush1.bf16.msra.mxu0 0
        %981 = vmatprep.subr.bf16.mxu0 0
        %982 = vmatpush1.bf16.msra.mxu0 0
        %983 = vmatprep.subr.bf16.mxu0 0
        %984 = vmatpush1.bf16.msra.mxu0 0
        %985 = vmatprep.subr.bf16.mxu0 0
        %986 = vmatpush1.bf16.msra.mxu0 0
        %987 = vmatprep.subr.bf16.mxu0 0
        %988 = vmatpush1.bf16.msra.mxu0 0
        %989 = vmatprep.subr.bf16.mxu0 0
        %990 = vmatpush1.bf16.msra.mxu0 0
        %991 = vmatprep.subr.bf16.mxu0 0
        %992 = vmatpush1.bf16.msra.mxu0 0
        %993 = vmatprep.subr.bf16.mxu0 0
        %994 = vmatpush1.bf16.msra.mxu0 0
        %995 = vmatprep.subr.bf16.mxu0 0
        %996 = vmatpush1.bf16.msra.mxu0 0
        %997 = vmatprep.subr.bf16.mxu0 0
        %998 = vmatpush1.bf16.msra.mxu0 0
        %999 = vmatprep.subr.bf16.mxu0 0
        %1000 = vmatpush1.bf16.msra.mxu0 0
        %1001 = vmatprep.subr.bf16.mxu0 0
        %1002 = vmatpush1.bf16.msra.mxu0 0
        %1003 = vmatprep.mubr.bf16.mxu0 0
        %1004 = vmatmul.mubr.bf16.gmra.mrb[0].mxu0 %v954
        %v1005 = vpop.f32.mrb[0].mxu0
        %v1006 = vadd.f32 0.0, %v1005
        %v1007 = vpop.f32.mrb[0].mxu0
        %v1008 = vpop.f32.mrb[0].mxu0
        %v1009 = vadd.f32 0.0, %v1008
        %v1010 = vpop.f32.mrb[0].mxu0
        %1011 = vmatprep.mubr.bf16.mxu0 0
        %1012 = vmatmul.mubr.bf16.gmra.mrb[0].mxu0 %v957
        %v1013 = vpop.f32.mrb[0].mxu0
        %v1014 = vadd.f32 0.0, %v1013
        %v1015 = vpop.f32.mrb[0].mxu0
        %v1016 = vpop.f32.mrb[0].mxu0
        %v1017 = vadd.f32 0.0, %v1016
        %v1018 = vpop.f32.mrb[0].mxu0
        %1019 = vmatprep.mubr.bf16.mxu0 0
        %1020 = vmatmul.mubr.bf16.gmra.mrb[0].mxu0 %v960
        %v1021 = vpop.f32.mrb[0].mxu0
        %v1022 = vadd.f32 0.0, %v1021
        %v1023 = vpop.f32.mrb[0].mxu0
        %v1024 = vpop.f32.mrb[0].mxu0
        %v1025 = vadd.f32 0.0, %v1024
        %v1026 = vpop.f32.mrb[0].mxu0
        %1027 = vmatprep.mubr.bf16.mxu0 0
        %1028 = vmatmul.mubr.bf16.gmra.mrb[0].mxu0 %v963
        %v1029 = vpop.f32.mrb[0].mxu0
        %v1030 = vadd.f32 0.0, %v1029
        %v1031 = vpop.f32.mrb[0].mxu0
        %v1032 = vpop.f32.mrb[0].mxu0
        %v1033 = vpop.f32.mrb[0].mxu0
        %1034 = vdwg.mxu0
        %v1035 = vpack.c.bf16 %v1009, %v1006
        %v1036 = vpack.c.bf16 %v1017, %v1014
        %v1037 = vpack.c.bf16 %v1025, %v1022
        %v1038 = vpack.c.bf16 %v1030, %v1030
        %1043 = vrot.lane.b32.xlu0 %v602, 120
        %v1044 = vpop.permute.xlu0 %1043
        %1045 = vrot.lane.b32.xlu0 %v603, 120
        %v1046 = vpop.permute.xlu0 %1045
        %1047 = vrot.lane.b32.xlu0 %v604, 120
        %v1048 = vpop.permute.xlu0 %1047
        %1049 = vrot.lane.b32.xlu0 %v605, 120
        %v1050 = vpop.permute.xlu0 %1049
        %1055 = vrot.lane.b32.xlu0 %v686, 120
        %v1056 = vpop.permute.xlu0 %1055
        %1057 = vrot.lane.b32.xlu0 %v687, 120
        %v1058 = vpop.permute.xlu0 %1057
        %1059 = vrot.lane.b32.xlu0 %v688, 120
        %v1060 = vpop.permute.xlu0 %1059
        %1061 = vrot.lane.b32.xlu0 %v689, 120
        %v1062 = vpop.permute.xlu0 %1061
        %v1064 = vsel %vm774, %v1044, 0
        %v1067 = vsel %vm774, %v1046, 0
        %v1070 = vsel %vm774, %v1048, 0
        %v1073 = vsel %vm774, %v1050, 0
        %v1076 = vsel %vm774, %v1056, 0
        %v1079 = vsel %vm774, %v1058, 0
        %v1082 = vsel %vm774, %v1060, 0
        %v1085 = vsel %vm774, %v1062, 0
        %1087 = vmatprep.subr.bf16.mxu0 0
        %1088 = vmatpush1.bf16.xpose.msra.mxu0 %v1076
        %1089 = vmatprep.subr.bf16.mxu0 0
        %1090 = vmatpush1.bf16.xpose.msra.mxu0 %v1079
        %1091 = vmatprep.subr.bf16.mxu0 0
        %1092 = vmatpush1.bf16.xpose.msra.mxu0 %v1082
        %1093 = vmatprep.subr.bf16.mxu0 0
        %1094 = vmatpush1.bf16.xpose.msra.mxu0 %v1085
        %1095 = vmatprep.subr.bf16.mxu0 0
        %1096 = vmatpush1.bf16.xpose.msra.mxu0 0
        %1097 = vmatprep.subr.bf16.mxu0 0
        %1098 = vmatpush1.bf16.xpose.msra.mxu0 0
        %1099 = vmatprep.subr.bf16.mxu0 0
        %1100 = vmatpush1.bf16.xpose.msra.mxu0 0
        %1101 = vmatprep.subr.bf16.mxu0 0
        %1102 = vmatpush1.bf16.xpose.msra.mxu0 0
        %1103 = vmatprep.subr.bf16.mxu0 0
        %1104 = vmatpush1.bf16.xpose.msra.mxu0 0
        %1105 = vmatprep.subr.bf16.mxu0 0
        %1106 = vmatpush1.bf16.xpose.msra.mxu0 0
        %1107 = vmatprep.subr.bf16.mxu0 0
        %1108 = vmatpush1.bf16.xpose.msra.mxu0 0
        %1109 = vmatprep.subr.bf16.mxu0 0
        %1110 = vmatpush1.bf16.xpose.msra.mxu0 0
        %1111 = vmatprep.subr.bf16.mxu0 0
        %1112 = vmatpush1.bf16.xpose.msra.mxu0 0
        %1113 = vmatprep.subr.bf16.mxu0 0
        %1114 = vmatpush1.bf16.xpose.msra.mxu0 0
        %1115 = vmatprep.subr.bf16.mxu0 0
        %1116 = vmatpush1.bf16.xpose.msra.mxu0 0
        %1117 = vmatprep.subr.bf16.mxu0 0
        %1118 = vmatpush1.bf16.xpose.msra.mxu0 0
        %1119 = vmatprep.mubr.bf16.mxu0 0
        %1120 = vmatmul.mubr.bf16.gmra.mrb[0].mxu0 %v1064
        %v1121 = vpop.f32.mrb[0].mxu0
        %v1122 = vadd.f32 0.0, %v1121
        %v1123 = vpop.f32.mrb[0].mxu0
        %v1124 = vpop.f32.mrb[0].mxu0
        %v1125 = vadd.f32 0.0, %v1124
        %v1126 = vpop.f32.mrb[0].mxu0
        %1127 = vmatprep.mubr.bf16.mxu0 0
        %1128 = vmatmul.mubr.bf16.gmra.mrb[0].mxu0 %v1067
        %v1129 = vpop.f32.mrb[0].mxu0
        %v1130 = vadd.f32 0.0, %v1129
        %v1131 = vpop.f32.mrb[0].mxu0
        %v1132 = vpop.f32.mrb[0].mxu0
        %v1133 = vadd.f32 0.0, %v1132
        %v1134 = vpop.f32.mrb[0].mxu0
        %1135 = vmatprep.mubr.bf16.mxu0 0
        %1136 = vmatmul.mubr.bf16.gmra.mrb[0].mxu0 %v1070
        %v1137 = vpop.f32.mrb[0].mxu0
        %v1138 = vadd.f32 0.0, %v1137
        %v1139 = vpop.f32.mrb[0].mxu0
        %v1140 = vpop.f32.mrb[0].mxu0
        %v1141 = vadd.f32 0.0, %v1140
        %v1142 = vpop.f32.mrb[0].mxu0
        %1143 = vmatprep.mubr.bf16.mxu0 0
        %1144 = vmatmul.mubr.bf16.gmra.mrb[0].mxu0 %v1073
        %v1145 = vpop.f32.mrb[0].mxu0
        %v1146 = vadd.f32 0.0, %v1145
        %v1147 = vpop.f32.mrb[0].mxu0
        %v1148 = vpop.f32.mrb[0].mxu0
        %v1149 = vpop.f32.mrb[0].mxu0
        %1150 = vdwg.mxu0
        %v1151 = vmul.f32 %v1122, 0.35355338
        %v1152 = vmul.f32 %v1125, 0.35355338
        %v1153 = vmul.f32 %v1130, 0.35355338
        %v1154 = vmul.f32 %v1133, 0.35355338
        %v1155 = vmul.f32 %v1138, 0.35355338
        %v1156 = vmul.f32 %v1141, 0.35355338
        %v1157 = vmul.f32 %v1146, 0.35355338
        %v1158 = vsel %vm870, %v1151, -inf
        %1159 = vmax.xlane.f32.xlu0 %v1158
        %v1160 = vpop.xlane.xlu0 %1159
        %v1161 = vsel %vm870, %v1152, -inf
        %1162 = vmax.xlane.f32.xlu0 %v1161
        %v1163 = vpop.xlane.xlu0 %1162
        %v1164 = vsel %vm870, %v1153, -inf
        %1165 = vmax.xlane.f32.xlu0 %v1164
        %v1166 = vpop.xlane.xlu0 %1165
        %v1167 = vsel %vm870, %v1154, -inf
        %1168 = vmax.xlane.f32.xlu0 %v1167
        %v1169 = vpop.xlane.xlu0 %1168
        %v1170 = vsel %vm870, %v1155, -inf
        %1171 = vmax.xlane.f32.xlu0 %v1170
        %v1172 = vpop.xlane.xlu0 %1171
        %v1173 = vsel %vm870, %v1156, -inf
        %1174 = vmax.xlane.f32.xlu0 %v1173
        %v1175 = vpop.xlane.xlu0 %1174
        %v1176 = vsel %vm889, %v1157, -inf
        %1177 = vmax.xlane.f32.xlu0 %v1176
        %v1178 = vpop.xlane.xlu0 %1177
        %v1179 = vsub.f32 %v1151, %v1160
        %v1180 = vsub.f32 %v1152, %v1163
        %v1181 = vsub.f32 %v1153, %v1166
        %v1182 = vsub.f32 %v1154, %v1169
        %v1183 = vsub.f32 %v1155, %v1172
        %v1184 = vsub.f32 %v1156, %v1175
        %v1185 = vsub.f32 %v1157, %v1178
        %v1186 = vmul.f32 %v1179, 1.442695
        %v1187 = vpow.pop %v1186
        %v1188 = vmul.f32 %v1180, 1.442695
        %v1189 = vpow.pop %v1188
        %v1190 = vmul.f32 %v1181, 1.442695
        %v1191 = vpow.pop %v1190
        %v1192 = vmul.f32 %v1182, 1.442695
        %v1193 = vpow.pop %v1192
        %v1194 = vmul.f32 %v1183, 1.442695
        %v1195 = vpow.pop %v1194
        %v1196 = vmul.f32 %v1184, 1.442695
        %v1197 = vpow.pop %v1196
        %v1198 = vmul.f32 %v1185, 1.442695
        %v1199 = vpow.pop %v1198
        %v1200 = vsel %vm870, %v1187, 0.0
        %1201 = vadd.xlane.f32.xlu0 %v1200
        %v1202 = vpop.xlane.xlu0 %1201
        %v1203 = vsel %vm870, %v1189, 0.0
        %1204 = vadd.xlane.f32.xlu0 %v1203
        %v1205 = vpop.xlane.xlu0 %1204
        %v1206 = vsel %vm870, %v1191, 0.0
        %1207 = vadd.xlane.f32.xlu0 %v1206
        %v1208 = vpop.xlane.xlu0 %1207
        %v1209 = vsel %vm870, %v1193, 0.0
        %1210 = vadd.xlane.f32.xlu0 %v1209
        %v1211 = vpop.xlane.xlu0 %1210
        %v1212 = vsel %vm870, %v1195, 0.0
        %1213 = vadd.xlane.f32.xlu0 %v1212
        %v1214 = vpop.xlane.xlu0 %1213
        %v1215 = vsel %vm870, %v1197, 0.0
        %1216 = vadd.xlane.f32.xlu0 %v1215
        %v1217 = vpop.xlane.xlu0 %1216
        %v1218 = vsel %vm889, %v1199, 0.0
        %1219 = vadd.xlane.f32.xlu0 %v1218
        %v1220 = vpop.xlane.xlu0 %1219
        %v1221 = vrcp.pop %v1202
        %v1222 = vrcp.pop %v1205
        %v1223 = vrcp.pop %v1208
        %v1224 = vrcp.pop %v1211
        %v1225 = vrcp.pop %v1214
        %v1226 = vrcp.pop %v1217
        %v1227 = vrcp.pop %v1220
        %v1228 = vmul.f32 %v1187, %v1221
        %v1229 = vmul.f32 %v1189, %v1222
        %v1230 = vmul.f32 %v1191, %v1223
        %v1231 = vmul.f32 %v1193, %v1224
        %v1232 = vmul.f32 %v1195, %v1225
        %v1233 = vmul.f32 %v1197, %v1226
        %v1234 = vmul.f32 %v1199, %v1227
        %v1235 = vpack.c.bf16 %v1229, %v1228
        %v1236 = vpack.c.bf16 %v1231, %v1230
        %v1237 = vpack.c.bf16 %v1233, %v1232
        %v1238 = vpack.c.bf16 %v1234, %v1234
        %1243 = vrot.lane.b32.xlu0 %v770, 120
        %v1244 = vpop.permute.xlu0 %1243
        %1245 = vrot.lane.b32.xlu0 %v771, 120
        %v1246 = vpop.permute.xlu0 %1245
        %1247 = vrot.lane.b32.xlu0 %v772, 120
        %v1248 = vpop.permute.xlu0 %1247
        %1249 = vrot.lane.b32.xlu0 %v773, 120
        %v1250 = vpop.permute.xlu0 %1249
        %v1255 = vsel %vm870, %v1235, 0
        %v1258 = vsel %vm870, %v1236, 0
        %v1261 = vsel %vm870, %v1237, 0
        %v1264 = vsel %vm870, %v1238, 0
        %v1267 = vand.u32 %v1250, %v967
        %1269 = vmatprep.subr.bf16.mxu0 0
        %1270 = vmatpush1.bf16.msra.mxu0 %v1244
        %1271 = vmatprep.subr.bf16.mxu0 0
        %1272 = vmatpush1.bf16.msra.mxu0 %v1246
        %1273 = vmatprep.subr.bf16.mxu0 0
        %1274 = vmatpush1.bf16.msra.mxu0 %v1248
        %1275 = vmatprep.subr.bf16.mxu0 0
        %1276 = vmatpush1.bf16.msra.mxu0 %v1267
        %1277 = vmatprep.subr.bf16.mxu0 0
        %1278 = vmatpush1.bf16.msra.mxu0 0
        %1279 = vmatprep.subr.bf16.mxu0 0
        %1280 = vmatpush1.bf16.msra.mxu0 0
        %1281 = vmatprep.subr.bf16.mxu0 0
        %1282 = vmatpush1.bf16.msra.mxu0 0
        %1283 = vmatprep.subr.bf16.mxu0 0
        %1284 = vmatpush1.bf16.msra.mxu0 0
        %1285 = vmatprep.subr.bf16.mxu0 0
        %1286 = vmatpush1.bf16.msra.mxu0 0
        %1287 = vmatprep.subr.bf16.mxu0 0
        %1288 = vmatpush1.bf16.msra.mxu0 0
        %1289 = vmatprep.subr.bf16.mxu0 0
        %1290 = vmatpush1.bf16.msra.mxu0 0
        %1291 = vmatprep.subr.bf16.mxu0 0
        %1292 = vmatpush1.bf16.msra.mxu0 0
        %1293 = vmatprep.subr.bf16.mxu0 0
        %1294 = vmatpush1.bf16.msra.mxu0 0
        %1295 = vmatprep.subr.bf16.mxu0 0
        %1296 = vmatpush1.bf16.msra.mxu0 0
        %1297 = vmatprep.subr.bf16.mxu0 0
        %1298 = vmatpush1.bf16.msra.mxu0 0
        %1299 = vmatprep.subr.bf16.mxu0 0
        %1300 = vmatpush1.bf16.msra.mxu0 0
        %1301 = vmatprep.mubr.bf16.mxu0 0
        %1302 = vmatmul.mubr.bf16.gmra.mrb[0].mxu0 %v1255
        %v1303 = vpop.f32.mrb[0].mxu0
        %v1304 = vadd.f32 0.0, %v1303
        %v1305 = vpop.f32.mrb[0].mxu0
        %v1306 = vpop.f32.mrb[0].mxu0
        %v1307 = vadd.f32 0.0, %v1306
        %v1308 = vpop.f32.mrb[0].mxu0
        %1309 = vmatprep.mubr.bf16.mxu0 0
        %1310 = vmatmul.mubr.bf16.gmra.mrb[0].mxu0 %v1258
        %v1311 = vpop.f32.mrb[0].mxu0
        %v1312 = vadd.f32 0.0, %v1311
        %v1313 = vpop.f32.mrb[0].mxu0
        %v1314 = vpop.f32.mrb[0].mxu0
        %v1315 = vadd.f32 0.0, %v1314
        %v1316 = vpop.f32.mrb[0].mxu0
        %1317 = vmatprep.mubr.bf16.mxu0 0
        %1318 = vmatmul.mubr.bf16.gmra.mrb[0].mxu0 %v1261
        %v1319 = vpop.f32.mrb[0].mxu0
        %v1320 = vadd.f32 0.0, %v1319
        %v1321 = vpop.f32.mrb[0].mxu0
        %v1322 = vpop.f32.mrb[0].mxu0
        %v1323 = vadd.f32 0.0, %v1322
        %v1324 = vpop.f32.mrb[0].mxu0
        %1325 = vmatprep.mubr.bf16.mxu0 0
        %1326 = vmatmul.mubr.bf16.gmra.mrb[0].mxu0 %v1264
        %v1327 = vpop.f32.mrb[0].mxu0
        %v1328 = vadd.f32 0.0, %v1327
        %v1329 = vpop.f32.mrb[0].mxu0
        %v1330 = vpop.f32.mrb[0].mxu0
        %v1331 = vpop.f32.mrb[0].mxu0
        %1332 = vdwg.mxu0
        %v1333 = vpack.c.bf16 %v1307, %v1304
        %v1334 = vpack.c.bf16 %v1315, %v1312
        %v1335 = vpack.c.bf16 %v1323, %v1320
        %v1336 = vpack.c.bf16 %v1328, %v1328
        %v1338 = vsel %vm774, %v1333, 0
        %v1341 = vsel %vm774, %v1334, 0
        %v1344 = vsel %vm774, %v1335, 0
        %v1347 = vsel %vm774, %v1336, 0
        %vm1349 = vcmask 1043456
        %v1351 = vsel %vm1349, %v502, 0
        %1353 = vmatprep.subr.bf16.mxu0 0
        %1354 = vmatpush1.bf16.msra.mxu0 %v1351
        %1355 = vmatprep.subr.bf16.mxu0 0
        %1356 = vmatpush1.bf16.msra.mxu0 0
        %1357 = vmatprep.subr.bf16.mxu0 0
        %1358 = vmatpush1.bf16.msra.mxu0 0
        %1359 = vmatprep.subr.bf16.mxu0 0
        %1360 = vmatpush1.bf16.msra.mxu0 0
        %1361 = vmatprep.subr.bf16.mxu0 0
        %1362 = vmatpush1.bf16.msra.mxu0 0
        %1363 = vmatprep.subr.bf16.mxu0 0
        %1364 = vmatpush1.bf16.msra.mxu0 0
        %1365 = vmatprep.subr.bf16.mxu0 0
        %1366 = vmatpush1.bf16.msra.mxu0 0
        %1367 = vmatprep.subr.bf16.mxu0 0
        %1368 = vmatpush1.bf16.msra.mxu0 0
        %1369 = vmatprep.subr.bf16.mxu0 0
        %1370 = vmatpush1.bf16.msra.mxu0 0
        %1371 = vmatprep.subr.bf16.mxu0 0
        %1372 = vmatpush1.bf16.msra.mxu0 0
        %1373 = vmatprep.subr.bf16.mxu0 0
        %1374 = vmatpush1.bf16.msra.mxu0 0
        %1375 = vmatprep.subr.bf16.mxu0 0
        %1376 = vmatpush1.bf16.msra.mxu0 0
        %1377 = vmatprep.subr.bf16.mxu0 0
        %1378 = vmatpush1.bf16.msra.mxu0 0
        %1379 = vmatprep.subr.bf16.mxu0 0
        %1380 = vmatpush1.bf16.msra.mxu0 0
        %1381 = vmatprep.subr.bf16.mxu0 0
        %1382 = vmatpush1.bf16.msra.mxu0 0
        %1383 = vmatprep.subr.bf16.mxu0 0
        %1384 = vmatpush1.bf16.msra.mxu0 0
        %1385 = vmatprep.mubr.bf16.mxu0 0
        %1386 = vmatmul.mubr.bf16.gmra.mrb[0].mxu0 %v1338
        %v1387 = vpop.f32.mrb[0].mxu0
        %v1388 = vadd.f32 0.0, %v1387
        %v1389 = vpop.f32.mrb[0].mxu0
        %v1390 = vpop.f32.mrb[0].mxu0
        %v1391 = vadd.f32 0.0, %v1390
        %v1392 = vpop.f32.mrb[0].mxu0
        %1393 = vmatprep.mubr.bf16.mxu0 0
        %1394 = vmatmul.mubr.bf16.gmra.mrb[0].mxu0 %v1341
        %v1395 = vpop.f32.mrb[0].mxu0
        %v1396 = vadd.f32 0.0, %v1395
        %v1397 = vpop.f32.mrb[0].mxu0
        %v1398 = vpop.f32.mrb[0].mxu0
        %v1399 = vadd.f32 0.0, %v1398
        %v1400 = vpop.f32.mrb[0].mxu0
        %1401 = vmatprep.mubr.bf16.mxu0 0
        %1402 = vmatmul.mubr.bf16.gmra.mrb[0].mxu0 %v1344
        %v1403 = vpop.f32.mrb[0].mxu0
        %v1404 = vadd.f32 0.0, %v1403
        %v1405 = vpop.f32.mrb[0].mxu0
        %v1406 = vpop.f32.mrb[0].mxu0
        %v1407 = vadd.f32 0.0, %v1406
        %v1408 = vpop.f32.mrb[0].mxu0
        %1409 = vmatprep.mubr.bf16.mxu0 0
        %1410 = vmatmul.mubr.bf16.gmra.mrb[0].mxu0 %v1347
        %v1411 = vpop.f32.mrb[0].mxu0
        %v1412 = vadd.f32 0.0, %v1411
        %v1413 = vpop.f32.mrb[0].mxu0
        %v1414 = vpop.f32.mrb[0].mxu0
        %v1415 = vpop.f32.mrb[0].mxu0
        %1416 = vdwg.mxu0
        %v1418 = vsel %vm774, %v1035, 0
        %v1421 = vsel %vm774, %v1036, 0
        %v1424 = vsel %vm774, %v1037, 0
        %v1427 = vsel %vm774, %v1038, 0
        %v1430 = vsel %vm1349, %v501, 0
        %1432 = vmatprep.subr.bf16.mxu0 0
        %1433 = vmatpush1.bf16.msra.mxu0 %v1430
        %1434 = vmatprep.subr.bf16.mxu0 0
        %1435 = vmatpush1.bf16.msra.mxu0 0
        %1436 = vmatprep.subr.bf16.mxu0 0
        %1437 = vmatpush1.bf16.msra.mxu0 0
        %1438 = vmatprep.subr.bf16.mxu0 0
        %1439 = vmatpush1.bf16.msra.mxu0 0
        %1440 = vmatprep.subr.bf16.mxu0 0
        %1441 = vmatpush1.bf16.msra.mxu0 0
        %1442 = vmatprep.subr.bf16.mxu0 0
        %1443 = vmatpush1.bf16.msra.mxu0 0
        %1444 = vmatprep.subr.bf16.mxu0 0
        %1445 = vmatpush1.bf16.msra.mxu0 0
        %1446 = vmatprep.subr.bf16.mxu0 0
        %1447 = vmatpush1.bf16.msra.mxu0 0
        %1448 = vmatprep.subr.bf16.mxu0 0
        %1449 = vmatpush1.bf16.msra.mxu0 0
        %1450 = vmatprep.subr.bf16.mxu0 0
        %1451 = vmatpush1.bf16.msra.mxu0 0
        %1452 = vmatprep.subr.bf16.mxu0 0
        %1453 = vmatpush1.bf16.msra.mxu0 0
        %1454 = vmatprep.subr.bf16.mxu0 0
        %1455 = vmatpush1.bf16.msra.mxu0 0
        %1456 = vmatprep.subr.bf16.mxu0 0
        %1457 = vmatpush1.bf16.msra.mxu0 0
        %1458 = vmatprep.subr.bf16.mxu0 0
        %1459 = vmatpush1.bf16.msra.mxu0 0
        %1460 = vmatprep.subr.bf16.mxu0 0
        %1461 = vmatpush1.bf16.msra.mxu0 0
        %1462 = vmatprep.subr.bf16.mxu0 0
        %1463 = vmatpush1.bf16.msra.mxu0 0
        %1464 = vmatprep.mubr.bf16.mxu0 0
        %1465 = vmatmul.mubr.bf16.gmra.mrb[0].mxu0 %v1418
        %v1466 = vpop.f32.mrb[0].mxu0
        %v1467 = vadd.f32 %v1388, %v1466
        %v1468 = vpop.f32.mrb[0].mxu0
        %v1469 = vpop.f32.mrb[0].mxu0
        %v1470 = vadd.f32 %v1391, %v1469
        %v1471 = vpop.f32.mrb[0].mxu0
        %1472 = vmatprep.mubr.bf16.mxu0 0
        %1473 = vmatmul.mubr.bf16.gmra.mrb[0].mxu0 %v1421
        %v1474 = vpop.f32.mrb[0].mxu0
        %v1475 = vadd.f32 %v1396, %v1474
        %v1476 = vpop.f32.mrb[0].mxu0
        %v1477 = vpop.f32.mrb[0].mxu0
        %v1478 = vadd.f32 %v1399, %v1477
        %v1479 = vpop.f32.mrb[0].mxu0
        %1480 = vmatprep.mubr.bf16.mxu0 0
        %1481 = vmatmul.mubr.bf16.gmra.mrb[0].mxu0 %v1424
        %v1482 = vpop.f32.mrb[0].mxu0
        %v1483 = vadd.f32 %v1404, %v1482
        %v1484 = vpop.f32.mrb[0].mxu0
        %v1485 = vpop.f32.mrb[0].mxu0
        %v1486 = vadd.f32 %v1407, %v1485
        %v1487 = vpop.f32.mrb[0].mxu0
        %1488 = vmatprep.mubr.bf16.mxu0 0
        %1489 = vmatmul.mubr.bf16.gmra.mrb[0].mxu0 %v1427
        %v1490 = vpop.f32.mrb[0].mxu0
        %v1491 = vadd.f32 %v1412, %v1490
        %v1492 = vpop.f32.mrb[0].mxu0
        %v1493 = vpop.f32.mrb[0].mxu0
        %v1494 = vpop.f32.mrb[0].mxu0
        %1495 = vdwg.mxu0
        %1496 = vrot.lane.b32.xlu0 %v602, 112
        %v1497 = vpop.permute.xlu0 %1496
        %1498 = vrot.lane.b32.xlu0 %v603, 112
        %v1499 = vpop.permute.xlu0 %1498
        %1500 = vrot.lane.b32.xlu0 %v604, 112
        %v1501 = vpop.permute.xlu0 %1500
        %1502 = vrot.lane.b32.xlu0 %v605, 112
        %v1503 = vpop.permute.xlu0 %1502
        %1504 = vrot.lane.b32.xlu0 %v686, 112
        %v1505 = vpop.permute.xlu0 %1504
        %1506 = vrot.lane.b32.xlu0 %v687, 112
        %v1507 = vpop.permute.xlu0 %1506
        %1508 = vrot.lane.b32.xlu0 %v688, 112
        %v1509 = vpop.permute.xlu0 %1508
        %1510 = vrot.lane.b32.xlu0 %v689, 112
        %v1511 = vpop.permute.xlu0 %1510
        %v1513 = vsel %vm774, %v1497, 0
        %v1516 = vsel %vm774, %v1499, 0
        %v1519 = vsel %vm774, %v1501, 0
        %v1522 = vsel %vm774, %v1503, 0
        %v1525 = vsel %vm774, %v1505, 0
        %v1528 = vsel %vm774, %v1507, 0
        %v1531 = vsel %vm774, %v1509, 0
        %v1534 = vsel %vm774, %v1511, 0
        %1536 = vmatprep.subr.bf16.mxu0 0
        %1537 = vmatpush1.bf16.xpose.msra.mxu0 %v1525
        %1538 = vmatprep.subr.bf16.mxu0 0
        %1539 = vmatpush1.bf16.xpose.msra.mxu0 %v1528
        %1540 = vmatprep.subr.bf16.mxu0 0
        %1541 = vmatpush1.bf16.xpose.msra.mxu0 %v1531
        %1542 = vmatprep.subr.bf16.mxu0 0
        %1543 = vmatpush1.bf16.xpose.msra.mxu0 %v1534
        %1544 = vmatprep.subr.bf16.mxu0 0
        %1545 = vmatpush1.bf16.xpose.msra.mxu0 0
        %1546 = vmatprep.subr.bf16.mxu0 0
        %1547 = vmatpush1.bf16.xpose.msra.mxu0 0
        %1548 = vmatprep.subr.bf16.mxu0 0
        %1549 = vmatpush1.bf16.xpose.msra.mxu0 0
        %1550 = vmatprep.subr.bf16.mxu0 0
        %1551 = vmatpush1.bf16.xpose.msra.mxu0 0
        %1552 = vmatprep.subr.bf16.mxu0 0
        %1553 = vmatpush1.bf16.xpose.msra.mxu0 0
        %1554 = vmatprep.subr.bf16.mxu0 0
        %1555 = vmatpush1.bf16.xpose.msra.mxu0 0
        %1556 = vmatprep.subr.bf16.mxu0 0
        %1557 = vmatpush1.bf16.xpose.msra.mxu0 0
        %1558 = vmatprep.subr.bf16.mxu0 0
        %1559 = vmatpush1.bf16.xpose.msra.mxu0 0
        %1560 = vmatprep.subr.bf16.mxu0 0
        %1561 = vmatpush1.bf16.xpose.msra.mxu0 0
        %1562 = vmatprep.subr.bf16.mxu0 0
        %1563 = vmatpush1.bf16.xpose.msra.mxu0 0
        %1564 = vmatprep.subr.bf16.mxu0 0
        %1565 = vmatpush1.bf16.xpose.msra.mxu0 0
        %1566 = vmatprep.subr.bf16.mxu0 0
        %1567 = vmatpush1.bf16.xpose.msra.mxu0 0
        %1568 = vmatprep.mubr.bf16.mxu0 0
        %1569 = vmatmul.mubr.bf16.gmra.mrb[0].mxu0 %v1513
        %v1570 = vpop.f32.mrb[0].mxu0
        %v1571 = vadd.f32 0.0, %v1570
        %v1572 = vpop.f32.mrb[0].mxu0
        %v1573 = vpop.f32.mrb[0].mxu0
        %v1574 = vadd.f32 0.0, %v1573
        %v1575 = vpop.f32.mrb[0].mxu0
        %1576 = vmatprep.mubr.bf16.mxu0 0
        %1577 = vmatmul.mubr.bf16.gmra.mrb[0].mxu0 %v1516
        %v1578 = vpop.f32.mrb[0].mxu0
        %v1579 = vadd.f32 0.0, %v1578
        %v1580 = vpop.f32.mrb[0].mxu0
        %v1581 = vpop.f32.mrb[0].mxu0
        %v1582 = vadd.f32 0.0, %v1581
        %v1583 = vpop.f32.mrb[0].mxu0
        %1584 = vmatprep.mubr.bf16.mxu0 0
        %1585 = vmatmul.mubr.bf16.gmra.mrb[0].mxu0 %v1519
        %v1586 = vpop.f32.mrb[0].mxu0
        %v1587 = vadd.f32 0.0, %v1586
        %v1588 = vpop.f32.mrb[0].mxu0
        %v1589 = vpop.f32.mrb[0].mxu0
        %v1590 = vadd.f32 0.0, %v1589
        %v1591 = vpop.f32.mrb[0].mxu0
        %1592 = vmatprep.mubr.bf16.mxu0 0
        %1593 = vmatmul.mubr.bf16.gmra.mrb[0].mxu0 %v1522
        %v1594 = vpop.f32.mrb[0].mxu0
        %v1595 = vadd.f32 0.0, %v1594
        %v1596 = vpop.f32.mrb[0].mxu0
        %v1597 = vpop.f32.mrb[0].mxu0
        %v1598 = vpop.f32.mrb[0].mxu0
        %1599 = vdwg.mxu0
        %v1600 = vmul.f32 %v1571, 0.35355338
        %v1601 = vmul.f32 %v1574, 0.35355338
        %v1602 = vmul.f32 %v1579, 0.35355338
        %v1603 = vmul.f32 %v1582, 0.35355338
        %v1604 = vmul.f32 %v1587, 0.35355338
        %v1605 = vmul.f32 %v1590, 0.35355338
        %v1606 = vmul.f32 %v1595, 0.35355338
        %v1607 = vsel %vm870, %v1600, -inf
        %1608 = vmax.xlane.f32.xlu0 %v1607
        %v1609 = vpop.xlane.xlu0 %1608
        %v1610 = vsel %vm870, %v1601, -inf
        %1611 = vmax.xlane.f32.xlu0 %v1610
        %v1612 = vpop.xlane.xlu0 %1611
        %v1613 = vsel %vm870, %v1602, -inf
        %1614 = vmax.xlane.f32.xlu0 %v1613
        %v1615 = vpop.xlane.xlu0 %1614
        %v1616 = vsel %vm870, %v1603, -inf
        %1617 = vmax.xlane.f32.xlu0 %v1616
        %v1618 = vpop.xlane.xlu0 %1617
        %v1619 = vsel %vm870, %v1604, -inf
        %1620 = vmax.xlane.f32.xlu0 %v1619
        %v1621 = vpop.xlane.xlu0 %1620
        %v1622 = vsel %vm870, %v1605, -inf
        %1623 = vmax.xlane.f32.xlu0 %v1622
        %v1624 = vpop.xlane.xlu0 %1623
        %v1625 = vsel %vm889, %v1606, -inf
        %1626 = vmax.xlane.f32.xlu0 %v1625
        %v1627 = vpop.xlane.xlu0 %1626
        %v1628 = vsub.f32 %v1600, %v1609
        %v1629 = vsub.f32 %v1601, %v1612
        %v1630 = vsub.f32 %v1602, %v1615
        %v1631 = vsub.f32 %v1603, %v1618
        %v1632 = vsub.f32 %v1604, %v1621
        %v1633 = vsub.f32 %v1605, %v1624
        %v1634 = vsub.f32 %v1606, %v1627
        %v1635 = vmul.f32 %v1628, 1.442695
        %v1636 = vpow.pop %v1635
        %v1637 = vmul.f32 %v1629, 1.442695
        %v1638 = vpow.pop %v1637
        %v1639 = vmul.f32 %v1630, 1.442695
        %v1640 = vpow.pop %v1639
        %v1641 = vmul.f32 %v1631, 1.442695
        %v1642 = vpow.pop %v1641
        %v1643 = vmul.f32 %v1632, 1.442695
        %v1644 = vpow.pop %v1643
        %v1645 = vmul.f32 %v1633, 1.442695
        %v1646 = vpow.pop %v1645
        %v1647 = vmul.f32 %v1634, 1.442695
        %v1648 = vpow.pop %v1647
        %v1649 = vsel %vm870, %v1636, 0.0
        %1650 = vadd.xlane.f32.xlu0 %v1649
        %v1651 = vpop.xlane.xlu0 %1650
        %v1652 = vsel %vm870, %v1638, 0.0
        %1653 = vadd.xlane.f32.xlu0 %v1652
        %v1654 = vpop.xlane.xlu0 %1653
        %v1655 = vsel %vm870, %v1640, 0.0
        %1656 = vadd.xlane.f32.xlu0 %v1655
        %v1657 = vpop.xlane.xlu0 %1656
        %v1658 = vsel %vm870, %v1642, 0.0
        %1659 = vadd.xlane.f32.xlu0 %v1658
        %v1660 = vpop.xlane.xlu0 %1659
        %v1661 = vsel %vm870, %v1644, 0.0
        %1662 = vadd.xlane.f32.xlu0 %v1661
        %v1663 = vpop.xlane.xlu0 %1662
        %v1664 = vsel %vm870, %v1646, 0.0
        %1665 = vadd.xlane.f32.xlu0 %v1664
        %v1666 = vpop.xlane.xlu0 %1665
        %v1667 = vsel %vm889, %v1648, 0.0
        %1668 = vadd.xlane.f32.xlu0 %v1667
        %v1669 = vpop.xlane.xlu0 %1668
        %v1670 = vrcp.pop %v1651
        %v1671 = vrcp.pop %v1654
        %v1672 = vrcp.pop %v1657
        %v1673 = vrcp.pop %v1660
        %v1674 = vrcp.pop %v1663
        %v1675 = vrcp.pop %v1666
        %v1676 = vrcp.pop %v1669
        %v1677 = vmul.f32 %v1636, %v1670
        %v1678 = vmul.f32 %v1638, %v1671
        %v1679 = vmul.f32 %v1640, %v1672
        %v1680 = vmul.f32 %v1642, %v1673
        %v1681 = vmul.f32 %v1644, %v1674
        %v1682 = vmul.f32 %v1646, %v1675
        %v1683 = vmul.f32 %v1648, %v1676
        %v1684 = vpack.c.bf16 %v1678, %v1677
        %v1685 = vpack.c.bf16 %v1680, %v1679
        %v1686 = vpack.c.bf16 %v1682, %v1681
        %v1687 = vpack.c.bf16 %v1683, %v1683
        %1688 = vrot.lane.b32.xlu0 %v770, 112
        %v1689 = vpop.permute.xlu0 %1688
        %1690 = vrot.lane.b32.xlu0 %v771, 112
        %v1691 = vpop.permute.xlu0 %1690
        %1692 = vrot.lane.b32.xlu0 %v772, 112
        %v1693 = vpop.permute.xlu0 %1692
        %1694 = vrot.lane.b32.xlu0 %v773, 112
        %v1695 = vpop.permute.xlu0 %1694
        %v1700 = vsel %vm870, %v1684, 0
        %v1703 = vsel %vm870, %v1685, 0
        %v1706 = vsel %vm870, %v1686, 0
        %v1709 = vsel %vm870, %v1687, 0
        %v1712 = vand.u32 %v1695, %v967
        %1714 = vmatprep.subr.bf16.mxu0 0
        %1715 = vmatpush1.bf16.msra.mxu0 %v1689
        %1716 = vmatprep.subr.bf16.mxu0 0
        %1717 = vmatpush1.bf16.msra.mxu0 %v1691
        %1718 = vmatprep.subr.bf16.mxu0 0
        %1719 = vmatpush1.bf16.msra.mxu0 %v1693
        %1720 = vmatprep.subr.bf16.mxu0 0
        %1721 = vmatpush1.bf16.msra.mxu0 %v1712
        %1722 = vmatprep.subr.bf16.mxu0 0
        %1723 = vmatpush1.bf16.msra.mxu0 0
        %1724 = vmatprep.subr.bf16.mxu0 0
        %1725 = vmatpush1.bf16.msra.mxu0 0
        %1726 = vmatprep.subr.bf16.mxu0 0
        %1727 = vmatpush1.bf16.msra.mxu0 0
        %1728 = vmatprep.subr.bf16.mxu0 0
        %1729 = vmatpush1.bf16.msra.mxu0 0
        %1730 = vmatprep.subr.bf16.mxu0 0
        %1731 = vmatpush1.bf16.msra.mxu0 0
        %1732 = vmatprep.subr.bf16.mxu0 0
        %1733 = vmatpush1.bf16.msra.mxu0 0
        %1734 = vmatprep.subr.bf16.mxu0 0
        %1735 = vmatpush1.bf16.msra.mxu0 0
        %1736 = vmatprep.subr.bf16.mxu0 0
        %1737 = vmatpush1.bf16.msra.mxu0 0
        %1738 = vmatprep.subr.bf16.mxu0 0
        %1739 = vmatpush1.bf16.msra.mxu0 0
        %1740 = vmatprep.subr.bf16.mxu0 0
        %1741 = vmatpush1.bf16.msra.mxu0 0
        %1742 = vmatprep.subr.bf16.mxu0 0
        %1743 = vmatpush1.bf16.msra.mxu0 0
        %1744 = vmatprep.subr.bf16.mxu0 0
        %1745 = vmatpush1.bf16.msra.mxu0 0
        %1746 = vmatprep.mubr.bf16.mxu0 0
        %1747 = vmatmul.mubr.bf16.gmra.mrb[0].mxu0 %v1700
        %v1748 = vpop.f32.mrb[0].mxu0
        %v1749 = vadd.f32 0.0, %v1748
        %v1750 = vpop.f32.mrb[0].mxu0
        %v1751 = vpop.f32.mrb[0].mxu0
        %v1752 = vadd.f32 0.0, %v1751
        %v1753 = vpop.f32.mrb[0].mxu0
        %1754 = vmatprep.mubr.bf16.mxu0 0
        %1755 = vmatmul.mubr.bf16.gmra.mrb[0].mxu0 %v1703
        %v1756 = vpop.f32.mrb[0].mxu0
        %v1757 = vadd.f32 0.0, %v1756
        %v1758 = vpop.f32.mrb[0].mxu0
        %v1759 = vpop.f32.mrb[0].mxu0
        %v1760 = vadd.f32 0.0, %v1759
        %v1761 = vpop.f32.mrb[0].mxu0
        %1762 = vmatprep.mubr.bf16.mxu0 0
        %1763 = vmatmul.mubr.bf16.gmra.mrb[0].mxu0 %v1706
        %v1764 = vpop.f32.mrb[0].mxu0
        %v1765 = vadd.f32 0.0, %v1764
        %v1766 = vpop.f32.mrb[0].mxu0
        %v1767 = vpop.f32.mrb[0].mxu0
        %v1768 = vadd.f32 0.0, %v1767
        %v1769 = vpop.f32.mrb[0].mxu0
        %1770 = vmatprep.mubr.bf16.mxu0 0
        %1771 = vmatmul.mubr.bf16.gmra.mrb[0].mxu0 %v1709
        %v1772 = vpop.f32.mrb[0].mxu0
        %v1773 = vadd.f32 0.0, %v1772
        %v1774 = vpop.f32.mrb[0].mxu0
        %v1775 = vpop.f32.mrb[0].mxu0
        %v1776 = vpop.f32.mrb[0].mxu0
        %1777 = vdwg.mxu0
        %v1778 = vpack.c.bf16 %v1752, %v1749
        %v1779 = vpack.c.bf16 %v1760, %v1757
        %v1780 = vpack.c.bf16 %v1768, %v1765
        %v1781 = vpack.c.bf16 %v1773, %v1773
        %v1783 = vsel %vm774, %v1778, 0
        %v1786 = vsel %vm774, %v1779, 0
        %v1789 = vsel %vm774, %v1780, 0
        %v1792 = vsel %vm774, %v1781, 0
        %v1795 = vsel %vm1349, %v503, 0
        %1797 = vmatprep.subr.bf16.mxu0 0
        %1798 = vmatpush1.bf16.msra.mxu0 %v1795
        %1799 = vmatprep.subr.bf16.mxu0 0
        %1800 = vmatpush1.bf16.msra.mxu0 0
        %1801 = vmatprep.subr.bf16.mxu0 0
        %1802 = vmatpush1.bf16.msra.mxu0 0
        %1803 = vmatprep.subr.bf16.mxu0 0
        %1804 = vmatpush1.bf16.msra.mxu0 0
        %1805 = vmatprep.subr.bf16.mxu0 0
        %1806 = vmatpush1.bf16.msra.mxu0 0
        %1807 = vmatprep.subr.bf16.mxu0 0
        %1808 = vmatpush1.bf16.msra.mxu0 0
        %1809 = vmatprep.subr.bf16.mxu0 0
        %1810 = vmatpush1.bf16.msra.mxu0 0
        %1811 = vmatprep.subr.bf16.mxu0 0
        %1812 = vmatpush1.bf16.msra.mxu0 0
        %1813 = vmatprep.subr.bf16.mxu0 0
        %1814 = vmatpush1.bf16.msra.mxu0 0
        %1815 = vmatprep.subr.bf16.mxu0 0
        %1816 = vmatpush1.bf16.msra.mxu0 0
        %1817 = vmatprep.subr.bf16.mxu0 0
        %1818 = vmatpush1.bf16.msra.mxu0 0
        %1819 = vmatprep.subr.bf16.mxu0 0
        %1820 = vmatpush1.bf16.msra.mxu0 0
        %1821 = vmatprep.subr.bf16.mxu0 0
        %1822 = vmatpush1.bf16.msra.mxu0 0
        %1823 = vmatprep.subr.bf16.mxu0 0
        %1824 = vmatpush1.bf16.msra.mxu0 0
        %1825 = vmatprep.subr.bf16.mxu0 0
        %1826 = vmatpush1.bf16.msra.mxu0 0
        %1827 = vmatprep.subr.bf16.mxu0 0
        %1828 = vmatpush1.bf16.msra.mxu0 0
        %1829 = vmatprep.mubr.bf16.mxu0 0
        %1830 = vmatmul.mubr.bf16.gmra.mrb[0].mxu0 %v1783
        %v1831 = vpop.f32.mrb[0].mxu0
        %v1832 = vadd.f32 0.0, %v1831
        %v1833 = vpop.f32.mrb[0].mxu0
        %v1834 = vpop.f32.mrb[0].mxu0
        %v1835 = vadd.f32 0.0, %v1834
        %v1836 = vpop.f32.mrb[0].mxu0
        %1837 = vmatprep.mubr.bf16.mxu0 0
        %1838 = vmatmul.mubr.bf16.gmra.mrb[0].mxu0 %v1786
        %v1839 = vpop.f32.mrb[0].mxu0
        %v1840 = vadd.f32 0.0, %v1839
        %v1841 = vpop.f32.mrb[0].mxu0
        %v1842 = vpop.f32.mrb[0].mxu0
        %v1843 = vadd.f32 0.0, %v1842
        %v1844 = vpop.f32.mrb[0].mxu0
        %1845 = vmatprep.mubr.bf16.mxu0 0
        %1846 = vmatmul.mubr.bf16.gmra.mrb[0].mxu0 %v1789
        %v1847 = vpop.f32.mrb[0].mxu0
        %v1848 = vadd.f32 0.0, %v1847
        %v1849 = vpop.f32.mrb[0].mxu0
        %v1850 = vpop.f32.mrb[0].mxu0
        %v1851 = vadd.f32 0.0, %v1850
        %v1852 = vpop.f32.mrb[0].mxu0
        %1853 = vmatprep.mubr.bf16.mxu0 0
        %1854 = vmatmul.mubr.bf16.gmra.mrb[0].mxu0 %v1792
        %v1855 = vpop.f32.mrb[0].mxu0
        %v1856 = vadd.f32 0.0, %v1855
        %v1857 = vpop.f32.mrb[0].mxu0
        %v1858 = vpop.f32.mrb[0].mxu0
        %v1859 = vpop.f32.mrb[0].mxu0
        %1860 = vdwg.mxu0
        %v1861 = vadd.f32 %v1467, %v1832
        %v1862 = vadd.f32 %v1470, %v1835
        %v1863 = vadd.f32 %v1475, %v1840
        %v1864 = vadd.f32 %v1478, %v1843
        %v1865 = vadd.f32 %v1483, %v1848
        %v1866 = vadd.f32 %v1486, %v1851
        %v1867 = vadd.f32 %v1491, %v1856
        %1868 = vrot.lane.b32.xlu0 %v602, 104
        %v1869 = vpop.permute.xlu0 %1868
        %1870 = vrot.lane.b32.xlu0 %v603, 104
        %v1871 = vpop.permute.xlu0 %1870
        %1872 = vrot.lane.b32.xlu0 %v604, 104
        %v1873 = vpop.permute.xlu0 %1872
        %1874 = vrot.lane.b32.xlu0 %v605, 104
        %v1875 = vpop.permute.xlu0 %1874
        %1876 = vrot.lane.b32.xlu0 %v686, 104
        %v1877 = vpop.permute.xlu0 %1876
        %1878 = vrot.lane.b32.xlu0 %v687, 104
        %v1879 = vpop.permute.xlu0 %1878
        %1880 = vrot.lane.b32.xlu0 %v688, 104
        %v1881 = vpop.permute.xlu0 %1880
        %1882 = vrot.lane.b32.xlu0 %v689, 104
        %v1883 = vpop.permute.xlu0 %1882
        %v1885 = vsel %vm774, %v1869, 0
        %v1888 = vsel %vm774, %v1871, 0
        %v1891 = vsel %vm774, %v1873, 0
        %v1894 = vsel %vm774, %v1875, 0
        %v1897 = vsel %vm774, %v1877, 0
        %v1900 = vsel %vm774, %v1879, 0
        %v1903 = vsel %vm774, %v1881, 0
        %v1906 = vsel %vm774, %v1883, 0
        %1908 = vmatprep.subr.bf16.mxu0 0
        %1909 = vmatpush1.bf16.xpose.msra.mxu0 %v1897
        %1910 = vmatprep.subr.bf16.mxu0 0
        %1911 = vmatpush1.bf16.xpose.msra.mxu0 %v1900
        %1912 = vmatprep.subr.bf16.mxu0 0
        %1913 = vmatpush1.bf16.xpose.msra.mxu0 %v1903
        %1914 = vmatprep.subr.bf16.mxu0 0
        %1915 = vmatpush1.bf16.xpose.msra.mxu0 %v1906
        %1916 = vmatprep.subr.bf16.mxu0 0
        %1917 = vmatpush1.bf16.xpose.msra.mxu0 0
        %1918 = vmatprep.subr.bf16.mxu0 0
        %1919 = vmatpush1.bf16.xpose.msra.mxu0 0
        %1920 = vmatprep.subr.bf16.mxu0 0
        %1921 = vmatpush1.bf16.xpose.msra.mxu0 0
        %1922 = vmatprep.subr.bf16.mxu0 0
        %1923 = vmatpush1.bf16.xpose.msra.mxu0 0
        %1924 = vmatprep.subr.bf16.mxu0 0
        %1925 = vmatpush1.bf16.xpose.msra.mxu0 0
        %1926 = vmatprep.subr.bf16.mxu0 0
        %1927 = vmatpush1.bf16.xpose.msra.mxu0 0
        %1928 = vmatprep.subr.bf16.mxu0 0
        %1929 = vmatpush1.bf16.xpose.msra.mxu0 0
        %1930 = vmatprep.subr.bf16.mxu0 0
        %1931 = vmatpush1.bf16.xpose.msra.mxu0 0
        %1932 = vmatprep.subr.bf16.mxu0 0
        %1933 = vmatpush1.bf16.xpose.msra.mxu0 0
        %1934 = vmatprep.subr.bf16.mxu0 0
        %1935 = vmatpush1.bf16.xpose.msra.mxu0 0
        %1936 = vmatprep.subr.bf16.mxu0 0
        %1937 = vmatpush1.bf16.xpose.msra.mxu0 0
        %1938 = vmatprep.subr.bf16.mxu0 0
        %1939 = vmatpush1.bf16.xpose.msra.mxu0 0
        %1940 = vmatprep.mubr.bf16.mxu0 0
        %1941 = vmatmul.mubr.bf16.gmra.mrb[0].mxu0 %v1885
        %v1942 = vpop.f32.mrb[0].mxu0
        %v1943 = vadd.f32 0.0, %v1942
        %v1944 = vpop.f32.mrb[0].mxu0
        %v1945 = vpop.f32.mrb[0].mxu0
        %v1946 = vadd.f32 0.0, %v1945
        %v1947 = vpop.f32.mrb[0].mxu0
        %1948 = vmatprep.mubr.bf16.mxu0 0
        %1949 = vmatmul.mubr.bf16.gmra.mrb[0].mxu0 %v1888
        %v1950 = vpop.f32.mrb[0].mxu0
        %v1951 = vadd.f32 0.0, %v1950
        %v1952 = vpop.f32.mrb[0].mxu0
        %v1953 = vpop.f32.mrb[0].mxu0
        %v1954 = vadd.f32 0.0, %v1953
        %v1955 = vpop.f32.mrb[0].mxu0
        %1956 = vmatprep.mubr.bf16.mxu0 0
        %1957 = vmatmul.mubr.bf16.gmra.mrb[0].mxu0 %v1891
        %v1958 = vpop.f32.mrb[0].mxu0
        %v1959 = vadd.f32 0.0, %v1958
        %v1960 = vpop.f32.mrb[0].mxu0
        %v1961 = vpop.f32.mrb[0].mxu0
        %v1962 = vadd.f32 0.0, %v1961
        %v1963 = vpop.f32.mrb[0].mxu0
        %1964 = vmatprep.mubr.bf16.mxu0 0
        %1965 = vmatmul.mubr.bf16.gmra.mrb[0].mxu0 %v1894
        %v1966 = vpop.f32.mrb[0].mxu0
        %v1967 = vadd.f32 0.0, %v1966
        %v1968 = vpop.f32.mrb[0].mxu0
        %v1969 = vpop.f32.mrb[0].mxu0
        %v1970 = vpop.f32.mrb[0].mxu0
        %1971 = vdwg.mxu0
        %v1972 = vmul.f32 %v1943, 0.35355338
        %v1973 = vmul.f32 %v1946, 0.35355338
        %v1974 = vmul.f32 %v1951, 0.35355338
        %v1975 = vmul.f32 %v1954, 0.35355338
        %v1976 = vmul.f32 %v1959, 0.35355338
        %v1977 = vmul.f32 %v1962, 0.35355338
        %v1978 = vmul.f32 %v1967, 0.35355338
        %v1979 = vsel %vm870, %v1972, -inf
        %1980 = vmax.xlane.f32.xlu0 %v1979
        %v1981 = vpop.xlane.xlu0 %1980
        %v1982 = vsel %vm870, %v1973, -inf
        %1983 = vmax.xlane.f32.xlu0 %v1982
        %v1984 = vpop.xlane.xlu0 %1983
        %v1985 = vsel %vm870, %v1974, -inf
        %1986 = vmax.xlane.f32.xlu0 %v1985
        %v1987 = vpop.xlane.xlu0 %1986
        %v1988 = vsel %vm870, %v1975, -inf
        %1989 = vmax.xlane.f32.xlu0 %v1988
        %v1990 = vpop.xlane.xlu0 %1989
        %v1991 = vsel %vm870, %v1976, -inf
        %1992 = vmax.xlane.f32.xlu0 %v1991
        %v1993 = vpop.xlane.xlu0 %1992
        %v1994 = vsel %vm870, %v1977, -inf
        %1995 = vmax.xlane.f32.xlu0 %v1994
        %v1996 = vpop.xlane.xlu0 %1995
        %v1997 = vsel %vm889, %v1978, -inf
        %1998 = vmax.xlane.f32.xlu0 %v1997
        %v1999 = vpop.xlane.xlu0 %1998
        %v2000 = vsub.f32 %v1972, %v1981
        %v2001 = vsub.f32 %v1973, %v1984
        %v2002 = vsub.f32 %v1974, %v1987
        %v2003 = vsub.f32 %v1975, %v1990
        %v2004 = vsub.f32 %v1976, %v1993
        %v2005 = vsub.f32 %v1977, %v1996
        %v2006 = vsub.f32 %v1978, %v1999
        %v2007 = vmul.f32 %v2000, 1.442695
        %v2008 = vpow.pop %v2007
        %v2009 = vmul.f32 %v2001, 1.442695
        %v2010 = vpow.pop %v2009
        %v2011 = vmul.f32 %v2002, 1.442695
        %v2012 = vpow.pop %v2011
        %v2013 = vmul.f32 %v2003, 1.442695
        %v2014 = vpow.pop %v2013
        %v2015 = vmul.f32 %v2004, 1.442695
        %v2016 = vpow.pop %v2015
        %v2017 = vmul.f32 %v2005, 1.442695
        %v2018 = vpow.pop %v2017
        %v2019 = vmul.f32 %v2006, 1.442695
        %v2020 = vpow.pop %v2019
        %v2021 = vsel %vm870, %v2008, 0.0
        %2022 = vadd.xlane.f32.xlu0 %v2021
        %v2023 = vpop.xlane.xlu0 %2022
        %v2024 = vsel %vm870, %v2010, 0.0
        %2025 = vadd.xlane.f32.xlu0 %v2024
        %v2026 = vpop.xlane.xlu0 %2025
        %v2027 = vsel %vm870, %v2012, 0.0
        %2028 = vadd.xlane.f32.xlu0 %v2027
        %v2029 = vpop.xlane.xlu0 %2028
        %v2030 = vsel %vm870, %v2014, 0.0
        %2031 = vadd.xlane.f32.xlu0 %v2030
        %v2032 = vpop.xlane.xlu0 %2031
        %v2033 = vsel %vm870, %v2016, 0.0
        %2034 = vadd.xlane.f32.xlu0 %v2033
        %v2035 = vpop.xlane.xlu0 %2034
        %v2036 = vsel %vm870, %v2018, 0.0
        %2037 = vadd.xlane.f32.xlu0 %v2036
        %v2038 = vpop.xlane.xlu0 %2037
        %v2039 = vsel %vm889, %v2020, 0.0
        %2040 = vadd.xlane.f32.xlu0 %v2039
        %v2041 = vpop.xlane.xlu0 %2040
        %v2042 = vrcp.pop %v2023
        %v2043 = vrcp.pop %v2026
        %v2044 = vrcp.pop %v2029
        %v2045 = vrcp.pop %v2032
        %v2046 = vrcp.pop %v2035
        %v2047 = vrcp.pop %v2038
        %v2048 = vrcp.pop %v2041
        %v2049 = vmul.f32 %v2008, %v2042
        %v2050 = vmul.f32 %v2010, %v2043
        %v2051 = vmul.f32 %v2012, %v2044
        %v2052 = vmul.f32 %v2014, %v2045
        %v2053 = vmul.f32 %v2016, %v2046
        %v2054 = vmul.f32 %v2018, %v2047
        %v2055 = vmul.f32 %v2020, %v2048
        %v2056 = vpack.c.bf16 %v2050, %v2049
        %v2057 = vpack.c.bf16 %v2052, %v2051
        %v2058 = vpack.c.bf16 %v2054, %v2053
        %v2059 = vpack.c.bf16 %v2055, %v2055
        %2060 = vrot.lane.b32.xlu0 %v770, 104
        %v2061 = vpop.permute.xlu0 %2060
        %2062 = vrot.lane.b32.xlu0 %v771, 104
        %v2063 = vpop.permute.xlu0 %2062
        %2064 = vrot.lane.b32.xlu0 %v772, 104
        %v2065 = vpop.permute.xlu0 %2064
        %2066 = vrot.lane.b32.xlu0 %v773, 104
        %v2067 = vpop.permute.xlu0 %2066
        %v2072 = vsel %vm870, %v2056, 0
        %v2075 = vsel %vm870, %v2057, 0
        %v2078 = vsel %vm870, %v2058, 0
        %v2081 = vsel %vm870, %v2059, 0
        %v2084 = vand.u32 %v2067, %v967
        %2086 = vmatprep.subr.bf16.mxu0 0
        %2087 = vmatpush1.bf16.msra.mxu0 %v2061
        %2088 = vmatprep.subr.bf16.mxu0 0
        %2089 = vmatpush1.bf16.msra.mxu0 %v2063
        %2090 = vmatprep.subr.bf16.mxu0 0
        %2091 = vmatpush1.bf16.msra.mxu0 %v2065
        %2092 = vmatprep.subr.bf16.mxu0 0
        %2093 = vmatpush1.bf16.msra.mxu0 %v2084
        %2094 = vmatprep.subr.bf16.mxu0 0
        %2095 = vmatpush1.bf16.msra.mxu0 0
        %2096 = vmatprep.subr.bf16.mxu0 0
        %2097 = vmatpush1.bf16.msra.mxu0 0
        %2098 = vmatprep.subr.bf16.mxu0 0
        %2099 = vmatpush1.bf16.msra.mxu0 0
        %2100 = vmatprep.subr.bf16.mxu0 0
        %2101 = vmatpush1.bf16.msra.mxu0 0
        %2102 = vmatprep.subr.bf16.mxu0 0
        %2103 = vmatpush1.bf16.msra.mxu0 0
        %2104 = vmatprep.subr.bf16.mxu0 0
        %2105 = vmatpush1.bf16.msra.mxu0 0
        %2106 = vmatprep.subr.bf16.mxu0 0
        %2107 = vmatpush1.bf16.msra.mxu0 0
        %2108 = vmatprep.subr.bf16.mxu0 0
        %2109 = vmatpush1.bf16.msra.mxu0 0
        %2110 = vmatprep.subr.bf16.mxu0 0
        %2111 = vmatpush1.bf16.msra.mxu0 0
        %2112 = vmatprep.subr.bf16.mxu0 0
        %2113 = vmatpush1.bf16.msra.mxu0 0
        %2114 = vmatprep.subr.bf16.mxu0 0
        %2115 = vmatpush1.bf16.msra.mxu0 0
        %2116 = vmatprep.subr.bf16.mxu0 0
        %2117 = vmatpush1.bf16.msra.mxu0 0
        %2118 = vmatprep.mubr.bf16.mxu0 0
        %2119 = vmatmul.mubr.bf16.gmra.mrb[0].mxu0 %v2072
        %v2120 = vpop.f32.mrb[0].mxu0
        %v2121 = vadd.f32 0.0, %v2120
        %v2122 = vpop.f32.mrb[0].mxu0
        %v2123 = vpop.f32.mrb[0].mxu0
        %v2124 = vadd.f32 0.0, %v2123
        %v2125 = vpop.f32.mrb[0].mxu0
        %2126 = vmatprep.mubr.bf16.mxu0 0
        %2127 = vmatmul.mubr.bf16.gmra.mrb[0].mxu0 %v2075
        %v2128 = vpop.f32.mrb[0].mxu0
        %v2129 = vadd.f32 0.0, %v2128
        %v2130 = vpop.f32.mrb[0].mxu0
        %v2131 = vpop.f32.mrb[0].mxu0
        %v2132 = vadd.f32 0.0, %v2131
        %v2133 = vpop.f32.mrb[0].mxu0
        %2134 = vmatprep.mubr.bf16.mxu0 0
        %2135 = vmatmul.mubr.bf16.gmra.mrb[0].mxu0 %v2078
        %v2136 = vpop.f32.mrb[0].mxu0
        %v2137 = vadd.f32 0.0, %v2136
        %v2138 = vpop.f32.mrb[0].mxu0
        %v2139 = vpop.f32.mrb[0].mxu0
        %v2140 = vadd.f32 0.0, %v2139
        %v2141 = vpop.f32.mrb[0].mxu0
        %2142 = vmatprep.mubr.bf16.mxu0 0
        %2143 = vmatmul.mubr.bf16.gmra.mrb[0].mxu0 %v2081
        %v2144 = vpop.f32.mrb[0].mxu0
        %v2145 = vadd.f32 0.0, %v2144
        %v2146 = vpop.f32.mrb[0].mxu0
        %v2147 = vpop.f32.mrb[0].mxu0
        %v2148 = vpop.f32.mrb[0].mxu0
        %2149 = vdwg.mxu0
        %v2150 = vpack.c.bf16 %v2124, %v2121
        %v2151 = vpack.c.bf16 %v2132, %v2129
        %v2152 = vpack.c.bf16 %v2140, %v2137
        %v2153 = vpack.c.bf16 %v2145, %v2145
        %v2155 = vsel %vm774, %v2150, 0
        %v2158 = vsel %vm774, %v2151, 0
        %v2161 = vsel %vm774, %v2152, 0
        %v2164 = vsel %vm774, %v2153, 0
        %v2167 = vsel %vm1349, %v504, 0
        %2169 = vmatprep.subr.bf16.mxu0 0
        %2170 = vmatpush1.bf16.msra.mxu0 %v2167
        %2171 = vmatprep.subr.bf16.mxu0 0
        %2172 = vmatpush1.bf16.msra.mxu0 0
        %2173 = vmatprep.subr.bf16.mxu0 0
        %2174 = vmatpush1.bf16.msra.mxu0 0
        %2175 = vmatprep.subr.bf16.mxu0 0
        %2176 = vmatpush1.bf16.msra.mxu0 0
        %2177 = vmatprep.subr.bf16.mxu0 0
        %2178 = vmatpush1.bf16.msra.mxu0 0
        %2179 = vmatprep.subr.bf16.mxu0 0
        %2180 = vmatpush1.bf16.msra.mxu0 0
        %2181 = vmatprep.subr.bf16.mxu0 0
        %2182 = vmatpush1.bf16.msra.mxu0 0
        %2183 = vmatprep.subr.bf16.mxu0 0
        %2184 = vmatpush1.bf16.msra.mxu0 0
        %2185 = vmatprep.subr.bf16.mxu0 0
        %2186 = vmatpush1.bf16.msra.mxu0 0
        %2187 = vmatprep.subr.bf16.mxu0 0
        %2188 = vmatpush1.bf16.msra.mxu0 0
        %2189 = vmatprep.subr.bf16.mxu0 0
        %2190 = vmatpush1.bf16.msra.mxu0 0
        %2191 = vmatprep.subr.bf16.mxu0 0
        %2192 = vmatpush1.bf16.msra.mxu0 0
        %2193 = vmatprep.subr.bf16.mxu0 0
        %2194 = vmatpush1.bf16.msra.mxu0 0
        %2195 = vmatprep.subr.bf16.mxu0 0
        %2196 = vmatpush1.bf16.msra.mxu0 0
        %2197 = vmatprep.subr.bf16.mxu0 0
        %2198 = vmatpush1.bf16.msra.mxu0 0
        %2199 = vmatprep.subr.bf16.mxu0 0
        %2200 = vmatpush1.bf16.msra.mxu0 0
        %2201 = vmatprep.mubr.bf16.mxu0 0
        %2202 = vmatmul.mubr.bf16.gmra.mrb[0].mxu0 %v2155
        %v2203 = vpop.f32.mrb[0].mxu0
        %v2204 = vadd.f32 0.0, %v2203
        %v2205 = vpop.f32.mrb[0].mxu0
        %v2206 = vpop.f32.mrb[0].mxu0
        %v2207 = vadd.f32 0.0, %v2206
        %v2208 = vpop.f32.mrb[0].mxu0
        %2209 = vmatprep.mubr.bf16.mxu0 0
        %2210 = vmatmul.mubr.bf16.gmra.mrb[0].mxu0 %v2158
        %v2211 = vpop.f32.mrb[0].mxu0
        %v2212 = vadd.f32 0.0, %v2211
        %v2213 = vpop.f32.mrb[0].mxu0
        %v2214 = vpop.f32.mrb[0].mxu0
        %v2215 = vadd.f32 0.0, %v2214
        %v2216 = vpop.f32.mrb[0].mxu0
        %2217 = vmatprep.mubr.bf16.mxu0 0
        %2218 = vmatmul.mubr.bf16.gmra.mrb[0].mxu0 %v2161
        %v2219 = vpop.f32.mrb[0].mxu0
        %v2220 = vadd.f32 0.0, %v2219
        %v2221 = vpop.f32.mrb[0].mxu0
        %v2222 = vpop.f32.mrb[0].mxu0
        %v2223 = vadd.f32 0.0, %v2222
        %v2224 = vpop.f32.mrb[0].mxu0
        %2225 = vmatprep.mubr.bf16.mxu0 0
        %2226 = vmatmul.mubr.bf16.gmra.mrb[0].mxu0 %v2164
        %v2227 = vpop.f32.mrb[0].mxu0
        %v2228 = vadd.f32 0.0, %v2227
        %v2229 = vpop.f32.mrb[0].mxu0
        %v2230 = vpop.f32.mrb[0].mxu0
        %v2231 = vpop.f32.mrb[0].mxu0
        %2232 = vdwg.mxu0
        %v2233 = vadd.f32 %v1861, %v2204
        %v2234 = vadd.f32 %v1862, %v2207
        %v2235 = vadd.f32 %v1863, %v2212
        %v2236 = vadd.f32 %v1864, %v2215
        %v2237 = vadd.f32 %v1865, %v2220
        %v2238 = vadd.f32 %v1866, %v2223
        %v2239 = vadd.f32 %v1867, %v2228
        %v2240 = vlaneseq
        %v2241 = vshrl.u32 %v2240, 7
        %v2242 = vsub.s32 0, %v2241
        %v2243 = vrot.slane %v505, %v2242
        %v2244 = vadd.f32 %v2233, %v2243
        %v2245 = vadd.f32 %v2234, %v2243
        %v2246 = vadd.f32 %v2235, %v2243
        %v2247 = vadd.f32 %v2236, %v2243
        %v2248 = vadd.f32 %v2237, %v2243
        %v2249 = vadd.f32 %v2238, %v2243
        %v2250 = vadd.f32 %v2239, %v2243
        %v2251 = vadd.f32 %v479, %v2244
        %v2252 = vadd.f32 %v480, %v2245
        %v2253 = vadd.f32 %v481, %v2246
        %v2254 = vadd.f32 %v482, %v2247
        %v2255 = vadd.f32 %v483, %v2248
        %v2256 = vadd.f32 %v484, %v2249
        %v2257 = vadd.f32 %v485, %v2250
        %v2258 = vld [vmem:[#allocation2 + $0x70] sm:$0x1]
        %v2259 = vld [vmem:[#allocation2 + $0x78] sm:$0x1]
        %v2260 = vsel %vm356, %v2251, 0.0
        %2261 = vadd.xlane.f32.xlu0 %v2260
        %v2262 = vpop.xlane.xlu0 %2261
        %v2263 = vsel %vm356, %v2252, 0.0
        %2264 = vadd.xlane.f32.xlu0 %v2263
        %v2265 = vpop.xlane.xlu0 %2264
        %v2266 = vsel %vm356, %v2253, 0.0
        %2267 = vadd.xlane.f32.xlu0 %v2266
        %v2268 = vpop.xlane.xlu0 %2267
        %v2269 = vsel %vm356, %v2254, 0.0
        %2270 = vadd.xlane.f32.xlu0 %v2269
        %v2271 = vpop.xlane.xlu0 %2270
        %v2272 = vsel %vm356, %v2255, 0.0
        %2273 = vadd.xlane.f32.xlu0 %v2272
        %v2274 = vpop.xlane.xlu0 %2273
        %v2275 = vsel %vm356, %v2256, 0.0
        %2276 = vadd.xlane.f32.xlu0 %v2275
        %v2277 = vpop.xlane.xlu0 %2276
        %v2278 = vsel %vm375, %v2257, 0.0
        %2279 = vadd.xlane.f32.xlu0 %v2278
        %v2280 = vpop.xlane.xlu0 %2279
        %v2281 = vmul.f32 %v2262, %v379
        %v2282 = vmul.f32 %v2265, %v379
        %v2283 = vmul.f32 %v2268, %v379
        %v2284 = vmul.f32 %v2271, %v379
        %v2285 = vmul.f32 %v2274, %v379
        %v2286 = vmul.f32 %v2277, %v379
        %v2287 = vmul.f32 %v2280, %v379
        %v2288 = vsub.f32 %v2251, %v2281
        %v2289 = vsub.f32 %v2252, %v2282
        %v2290 = vsub.f32 %v2253, %v2283
        %v2291 = vsub.f32 %v2254, %v2284
        %v2292 = vsub.f32 %v2255, %v2285
        %v2293 = vsub.f32 %v2256, %v2286
        %v2294 = vsub.f32 %v2257, %v2287
        %v2295 = vmul.f32 %v2288, %v2288
        %v2296 = vmul.f32 %v2289, %v2289
        %v2297 = vmul.f32 %v2290, %v2290
        %v2298 = vmul.f32 %v2291, %v2291
        %v2299 = vmul.f32 %v2292, %v2292
        %v2300 = vmul.f32 %v2293, %v2293
        %v2301 = vmul.f32 %v2294, %v2294
        %v2302 = vsel %vm356, %v2295, 0.0
        %2303 = vadd.xlane.f32.xlu0 %v2302
        %v2304 = vpop.xlane.xlu0 %2303
        %v2305 = vsel %vm356, %v2296, 0.0
        %2306 = vadd.xlane.f32.xlu0 %v2305
        %v2307 = vpop.xlane.xlu0 %2306
        %v2308 = vsel %vm356, %v2297, 0.0
        %2309 = vadd.xlane.f32.xlu0 %v2308
        %v2310 = vpop.xlane.xlu0 %2309
        %v2311 = vsel %vm356, %v2298, 0.0
        %2312 = vadd.xlane.f32.xlu0 %v2311
        %v2313 = vpop.xlane.xlu0 %2312
        %v2314 = vsel %vm356, %v2299, 0.0
        %2315 = vadd.xlane.f32.xlu0 %v2314
        %v2316 = vpop.xlane.xlu0 %2315
        %v2317 = vsel %vm356, %v2300, 0.0
        %2318 = vadd.xlane.f32.xlu0 %v2317
        %v2319 = vpop.xlane.xlu0 %2318
        %v2320 = vsel %vm375, %v2301, 0.0
        %2321 = vadd.xlane.f32.xlu0 %v2320
        %v2322 = vpop.xlane.xlu0 %2321
        %v2323 = vmul.f32 %v2304, %v379
        %v2324 = vmul.f32 %v2307, %v379
        %v2325 = vmul.f32 %v2310, %v379
        %v2326 = vmul.f32 %v2313, %v379
        %v2327 = vmul.f32 %v2316, %v379
        %v2328 = vmul.f32 %v2319, %v379
        %v2329 = vmul.f32 %v2322, %v379
        %v2330 = vadd.f32 %v2323, 1e-05
        %v2331 = vadd.f32 %v2324, 1e-05
        %v2332 = vadd.f32 %v2325, 1e-05
        %v2333 = vadd.f32 %v2326, 1e-05
        %v2334 = vadd.f32 %v2327, 1e-05
        %v2335 = vadd.f32 %v2328, 1e-05
        %v2336 = vadd.f32 %v2329, 1e-05
        %v2337 = vrsqrt.pop %v2330
        %v2338 = vrsqrt.pop %v2331
        %v2339 = vrsqrt.pop %v2332
        %v2340 = vrsqrt.pop %v2333
        %v2341 = vrsqrt.pop %v2334
        %v2342 = vrsqrt.pop %v2335
        %v2343 = vrsqrt.pop %v2336
        %v2344 = vmul.f32 %v2288, %v2337
        %v2345 = vmul.f32 %v2289, %v2338
        %v2346 = vmul.f32 %v2290, %v2339
        %v2347 = vmul.f32 %v2291, %v2340
        %v2348 = vmul.f32 %v2292, %v2341
        %v2349 = vmul.f32 %v2293, %v2342
        %v2350 = vmul.f32 %v2294, %v2343
        %v2351 = vlaneseq
        %v2352 = vshrl.u32 %v2351, 7
        %v2353 = vsub.s32 0, %v2352
        %v2354 = vrot.slane %v2258, %v2353
        %v2355 = vmul.f32 %v2344, %v2354
        %v2356 = vmul.f32 %v2345, %v2354
        %v2357 = vmul.f32 %v2346, %v2354
        %v2358 = vmul.f32 %v2347, %v2354
        %v2359 = vmul.f32 %v2348, %v2354
        %v2360 = vmul.f32 %v2349, %v2354
        %v2361 = vmul.f32 %v2350, %v2354
        %v2362 = vlaneseq
        %v2363 = vshrl.u32 %v2362, 7
        %v2364 = vsub.s32 0, %v2363
        %v2365 = vrot.slane %v2259, %v2364
        %v2366 = vadd.f32 %v2355, %v2365
        %v2367 = vadd.f32 %v2356, %v2365
        %v2368 = vadd.f32 %v2357, %v2365
        %v2369 = vadd.f32 %v2358, %v2365
        %v2370 = vadd.f32 %v2359, %v2365
        %v2371 = vadd.f32 %v2360, %v2365
        %v2372 = vadd.f32 %v2361, %v2365
        %v2373 = vld [vmem:[%s2 + $0x70] sm:$0xf]
        %v2374 = vld [vmem:[%s2 + $0x74] sm:$0xf]
        %v2375 = vld [vmem:[%s2 + $0x78] sm:$0xf]
        %v2376 = vld [vmem:[%s2 + $0x7c] sm:$0xf]
        %v2377 = vld [vmem:[#allocation2 + $0x80] sm:$0x1]
        %v2378 = vpack.c.bf16 %v2367, %v2366
        %v2379 = vpack.c.bf16 %v2369, %v2368
        %v2380 = vpack.c.bf16 %v2371, %v2370
        %v2381 = vpack.c.bf16 %v2372, %v2372
        %v2382 = vlaneseq
        %v2383 = vshrl.u32 %v2382, 7
        %v2384 = vsub.s32 0, %v2383
        %v2385 = vrot.slane %v2377, %v2384
        %v2390 = vunpack.c.l.b16 %v2373
        %v2391 = vunpack.c.l.b16 %v2374
        %v2392 = vunpack.c.l.b16 %v2375
        %v2393 = vunpack.c.l.b16 %v2376
        %v2394 = vpack.c.b16 %v2391, %v2390
        %v2395 = vpack.c.b16 %v2393, %v2392
        %v2399 = vsel %vm356, %v2378, 0
        %v2402 = vsel %vm356, %v2379, 0
        %v2405 = vsel %vm356, %v2380, 0
        %v2408 = vsel %vm356, %v2381, 0
        %2410 = vmatprep.subr.bf16.mxu0 0
        %2411 = vmatpush1.bf16.msra.mxu0 %v2394
        %2412 = vmatprep.subr.bf16.mxu0 0
        %2413 = vmatpush1.bf16.msra.mxu0 %v2395
        %2414 = vmatprep.subr.bf16.mxu0 0
        %2415 = vmatpush1.bf16.msra.mxu0 0
        %2416 = vmatprep.subr.bf16.mxu0 0
        %2417 = vmatpush1.bf16.msra.mxu0 0
        %2418 = vmatprep.subr.bf16.mxu0 0
        %2419 = vmatpush1.bf16.msra.mxu0 0
        %2420 = vmatprep.subr.bf16.mxu0 0
        %2421 = vmatpush1.bf16.msra.mxu0 0
        %2422 = vmatprep.subr.bf16.mxu0 0
        %2423 = vmatpush1.bf16.msra.mxu0 0
        %2424 = vmatprep.subr.bf16.mxu0 0
        %2425 = vmatpush1.bf16.msra.mxu0 0
        %2426 = vmatprep.subr.bf16.mxu0 0
        %2427 = vmatpush1.bf16.msra.mxu0 0
        %2428 = vmatprep.subr.bf16.mxu0 0
        %2429 = vmatpush1.bf16.msra.mxu0 0
        %2430 = vmatprep.subr.bf16.mxu0 0
        %2431 = vmatpush1.bf16.msra.mxu0 0
        %2432 = vmatprep.subr.bf16.mxu0 0
        %2433 = vmatpush1.bf16.msra.mxu0 0
        %2434 = vmatprep.subr.bf16.mxu0 0
        %2435 = vmatpush1.bf16.msra.mxu0 0
        %2436 = vmatprep.subr.bf16.mxu0 0
        %2437 = vmatpush1.bf16.msra.mxu0 0
        %2438 = vmatprep.subr.bf16.mxu0 0
        %2439 = vmatpush1.bf16.msra.mxu0 0
        %2440 = vmatprep.subr.bf16.mxu0 0
        %2441 = vmatpush1.bf16.msra.mxu0 0
        %2442 = vmatprep.mubr.bf16.mxu0 0
        %2443 = vmatmul.mubr.bf16.gmra.mrb[0].mxu0 %v2399
        %v2444 = vpop.f32.mrb[0].mxu0
        %v2445 = vadd.f32 %v2385, %v2444
        %v2446 = vpop.f32.mrb[0].mxu0
        %v2447 = vpop.f32.mrb[0].mxu0
        %v2448 = vadd.f32 %v2385, %v2447
        %v2449 = vpop.f32.mrb[0].mxu0
        %2450 = vmatprep.mubr.bf16.mxu0 0
        %2451 = vmatmul.mubr.bf16.gmra.mrb[0].mxu0 %v2402
        %v2452 = vpop.f32.mrb[0].mxu0
        %v2453 = vadd.f32 %v2385, %v2452
        %v2454 = vpop.f32.mrb[0].mxu0
        %v2455 = vpop.f32.mrb[0].mxu0
        %v2456 = vadd.f32 %v2385, %v2455
        %v2457 = vpop.f32.mrb[0].mxu0
        %2458 = vmatprep.mubr.bf16.mxu0 0
        %2459 = vmatmul.mubr.bf16.gmra.mrb[0].mxu0 %v2405
        %v2460 = vpop.f32.mrb[0].mxu0
        %v2461 = vadd.f32 %v2385, %v2460
        %v2462 = vpop.f32.mrb[0].mxu0
        %v2463 = vpop.f32.mrb[0].mxu0
        %v2464 = vadd.f32 %v2385, %v2463
        %v2465 = vpop.f32.mrb[0].mxu0
        %2466 = vmatprep.mubr.bf16.mxu0 0
        %2467 = vmatmul.mubr.bf16.gmra.mrb[0].mxu0 %v2408
        %v2468 = vpop.f32.mrb[0].mxu0
        %v2469 = vadd.f32 %v2385, %v2468
        %v2470 = vpop.f32.mrb[0].mxu0
        %v2471 = vpop.f32.mrb[0].mxu0
        %v2472 = vpop.f32.mrb[0].mxu0
        %2473 = vdwg.mxu0
        %v2474 = vmax.f32 %v2445, 0.0
        %v2475 = vmax.f32 %v2448, 0.0
        %v2476 = vmax.f32 %v2453, 0.0
        %v2477 = vmax.f32 %v2456, 0.0
        %v2478 = vmax.f32 %v2461, 0.0
        %v2479 = vmax.f32 %v2464, 0.0
        %v2480 = vmax.f32 %v2469, 0.0
        %v2481 = vld [vmem:[%s2 + $0x80] sm:$0xf]
        %v2482 = vld [vmem:[%s2 + $0x84] sm:$0xf]
        %v2483 = vld [vmem:[%s2 + $0x88] sm:$0xf]
        %v2484 = vld [vmem:[%s2 + $0x8c] sm:$0xf]
        %v2485 = vld [vmem:[%s2 + $0x90] sm:$0xf]
        %v2486 = vld [vmem:[%s2 + $0x94] sm:$0xf]
        %v2487 = vld [vmem:[%s2 + $0x98] sm:$0xf]
        %v2488 = vld [vmem:[%s2 + $0x9c] sm:$0xf]
        %v2489 = vld [vmem:[#allocation2 + $0x88] sm:$0x1]
        %v2490 = vpack.c.bf16 %v2475, %v2474
        %v2491 = vpack.c.bf16 %v2477, %v2476
        %v2492 = vpack.c.bf16 %v2479, %v2478
        %v2493 = vpack.c.bf16 %v2480, %v2480
        %v2494 = vlaneseq
        %v2495 = vshrl.u32 %v2494, 7
        %v2496 = vsub.s32 0, %v2495
        %v2497 = vrot.slane %v2489, %v2496
        %v2506 = vunpack.c.l.b16 %v2481
        %v2507 = vunpack.c.l.b16 %v2482
        %v2508 = vunpack.c.l.b16 %v2483
        %v2509 = vunpack.c.l.b16 %v2484
        %v2510 = vunpack.c.l.b16 %v2485
        %v2511 = vunpack.c.l.b16 %v2486
        %v2512 = vunpack.c.l.b16 %v2487
        %v2513 = vunpack.c.l.b16 %v2488
        %v2514 = vpack.c.b16 %v2507, %v2506
        %v2515 = vpack.c.b16 %v2509, %v2508
        %v2516 = vpack.c.b16 %v2511, %v2510
        %v2517 = vpack.c.b16 %v2513, %v2512
        %v2523 = vsel %vm277, %v2490, 0
        %v2526 = vsel %vm277, %v2491, 0
        %v2529 = vsel %vm277, %v2492, 0
        %v2532 = vsel %vm277, %v2493, 0
        %2534 = vmatprep.subr.bf16.mxu0 0
        %2535 = vmatpush1.bf16.msra.mxu0 %v2514
        %2536 = vmatprep.subr.bf16.mxu0 0
        %2537 = vmatpush1.bf16.msra.mxu0 %v2515
        %2538 = vmatprep.subr.bf16.mxu0 0
        %2539 = vmatpush1.bf16.msra.mxu0 %v2516
        %2540 = vmatprep.subr.bf16.mxu0 0
        %2541 = vmatpush1.bf16.msra.mxu0 %v2517
        %2542 = vmatprep.subr.bf16.mxu0 0
        %2543 = vmatpush1.bf16.msra.mxu0 0
        %2544 = vmatprep.subr.bf16.mxu0 0
        %2545 = vmatpush1.bf16.msra.mxu0 0
        %2546 = vmatprep.subr.bf16.mxu0 0
        %2547 = vmatpush1.bf16.msra.mxu0 0
        %2548 = vmatprep.subr.bf16.mxu0 0
        %2549 = vmatpush1.bf16.msra.mxu0 0
        %2550 = vmatprep.subr.bf16.mxu0 0
        %2551 = vmatpush1.bf16.msra.mxu0 0
        %2552 = vmatprep.subr.bf16.mxu0 0
        %2553 = vmatpush1.bf16.msra.mxu0 0
        %2554 = vmatprep.subr.bf16.mxu0 0
        %2555 = vmatpush1.bf16.msra.mxu0 0
        %2556 = vmatprep.subr.bf16.mxu0 0
        %2557 = vmatpush1.bf16.msra.mxu0 0
        %2558 = vmatprep.subr.bf16.mxu0 0
        %2559 = vmatpush1.bf16.msra.mxu0 0
        %2560 = vmatprep.subr.bf16.mxu0 0
        %2561 = vmatpush1.bf16.msra.mxu0 0
        %2562 = vmatprep.subr.bf16.mxu0 0
        %2563 = vmatpush1.bf16.msra.mxu0 0
        %2564 = vmatprep.subr.bf16.mxu0 0
        %2565 = vmatpush1.bf16.msra.mxu0 0
        %2566 = vmatprep.mubr.bf16.mxu0 0
        %2567 = vmatmul.mubr.bf16.gmra.mrb[0].mxu0 %v2523
        %v2568 = vpop.f32.mrb[0].mxu0
        %v2569 = vadd.f32 %v2497, %v2568
        %v2570 = vpop.f32.mrb[0].mxu0
        %v2571 = vpop.f32.mrb[0].mxu0
        %v2572 = vadd.f32 %v2497, %v2571
        %v2573 = vpop.f32.mrb[0].mxu0
        %2574 = vmatprep.mubr.bf16.mxu0 0
        %2575 = vmatmul.mubr.bf16.gmra.mrb[0].mxu0 %v2526
        %v2576 = vpop.f32.mrb[0].mxu0
        %v2577 = vadd.f32 %v2497, %v2576
        %v2578 = vpop.f32.mrb[0].mxu0
        %v2579 = vpop.f32.mrb[0].mxu0
        %v2580 = vadd.f32 %v2497, %v2579
        %v2581 = vpop.f32.mrb[0].mxu0
        %2582 = vmatprep.mubr.bf16.mxu0 0
        %2583 = vmatmul.mubr.bf16.gmra.mrb[0].mxu0 %v2529
        %v2584 = vpop.f32.mrb[0].mxu0
        %v2585 = vadd.f32 %v2497, %v2584
        %v2586 = vpop.f32.mrb[0].mxu0
        %v2587 = vpop.f32.mrb[0].mxu0
        %v2588 = vadd.f32 %v2497, %v2587
        %v2589 = vpop.f32.mrb[0].mxu0
        %2590 = vmatprep.mubr.bf16.mxu0 0
        %2591 = vmatmul.mubr.bf16.gmra.mrb[0].mxu0 %v2532
        %v2592 = vpop.f32.mrb[0].mxu0
        %v2593 = vadd.f32 %v2497, %v2592
        %v2594 = vpop.f32.mrb[0].mxu0
        %v2595 = vpop.f32.mrb[0].mxu0
        %v2596 = vpop.f32.mrb[0].mxu0
        %2597 = vdwg.mxu0
        %v2598 = vadd.f32 %v2366, %v2569
        %v2599 = vadd.f32 %v2367, %v2572
        %v2600 = vadd.f32 %v2368, %v2577
        %v2601 = vadd.f32 %v2369, %v2580
        %v2602 = vadd.f32 %v2370, %v2585
        %v2603 = vadd.f32 %v2371, %v2588
        %v2604 = vadd.f32 %v2372, %v2593
        %v2605 = vld [vmem:[#allocation2 + $0x90] sm:$0x1]
        %v2606 = vld [vmem:[#allocation2 + $0x98] sm:$0x1]
        %v2607 = vsel %vm356, %v2598, 0.0
        %2608 = vadd.xlane.f32.xlu0 %v2607
        %v2609 = vpop.xlane.xlu0 %2608
        %v2610 = vsel %vm356, %v2599, 0.0
        %2611 = vadd.xlane.f32.xlu0 %v2610
        %v2612 = vpop.xlane.xlu0 %2611
        %v2613 = vsel %vm356, %v2600, 0.0
        %2614 = vadd.xlane.f32.xlu0 %v2613
        %v2615 = vpop.xlane.xlu0 %2614
        %v2616 = vsel %vm356, %v2601, 0.0
        %2617 = vadd.xlane.f32.xlu0 %v2616
        %v2618 = vpop.xlane.xlu0 %2617
        %v2619 = vsel %vm356, %v2602, 0.0
        %2620 = vadd.xlane.f32.xlu0 %v2619
        %v2621 = vpop.xlane.xlu0 %2620
        %v2622 = vsel %vm356, %v2603, 0.0
        %2623 = vadd.xlane.f32.xlu0 %v2622
        %v2624 = vpop.xlane.xlu0 %2623
        %v2625 = vsel %vm375, %v2604, 0.0
        %2626 = vadd.xlane.f32.xlu0 %v2625
        %v2627 = vpop.xlane.xlu0 %2626
        %v2628 = vmul.f32 %v2609, %v379
        %v2629 = vmul.f32 %v2612, %v379
        %v2630 = vmul.f32 %v2615, %v379
        %v2631 = vmul.f32 %v2618, %v379
        %v2632 = vmul.f32 %v2621, %v379
        %v2633 = vmul.f32 %v2624, %v379
        %v2634 = vmul.f32 %v2627, %v379
        %v2635 = vsub.f32 %v2598, %v2628
        %v2636 = vsub.f32 %v2599, %v2629
        %v2637 = vsub.f32 %v2600, %v2630
        %v2638 = vsub.f32 %v2601, %v2631
        %v2639 = vsub.f32 %v2602, %v2632
        %v2640 = vsub.f32 %v2603, %v2633
        %v2641 = vsub.f32 %v2604, %v2634
        %v2642 = vmul.f32 %v2635, %v2635
        %v2643 = vmul.f32 %v2636, %v2636
        %v2644 = vmul.f32 %v2637, %v2637
        %v2645 = vmul.f32 %v2638, %v2638
        %v2646 = vmul.f32 %v2639, %v2639
        %v2647 = vmul.f32 %v2640, %v2640
        %v2648 = vmul.f32 %v2641, %v2641
        %v2649 = vsel %vm356, %v2642, 0.0
        %2650 = vadd.xlane.f32.xlu0 %v2649
        %v2651 = vpop.xlane.xlu0 %2650
        %v2652 = vsel %vm356, %v2643, 0.0
        %2653 = vadd.xlane.f32.xlu0 %v2652
        %v2654 = vpop.xlane.xlu0 %2653
        %v2655 = vsel %vm356, %v2644, 0.0
        %2656 = vadd.xlane.f32.xlu0 %v2655
        %v2657 = vpop.xlane.xlu0 %2656
        %v2658 = vsel %vm356, %v2645, 0.0
        %2659 = vadd.xlane.f32.xlu0 %v2658
        %v2660 = vpop.xlane.xlu0 %2659
        %v2661 = vsel %vm356, %v2646, 0.0
        %2662 = vadd.xlane.f32.xlu0 %v2661
        %v2663 = vpop.xlane.xlu0 %2662
        %v2664 = vsel %vm356, %v2647, 0.0
        %2665 = vadd.xlane.f32.xlu0 %v2664
        %v2666 = vpop.xlane.xlu0 %2665
        %v2667 = vsel %vm375, %v2648, 0.0
        %2668 = vadd.xlane.f32.xlu0 %v2667
        %v2669 = vpop.xlane.xlu0 %2668
        %v2670 = vmul.f32 %v2651, %v379
        %v2671 = vmul.f32 %v2654, %v379
        %v2672 = vmul.f32 %v2657, %v379
        %v2673 = vmul.f32 %v2660, %v379
        %v2674 = vmul.f32 %v2663, %v379
        %v2675 = vmul.f32 %v2666, %v379
        %v2676 = vmul.f32 %v2669, %v379
        %v2677 = vadd.f32 %v2670, 1e-05
        %v2678 = vadd.f32 %v2671, 1e-05
        %v2679 = vadd.f32 %v2672, 1e-05
        %v2680 = vadd.f32 %v2673, 1e-05
        %v2681 = vadd.f32 %v2674, 1e-05
        %v2682 = vadd.f32 %v2675, 1e-05
        %v2683 = vadd.f32 %v2676, 1e-05
        %v2684 = vrsqrt.pop %v2677
        %v2685 = vrsqrt.pop %v2678
        %v2686 = vrsqrt.pop %v2679
        %v2687 = vrsqrt.pop %v2680
        %v2688 = vrsqrt.pop %v2681
        %v2689 = vrsqrt.pop %v2682
        %v2690 = vrsqrt.pop %v2683
        %v2691 = vmul.f32 %v2635, %v2684
        %v2692 = vmul.f32 %v2636, %v2685
        %v2693 = vmul.f32 %v2637, %v2686
        %v2694 = vmul.f32 %v2638, %v2687
        %v2695 = vmul.f32 %v2639, %v2688
        %v2696 = vmul.f32 %v2640, %v2689
        %v2697 = vmul.f32 %v2641, %v2690
        %v2698 = vlaneseq
        %v2699 = vshrl.u32 %v2698, 7
        %v2700 = vsub.s32 0, %v2699
        %v2701 = vrot.slane %v2605, %v2700
        %v2702 = vmul.f32 %v2691, %v2701
        %v2703 = vmul.f32 %v2692, %v2701
        %v2704 = vmul.f32 %v2693, %v2701
        %v2705 = vmul.f32 %v2694, %v2701
        %v2706 = vmul.f32 %v2695, %v2701
        %v2707 = vmul.f32 %v2696, %v2701
        %v2708 = vmul.f32 %v2697, %v2701
        %v2709 = vlaneseq
        %v2710 = vshrl.u32 %v2709, 7
        %v2711 = vsub.s32 0, %v2710
        %v2712 = vrot.slane %v2606, %v2711
        %v2713 = vadd.f32 %v2702, %v2712
        %v2714 = vadd.f32 %v2703, %v2712
        %v2715 = vadd.f32 %v2704, %v2712
        %v2716 = vadd.f32 %v2705, %v2712
        %v2717 = vadd.f32 %v2706, %v2712
        %v2718 = vadd.f32 %v2707, %v2712
        %v2719 = vadd.f32 %v2708, %v2712
        %v2720 = vld [vmem:[%s227] sm:$0xff]
        %v2721 = vld [vmem:[%s2 + $0xa0] sm:$0xf]
        %v2722 = vld [vmem:[%s2 + $0xa4] sm:$0xf]
        %v2723 = vld [vmem:[%s2 + $0xa8] sm:$0xf]
        %v2724 = vld [vmem:[%s2 + $0xac] sm:$0xf]
        %v2725 = vld [vmem:[#allocation2 + $0xa0] sm:$0x1]
        %v2726 = vld [vmem:[%s2 + $0xb0] sm:$0xf]
        %v2727 = vld [vmem:[%s2 + $0xb4] sm:$0xf]
        %v2728 = vld [vmem:[%s2 + $0xb8] sm:$0xf]
        %v2729 = vld [vmem:[%s2 + $0xbc] sm:$0xf]
        %v2730 = vld [vmem:[#allocation2 + $0xa8] sm:$0x1]
        %v2731 = vld [vmem:[%s2 + $0xc0] sm:$0xf]
        %v2732 = vld [vmem:[%s2 + $0xc4] sm:$0xf]
        %v2733 = vld [vmem:[%s2 + $0xc8] sm:$0xf]
        %v2734 = vld [vmem:[%s2 + $0xcc] sm:$0xf]
        %v2735 = vld [vmem:[#allocation2 + $0xb0] sm:$0x1]
        %v2736 = vld [vmem:[%s2 + $0xd0] sm:$0xf]
        %v2737 = vld [vmem:[%s2 + $0xd8] sm:$0xf]
        %v2738 = vld [vmem:[%s2 + $0xe0] sm:$0xf]
        %v2739 = vld [vmem:[%s2 + $0xe8] sm:$0xf]
        %v2740 = vld [vmem:[#allocation2 + $0xb8] sm:$0x1]
        %v2741 = vpack.c.bf16 %v2720, %v2720
        %v2742 = vlaneseq
        %v2743 = vshrl.u32 %v2742, 7
        %v2744 = vsub.s32 0, %v2743
        %v2745 = vrot.slane %v2725, %v2744
        %v2750 = vunpack.c.l.b16 %v2721
        %v2751 = vunpack.c.l.b16 %v2722
        %v2752 = vunpack.c.l.b16 %v2723
        %v2753 = vunpack.c.l.b16 %v2724
        %v2754 = vpack.c.b16 %v2751, %v2750
        %v2755 = vpack.c.b16 %v2753, %v2752
        %v2759 = vsel %vm356, %v2741, 0
        %2761 = vmatprep.subr.bf16.mxu0 0
        %2762 = vmatpush1.bf16.msra.mxu0 %v2754
        %2763 = vmatprep.subr.bf16.mxu0 0
        %2764 = vmatpush1.bf16.msra.mxu0 %v2755
        %2765 = vmatprep.subr.bf16.mxu0 0
        %2766 = vmatpush1.bf16.msra.mxu0 0
        %2767 = vmatprep.subr.bf16.mxu0 0
        %2768 = vmatpush1.bf16.msra.mxu0 0
        %2769 = vmatprep.subr.bf16.mxu0 0
        %2770 = vmatpush1.bf16.msra.mxu0 0
        %2771 = vmatprep.subr.bf16.mxu0 0
        %2772 = vmatpush1.bf16.msra.mxu0 0
        %2773 = vmatprep.subr.bf16.mxu0 0
        %2774 = vmatpush1.bf16.msra.mxu0 0
        %2775 = vmatprep.subr.bf16.mxu0 0
        %2776 = vmatpush1.bf16.msra.mxu0 0
        %2777 = vmatprep.subr.bf16.mxu0 0
        %2778 = vmatpush1.bf16.msra.mxu0 0
        %2779 = vmatprep.subr.bf16.mxu0 0
        %2780 = vmatpush1.bf16.msra.mxu0 0
        %2781 = vmatprep.subr.bf16.mxu0 0
        %2782 = vmatpush1.bf16.msra.mxu0 0
        %2783 = vmatprep.subr.bf16.mxu0 0
        %2784 = vmatpush1.bf16.msra.mxu0 0
        %2785 = vmatprep.subr.bf16.mxu0 0
        %2786 = vmatpush1.bf16.msra.mxu0 0
        %2787 = vmatprep.subr.bf16.mxu0 0
        %2788 = vmatpush1.bf16.msra.mxu0 0
        %2789 = vmatprep.subr.bf16.mxu0 0
        %2790 = vmatpush1.bf16.msra.mxu0 0
        %2791 = vmatprep.subr.bf16.mxu0 0
        %2792 = vmatpush1.bf16.msra.mxu0 0
        %2793 = vmatprep.mubr.bf16.mxu0 0
        %2794 = vmatmul.mubr.bf16.gmra.mrb[0].mxu0 %v2759
        %v2795 = vpop.f32.mrb[0].mxu0
        %v2796 = vadd.f32 %v2745, %v2795
        %v2797 = vpop.f32.mrb[0].mxu0
        %v2798 = vpop.f32.mrb[0].mxu0
        %v2799 = vpop.f32.mrb[0].mxu0
        %2800 = vdwg.mxu0
        %v2801 = vpack.c.bf16 %v2796, %v2796
        %v2802 = vlaneseq
        %v2803 = vshrl.u32 %v2802, 7
        %v2804 = vsub.s32 0, %v2803
        %v2805 = vrot.slane %v2730, %v2804
        %v2810 = vunpack.c.l.b16 %v2726
        %v2811 = vunpack.c.l.b16 %v2727
        %v2812 = vunpack.c.l.b16 %v2728
        %v2813 = vunpack.c.l.b16 %v2729
        %v2814 = vpack.c.b16 %v2811, %v2810
        %v2815 = vpack.c.b16 %v2813, %v2812
        %2818 = vmatprep.subr.bf16.mxu0 0
        %2819 = vmatpush1.bf16.msra.mxu0 %v2814
        %2820 = vmatprep.subr.bf16.mxu0 0
        %2821 = vmatpush1.bf16.msra.mxu0 %v2815
        %2822 = vmatprep.subr.bf16.mxu0 0
        %2823 = vmatpush1.bf16.msra.mxu0 0
        %2824 = vmatprep.subr.bf16.mxu0 0
        %2825 = vmatpush1.bf16.msra.mxu0 0
        %2826 = vmatprep.subr.bf16.mxu0 0
        %2827 = vmatpush1.bf16.msra.mxu0 0
        %2828 = vmatprep.subr.bf16.mxu0 0
        %2829 = vmatpush1.bf16.msra.mxu0 0
        %2830 = vmatprep.subr.bf16.mxu0 0
        %2831 = vmatpush1.bf16.msra.mxu0 0
        %2832 = vmatprep.subr.bf16.mxu0 0
        %2833 = vmatpush1.bf16.msra.mxu0 0
        %2834 = vmatprep.subr.bf16.mxu0 0
        %2835 = vmatpush1.bf16.msra.mxu0 0
        %2836 = vmatprep.subr.bf16.mxu0 0
        %2837 = vmatpush1.bf16.msra.mxu0 0
        %2838 = vmatprep.subr.bf16.mxu0 0
        %2839 = vmatpush1.bf16.msra.mxu0 0
        %2840 = vmatprep.subr.bf16.mxu0 0
        %2841 = vmatpush1.bf16.msra.mxu0 0
        %2842 = vmatprep.subr.bf16.mxu0 0
        %2843 = vmatpush1.bf16.msra.mxu0 0
        %2844 = vmatprep.subr.bf16.mxu0 0
        %2845 = vmatpush1.bf16.msra.mxu0 0
        %2846 = vmatprep.subr.bf16.mxu0 0
        %2847 = vmatpush1.bf16.msra.mxu0 0
        %2848 = vmatprep.subr.bf16.mxu0 0
        %2849 = vmatpush1.bf16.msra.mxu0 0
        %2850 = vmatprep.mubr.bf16.mxu0 0
        %2851 = vmatmul.mubr.bf16.gmra.mrb[0].mxu0 %v2759
        %v2852 = vpop.f32.mrb[0].mxu0
        %v2853 = vadd.f32 %v2805, %v2852
        %v2854 = vpop.f32.mrb[0].mxu0
        %v2855 = vpop.f32.mrb[0].mxu0
        %v2856 = vpop.f32.mrb[0].mxu0
        %2857 = vdwg.mxu0
        %v2858 = vpack.c.bf16 %v2853, %v2853
        %v2859 = vlaneseq
        %v2860 = vshrl.u32 %v2859, 7
        %v2861 = vsub.s32 0, %v2860
        %v2862 = vrot.slane %v2735, %v2861
        %v2867 = vunpack.c.l.b16 %v2731
        %v2868 = vunpack.c.l.b16 %v2732
        %v2869 = vunpack.c.l.b16 %v2733
        %v2870 = vunpack.c.l.b16 %v2734
        %v2871 = vpack.c.b16 %v2868, %v2867
        %v2872 = vpack.c.b16 %v2870, %v2869
        %2875 = vmatprep.subr.bf16.mxu0 0
        %2876 = vmatpush1.bf16.msra.mxu0 %v2871
        %2877 = vmatprep.subr.bf16.mxu0 0
        %2878 = vmatpush1.bf16.msra.mxu0 %v2872
        %2879 = vmatprep.subr.bf16.mxu0 0
        %2880 = vmatpush1.bf16.msra.mxu0 0
        %2881 = vmatprep.subr.bf16.mxu0 0
        %2882 = vmatpush1.bf16.msra.mxu0 0
        %2883 = vmatprep.subr.bf16.mxu0 0
        %2884 = vmatpush1.bf16.msra.mxu0 0
        %2885 = vmatprep.subr.bf16.mxu0 0
        %2886 = vmatpush1.bf16.msra.mxu0 0
        %2887 = vmatprep.subr.bf16.mxu0 0
        %2888 = vmatpush1.bf16.msra.mxu0 0
        %2889 = vmatprep.subr.bf16.mxu0 0
        %2890 = vmatpush1.bf16.msra.mxu0 0
        %2891 = vmatprep.subr.bf16.mxu0 0
        %2892 = vmatpush1.bf16.msra.mxu0 0
        %2893 = vmatprep.subr.bf16.mxu0 0
        %2894 = vmatpush1.bf16.msra.mxu0 0
        %2895 = vmatprep.subr.bf16.mxu0 0
        %2896 = vmatpush1.bf16.msra.mxu0 0
        %2897 = vmatprep.subr.bf16.mxu0 0
        %2898 = vmatpush1.bf16.msra.mxu0 0
        %2899 = vmatprep.subr.bf16.mxu0 0
        %2900 = vmatpush1.bf16.msra.mxu0 0
        %2901 = vmatprep.subr.bf16.mxu0 0
        %2902 = vmatpush1.bf16.msra.mxu0 0
        %2903 = vmatprep.subr.bf16.mxu0 0
        %2904 = vmatpush1.bf16.msra.mxu0 0
        %2905 = vmatprep.subr.bf16.mxu0 0
        %2906 = vmatpush1.bf16.msra.mxu0 0
        %2907 = vmatprep.mubr.bf16.mxu0 0
        %2908 = vmatmul.mubr.bf16.gmra.mrb[0].mxu0 %v2759
        %v2909 = vpop.f32.mrb[0].mxu0
        %v2910 = vadd.f32 %v2862, %v2909
        %v2911 = vpop.f32.mrb[0].mxu0
        %v2912 = vpop.f32.mrb[0].mxu0
        %v2913 = vpop.f32.mrb[0].mxu0
        %2914 = vdwg.mxu0
        %v2915 = vpack.c.bf16 %v2910, %v2910
        %v2916 = vlaneseq
        %v2917 = vshrl.u32 %v2916, 7
        %v2918 = vlaneseq
        %v2919 = vand.u32 %v2918, 127
        %vm2920 = vcmp.gt.s32.totalorder %v2919, %v2917
        %v2921 = vsel %vm2920, -1e+09, 0.0
        %v2923 = vsel %vm774, %v2801, 0
        %v2926 = vsel %vm774, %v2858, 0
        %2928 = vmatprep.subr.bf16.mxu0 0
        %2929 = vmatpush1.bf16.xpose.msra.mxu0 %v2926
        %2930 = vmatprep.subr.bf16.mxu0 0
        %2931 = vmatpush1.bf16.xpose.msra.mxu0 0
        %2932 = vmatprep.subr.bf16.mxu0 0
        %2933 = vmatpush1.bf16.xpose.msra.mxu0 0
        %2934 = vmatprep.subr.bf16.mxu0 0
        %2935 = vmatpush1.bf16.xpose.msra.mxu0 0
        %2936 = vmatprep.subr.bf16.mxu0 0
        %2937 = vmatpush1.bf16.xpose.msra.mxu0 0
        %2938 = vmatprep.subr.bf16.mxu0 0
        %2939 = vmatpush1.bf16.xpose.msra.mxu0 0
        %2940 = vmatprep.subr.bf16.mxu0 0
        %2941 = vmatpush1.bf16.xpose.msra.mxu0 0
        %2942 = vmatprep.subr.bf16.mxu0 0
        %2943 = vmatpush1.bf16.xpose.msra.mxu0 0
        %2944 = vmatprep.subr.bf16.mxu0 0
        %2945 = vmatpush1.bf16.xpose.msra.mxu0 0
        %2946 = vmatprep.subr.bf16.mxu0 0
        %2947 = vmatpush1.bf16.xpose.msra.mxu0 0
        %2948 = vmatprep.subr.bf16.mxu0 0
        %2949 = vmatpush1.bf16.xpose.msra.mxu0 0
        %2950 = vmatprep.subr.bf16.mxu0 0
        %2951 = vmatpush1.bf16.xpose.msra.mxu0 0
        %2952 = vmatprep.subr.bf16.mxu0 0
        %2953 = vmatpush1.bf16.xpose.msra.mxu0 0
        %2954 = vmatprep.subr.bf16.mxu0 0
        %2955 = vmatpush1.bf16.xpose.msra.mxu0 0
        %2956 = vmatprep.subr.bf16.mxu0 0
        %2957 = vmatpush1.bf16.xpose.msra.mxu0 0
        %2958 = vmatprep.subr.bf16.mxu0 0
        %2959 = vmatpush1.bf16.xpose.msra.mxu0 0
        %2960 = vmatprep.mubr.bf16.mxu0 0
        %2961 = vmatmul.mubr.bf16.gmra.mrb[0].mxu0 %v2923
        %v2962 = vpop.f32.mrb[0].mxu0
        %v2963 = vadd.f32 0.0, %v2962
        %v2964 = vpop.f32.mrb[0].mxu0
        %v2965 = vpop.f32.mrb[0].mxu0
        %v2966 = vpop.f32.mrb[0].mxu0
        %2967 = vdwg.mxu0
        %v2968 = vmul.f32 %v2963, 0.35355338
        %v2969 = vadd.f32 %v2968, %v2921
        %v2970 = vsel %vm774, %v2969, -inf
        %2971 = vmax.xlane.f32.xlu0 %v2970
        %v2972 = vpop.xlane.xlu0 %2971
        %v2973 = vsub.f32 %v2969, %v2972
        %v2974 = vmul.f32 %v2973, 1.442695
        %v2975 = vpow.pop %v2974
        %v2976 = vsel %vm774, %v2975, 0.0
        %2977 = vadd.xlane.f32.xlu0 %v2976
        %v2978 = vpop.xlane.xlu0 %2977
        %v2979 = vrcp.pop %v2978
        %v2980 = vmul.f32 %v2975, %v2979
        %v2981 = vpack.c.bf16 %v2980, %v2980
        %v2983 = vsel %vm774, %v2981, 0
        %v2986 = vsel %vm1349, %v2915, 0
        %2988 = vmatprep.subr.bf16.mxu0 0
        %2989 = vmatpush1.bf16.msra.mxu0 %v2986
        %2990 = vmatprep.subr.bf16.mxu0 0
        %2991 = vmatpush1.bf16.msra.mxu0 0
        %2992 = vmatprep.subr.bf16.mxu0 0
        %2993 = vmatpush1.bf16.msra.mxu0 0
        %2994 = vmatprep.subr.bf16.mxu0 0
        %2995 = vmatpush1.bf16.msra.mxu0 0
        %2996 = vmatprep.subr.bf16.mxu0 0
        %2997 = vmatpush1.bf16.msra.mxu0 0
        %2998 = vmatprep.subr.bf16.mxu0 0
        %2999 = vmatpush1.bf16.msra.mxu0 0
        %3000 = vmatprep.subr.bf16.mxu0 0
        %3001 = vmatpush1.bf16.msra.mxu0 0
        %3002 = vmatprep.subr.bf16.mxu0 0
        %3003 = vmatpush1.bf16.msra.mxu0 0
        %3004 = vmatprep.subr.bf16.mxu0 0
        %3005 = vmatpush1.bf16.msra.mxu0 0
        %3006 = vmatprep.subr.bf16.mxu0 0
        %3007 = vmatpush1.bf16.msra.mxu0 0
        %3008 = vmatprep.subr.bf16.mxu0 0
        %3009 = vmatpush1.bf16.msra.mxu0 0
        %3010 = vmatprep.subr.bf16.mxu0 0
        %3011 = vmatpush1.bf16.msra.mxu0 0
        %3012 = vmatprep.subr.bf16.mxu0 0
        %3013 = vmatpush1.bf16.msra.mxu0 0
        %3014 = vmatprep.subr.bf16.mxu0 0
        %3015 = vmatpush1.bf16.msra.mxu0 0
        %3016 = vmatprep.subr.bf16.mxu0 0
        %3017 = vmatpush1.bf16.msra.mxu0 0
        %3018 = vmatprep.subr.bf16.mxu0 0
        %3019 = vmatpush1.bf16.msra.mxu0 0
        %3020 = vmatprep.mubr.bf16.mxu0 0
        %3021 = vmatmul.mubr.bf16.gmra.mrb[0].mxu0 %v2983
        %v3022 = vpop.f32.mrb[0].mxu0
        %v3023 = vadd.f32 0.0, %v3022
        %v3024 = vpop.f32.mrb[0].mxu0
        %v3025 = vpop.f32.mrb[0].mxu0
        %v3026 = vpop.f32.mrb[0].mxu0
        %3027 = vdwg.mxu0
        %v3028 = vpack.c.bf16 %v3023, %v3023
        %3030 = vrot.lane.b32.xlu0 %v2801, 120
        %v3031 = vpop.permute.xlu0 %3030
        %3033 = vrot.lane.b32.xlu0 %v2858, 120
        %v3034 = vpop.permute.xlu0 %3033
        %v3036 = vsel %vm774, %v3031, 0
        %v3039 = vsel %vm774, %v3034, 0
        %3041 = vmatprep.subr.bf16.mxu0 0
        %3042 = vmatpush1.bf16.xpose.msra.mxu0 %v3039
        %3043 = vmatprep.subr.bf16.mxu0 0
        %3044 = vmatpush1.bf16.xpose.msra.mxu0 0
        %3045 = vmatprep.subr.bf16.mxu0 0
        %3046 = vmatpush1.bf16.xpose.msra.mxu0 0
        %3047 = vmatprep.subr.bf16.mxu0 0
        %3048 = vmatpush1.bf16.xpose.msra.mxu0 0
        %3049 = vmatprep.subr.bf16.mxu0 0
        %3050 = vmatpush1.bf16.xpose.msra.mxu0 0
        %3051 = vmatprep.subr.bf16.mxu0 0
        %3052 = vmatpush1.bf16.xpose.msra.mxu0 0
        %3053 = vmatprep.subr.bf16.mxu0 0
        %3054 = vmatpush1.bf16.xpose.msra.mxu0 0
        %3055 = vmatprep.subr.bf16.mxu0 0
        %3056 = vmatpush1.bf16.xpose.msra.mxu0 0
        %3057 = vmatprep.subr.bf16.mxu0 0
        %3058 = vmatpush1.bf16.xpose.msra.mxu0 0
        %3059 = vmatprep.subr.bf16.mxu0 0
        %3060 = vmatpush1.bf16.xpose.msra.mxu0 0
        %3061 = vmatprep.subr.bf16.mxu0 0
        %3062 = vmatpush1.bf16.xpose.msra.mxu0 0
        %3063 = vmatprep.subr.bf16.mxu0 0
        %3064 = vmatpush1.bf16.xpose.msra.mxu0 0
        %3065 = vmatprep.subr.bf16.mxu0 0
        %3066 = vmatpush1.bf16.xpose.msra.mxu0 0
        %3067 = vmatprep.subr.bf16.mxu0 0
        %3068 = vmatpush1.bf16.xpose.msra.mxu0 0
        %3069 = vmatprep.subr.bf16.mxu0 0
        %3070 = vmatpush1.bf16.xpose.msra.mxu0 0
        %3071 = vmatprep.subr.bf16.mxu0 0
        %3072 = vmatpush1.bf16.xpose.msra.mxu0 0
        %3073 = vmatprep.mubr.bf16.mxu0 0
        %3074 = vmatmul.mubr.bf16.gmra.mrb[0].mxu0 %v3036
        %v3075 = vpop.f32.mrb[0].mxu0
        %v3076 = vadd.f32 0.0, %v3075
        %v3077 = vpop.f32.mrb[0].mxu0
        %v3078 = vpop.f32.mrb[0].mxu0
        %v3079 = vpop.f32.mrb[0].mxu0
        %3080 = vdwg.mxu0
        %v3081 = vmul.f32 %v3076, 0.35355338
        %v3082 = vadd.f32 %v3081, %v2921
        %v3083 = vsel %vm774, %v3082, -inf
        %3084 = vmax.xlane.f32.xlu0 %v3083
        %v3085 = vpop.xlane.xlu0 %3084
        %v3086 = vsub.f32 %v3082, %v3085
        %v3087 = vmul.f32 %v3086, 1.442695
        %v3088 = vpow.pop %v3087
        %v3089 = vsel %vm774, %v3088, 0.0
        %3090 = vadd.xlane.f32.xlu0 %v3089
        %v3091 = vpop.xlane.xlu0 %3090
        %v3092 = vrcp.pop %v3091
        %v3093 = vmul.f32 %v3088, %v3092
        %v3094 = vpack.c.bf16 %v3093, %v3093
        %3096 = vrot.lane.b32.xlu0 %v2915, 120
        %v3097 = vpop.permute.xlu0 %3096
        %v3099 = vsel %vm774, %v3094, 0
        %v3102 = vsel %vm1349, %v3097, 0
        %3104 = vmatprep.subr.bf16.mxu0 0
        %3105 = vmatpush1.bf16.msra.mxu0 %v3102
        %3106 = vmatprep.subr.bf16.mxu0 0
        %3107 = vmatpush1.bf16.msra.mxu0 0
        %3108 = vmatprep.subr.bf16.mxu0 0
        %3109 = vmatpush1.bf16.msra.mxu0 0
        %3110 = vmatprep.subr.bf16.mxu0 0
        %3111 = vmatpush1.bf16.msra.mxu0 0
        %3112 = vmatprep.subr.bf16.mxu0 0
        %3113 = vmatpush1.bf16.msra.mxu0 0
        %3114 = vmatprep.subr.bf16.mxu0 0
        %3115 = vmatpush1.bf16.msra.mxu0 0
        %3116 = vmatprep.subr.bf16.mxu0 0
        %3117 = vmatpush1.bf16.msra.mxu0 0
        %3118 = vmatprep.subr.bf16.mxu0 0
        %3119 = vmatpush1.bf16.msra.mxu0 0
        %3120 = vmatprep.subr.bf16.mxu0 0
        %3121 = vmatpush1.bf16.msra.mxu0 0
        %3122 = vmatprep.subr.bf16.mxu0 0
        %3123 = vmatpush1.bf16.msra.mxu0 0
        %3124 = vmatprep.subr.bf16.mxu0 0
        %3125 = vmatpush1.bf16.msra.mxu0 0
        %3126 = vmatprep.subr.bf16.mxu0 0
        %3127 = vmatpush1.bf16.msra.mxu0 0
        %3128 = vmatprep.subr.bf16.mxu0 0
        %3129 = vmatpush1.bf16.msra.mxu0 0
        %3130 = vmatprep.subr.bf16.mxu0 0
        %3131 = vmatpush1.bf16.msra.mxu0 0
        %3132 = vmatprep.subr.bf16.mxu0 0
        %3133 = vmatpush1.bf16.msra.mxu0 0
        %3134 = vmatprep.subr.bf16.mxu0 0
        %3135 = vmatpush1.bf16.msra.mxu0 0
        %3136 = vmatprep.mubr.bf16.mxu0 0
        %3137 = vmatmul.mubr.bf16.gmra.mrb[0].mxu0 %v3099
        %v3138 = vpop.f32.mrb[0].mxu0
        %v3139 = vadd.f32 0.0, %v3138
        %v3140 = vpop.f32.mrb[0].mxu0
        %v3141 = vpop.f32.mrb[0].mxu0
        %v3142 = vpop.f32.mrb[0].mxu0
        %3143 = vdwg.mxu0
        %v3144 = vpack.c.bf16 %v3139, %v3139
        %v3146 = vsel %vm774, %v3144, 0
        %v3149 = vsel %vm1349, %v2737, 0
        %3151 = vmatprep.subr.bf16.mxu0 0
        %3152 = vmatpush1.bf16.msra.mxu0 %v3149
        %3153 = vmatprep.subr.bf16.mxu0 0
        %3154 = vmatpush1.bf16.msra.mxu0 0
        %3155 = vmatprep.subr.bf16.mxu0 0
        %3156 = vmatpush1.bf16.msra.mxu0 0
        %3157 = vmatprep.subr.bf16.mxu0 0
        %3158 = vmatpush1.bf16.msra.mxu0 0
        %3159 = vmatprep.subr.bf16.mxu0 0
        %3160 = vmatpush1.bf16.msra.mxu0 0
        %3161 = vmatprep.subr.bf16.mxu0 0
        %3162 = vmatpush1.bf16.msra.mxu0 0
        %3163 = vmatprep.subr.bf16.mxu0 0
        %3164 = vmatpush1.bf16.msra.mxu0 0
        %3165 = vmatprep.subr.bf16.mxu0 0
        %3166 = vmatpush1.bf16.msra.mxu0 0
        %3167 = vmatprep.subr.bf16.mxu0 0
        %3168 = vmatpush1.bf16.msra.mxu0 0
        %3169 = vmatprep.subr.bf16.mxu0 0
        %3170 = vmatpush1.bf16.msra.mxu0 0
        %3171 = vmatprep.subr.bf16.mxu0 0
        %3172 = vmatpush1.bf16.msra.mxu0 0
        %3173 = vmatprep.subr.bf16.mxu0 0
        %3174 = vmatpush1.bf16.msra.mxu0 0
        %3175 = vmatprep.subr.bf16.mxu0 0
        %3176 = vmatpush1.bf16.msra.mxu0 0
        %3177 = vmatprep.subr.bf16.mxu0 0
        %3178 = vmatpush1.bf16.msra.mxu0 0
        %3179 = vmatprep.subr.bf16.mxu0 0
        %3180 = vmatpush1.bf16.msra.mxu0 0
        %3181 = vmatprep.subr.bf16.mxu0 0
        %3182 = vmatpush1.bf16.msra.mxu0 0
        %3183 = vmatprep.mubr.bf16.mxu0 0
        %3184 = vmatmul.mubr.bf16.gmra.mrb[0].mxu0 %v3146
        %v3185 = vpop.f32.mrb[0].mxu0
        %v3186 = vadd.f32 0.0, %v3185
        %v3187 = vpop.f32.mrb[0].mxu0
        %v3188 = vpop.f32.mrb[0].mxu0
        %v3189 = vpop.f32.mrb[0].mxu0
        %3190 = vdwg.mxu0
        %v3192 = vsel %vm774, %v3028, 0
        %v3195 = vsel %vm1349, %v2736, 0
        %3197 = vmatprep.subr.bf16.mxu0 0
        %3198 = vmatpush1.bf16.msra.mxu0 %v3195
        %3199 = vmatprep.subr.bf16.mxu0 0
        %3200 = vmatpush1.bf16.msra.mxu0 0
        %3201 = vmatprep.subr.bf16.mxu0 0
        %3202 = vmatpush1.bf16.msra.mxu0 0
        %3203 = vmatprep.subr.bf16.mxu0 0
        %3204 = vmatpush1.bf16.msra.mxu0 0
        %3205 = vmatprep.subr.bf16.mxu0 0
        %3206 = vmatpush1.bf16.msra.mxu0 0
        %3207 = vmatprep.subr.bf16.mxu0 0
        %3208 = vmatpush1.bf16.msra.mxu0 0
        %3209 = vmatprep.subr.bf16.mxu0 0
        %3210 = vmatpush1.bf16.msra.mxu0 0
        %3211 = vmatprep.subr.bf16.mxu0 0
        %3212 = vmatpush1.bf16.msra.mxu0 0
        %3213 = vmatprep.subr.bf16.mxu0 0
        %3214 = vmatpush1.bf16.msra.mxu0 0
        %3215 = vmatprep.subr.bf16.mxu0 0
        %3216 = vmatpush1.bf16.msra.mxu0 0
        %3217 = vmatprep.subr.bf16.mxu0 0
        %3218 = vmatpush1.bf16.msra.mxu0 0
        %3219 = vmatprep.subr.bf16.mxu0 0
        %3220 = vmatpush1.bf16.msra.mxu0 0
        %3221 = vmatprep.subr.bf16.mxu0 0
        %3222 = vmatpush1.bf16.msra.mxu0 0
        %3223 = vmatprep.subr.bf16.mxu0 0
        %3224 = vmatpush1.bf16.msra.mxu0 0
        %3225 = vmatprep.subr.bf16.mxu0 0
        %3226 = vmatpush1.bf16.msra.mxu0 0
        %3227 = vmatprep.subr.bf16.mxu0 0
        %3228 = vmatpush1.bf16.msra.mxu0 0
        %3229 = vmatprep.mubr.bf16.mxu0 0
        %3230 = vmatmul.mubr.bf16.gmra.mrb[0].mxu0 %v3192
        %v3231 = vpop.f32.mrb[0].mxu0
        %v3232 = vadd.f32 %v3186, %v3231
        %v3233 = vpop.f32.mrb[0].mxu0
        %v3234 = vpop.f32.mrb[0].mxu0
        %v3235 = vpop.f32.mrb[0].mxu0
        %3236 = vdwg.mxu0
        %3237 = vrot.lane.b32.xlu0 %v2801, 112
        %v3238 = vpop.permute.xlu0 %3237
        %3239 = vrot.lane.b32.xlu0 %v2858, 112
        %v3240 = vpop.permute.xlu0 %3239
        %v3242 = vsel %vm774, %v3238, 0
        %v3245 = vsel %vm774, %v3240, 0
        %3247 = vmatprep.subr.bf16.mxu0 0
        %3248 = vmatpush1.bf16.xpose.msra.mxu0 %v3245
        %3249 = vmatprep.subr.bf16.mxu0 0
        %3250 = vmatpush1.bf16.xpose.msra.mxu0 0
        %3251 = vmatprep.subr.bf16.mxu0 0
        %3252 = vmatpush1.bf16.xpose.msra.mxu0 0
        %3253 = vmatprep.subr.bf16.mxu0 0
        %3254 = vmatpush1.bf16.xpose.msra.mxu0 0
        %3255 = vmatprep.subr.bf16.mxu0 0
        %3256 = vmatpush1.bf16.xpose.msra.mxu0 0
        %3257 = vmatprep.subr.bf16.mxu0 0
        %3258 = vmatpush1.bf16.xpose.msra.mxu0 0
        %3259 = vmatprep.subr.bf16.mxu0 0
        %3260 = vmatpush1.bf16.xpose.msra.mxu0 0
        %3261 = vmatprep.subr.bf16.mxu0 0
        %3262 = vmatpush1.bf16.xpose.msra.mxu0 0
        %3263 = vmatprep.subr.bf16.mxu0 0
        %3264 = vmatpush1.bf16.xpose.msra.mxu0 0
        %3265 = vmatprep.subr.bf16.mxu0 0
        %3266 = vmatpush1.bf16.xpose.msra.mxu0 0
        %3267 = vmatprep.subr.bf16.mxu0 0
        %3268 = vmatpush1.bf16.xpose.msra.mxu0 0
        %3269 = vmatprep.subr.bf16.mxu0 0
        %3270 = vmatpush1.bf16.xpose.msra.mxu0 0
        %3271 = vmatprep.subr.bf16.mxu0 0
        %3272 = vmatpush1.bf16.xpose.msra.mxu0 0
        %3273 = vmatprep.subr.bf16.mxu0 0
        %3274 = vmatpush1.bf16.xpose.msra.mxu0 0
        %3275 = vmatprep.subr.bf16.mxu0 0
        %3276 = vmatpush1.bf16.xpose.msra.mxu0 0
        %3277 = vmatprep.subr.bf16.mxu0 0
        %3278 = vmatpush1.bf16.xpose.msra.mxu0 0
        %3279 = vmatprep.mubr.bf16.mxu0 0
        %3280 = vmatmul.mubr.bf16.gmra.mrb[0].mxu0 %v3242
        %v3281 = vpop.f32.mrb[0].mxu0
        %v3282 = vadd.f32 0.0, %v3281
        %v3283 = vpop.f32.mrb[0].mxu0
        %v3284 = vpop.f32.mrb[0].mxu0
        %v3285 = vpop.f32.mrb[0].mxu0
        %3286 = vdwg.mxu0
        %v3287 = vmul.f32 %v3282, 0.35355338
        %v3288 = vadd.f32 %v3287, %v2921
        %v3289 = vsel %vm774, %v3288, -inf
        %3290 = vmax.xlane.f32.xlu0 %v3289
        %v3291 = vpop.xlane.xlu0 %3290
        %v3292 = vsub.f32 %v3288, %v3291
        %v3293 = vmul.f32 %v3292, 1.442695
        %v3294 = vpow.pop %v3293
        %v3295 = vsel %vm774, %v3294, 0.0
        %3296 = vadd.xlane.f32.xlu0 %v3295
        %v3297 = vpop.xlane.xlu0 %3296
        %v3298 = vrcp.pop %v3297
        %v3299 = vmul.f32 %v3294, %v3298
        %v3300 = vpack.c.bf16 %v3299, %v3299
        %3301 = vrot.lane.b32.xlu0 %v2915, 112
        %v3302 = vpop.permute.xlu0 %3301
        %v3304 = vsel %vm774, %v3300, 0
        %v3307 = vsel %vm1349, %v3302, 0
        %3309 = vmatprep.subr.bf16.mxu0 0
        %3310 = vmatpush1.bf16.msra.mxu0 %v3307
        %3311 = vmatprep.subr.bf16.mxu0 0
        %3312 = vmatpush1.bf16.msra.mxu0 0
        %3313 = vmatprep.subr.bf16.mxu0 0
        %3314 = vmatpush1.bf16.msra.mxu0 0
        %3315 = vmatprep.subr.bf16.mxu0 0
        %3316 = vmatpush1.bf16.msra.mxu0 0
        %3317 = vmatprep.subr.bf16.mxu0 0
        %3318 = vmatpush1.bf16.msra.mxu0 0
        %3319 = vmatprep.subr.bf16.mxu0 0
        %3320 = vmatpush1.bf16.msra.mxu0 0
        %3321 = vmatprep.subr.bf16.mxu0 0
        %3322 = vmatpush1.bf16.msra.mxu0 0
        %3323 = vmatprep.subr.bf16.mxu0 0
        %3324 = vmatpush1.bf16.msra.mxu0 0
        %3325 = vmatprep.subr.bf16.mxu0 0
        %3326 = vmatpush1.bf16.msra.mxu0 0
        %3327 = vmatprep.subr.bf16.mxu0 0
        %3328 = vmatpush1.bf16.msra.mxu0 0
        %3329 = vmatprep.subr.bf16.mxu0 0
        %3330 = vmatpush1.bf16.msra.mxu0 0
        %3331 = vmatprep.subr.bf16.mxu0 0
        %3332 = vmatpush1.bf16.msra.mxu0 0
        %3333 = vmatprep.subr.bf16.mxu0 0
        %3334 = vmatpush1.bf16.msra.mxu0 0
        %3335 = vmatprep.subr.bf16.mxu0 0
        %3336 = vmatpush1.bf16.msra.mxu0 0
        %3337 = vmatprep.subr.bf16.mxu0 0
        %3338 = vmatpush1.bf16.msra.mxu0 0
        %3339 = vmatprep.subr.bf16.mxu0 0
        %3340 = vmatpush1.bf16.msra.mxu0 0
        %3341 = vmatprep.mubr.bf16.mxu0 0
        %3342 = vmatmul.mubr.bf16.gmra.mrb[0].mxu0 %v3304
        %v3343 = vpop.f32.mrb[0].mxu0
        %v3344 = vadd.f32 0.0, %v3343
        %v3345 = vpop.f32.mrb[0].mxu0
        %v3346 = vpop.f32.mrb[0].mxu0
        %v3347 = vpop.f32.mrb[0].mxu0
        %3348 = vdwg.mxu0
        %v3349 = vpack.c.bf16 %v3344, %v3344
        %v3351 = vsel %vm774, %v3349, 0
        %v3354 = vsel %vm1349, %v2738, 0
        %3356 = vmatprep.subr.bf16.mxu0 0
        %3357 = vmatpush1.bf16.msra.mxu0 %v3354
        %3358 = vmatprep.subr.bf16.mxu0 0
        %3359 = vmatpush1.bf16.msra.mxu0 0
        %3360 = vmatprep.subr.bf16.mxu0 0
        %3361 = vmatpush1.bf16.msra.mxu0 0
        %3362 = vmatprep.subr.bf16.mxu0 0
        %3363 = vmatpush1.bf16.msra.mxu0 0
        %3364 = vmatprep.subr.bf16.mxu0 0
        %3365 = vmatpush1.bf16.msra.mxu0 0
        %3366 = vmatprep.subr.bf16.mxu0 0
        %3367 = vmatpush1.bf16.msra.mxu0 0
        %3368 = vmatprep.subr.bf16.mxu0 0
        %3369 = vmatpush1.bf16.msra.mxu0 0
        %3370 = vmatprep.subr.bf16.mxu0 0
        %3371 = vmatpush1.bf16.msra.mxu0 0
        %3372 = vmatprep.subr.bf16.mxu0 0
        %3373 = vmatpush1.bf16.msra.mxu0 0
        %3374 = vmatprep.subr.bf16.mxu0 0
        %3375 = vmatpush1.bf16.msra.mxu0 0
        %3376 = vmatprep.subr.bf16.mxu0 0
        %3377 = vmatpush1.bf16.msra.mxu0 0
        %3378 = vmatprep.subr.bf16.mxu0 0
        %3379 = vmatpush1.bf16.msra.mxu0 0
        %3380 = vmatprep.subr.bf16.mxu0 0
        %3381 = vmatpush1.bf16.msra.mxu0 0
        %3382 = vmatprep.subr.bf16.mxu0 0
        %3383 = vmatpush1.bf16.msra.mxu0 0
        %3384 = vmatprep.subr.bf16.mxu0 0
        %3385 = vmatpush1.bf16.msra.mxu0 0
        %3386 = vmatprep.subr.bf16.mxu0 0
        %3387 = vmatpush1.bf16.msra.mxu0 0
        %3388 = vmatprep.mubr.bf16.mxu0 0
        %3389 = vmatmul.mubr.bf16.gmra.mrb[0].mxu0 %v3351
        %v3390 = vpop.f32.mrb[0].mxu0
        %v3391 = vadd.f32 0.0, %v3390
        %v3392 = vpop.f32.mrb[0].mxu0
        %v3393 = vpop.f32.mrb[0].mxu0
        %v3394 = vpop.f32.mrb[0].mxu0
        %3395 = vdwg.mxu0
        %v3396 = vadd.f32 %v3232, %v3391
        %3397 = vrot.lane.b32.xlu0 %v2801, 104
        %v3398 = vpop.permute.xlu0 %3397
        %3399 = vrot.lane.b32.xlu0 %v2858, 104
        %v3400 = vpop.permute.xlu0 %3399
        %v3402 = vsel %vm774, %v3398, 0
        %v3405 = vsel %vm774, %v3400, 0
        %3407 = vmatprep.subr.bf16.mxu0 0
        %3408 = vmatpush1.bf16.xpose.msra.mxu0 %v3405
        %3409 = vmatprep.subr.bf16.mxu0 0
        %3410 = vmatpush1.bf16.xpose.msra.mxu0 0
        %3411 = vmatprep.subr.bf16.mxu0 0
        %3412 = vmatpush1.bf16.xpose.msra.mxu0 0
        %3413 = vmatprep.subr.bf16.mxu0 0
        %3414 = vmatpush1.bf16.xpose.msra.mxu0 0
        %3415 = vmatprep.subr.bf16.mxu0 0
        %3416 = vmatpush1.bf16.xpose.msra.mxu0 0
        %3417 = vmatprep.subr.bf16.mxu0 0
        %3418 = vmatpush1.bf16.xpose.msra.mxu0 0
        %3419 = vmatprep.subr.bf16.mxu0 0
        %3420 = vmatpush1.bf16.xpose.msra.mxu0 0
        %3421 = vmatprep.subr.bf16.mxu0 0
        %3422 = vmatpush1.bf16.xpose.msra.mxu0 0
        %3423 = vmatprep.subr.bf16.mxu0 0
        %3424 = vmatpush1.bf16.xpose.msra.mxu0 0
        %3425 = vmatprep.subr.bf16.mxu0 0
        %3426 = vmatpush1.bf16.xpose.msra.mxu0 0
        %3427 = vmatprep.subr.bf16.mxu0 0
        %3428 = vmatpush1.bf16.xpose.msra.mxu0 0
        %3429 = vmatprep.subr.bf16.mxu0 0
        %3430 = vmatpush1.bf16.xpose.msra.mxu0 0
        %3431 = vmatprep.subr.bf16.mxu0 0
        %3432 = vmatpush1.bf16.xpose.msra.mxu0 0
        %3433 = vmatprep.subr.bf16.mxu0 0
        %3434 = vmatpush1.bf16.xpose.msra.mxu0 0
        %3435 = vmatprep.subr.bf16.mxu0 0
        %3436 = vmatpush1.bf16.xpose.msra.mxu0 0
        %3437 = vmatprep.subr.bf16.mxu0 0
        %3438 = vmatpush1.bf16.xpose.msra.mxu0 0
        %3439 = vmatprep.mubr.bf16.mxu0 0
        %3440 = vmatmul.mubr.bf16.gmra.mrb[0].mxu0 %v3402
        %v3441 = vpop.f32.mrb[0].mxu0
        %v3442 = vadd.f32 0.0, %v3441
        %v3443 = vpop.f32.mrb[0].mxu0
        %v3444 = vpop.f32.mrb[0].mxu0
        %v3445 = vpop.f32.mrb[0].mxu0
        %3446 = vdwg.mxu0
        %v3447 = vmul.f32 %v3442, 0.35355338
        %v3448 = vadd.f32 %v3447, %v2921
        %v3449 = vsel %vm774, %v3448, -inf
        %3450 = vmax.xlane.f32.xlu0 %v3449
        %v3451 = vpop.xlane.xlu0 %3450
        %v3452 = vsub.f32 %v3448, %v3451
        %v3453 = vmul.f32 %v3452, 1.442695
        %v3454 = vpow.pop %v3453
        %v3455 = vsel %vm774, %v3454, 0.0
        %3456 = vadd.xlane.f32.xlu0 %v3455
        %v3457 = vpop.xlane.xlu0 %3456
        %v3458 = vrcp.pop %v3457
        %v3459 = vmul.f32 %v3454, %v3458
        %v3460 = vpack.c.bf16 %v3459, %v3459
        %3461 = vrot.lane.b32.xlu0 %v2915, 104
        %v3462 = vpop.permute.xlu0 %3461
        %v3464 = vsel %vm774, %v3460, 0
        %v3467 = vsel %vm1349, %v3462, 0
        %3469 = vmatprep.subr.bf16.mxu0 0
        %3470 = vmatpush1.bf16.msra.mxu0 %v3467
        %3471 = vmatprep.subr.bf16.mxu0 0
        %3472 = vmatpush1.bf16.msra.mxu0 0
        %3473 = vmatprep.subr.bf16.mxu0 0
        %3474 = vmatpush1.bf16.msra.mxu0 0
        %3475 = vmatprep.subr.bf16.mxu0 0
        %3476 = vmatpush1.bf16.msra.mxu0 0
        %3477 = vmatprep.subr.bf16.mxu0 0
        %3478 = vmatpush1.bf16.msra.mxu0 0
        %3479 = vmatprep.subr.bf16.mxu0 0
        %3480 = vmatpush1.bf16.msra.mxu0 0
        %3481 = vmatprep.subr.bf16.mxu0 0
        %3482 = vmatpush1.bf16.msra.mxu0 0
        %3483 = vmatprep.subr.bf16.mxu0 0
        %3484 = vmatpush1.bf16.msra.mxu0 0
        %3485 = vmatprep.subr.bf16.mxu0 0
        %3486 = vmatpush1.bf16.msra.mxu0 0
        %3487 = vmatprep.subr.bf16.mxu0 0
        %3488 = vmatpush1.bf16.msra.mxu0 0
        %3489 = vmatprep.subr.bf16.mxu0 0
        %3490 = vmatpush1.bf16.msra.mxu0 0
        %3491 = vmatprep.subr.bf16.mxu0 0
        %3492 = vmatpush1.bf16.msra.mxu0 0
        %3493 = vmatprep.subr.bf16.mxu0 0
        %3494 = vmatpush1.bf16.msra.mxu0 0
        %3495 = vmatprep.subr.bf16.mxu0 0
        %3496 = vmatpush1.bf16.msra.mxu0 0
        %3497 = vmatprep.subr.bf16.mxu0 0
        %3498 = vmatpush1.bf16.msra.mxu0 0
        %3499 = vmatprep.subr.bf16.mxu0 0
        %3500 = vmatpush1.bf16.msra.mxu0 0
        %3501 = vmatprep.mubr.bf16.mxu0 0
        %3502 = vmatmul.mubr.bf16.gmra.mrb[0].mxu0 %v3464
        %v3503 = vpop.f32.mrb[0].mxu0
        %v3504 = vadd.f32 0.0, %v3503
        %v3505 = vpop.f32.mrb[0].mxu0
        %v3506 = vpop.f32.mrb[0].mxu0
        %v3507 = vpop.f32.mrb[0].mxu0
        %3508 = vdwg.mxu0
        %v3509 = vpack.c.bf16 %v3504, %v3504
        %v3511 = vsel %vm774, %v3509, 0
        %v3514 = vsel %vm1349, %v2739, 0
        %3516 = vmatprep.subr.bf16.mxu0 0
        %3517 = vmatpush1.bf16.msra.mxu0 %v3514
        %3518 = vmatprep.subr.bf16.mxu0 0
        %3519 = vmatpush1.bf16.msra.mxu0 0
        %3520 = vmatprep.subr.bf16.mxu0 0
        %3521 = vmatpush1.bf16.msra.mxu0 0
        %3522 = vmatprep.subr.bf16.mxu0 0
        %3523 = vmatpush1.bf16.msra.mxu0 0
        %3524 = vmatprep.subr.bf16.mxu0 0
        %3525 = vmatpush1.bf16.msra.mxu0 0
        %3526 = vmatprep.subr.bf16.mxu0 0
        %3527 = vmatpush1.bf16.msra.mxu0 0
        %3528 = vmatprep.subr.bf16.mxu0 0
        %3529 = vmatpush1.bf16.msra.mxu0 0
        %3530 = vmatprep.subr.bf16.mxu0 0
        %3531 = vmatpush1.bf16.msra.mxu0 0
        %3532 = vmatprep.subr.bf16.mxu0 0
        %3533 = vmatpush1.bf16.msra.mxu0 0
        %3534 = vmatprep.subr.bf16.mxu0 0
        %3535 = vmatpush1.bf16.msra.mxu0 0
        %3536 = vmatprep.subr.bf16.mxu0 0
        %3537 = vmatpush1.bf16.msra.mxu0 0
        %3538 = vmatprep.subr.bf16.mxu0 0
        %3539 = vmatpush1.bf16.msra.mxu0 0
        %3540 = vmatprep.subr.bf16.mxu0 0
        %3541 = vmatpush1.bf16.msra.mxu0 0
        %3542 = vmatprep.subr.bf16.mxu0 0
        %3543 = vmatpush1.bf16.msra.mxu0 0
        %3544 = vmatprep.subr.bf16.mxu0 0
        %3545 = vmatpush1.bf16.msra.mxu0 0
        %3546 = vmatprep.subr.bf16.mxu0 0
        %3547 = vmatpush1.bf16.msra.mxu0 0
        %3548 = vmatprep.mubr.bf16.mxu0 0
        %3549 = vmatmul.mubr.bf16.gmra.mrb[0].mxu0 %v3511
        %v3550 = vpop.f32.mrb[0].mxu0
        %v3551 = vadd.f32 0.0, %v3550
        %v3552 = vpop.f32.mrb[0].mxu0
        %v3553 = vpop.f32.mrb[0].mxu0
        %v3554 = vpop.f32.mrb[0].mxu0
        %3555 = vdwg.mxu0
        %v3556 = vadd.f32 %v3396, %v3551
        %v3557 = vlaneseq
        %v3558 = vshrl.u32 %v3557, 7
        %v3559 = vsub.s32 0, %v3558
        %v3560 = vrot.slane %v2740, %v3559
        %v3561 = vadd.f32 %v3556, %v3560
        %v3562 = vadd.f32 %v2720, %v3561
        %v3563 = vld [vmem:[#allocation2 + $0xc0] sm:$0x1]
        %v3564 = vld [vmem:[#allocation2 + $0xc8] sm:$0x1]
        %v3565 = vsel %vm356, %v3562, 0.0
        %3566 = vadd.xlane.f32.xlu0 %v3565
        %v3567 = vpop.xlane.xlu0 %3566
        %v3568 = vmul.f32 %v3567, %v379
        %v3569 = vsub.f32 %v3562, %v3568
        %v3570 = vmul.f32 %v3569, %v3569
        %v3571 = vsel %vm356, %v3570, 0.0
        %3572 = vadd.xlane.f32.xlu0 %v3571
        %v3573 = vpop.xlane.xlu0 %3572
        %v3574 = vmul.f32 %v3573, %v379
        %v3575 = vadd.f32 %v3574, 1e-05
        %v3576 = vrsqrt.pop %v3575
        %v3577 = vmul.f32 %v3569, %v3576
        %v3578 = vlaneseq
        %v3579 = vshrl.u32 %v3578, 7
        %v3580 = vsub.s32 0, %v3579
        %v3581 = vrot.slane %v3563, %v3580
        %v3582 = vmul.f32 %v3577, %v3581
        %v3583 = vlaneseq
        %v3584 = vshrl.u32 %v3583, 7
        %v3585 = vsub.s32 0, %v3584
        %v3586 = vrot.slane %v3564, %v3585
        %v3587 = vadd.f32 %v3582, %v3586
        %v3588 = vld [vmem:[%s2 + $0xf0] sm:$0xf]
        %v3589 = vld [vmem:[%s2 + $0xf4] sm:$0xf]
        %v3590 = vld [vmem:[%s2 + $0xf8] sm:$0xf]
        %v3591 = vld [vmem:[%s2 + $0xfc] sm:$0xf]
        %v3592 = vld [vmem:[#allocation2 + $0xd0] sm:$0x1]
        %v3593 = vld [vmem:[%s2 + $0x100] sm:$0xf]
        %v3594 = vld [vmem:[%s2 + $0x104] sm:$0xf]
        %v3595 = vld [vmem:[%s2 + $0x108] sm:$0xf]
        %v3596 = vld [vmem:[%s2 + $0x10c] sm:$0xf]
        %v3597 = vld [vmem:[#allocation2 + $0xd8] sm:$0x1]
        %v3598 = vld [vmem:[%s2 + $0x110] sm:$0xf]
        %v3599 = vld [vmem:[%s2 + $0x114] sm:$0xf]
        %v3600 = vld [vmem:[%s2 + $0x118] sm:$0xf]
        %v3601 = vld [vmem:[%s2 + $0x11c] sm:$0xf]
        %v3602 = vld [vmem:[#allocation2 + $0xe0] sm:$0x1]
        %v3603 = vld [vmem:[%s2 + $0x120] sm:$0xf]
        %v3604 = vld [vmem:[%s2 + $0x128] sm:$0xf]
        %v3605 = vld [vmem:[%s2 + $0x130] sm:$0xf]
        %v3606 = vld [vmem:[%s2 + $0x138] sm:$0xf]
        %v3607 = vld [vmem:[#allocation2 + $0xe8] sm:$0x1]
        %v3608 = vpack.c.bf16 %v3587, %v3587
        %v3609 = vpack.c.bf16 %v2714, %v2713
        %v3610 = vpack.c.bf16 %v2716, %v2715
        %v3611 = vpack.c.bf16 %v2718, %v2717
        %v3612 = vpack.c.bf16 %v2719, %v2719
        %v3613 = vlaneseq
        %v3614 = vshrl.u32 %v3613, 7
        %v3615 = vsub.s32 0, %v3614
        %v3616 = vrot.slane %v3592, %v3615
        %v3621 = vunpack.c.l.b16 %v3588
        %v3622 = vunpack.c.l.b16 %v3589
        %v3623 = vunpack.c.l.b16 %v3590
        %v3624 = vunpack.c.l.b16 %v3591
        %v3625 = vpack.c.b16 %v3622, %v3621
        %v3626 = vpack.c.b16 %v3624, %v3623
        %v3630 = vsel %vm356, %v3608, 0
        %3632 = vmatprep.subr.bf16.mxu0 0
        %3633 = vmatpush1.bf16.msra.mxu0 %v3625
        %3634 = vmatprep.subr.bf16.mxu0 0
        %3635 = vmatpush1.bf16.msra.mxu0 %v3626
        %3636 = vmatprep.subr.bf16.mxu0 0
        %3637 = vmatpush1.bf16.msra.mxu0 0
        %3638 = vmatprep.subr.bf16.mxu0 0
        %3639 = vmatpush1.bf16.msra.mxu0 0
        %3640 = vmatprep.subr.bf16.mxu0 0
        %3641 = vmatpush1.bf16.msra.mxu0 0
        %3642 = vmatprep.subr.bf16.mxu0 0
        %3643 = vmatpush1.bf16.msra.mxu0 0
        %3644 = vmatprep.subr.bf16.mxu0 0
        %3645 = vmatpush1.bf16.msra.mxu0 0
        %3646 = vmatprep.subr.bf16.mxu0 0
        %3647 = vmatpush1.bf16.msra.mxu0 0
        %3648 = vmatprep.subr.bf16.mxu0 0
        %3649 = vmatpush1.bf16.msra.mxu0 0
        %3650 = vmatprep.subr.bf16.mxu0 0
        %3651 = vmatpush1.bf16.msra.mxu0 0
        %3652 = vmatprep.subr.bf16.mxu0 0
        %3653 = vmatpush1.bf16.msra.mxu0 0
        %3654 = vmatprep.subr.bf16.mxu0 0
        %3655 = vmatpush1.bf16.msra.mxu0 0
        %3656 = vmatprep.subr.bf16.mxu0 0
        %3657 = vmatpush1.bf16.msra.mxu0 0
        %3658 = vmatprep.subr.bf16.mxu0 0
        %3659 = vmatpush1.bf16.msra.mxu0 0
        %3660 = vmatprep.subr.bf16.mxu0 0
        %3661 = vmatpush1.bf16.msra.mxu0 0
        %3662 = vmatprep.subr.bf16.mxu0 0
        %3663 = vmatpush1.bf16.msra.mxu0 0
        %3664 = vmatprep.mubr.bf16.mxu0 0
        %3665 = vmatmul.mubr.bf16.gmra.mrb[0].mxu0 %v3630
        %v3666 = vpop.f32.mrb[0].mxu0
        %v3667 = vadd.f32 %v3616, %v3666
        %v3668 = vpop.f32.mrb[0].mxu0
        %v3669 = vpop.f32.mrb[0].mxu0
        %v3670 = vpop.f32.mrb[0].mxu0
        %3671 = vdwg.mxu0
        %v3672 = vpack.c.bf16 %v3667, %v3667
        %v3673 = vlaneseq
        %v3674 = vshrl.u32 %v3673, 7
        %v3675 = vsub.s32 0, %v3674
        %v3676 = vrot.slane %v3597, %v3675
        %v3681 = vunpack.c.l.b16 %v3593
        %v3682 = vunpack.c.l.b16 %v3594
        %v3683 = vunpack.c.l.b16 %v3595
        %v3684 = vunpack.c.l.b16 %v3596
        %v3685 = vpack.c.b16 %v3682, %v3681
        %v3686 = vpack.c.b16 %v3684, %v3683
        %v3690 = vsel %vm356, %v3609, 0
        %v3693 = vsel %vm356, %v3610, 0
        %v3696 = vsel %vm356, %v3611, 0
        %v3699 = vsel %vm356, %v3612, 0
        %3701 = vmatprep.subr.bf16.mxu0 0
        %3702 = vmatpush1.bf16.msra.mxu0 %v3685
        %3703 = vmatprep.subr.bf16.mxu0 0
        %3704 = vmatpush1.bf16.msra.mxu0 %v3686
        %3705 = vmatprep.subr.bf16.mxu0 0
        %3706 = vmatpush1.bf16.msra.mxu0 0
        %3707 = vmatprep.subr.bf16.mxu0 0
        %3708 = vmatpush1.bf16.msra.mxu0 0
        %3709 = vmatprep.subr.bf16.mxu0 0
        %3710 = vmatpush1.bf16.msra.mxu0 0
        %3711 = vmatprep.subr.bf16.mxu0 0
        %3712 = vmatpush1.bf16.msra.mxu0 0
        %3713 = vmatprep.subr.bf16.mxu0 0
        %3714 = vmatpush1.bf16.msra.mxu0 0
        %3715 = vmatprep.subr.bf16.mxu0 0
        %3716 = vmatpush1.bf16.msra.mxu0 0
        %3717 = vmatprep.subr.bf16.mxu0 0
        %3718 = vmatpush1.bf16.msra.mxu0 0
        %3719 = vmatprep.subr.bf16.mxu0 0
        %3720 = vmatpush1.bf16.msra.mxu0 0
        %3721 = vmatprep.subr.bf16.mxu0 0
        %3722 = vmatpush1.bf16.msra.mxu0 0
        %3723 = vmatprep.subr.bf16.mxu0 0
        %3724 = vmatpush1.bf16.msra.mxu0 0
        %3725 = vmatprep.subr.bf16.mxu0 0
        %3726 = vmatpush1.bf16.msra.mxu0 0
        %3727 = vmatprep.subr.bf16.mxu0 0
        %3728 = vmatpush1.bf16.msra.mxu0 0
        %3729 = vmatprep.subr.bf16.mxu0 0
        %3730 = vmatpush1.bf16.msra.mxu0 0
        %3731 = vmatprep.subr.bf16.mxu0 0
        %3732 = vmatpush1.bf16.msra.mxu0 0
        %3733 = vmatprep.mubr.bf16.mxu0 0
        %3734 = vmatmul.mubr.bf16.gmra.mrb[0].mxu0 %v3690
        %v3735 = vpop.f32.mrb[0].mxu0
        %v3736 = vadd.f32 %v3676, %v3735
        %v3737 = vpop.f32.mrb[0].mxu0
        %v3738 = vpop.f32.mrb[0].mxu0
        %v3739 = vadd.f32 %v3676, %v3738
        %v3740 = vpop.f32.mrb[0].mxu0
        %3741 = vmatprep.mubr.bf16.mxu0 0
        %3742 = vmatmul.mubr.bf16.gmra.mrb[0].mxu0 %v3693
        %v3743 = vpop.f32.mrb[0].mxu0
        %v3744 = vadd.f32 %v3676, %v3743
        %v3745 = vpop.f32.mrb[0].mxu0
        %v3746 = vpop.f32.mrb[0].mxu0
        %v3747 = vadd.f32 %v3676, %v3746
        %v3748 = vpop.f32.mrb[0].mxu0
        %3749 = vmatprep.mubr.bf16.mxu0 0
        %3750 = vmatmul.mubr.bf16.gmra.mrb[0].mxu0 %v3696
        %v3751 = vpop.f32.mrb[0].mxu0
        %v3752 = vadd.f32 %v3676, %v3751
        %v3753 = vpop.f32.mrb[0].mxu0
        %v3754 = vpop.f32.mrb[0].mxu0
        %v3755 = vadd.f32 %v3676, %v3754
        %v3756 = vpop.f32.mrb[0].mxu0
        %3757 = vmatprep.mubr.bf16.mxu0 0
        %3758 = vmatmul.mubr.bf16.gmra.mrb[0].mxu0 %v3699
        %v3759 = vpop.f32.mrb[0].mxu0
        %v3760 = vadd.f32 %v3676, %v3759
        %v3761 = vpop.f32.mrb[0].mxu0
        %v3762 = vpop.f32.mrb[0].mxu0
        %v3763 = vpop.f32.mrb[0].mxu0
        %3764 = vdwg.mxu0
        %v3765 = vpack.c.bf16 %v3739, %v3736
        %v3766 = vpack.c.bf16 %v3747, %v3744
        %v3767 = vpack.c.bf16 %v3755, %v3752
        %v3768 = vpack.c.bf16 %v3760, %v3760
        %v3769 = vlaneseq
        %v3770 = vshrl.u32 %v3769, 7
        %v3771 = vsub.s32 0, %v3770
        %v3772 = vrot.slane %v3602, %v3771
        %v3777 = vunpack.c.l.b16 %v3598
        %v3778 = vunpack.c.l.b16 %v3599
        %v3779 = vunpack.c.l.b16 %v3600
        %v3780 = vunpack.c.l.b16 %v3601
        %v3781 = vpack.c.b16 %v3778, %v3777
        %v3782 = vpack.c.b16 %v3780, %v3779
        %3785 = vmatprep.subr.bf16.mxu0 0
        %3786 = vmatpush1.bf16.msra.mxu0 %v3781
        %3787 = vmatprep.subr.bf16.mxu0 0
        %3788 = vmatpush1.bf16.msra.mxu0 %v3782
        %3789 = vmatprep.subr.bf16.mxu0 0
        %3790 = vmatpush1.bf16.msra.mxu0 0
        %3791 = vmatprep.subr.bf16.mxu0 0
        %3792 = vmatpush1.bf16.msra.mxu0 0
        %3793 = vmatprep.subr.bf16.mxu0 0
        %3794 = vmatpush1.bf16.msra.mxu0 0
        %3795 = vmatprep.subr.bf16.mxu0 0
        %3796 = vmatpush1.bf16.msra.mxu0 0
        %3797 = vmatprep.subr.bf16.mxu0 0
        %3798 = vmatpush1.bf16.msra.mxu0 0
        %3799 = vmatprep.subr.bf16.mxu0 0
        %3800 = vmatpush1.bf16.msra.mxu0 0
        %3801 = vmatprep.subr.bf16.mxu0 0
        %3802 = vmatpush1.bf16.msra.mxu0 0
        %3803 = vmatprep.subr.bf16.mxu0 0
        %3804 = vmatpush1.bf16.msra.mxu0 0
        %3805 = vmatprep.subr.bf16.mxu0 0
        %3806 = vmatpush1.bf16.msra.mxu0 0
        %3807 = vmatprep.subr.bf16.mxu0 0
        %3808 = vmatpush1.bf16.msra.mxu0 0
        %3809 = vmatprep.subr.bf16.mxu0 0
        %3810 = vmatpush1.bf16.msra.mxu0 0
        %3811 = vmatprep.subr.bf16.mxu0 0
        %3812 = vmatpush1.bf16.msra.mxu0 0
        %3813 = vmatprep.subr.bf16.mxu0 0
        %3814 = vmatpush1.bf16.msra.mxu0 0
        %3815 = vmatprep.subr.bf16.mxu0 0
        %3816 = vmatpush1.bf16.msra.mxu0 0
        %3817 = vmatprep.mubr.bf16.mxu0 0
        %3818 = vmatmul.mubr.bf16.gmra.mrb[0].mxu0 %v3690
        %v3819 = vpop.f32.mrb[0].mxu0
        %v3820 = vadd.f32 %v3772, %v3819
        %v3821 = vpop.f32.mrb[0].mxu0
        %v3822 = vpop.f32.mrb[0].mxu0
        %v3823 = vadd.f32 %v3772, %v3822
        %v3824 = vpop.f32.mrb[0].mxu0
        %3825 = vmatprep.mubr.bf16.mxu0 0
        %3826 = vmatmul.mubr.bf16.gmra.mrb[0].mxu0 %v3693
        %v3827 = vpop.f32.mrb[0].mxu0
        %v3828 = vadd.f32 %v3772, %v3827
        %v3829 = vpop.f32.mrb[0].mxu0
        %v3830 = vpop.f32.mrb[0].mxu0
        %v3831 = vadd.f32 %v3772, %v3830
        %v3832 = vpop.f32.mrb[0].mxu0
        %3833 = vmatprep.mubr.bf16.mxu0 0
        %3834 = vmatmul.mubr.bf16.gmra.mrb[0].mxu0 %v3696
        %v3835 = vpop.f32.mrb[0].mxu0
        %v3836 = vadd.f32 %v3772, %v3835
        %v3837 = vpop.f32.mrb[0].mxu0
        %v3838 = vpop.f32.mrb[0].mxu0
        %v3839 = vadd.f32 %v3772, %v3838
        %v3840 = vpop.f32.mrb[0].mxu0
        %3841 = vmatprep.mubr.bf16.mxu0 0
        %3842 = vmatmul.mubr.bf16.gmra.mrb[0].mxu0 %v3699
        %v3843 = vpop.f32.mrb[0].mxu0
        %v3844 = vadd.f32 %v3772, %v3843
        %v3845 = vpop.f32.mrb[0].mxu0
        %v3846 = vpop.f32.mrb[0].mxu0
        %v3847 = vpop.f32.mrb[0].mxu0
        %3848 = vdwg.mxu0
        %v3849 = vpack.c.bf16 %v3823, %v3820
        %v3850 = vpack.c.bf16 %v3831, %v3828
        %v3851 = vpack.c.bf16 %v3839, %v3836
        %v3852 = vpack.c.bf16 %v3844, %v3844
        %v3854 = vsel %vm774, %v3672, 0
        %v3857 = vsel %vm774, %v3765, 0
        %v3860 = vsel %vm774, %v3766, 0
        %v3863 = vsel %vm774, %v3767, 0
        %v3866 = vsel %vm774, %v3768, 0
        %3868 = vmatprep.subr.bf16.mxu0 0
        %3869 = vmatpush1.bf16.xpose.msra.mxu0 %v3857
        %3870 = vmatprep.subr.bf16.mxu0 0
        %3871 = vmatpush1.bf16.xpose.msra.mxu0 %v3860
        %3872 = vmatprep.subr.bf16.mxu0 0
        %3873 = vmatpush1.bf16.xpose.msra.mxu0 %v3863
        %3874 = vmatprep.subr.bf16.mxu0 0
        %3875 = vmatpush1.bf16.xpose.msra.mxu0 %v3866
        %3876 = vmatprep.subr.bf16.mxu0 0
        %3877 = vmatpush1.bf16.xpose.msra.mxu0 0
        %3878 = vmatprep.subr.bf16.mxu0 0
        %3879 = vmatpush1.bf16.xpose.msra.mxu0 0
        %3880 = vmatprep.subr.bf16.mxu0 0
        %3881 = vmatpush1.bf16.xpose.msra.mxu0 0
        %3882 = vmatprep.subr.bf16.mxu0 0
        %3883 = vmatpush1.bf16.xpose.msra.mxu0 0
        %3884 = vmatprep.subr.bf16.mxu0 0
        %3885 = vmatpush1.bf16.xpose.msra.mxu0 0
        %3886 = vmatprep.subr.bf16.mxu0 0
        %3887 = vmatpush1.bf16.xpose.msra.mxu0 0
        %3888 = vmatprep.subr.bf16.mxu0 0
        %3889 = vmatpush1.bf16.xpose.msra.mxu0 0
        %3890 = vmatprep.subr.bf16.mxu0 0
        %3891 = vmatpush1.bf16.xpose.msra.mxu0 0
        %3892 = vmatprep.subr.bf16.mxu0 0
        %3893 = vmatpush1.bf16.xpose.msra.mxu0 0
        %3894 = vmatprep.subr.bf16.mxu0 0
        %3895 = vmatpush1.bf16.xpose.msra.mxu0 0
        %3896 = vmatprep.subr.bf16.mxu0 0
        %3897 = vmatpush1.bf16.xpose.msra.mxu0 0
        %3898 = vmatprep.subr.bf16.mxu0 0
        %3899 = vmatpush1.bf16.xpose.msra.mxu0 0
        %3900 = vmatprep.mubr.bf16.mxu0 0
        %3901 = vmatmul.mubr.bf16.gmra.mrb[0].mxu0 %v3854
        %v3902 = vpop.f32.mrb[0].mxu0
        %v3903 = vadd.f32 0.0, %v3902
        %v3904 = vpop.f32.mrb[0].mxu0
        %v3905 = vpop.f32.mrb[0].mxu0
        %v3906 = vpop.f32.mrb[0].mxu0
        %3907 = vdwg.mxu0
        %v3908 = vmul.f32 %v3903, 0.35355338
        %v3909 = vsel %vm870, %v3908, -inf
        %3910 = vmax.xlane.f32.xlu0 %v3909
        %v3911 = vpop.xlane.xlu0 %3910
        %v3912 = vsub.f32 %v3908, %v3911
        %v3913 = vmul.f32 %v3912, 1.442695
        %v3914 = vpow.pop %v3913
        %v3915 = vsel %vm870, %v3914, 0.0
        %3916 = vadd.xlane.f32.xlu0 %v3915
        %v3917 = vpop.xlane.xlu0 %3916
        %v3918 = vrcp.pop %v3917
        %v3919 = vmul.f32 %v3914, %v3918
        %v3920 = vpack.c.bf16 %v3919, %v3919
        %v3922 = vsel %vm870, %v3920, 0
        %v3925 = vand.u32 %v3852, %v967
        %3927 = vmatprep.subr.bf16.mxu0 0
        %3928 = vmatpush1.bf16.msra.mxu0 %v3849
        %3929 = vmatprep.subr.bf16.mxu0 0
        %3930 = vmatpush1.bf16.msra.mxu0 %v3850
        %3931 = vmatprep.subr.bf16.mxu0 0
        %3932 = vmatpush1.bf16.msra.mxu0 %v3851
        %3933 = vmatprep.subr.bf16.mxu0 0
        %3934 = vmatpush1.bf16.msra.mxu0 %v3925
        %3935 = vmatprep.subr.bf16.mxu0 0
        %3936 = vmatpush1.bf16.msra.mxu0 0
        %3937 = vmatprep.subr.bf16.mxu0 0
        %3938 = vmatpush1.bf16.msra.mxu0 0
        %3939 = vmatprep.subr.bf16.mxu0 0
        %3940 = vmatpush1.bf16.msra.mxu0 0
        %3941 = vmatprep.subr.bf16.mxu0 0
        %3942 = vmatpush1.bf16.msra.mxu0 0
        %3943 = vmatprep.subr.bf16.mxu0 0
        %3944 = vmatpush1.bf16.msra.mxu0 0
        %3945 = vmatprep.subr.bf16.mxu0 0
        %3946 = vmatpush1.bf16.msra.mxu0 0
        %3947 = vmatprep.subr.bf16.mxu0 0
        %3948 = vmatpush1.bf16.msra.mxu0 0
        %3949 = vmatprep.subr.bf16.mxu0 0
        %3950 = vmatpush1.bf16.msra.mxu0 0
        %3951 = vmatprep.subr.bf16.mxu0 0
        %3952 = vmatpush1.bf16.msra.mxu0 0
        %3953 = vmatprep.subr.bf16.mxu0 0
        %3954 = vmatpush1.bf16.msra.mxu0 0
        %3955 = vmatprep.subr.bf16.mxu0 0
        %3956 = vmatpush1.bf16.msra.mxu0 0
        %3957 = vmatprep.subr.bf16.mxu0 0
        %3958 = vmatpush1.bf16.msra.mxu0 0
        %3959 = vmatprep.mubr.bf16.mxu0 0
        %3960 = vmatmul.mubr.bf16.gmra.mrb[0].mxu0 %v3922
        %v3961 = vpop.f32.mrb[0].mxu0
        %v3962 = vadd.f32 0.0, %v3961
        %v3963 = vpop.f32.mrb[0].mxu0
        %v3964 = vpop.f32.mrb[0].mxu0
        %v3965 = vpop.f32.mrb[0].mxu0
        %3966 = vdwg.mxu0
        %v3967 = vpack.c.bf16 %v3962, %v3962
        %3969 = vrot.lane.b32.xlu0 %v3672, 120
        %v3970 = vpop.permute.xlu0 %3969
        %3975 = vrot.lane.b32.xlu0 %v3765, 120
        %v3976 = vpop.permute.xlu0 %3975
        %3977 = vrot.lane.b32.xlu0 %v3766, 120
        %v3978 = vpop.permute.xlu0 %3977
        %3979 = vrot.lane.b32.xlu0 %v3767, 120
        %v3980 = vpop.permute.xlu0 %3979
        %3981 = vrot.lane.b32.xlu0 %v3768, 120
        %v3982 = vpop.permute.xlu0 %3981
        %v3984 = vsel %vm774, %v3970, 0
        %v3987 = vsel %vm774, %v3976, 0
        %v3990 = vsel %vm774, %v3978, 0
        %v3993 = vsel %vm774, %v3980, 0
        %v3996 = vsel %vm774, %v3982, 0
        %3998 = vmatprep.subr.bf16.mxu0 0
        %3999 = vmatpush1.bf16.xpose.msra.mxu0 %v3987
        %4000 = vmatprep.subr.bf16.mxu0 0
        %4001 = vmatpush1.bf16.xpose.msra.mxu0 %v3990
        %4002 = vmatprep.subr.bf16.mxu0 0
        %4003 = vmatpush1.bf16.xpose.msra.mxu0 %v3993
        %4004 = vmatprep.subr.bf16.mxu0 0
        %4005 = vmatpush1.bf16.xpose.msra.mxu0 %v3996
        %4006 = vmatprep.subr.bf16.mxu0 0
        %4007 = vmatpush1.bf16.xpose.msra.mxu0 0
        %4008 = vmatprep.subr.bf16.mxu0 0
        %4009 = vmatpush1.bf16.xpose.msra.mxu0 0
        %4010 = vmatprep.subr.bf16.mxu0 0
        %4011 = vmatpush1.bf16.xpose.msra.mxu0 0
        %4012 = vmatprep.subr.bf16.mxu0 0
        %4013 = vmatpush1.bf16.xpose.msra.mxu0 0
        %4014 = vmatprep.subr.bf16.mxu0 0
        %4015 = vmatpush1.bf16.xpose.msra.mxu0 0
        %4016 = vmatprep.subr.bf16.mxu0 0
        %4017 = vmatpush1.bf16.xpose.msra.mxu0 0
        %4018 = vmatprep.subr.bf16.mxu0 0
        %4019 = vmatpush1.bf16.xpose.msra.mxu0 0
        %4020 = vmatprep.subr.bf16.mxu0 0
        %4021 = vmatpush1.bf16.xpose.msra.mxu0 0
        %4022 = vmatprep.subr.bf16.mxu0 0
        %4023 = vmatpush1.bf16.xpose.msra.mxu0 0
        %4024 = vmatprep.subr.bf16.mxu0 0
        %4025 = vmatpush1.bf16.xpose.msra.mxu0 0
        %4026 = vmatprep.subr.bf16.mxu0 0
        %4027 = vmatpush1.bf16.xpose.msra.mxu0 0
        %4028 = vmatprep.subr.bf16.mxu0 0
        %4029 = vmatpush1.bf16.xpose.msra.mxu0 0
        %4030 = vmatprep.mubr.bf16.mxu0 0
        %4031 = vmatmul.mubr.bf16.gmra.mrb[0].mxu0 %v3984
        %v4032 = vpop.f32.mrb[0].mxu0
        %v4033 = vadd.f32 0.0, %v4032
        %v4034 = vpop.f32.mrb[0].mxu0
        %v4035 = vpop.f32.mrb[0].mxu0
        %v4036 = vpop.f32.mrb[0].mxu0
        %4037 = vdwg.mxu0
        %v4038 = vmul.f32 %v4033, 0.35355338
        %v4039 = vsel %vm870, %v4038, -inf
        %4040 = vmax.xlane.f32.xlu0 %v4039
        %v4041 = vpop.xlane.xlu0 %4040
        %v4042 = vsub.f32 %v4038, %v4041
        %v4043 = vmul.f32 %v4042, 1.442695
        %v4044 = vpow.pop %v4043
        %v4045 = vsel %vm870, %v4044, 0.0
        %4046 = vadd.xlane.f32.xlu0 %v4045
        %v4047 = vpop.xlane.xlu0 %4046
        %v4048 = vrcp.pop %v4047
        %v4049 = vmul.f32 %v4044, %v4048
        %v4050 = vpack.c.bf16 %v4049, %v4049
        %4055 = vrot.lane.b32.xlu0 %v3849, 120
        %v4056 = vpop.permute.xlu0 %4055
        %4057 = vrot.lane.b32.xlu0 %v3850, 120
        %v4058 = vpop.permute.xlu0 %4057
        %4059 = vrot.lane.b32.xlu0 %v3851, 120
        %v4060 = vpop.permute.xlu0 %4059
        %4061 = vrot.lane.b32.xlu0 %v3852, 120
        %v4062 = vpop.permute.xlu0 %4061
        %v4067 = vsel %vm870, %v4050, 0
        %v4070 = vand.u32 %v4062, %v967
        %4072 = vmatprep.subr.bf16.mxu0 0
        %4073 = vmatpush1.bf16.msra.mxu0 %v4056
        %4074 = vmatprep.subr.bf16.mxu0 0
        %4075 = vmatpush1.bf16.msra.mxu0 %v4058
        %4076 = vmatprep.subr.bf16.mxu0 0
        %4077 = vmatpush1.bf16.msra.mxu0 %v4060
        %4078 = vmatprep.subr.bf16.mxu0 0
        %4079 = vmatpush1.bf16.msra.mxu0 %v4070
        %4080 = vmatprep.subr.bf16.mxu0 0
        %4081 = vmatpush1.bf16.msra.mxu0 0
        %4082 = vmatprep.subr.bf16.mxu0 0
        %4083 = vmatpush1.bf16.msra.mxu0 0
        %4084 = vmatprep.subr.bf16.mxu0 0
        %4085 = vmatpush1.bf16.msra.mxu0 0
        %4086 = vmatprep.subr.bf16.mxu0 0
        %4087 = vmatpush1.bf16.msra.mxu0 0
        %4088 = vmatprep.subr.bf16.mxu0 0
        %4089 = vmatpush1.bf16.msra.mxu0 0
        %4090 = vmatprep.subr.bf16.mxu0 0
        %4091 = vmatpush1.bf16.msra.mxu0 0
        %4092 = vmatprep.subr.bf16.mxu0 0
        %4093 = vmatpush1.bf16.msra.mxu0 0
        %4094 = vmatprep.subr.bf16.mxu0 0
        %4095 = vmatpush1.bf16.msra.mxu0 0
        %4096 = vmatprep.subr.bf16.mxu0 0
        %4097 = vmatpush1.bf16.msra.mxu0 0
        %4098 = vmatprep.subr.bf16.mxu0 0
        %4099 = vmatpush1.bf16.msra.mxu0 0
        %4100 = vmatprep.subr.bf16.mxu0 0
        %4101 = vmatpush1.bf16.msra.mxu0 0
        %4102 = vmatprep.subr.bf16.mxu0 0
        %4103 = vmatpush1.bf16.msra.mxu0 0
        %4104 = vmatprep.mubr.bf16.mxu0 0
        %4105 = vmatmul.mubr.bf16.gmra.mrb[0].mxu0 %v4067
        %v4106 = vpop.f32.mrb[0].mxu0
        %v4107 = vadd.f32 0.0, %v4106
        %v4108 = vpop.f32.mrb[0].mxu0
        %v4109 = vpop.f32.mrb[0].mxu0
        %v4110 = vpop.f32.mrb[0].mxu0
        %4111 = vdwg.mxu0
        %v4112 = vpack.c.bf16 %v4107, %v4107
        %v4114 = vsel %vm774, %v4112, 0
        %v4117 = vsel %vm1349, %v3604, 0
        %4119 = vmatprep.subr.bf16.mxu0 0
        %4120 = vmatpush1.bf16.msra.mxu0 %v4117
        %4121 = vmatprep.subr.bf16.mxu0 0
        %4122 = vmatpush1.bf16.msra.mxu0 0
        %4123 = vmatprep.subr.bf16.mxu0 0
        %4124 = vmatpush1.bf16.msra.mxu0 0
        %4125 = vmatprep.subr.bf16.mxu0 0
        %4126 = vmatpush1.bf16.msra.mxu0 0
        %4127 = vmatprep.subr.bf16.mxu0 0
        %4128 = vmatpush1.bf16.msra.mxu0 0
        %4129 = vmatprep.subr.bf16.mxu0 0
        %4130 = vmatpush1.bf16.msra.mxu0 0
        %4131 = vmatprep.subr.bf16.mxu0 0
        %4132 = vmatpush1.bf16.msra.mxu0 0
        %4133 = vmatprep.subr.bf16.mxu0 0
        %4134 = vmatpush1.bf16.msra.mxu0 0
        %4135 = vmatprep.subr.bf16.mxu0 0
        %4136 = vmatpush1.bf16.msra.mxu0 0
        %4137 = vmatprep.subr.bf16.mxu0 0
        %4138 = vmatpush1.bf16.msra.mxu0 0
        %4139 = vmatprep.subr.bf16.mxu0 0
        %4140 = vmatpush1.bf16.msra.mxu0 0
        %4141 = vmatprep.subr.bf16.mxu0 0
        %4142 = vmatpush1.bf16.msra.mxu0 0
        %4143 = vmatprep.subr.bf16.mxu0 0
        %4144 = vmatpush1.bf16.msra.mxu0 0
        %4145 = vmatprep.subr.bf16.mxu0 0
        %4146 = vmatpush1.bf16.msra.mxu0 0
        %4147 = vmatprep.subr.bf16.mxu0 0
        %4148 = vmatpush1.bf16.msra.mxu0 0
        %4149 = vmatprep.subr.bf16.mxu0 0
        %4150 = vmatpush1.bf16.msra.mxu0 0
        %4151 = vmatprep.mubr.bf16.mxu0 0
        %4152 = vmatmul.mubr.bf16.gmra.mrb[0].mxu0 %v4114
        %v4153 = vpop.f32.mrb[0].mxu0
        %v4154 = vadd.f32 0.0, %v4153
        %v4155 = vpop.f32.mrb[0].mxu0
        %v4156 = vpop.f32.mrb[0].mxu0
        %v4157 = vpop.f32.mrb[0].mxu0
        %4158 = vdwg.mxu0
        %v4160 = vsel %vm774, %v3967, 0
        %v4163 = vsel %vm1349, %v3603, 0
        %4165 = vmatprep.subr.bf16.mxu0 0
        %4166 = vmatpush1.bf16.msra.mxu0 %v4163
        %4167 = vmatprep.subr.bf16.mxu0 0
        %4168 = vmatpush1.bf16.msra.mxu0 0
        %4169 = vmatprep.subr.bf16.mxu0 0
        %4170 = vmatpush1.bf16.msra.mxu0 0
        %4171 = vmatprep.subr.bf16.mxu0 0
        %4172 = vmatpush1.bf16.msra.mxu0 0
        %4173 = vmatprep.subr.bf16.mxu0 0
        %4174 = vmatpush1.bf16.msra.mxu0 0
        %4175 = vmatprep.subr.bf16.mxu0 0
        %4176 = vmatpush1.bf16.msra.mxu0 0
        %4177 = vmatprep.subr.bf16.mxu0 0
        %4178 = vmatpush1.bf16.msra.mxu0 0
        %4179 = vmatprep.subr.bf16.mxu0 0
        %4180 = vmatpush1.bf16.msra.mxu0 0
        %4181 = vmatprep.subr.bf16.mxu0 0
        %4182 = vmatpush1.bf16.msra.mxu0 0
        %4183 = vmatprep.subr.bf16.mxu0 0
        %4184 = vmatpush1.bf16.msra.mxu0 0
        %4185 = vmatprep.subr.bf16.mxu0 0
        %4186 = vmatpush1.bf16.msra.mxu0 0
        %4187 = vmatprep.subr.bf16.mxu0 0
        %4188 = vmatpush1.bf16.msra.mxu0 0
        %4189 = vmatprep.subr.bf16.mxu0 0
        %4190 = vmatpush1.bf16.msra.mxu0 0
        %4191 = vmatprep.subr.bf16.mxu0 0
        %4192 = vmatpush1.bf16.msra.mxu0 0
        %4193 = vmatprep.subr.bf16.mxu0 0
        %4194 = vmatpush1.bf16.msra.mxu0 0
        %4195 = vmatprep.subr.bf16.mxu0 0
        %4196 = vmatpush1.bf16.msra.mxu0 0
        %4197 = vmatprep.mubr.bf16.mxu0 0
        %4198 = vmatmul.mubr.bf16.gmra.mrb[0].mxu0 %v4160
        %v4199 = vpop.f32.mrb[0].mxu0
        %v4200 = vadd.f32 %v4154, %v4199
        %v4201 = vpop.f32.mrb[0].mxu0
        %v4202 = vpop.f32.mrb[0].mxu0
        %v4203 = vpop.f32.mrb[0].mxu0
        %4204 = vdwg.mxu0
        %4205 = vrot.lane.b32.xlu0 %v3672, 112
        %v4206 = vpop.permute.xlu0 %4205
        %4207 = vrot.lane.b32.xlu0 %v3765, 112
        %v4208 = vpop.permute.xlu0 %4207
        %4209 = vrot.lane.b32.xlu0 %v3766, 112
        %v4210 = vpop.permute.xlu0 %4209
        %4211 = vrot.lane.b32.xlu0 %v3767, 112
        %v4212 = vpop.permute.xlu0 %4211
        %4213 = vrot.lane.b32.xlu0 %v3768, 112
        %v4214 = vpop.permute.xlu0 %4213
        %v4216 = vsel %vm774, %v4206, 0
        %v4219 = vsel %vm774, %v4208, 0
        %v4222 = vsel %vm774, %v4210, 0
        %v4225 = vsel %vm774, %v4212, 0
        %v4228 = vsel %vm774, %v4214, 0
        %4230 = vmatprep.subr.bf16.mxu0 0
        %4231 = vmatpush1.bf16.xpose.msra.mxu0 %v4219
        %4232 = vmatprep.subr.bf16.mxu0 0
        %4233 = vmatpush1.bf16.xpose.msra.mxu0 %v4222
        %4234 = vmatprep.subr.bf16.mxu0 0
        %4235 = vmatpush1.bf16.xpose.msra.mxu0 %v4225
        %4236 = vmatprep.subr.bf16.mxu0 0
        %4237 = vmatpush1.bf16.xpose.msra.mxu0 %v4228
        %4238 = vmatprep.subr.bf16.mxu0 0
        %4239 = vmatpush1.bf16.xpose.msra.mxu0 0
        %4240 = vmatprep.subr.bf16.mxu0 0
        %4241 = vmatpush1.bf16.xpose.msra.mxu0 0
        %4242 = vmatprep.subr.bf16.mxu0 0
        %4243 = vmatpush1.bf16.xpose.msra.mxu0 0
        %4244 = vmatprep.subr.bf16.mxu0 0
        %4245 = vmatpush1.bf16.xpose.msra.mxu0 0
        %4246 = vmatprep.subr.bf16.mxu0 0
        %4247 = vmatpush1.bf16.xpose.msra.mxu0 0
        %4248 = vmatprep.subr.bf16.mxu0 0
        %4249 = vmatpush1.bf16.xpose.msra.mxu0 0
        %4250 = vmatprep.subr.bf16.mxu0 0
        %4251 = vmatpush1.bf16.xpose.msra.mxu0 0
        %4252 = vmatprep.subr.bf16.mxu0 0
        %4253 = vmatpush1.bf16.xpose.msra.mxu0 0
        %4254 = vmatprep.subr.bf16.mxu0 0
        %4255 = vmatpush1.bf16.xpose.msra.mxu0 0
        %4256 = vmatprep.subr.bf16.mxu0 0
        %4257 = vmatpush1.bf16.xpose.msra.mxu0 0
        %4258 = vmatprep.subr.bf16.mxu0 0
        %4259 = vmatpush1.bf16.xpose.msra.mxu0 0
        %4260 = vmatprep.subr.bf16.mxu0 0
        %4261 = vmatpush1.bf16.xpose.msra.mxu0 0
        %4262 = vmatprep.mubr.bf16.mxu0 0
        %4263 = vmatmul.mubr.bf16.gmra.mrb[0].mxu0 %v4216
        %v4264 = vpop.f32.mrb[0].mxu0
        %v4265 = vadd.f32 0.0, %v4264
        %v4266 = vpop.f32.mrb[0].mxu0
        %v4267 = vpop.f32.mrb[0].mxu0
        %v4268 = vpop.f32.mrb[0].mxu0
        %4269 = vdwg.mxu0
        %v4270 = vmul.f32 %v4265, 0.35355338
        %v4271 = vsel %vm870, %v4270, -inf
        %4272 = vmax.xlane.f32.xlu0 %v4271
        %v4273 = vpop.xlane.xlu0 %4272
        %v4274 = vsub.f32 %v4270, %v4273
        %v4275 = vmul.f32 %v4274, 1.442695
        %v4276 = vpow.pop %v4275
        %v4277 = vsel %vm870, %v4276, 0.0
        %4278 = vadd.xlane.f32.xlu0 %v4277
        %v4279 = vpop.xlane.xlu0 %4278
        %v4280 = vrcp.pop %v4279
        %v4281 = vmul.f32 %v4276, %v4280
        %v4282 = vpack.c.bf16 %v4281, %v4281
        %4283 = vrot.lane.b32.xlu0 %v3849, 112
        %v4284 = vpop.permute.xlu0 %4283
        %4285 = vrot.lane.b32.xlu0 %v3850, 112
        %v4286 = vpop.permute.xlu0 %4285
        %4287 = vrot.lane.b32.xlu0 %v3851, 112
        %v4288 = vpop.permute.xlu0 %4287
        %4289 = vrot.lane.b32.xlu0 %v3852, 112
        %v4290 = vpop.permute.xlu0 %4289
        %v4295 = vsel %vm870, %v4282, 0
        %v4298 = vand.u32 %v4290, %v967
        %4300 = vmatprep.subr.bf16.mxu0 0
        %4301 = vmatpush1.bf16.msra.mxu0 %v4284
        %4302 = vmatprep.subr.bf16.mxu0 0
        %4303 = vmatpush1.bf16.msra.mxu0 %v4286
        %4304 = vmatprep.subr.bf16.mxu0 0
        %4305 = vmatpush1.bf16.msra.mxu0 %v4288
        %4306 = vmatprep.subr.bf16.mxu0 0
        %4307 = vmatpush1.bf16.msra.mxu0 %v4298
        %4308 = vmatprep.subr.bf16.mxu0 0
        %4309 = vmatpush1.bf16.msra.mxu0 0
        %4310 = vmatprep.subr.bf16.mxu0 0
        %4311 = vmatpush1.bf16.msra.mxu0 0
        %4312 = vmatprep.subr.bf16.mxu0 0
        %4313 = vmatpush1.bf16.msra.mxu0 0
        %4314 = vmatprep.subr.bf16.mxu0 0
        %4315 = vmatpush1.bf16.msra.mxu0 0
        %4316 = vmatprep.subr.bf16.mxu0 0
        %4317 = vmatpush1.bf16.msra.mxu0 0
        %4318 = vmatprep.subr.bf16.mxu0 0
        %4319 = vmatpush1.bf16.msra.mxu0 0
        %4320 = vmatprep.subr.bf16.mxu0 0
        %4321 = vmatpush1.bf16.msra.mxu0 0
        %4322 = vmatprep.subr.bf16.mxu0 0
        %4323 = vmatpush1.bf16.msra.mxu0 0
        %4324 = vmatprep.subr.bf16.mxu0 0
        %4325 = vmatpush1.bf16.msra.mxu0 0
        %4326 = vmatprep.subr.bf16.mxu0 0
        %4327 = vmatpush1.bf16.msra.mxu0 0
        %4328 = vmatprep.subr.bf16.mxu0 0
        %4329 = vmatpush1.bf16.msra.mxu0 0
        %4330 = vmatprep.subr.bf16.mxu0 0
        %4331 = vmatpush1.bf16.msra.mxu0 0
        %4332 = vmatprep.mubr.bf16.mxu0 0
        %4333 = vmatmul.mubr.bf16.gmra.mrb[0].mxu0 %v4295
        %v4334 = vpop.f32.mrb[0].mxu0
        %v4335 = vadd.f32 0.0, %v4334
        %v4336 = vpop.f32.mrb[0].mxu0
        %v4337 = vpop.f32.mrb[0].mxu0
        %v4338 = vpop.f32.mrb[0].mxu0
        %4339 = vdwg.mxu0
        %v4340 = vpack.c.bf16 %v4335, %v4335
        %v4342 = vsel %vm774, %v4340, 0
        %v4345 = vsel %vm1349, %v3605, 0
        %4347 = vmatprep.subr.bf16.mxu0 0
        %4348 = vmatpush1.bf16.msra.mxu0 %v4345
        %4349 = vmatprep.subr.bf16.mxu0 0
        %4350 = vmatpush1.bf16.msra.mxu0 0
        %4351 = vmatprep.subr.bf16.mxu0 0
        %4352 = vmatpush1.bf16.msra.mxu0 0
        %4353 = vmatprep.subr.bf16.mxu0 0
        %4354 = vmatpush1.bf16.msra.mxu0 0
        %4355 = vmatprep.subr.bf16.mxu0 0
        %4356 = vmatpush1.bf16.msra.mxu0 0
        %4357 = vmatprep.subr.bf16.mxu0 0
        %4358 = vmatpush1.bf16.msra.mxu0 0
        %4359 = vmatprep.subr.bf16.mxu0 0
        %4360 = vmatpush1.bf16.msra.mxu0 0
        %4361 = vmatprep.subr.bf16.mxu0 0
        %4362 = vmatpush1.bf16.msra.mxu0 0
        %4363 = vmatprep.subr.bf16.mxu0 0
        %4364 = vmatpush1.bf16.msra.mxu0 0
        %4365 = vmatprep.subr.bf16.mxu0 0
        %4366 = vmatpush1.bf16.msra.mxu0 0
        %4367 = vmatprep.subr.bf16.mxu0 0
        %4368 = vmatpush1.bf16.msra.mxu0 0
        %4369 = vmatprep.subr.bf16.mxu0 0
        %4370 = vmatpush1.bf16.msra.mxu0 0
        %4371 = vmatprep.subr.bf16.mxu0 0
        %4372 = vmatpush1.bf16.msra.mxu0 0
        %4373 = vmatprep.subr.bf16.mxu0 0
        %4374 = vmatpush1.bf16.msra.mxu0 0
        %4375 = vmatprep.subr.bf16.mxu0 0
        %4376 = vmatpush1.bf16.msra.mxu0 0
        %4377 = vmatprep.subr.bf16.mxu0 0
        %4378 = vmatpush1.bf16.msra.mxu0 0
        %4379 = vmatprep.mubr.bf16.mxu0 0
        %4380 = vmatmul.mubr.bf16.gmra.mrb[0].mxu0 %v4342
        %v4381 = vpop.f32.mrb[0].mxu0
        %v4382 = vadd.f32 0.0, %v4381
        %v4383 = vpop.f32.mrb[0].mxu0
        %v4384 = vpop.f32.mrb[0].mxu0
        %v4385 = vpop.f32.mrb[0].mxu0
        %4386 = vdwg.mxu0
        %v4387 = vadd.f32 %v4200, %v4382
        %4388 = vrot.lane.b32.xlu0 %v3672, 104
        %v4389 = vpop.permute.xlu0 %4388
        %4390 = vrot.lane.b32.xlu0 %v3765, 104
        %v4391 = vpop.permute.xlu0 %4390
        %4392 = vrot.lane.b32.xlu0 %v3766, 104
        %v4393 = vpop.permute.xlu0 %4392
        %4394 = vrot.lane.b32.xlu0 %v3767, 104
        %v4395 = vpop.permute.xlu0 %4394
        %4396 = vrot.lane.b32.xlu0 %v3768, 104
        %v4397 = vpop.permute.xlu0 %4396
        %v4399 = vsel %vm774, %v4389, 0
        %v4402 = vsel %vm774, %v4391, 0
        %v4405 = vsel %vm774, %v4393, 0
        %v4408 = vsel %vm774, %v4395, 0
        %v4411 = vsel %vm774, %v4397, 0
        %4413 = vmatprep.subr.bf16.mxu0 0
        %4414 = vmatpush1.bf16.xpose.msra.mxu0 %v4402
        %4415 = vmatprep.subr.bf16.mxu0 0
        %4416 = vmatpush1.bf16.xpose.msra.mxu0 %v4405
        %4417 = vmatprep.subr.bf16.mxu0 0
        %4418 = vmatpush1.bf16.xpose.msra.mxu0 %v4408
        %4419 = vmatprep.subr.bf16.mxu0 0
        %4420 = vmatpush1.bf16.xpose.msra.mxu0 %v4411
        %4421 = vmatprep.subr.bf16.mxu0 0
        %4422 = vmatpush1.bf16.xpose.msra.mxu0 0
        %4423 = vmatprep.subr.bf16.mxu0 0
        %4424 = vmatpush1.bf16.xpose.msra.mxu0 0
        %4425 = vmatprep.subr.bf16.mxu0 0
        %4426 = vmatpush1.bf16.xpose.msra.mxu0 0
        %4427 = vmatprep.subr.bf16.mxu0 0
        %4428 = vmatpush1.bf16.xpose.msra.mxu0 0
        %4429 = vmatprep.subr.bf16.mxu0 0
        %4430 = vmatpush1.bf16.xpose.msra.mxu0 0
        %4431 = vmatprep.subr.bf16.mxu0 0
        %4432 = vmatpush1.bf16.xpose.msra.mxu0 0
        %4433 = vmatprep.subr.bf16.mxu0 0
        %4434 = vmatpush1.bf16.xpose.msra.mxu0 0
        %4435 = vmatprep.subr.bf16.mxu0 0
        %4436 = vmatpush1.bf16.xpose.msra.mxu0 0
        %4437 = vmatprep.subr.bf16.mxu0 0
        %4438 = vmatpush1.bf16.xpose.msra.mxu0 0
        %4439 = vmatprep.subr.bf16.mxu0 0
        %4440 = vmatpush1.bf16.xpose.msra.mxu0 0
        %4441 = vmatprep.subr.bf16.mxu0 0
        %4442 = vmatpush1.bf16.xpose.msra.mxu0 0
        %4443 = vmatprep.subr.bf16.mxu0 0
        %4444 = vmatpush1.bf16.xpose.msra.mxu0 0
        %4445 = vmatprep.mubr.bf16.mxu0 0
        %4446 = vmatmul.mubr.bf16.gmra.mrb[0].mxu0 %v4399
        %v4447 = vpop.f32.mrb[0].mxu0
        %v4448 = vadd.f32 0.0, %v4447
        %v4449 = vpop.f32.mrb[0].mxu0
        %v4450 = vpop.f32.mrb[0].mxu0
        %v4451 = vpop.f32.mrb[0].mxu0
        %4452 = vdwg.mxu0
        %v4453 = vmul.f32 %v4448, 0.35355338
        %v4454 = vsel %vm870, %v4453, -inf
        %4455 = vmax.xlane.f32.xlu0 %v4454
        %v4456 = vpop.xlane.xlu0 %4455
        %v4457 = vsub.f32 %v4453, %v4456
        %v4458 = vmul.f32 %v4457, 1.442695
        %v4459 = vpow.pop %v4458
        %v4460 = vsel %vm870, %v4459, 0.0
        %4461 = vadd.xlane.f32.xlu0 %v4460
        %v4462 = vpop.xlane.xlu0 %4461
        %v4463 = vrcp.pop %v4462
        %v4464 = vmul.f32 %v4459, %v4463
        %v4465 = vpack.c.bf16 %v4464, %v4464
        %4466 = vrot.lane.b32.xlu0 %v3849, 104
        %v4467 = vpop.permute.xlu0 %4466
        %4468 = vrot.lane.b32.xlu0 %v3850, 104
        %v4469 = vpop.permute.xlu0 %4468
        %4470 = vrot.lane.b32.xlu0 %v3851, 104
        %v4471 = vpop.permute.xlu0 %4470
        %4472 = vrot.lane.b32.xlu0 %v3852, 104
        %v4473 = vpop.permute.xlu0 %4472
        %v4478 = vsel %vm870, %v4465, 0
        %v4481 = vand.u32 %v4473, %v967
        %4483 = vmatprep.subr.bf16.mxu0 0
        %4484 = vmatpush1.bf16.msra.mxu0 %v4467
        %4485 = vmatprep.subr.bf16.mxu0 0
        %4486 = vmatpush1.bf16.msra.mxu0 %v4469
        %4487 = vmatprep.subr.bf16.mxu0 0
        %4488 = vmatpush1.bf16.msra.mxu0 %v4471
        %4489 = vmatprep.subr.bf16.mxu0 0
        %4490 = vmatpush1.bf16.msra.mxu0 %v4481
        %4491 = vmatprep.subr.bf16.mxu0 0
        %4492 = vmatpush1.bf16.msra.mxu0 0
        %4493 = vmatprep.subr.bf16.mxu0 0
        %4494 = vmatpush1.bf16.msra.mxu0 0
        %4495 = vmatprep.subr.bf16.mxu0 0
        %4496 = vmatpush1.bf16.msra.mxu0 0
        %4497 = vmatprep.subr.bf16.mxu0 0
        %4498 = vmatpush1.bf16.msra.mxu0 0
        %4499 = vmatprep.subr.bf16.mxu0 0
        %4500 = vmatpush1.bf16.msra.mxu0 0
        %4501 = vmatprep.subr.bf16.mxu0 0
        %4502 = vmatpush1.bf16.msra.mxu0 0
        %4503 = vmatprep.subr.bf16.mxu0 0
        %4504 = vmatpush1.bf16.msra.mxu0 0
        %4505 = vmatprep.subr.bf16.mxu0 0
        %4506 = vmatpush1.bf16.msra.mxu0 0
        %4507 = vmatprep.subr.bf16.mxu0 0
        %4508 = vmatpush1.bf16.msra.mxu0 0
        %4509 = vmatprep.subr.bf16.mxu0 0
        %4510 = vmatpush1.bf16.msra.mxu0 0
        %4511 = vmatprep.subr.bf16.mxu0 0
        %4512 = vmatpush1.bf16.msra.mxu0 0
        %4513 = vmatprep.subr.bf16.mxu0 0
        %4514 = vmatpush1.bf16.msra.mxu0 0
        %4515 = vmatprep.mubr.bf16.mxu0 0
        %4516 = vmatmul.mubr.bf16.gmra.mrb[0].mxu0 %v4478
        %v4517 = vpop.f32.mrb[0].mxu0
        %v4518 = vadd.f32 0.0, %v4517
        %v4519 = vpop.f32.mrb[0].mxu0
        %v4520 = vpop.f32.mrb[0].mxu0
        %v4521 = vpop.f32.mrb[0].mxu0
        %4522 = vdwg.mxu0
        %v4523 = vpack.c.bf16 %v4518, %v4518
        %v4525 = vsel %vm774, %v4523, 0
        %v4528 = vsel %vm1349, %v3606, 0
        %4530 = vmatprep.subr.bf16.mxu0 0
        %4531 = vmatpush1.bf16.msra.mxu0 %v4528
        %4532 = vmatprep.subr.bf16.mxu0 0
        %4533 = vmatpush1.bf16.msra.mxu0 0
        %4534 = vmatprep.subr.bf16.mxu0 0
        %4535 = vmatpush1.bf16.msra.mxu0 0
        %4536 = vmatprep.subr.bf16.mxu0 0
        %4537 = vmatpush1.bf16.msra.mxu0 0
        %4538 = vmatprep.subr.bf16.mxu0 0
        %4539 = vmatpush1.bf16.msra.mxu0 0
        %4540 = vmatprep.subr.bf16.mxu0 0
        %4541 = vmatpush1.bf16.msra.mxu0 0
        %4542 = vmatprep.subr.bf16.mxu0 0
        %4543 = vmatpush1.bf16.msra.mxu0 0
        %4544 = vmatprep.subr.bf16.mxu0 0
        %4545 = vmatpush1.bf16.msra.mxu0 0
        %4546 = vmatprep.subr.bf16.mxu0 0
        %4547 = vmatpush1.bf16.msra.mxu0 0
        %4548 = vmatprep.subr.bf16.mxu0 0
        %4549 = vmatpush1.bf16.msra.mxu0 0
        %4550 = vmatprep.subr.bf16.mxu0 0
        %4551 = vmatpush1.bf16.msra.mxu0 0
        %4552 = vmatprep.subr.bf16.mxu0 0
        %4553 = vmatpush1.bf16.msra.mxu0 0
        %4554 = vmatprep.subr.bf16.mxu0 0
        %4555 = vmatpush1.bf16.msra.mxu0 0
        %4556 = vmatprep.subr.bf16.mxu0 0
        %4557 = vmatpush1.bf16.msra.mxu0 0
        %4558 = vmatprep.subr.bf16.mxu0 0
        %4559 = vmatpush1.bf16.msra.mxu0 0
        %4560 = vmatprep.subr.bf16.mxu0 0
        %4561 = vmatpush1.bf16.msra.mxu0 0
        %4562 = vmatprep.mubr.bf16.mxu0 0
        %4563 = vmatmul.mubr.bf16.gmra.mrb[0].mxu0 %v4525
        %v4564 = vpop.f32.mrb[0].mxu0
        %v4565 = vadd.f32 0.0, %v4564
        %v4566 = vpop.f32.mrb[0].mxu0
        %v4567 = vpop.f32.mrb[0].mxu0
        %v4568 = vpop.f32.mrb[0].mxu0
        %4569 = vdwg.mxu0
        %v4570 = vadd.f32 %v4387, %v4565
        %v4571 = vlaneseq
        %v4572 = vshrl.u32 %v4571, 7
        %v4573 = vsub.s32 0, %v4572
        %v4574 = vrot.slane %v3607, %v4573
        %v4575 = vadd.f32 %v4570, %v4574
        %v4576 = vadd.f32 %v3587, %v4575
        %v4577 = vld [vmem:[#allocation2 + $0xf0] sm:$0x1]
        %v4578 = vld [vmem:[#allocation2 + $0xf8] sm:$0x1]
        %v4579 = vsel %vm356, %v4576, 0.0
        %4580 = vadd.xlane.f32.xlu0 %v4579
        %v4581 = vpop.xlane.xlu0 %4580
        %v4582 = vmul.f32 %v4581, %v379
        %v4583 = vsub.f32 %v4576, %v4582
        %v4584 = vmul.f32 %v4583, %v4583
        %v4585 = vsel %vm356, %v4584, 0.0
        %4586 = vadd.xlane.f32.xlu0 %v4585
        %v4587 = vpop.xlane.xlu0 %4586
        %v4588 = vmul.f32 %v4587, %v379
        %v4589 = vadd.f32 %v4588, 1e-05
        %v4590 = vrsqrt.pop %v4589
        %v4591 = vmul.f32 %v4583, %v4590
        %v4592 = vlaneseq
        %v4593 = vshrl.u32 %v4592, 7
        %v4594 = vsub.s32 0, %v4593
        %v4595 = vrot.slane %v4577, %v4594
        %v4596 = vmul.f32 %v4591, %v4595
        %v4597 = vlaneseq
        %v4598 = vshrl.u32 %v4597, 7
        %v4599 = vsub.s32 0, %v4598
        %v4600 = vrot.slane %v4578, %v4599
        %v4601 = vadd.f32 %v4596, %v4600
        %v4602 = vld [vmem:[%s2 + $0x140] sm:$0xf]
        %v4603 = vld [vmem:[%s2 + $0x144] sm:$0xf]
        %v4604 = vld [vmem:[%s2 + $0x148] sm:$0xf]
        %v4605 = vld [vmem:[%s2 + $0x14c] sm:$0xf]
        %v4606 = vld [vmem:[#allocation2 + $0x100] sm:$0x1]
        %v4607 = vpack.c.bf16 %v4601, %v4601
        %v4608 = vlaneseq
        %v4609 = vshrl.u32 %v4608, 7
        %v4610 = vsub.s32 0, %v4609
        %v4611 = vrot.slane %v4606, %v4610
        %v4616 = vunpack.c.l.b16 %v4602
        %v4617 = vunpack.c.l.b16 %v4603
        %v4618 = vunpack.c.l.b16 %v4604
        %v4619 = vunpack.c.l.b16 %v4605
        %v4620 = vpack.c.b16 %v4617, %v4616
        %v4621 = vpack.c.b16 %v4619, %v4618
        %v4625 = vsel %vm356, %v4607, 0
        %4627 = vmatprep.subr.bf16.mxu0 0
        %4628 = vmatpush1.bf16.msra.mxu0 %v4620
        %4629 = vmatprep.subr.bf16.mxu0 0
        %4630 = vmatpush1.bf16.msra.mxu0 %v4621
        %4631 = vmatprep.subr.bf16.mxu0 0
        %4632 = vmatpush1.bf16.msra.mxu0 0
        %4633 = vmatprep.subr.bf16.mxu0 0
        %4634 = vmatpush1.bf16.msra.mxu0 0
        %4635 = vmatprep.subr.bf16.mxu0 0
        %4636 = vmatpush1.bf16.msra.mxu0 0
        %4637 = vmatprep.subr.bf16.mxu0 0
        %4638 = vmatpush1.bf16.msra.mxu0 0
        %4639 = vmatprep.subr.bf16.mxu0 0
        %4640 = vmatpush1.bf16.msra.mxu0 0
        %4641 = vmatprep.subr.bf16.mxu0 0
        %4642 = vmatpush1.bf16.msra.mxu0 0
        %4643 = vmatprep.subr.bf16.mxu0 0
        %4644 = vmatpush1.bf16.msra.mxu0 0
        %4645 = vmatprep.subr.bf16.mxu0 0
        %4646 = vmatpush1.bf16.msra.mxu0 0
        %4647 = vmatprep.subr.bf16.mxu0 0
        %4648 = vmatpush1.bf16.msra.mxu0 0
        %4649 = vmatprep.subr.bf16.mxu0 0
        %4650 = vmatpush1.bf16.msra.mxu0 0
        %4651 = vmatprep.subr.bf16.mxu0 0
        %4652 = vmatpush1.bf16.msra.mxu0 0
        %4653 = vmatprep.subr.bf16.mxu0 0
        %4654 = vmatpush1.bf16.msra.mxu0 0
        %4655 = vmatprep.subr.bf16.mxu0 0
        %4656 = vmatpush1.bf16.msra.mxu0 0
        %4657 = vmatprep.subr.bf16.mxu0 0
        %4658 = vmatpush1.bf16.msra.mxu0 0
        %4659 = vmatprep.mubr.bf16.mxu0 0
        %4660 = vmatmul.mubr.bf16.gmra.mrb[0].mxu0 %v4625
        %v4661 = vpop.f32.mrb[0].mxu0
        %v4662 = vadd.f32 %v4611, %v4661
        %v4663 = vpop.f32.mrb[0].mxu0
        %v4664 = vpop.f32.mrb[0].mxu0
        %v4665 = vpop.f32.mrb[0].mxu0
        %4666 = vdwg.mxu0
        %v4667 = vmax.f32 %v4662, 0.0
        %v4668 = vld [vmem:[%s2 + $0x150] sm:$0xf]
        %v4669 = vld [vmem:[%s2 + $0x154] sm:$0xf]
        %v4670 = vld [vmem:[%s2 + $0x158] sm:$0xf]
        %v4671 = vld [vmem:[%s2 + $0x15c] sm:$0xf]
        %v4672 = vld [vmem:[%s2 + $0x160] sm:$0xf]
        %v4673 = vld [vmem:[%s2 + $0x164] sm:$0xf]
        %v4674 = vld [vmem:[%s2 + $0x168] sm:$0xf]
        %v4675 = vld [vmem:[%s2 + $0x16c] sm:$0xf]
        %v4676 = vld [vmem:[#allocation2 + $0x108] sm:$0x1]
        %v4677 = vpack.c.bf16 %v4667, %v4667
        %v4678 = vlaneseq
        %v4679 = vshrl.u32 %v4678, 7
        %v4680 = vsub.s32 0, %v4679
        %v4681 = vrot.slane %v4676, %v4680
        %v4690 = vunpack.c.l.b16 %v4668
        %v4691 = vunpack.c.l.b16 %v4669
        %v4692 = vunpack.c.l.b16 %v4670
        %v4693 = vunpack.c.l.b16 %v4671
        %v4694 = vunpack.c.l.b16 %v4672
        %v4695 = vunpack.c.l.b16 %v4673
        %v4696 = vunpack.c.l.b16 %v4674
        %v4697 = vunpack.c.l.b16 %v4675
        %v4698 = vpack.c.b16 %v4691, %v4690
        %v4699 = vpack.c.b16 %v4693, %v4692
        %v4700 = vpack.c.b16 %v4695, %v4694
        %v4701 = vpack.c.b16 %v4697, %v4696
        %v4707 = vsel %vm277, %v4677, 0
        %4709 = vmatprep.subr.bf16.mxu0 0
        %4710 = vmatpush1.bf16.msra.mxu0 %v4698
        %4711 = vmatprep.subr.bf16.mxu0 0
        %4712 = vmatpush1.bf16.msra.mxu0 %v4699
        %4713 = vmatprep.subr.bf16.mxu0 0
        %4714 = vmatpush1.bf16.msra.mxu0 %v4700
        %4715 = vmatprep.subr.bf16.mxu0 0
        %4716 = vmatpush1.bf16.msra.mxu0 %v4701
        %4717 = vmatprep.subr.bf16.mxu0 0
        %4718 = vmatpush1.bf16.msra.mxu0 0
        %4719 = vmatprep.subr.bf16.mxu0 0
        %4720 = vmatpush1.bf16.msra.mxu0 0
        %4721 = vmatprep.subr.bf16.mxu0 0
        %4722 = vmatpush1.bf16.msra.mxu0 0
        %4723 = vmatprep.subr.bf16.mxu0 0
        %4724 = vmatpush1.bf16.msra.mxu0 0
        %4725 = vmatprep.subr.bf16.mxu0 0
        %4726 = vmatpush1.bf16.msra.mxu0 0
        %4727 = vmatprep.subr.bf16.mxu0 0
        %4728 = vmatpush1.bf16.msra.mxu0 0
        %4729 = vmatprep.subr.bf16.mxu0 0
        %4730 = vmatpush1.bf16.msra.mxu0 0
        %4731 = vmatprep.subr.bf16.mxu0 0
        %4732 = vmatpush1.bf16.msra.mxu0 0
        %4733 = vmatprep.subr.bf16.mxu0 0
        %4734 = vmatpush1.bf16.msra.mxu0 0
        %4735 = vmatprep.subr.bf16.mxu0 0
        %4736 = vmatpush1.bf16.msra.mxu0 0
        %4737 = vmatprep.subr.bf16.mxu0 0
        %4738 = vmatpush1.bf16.msra.mxu0 0
        %4739 = vmatprep.subr.bf16.mxu0 0
        %4740 = vmatpush1.bf16.msra.mxu0 0
        %4741 = vmatprep.mubr.bf16.mxu0 0
        %4742 = vmatmul.mubr.bf16.gmra.mrb[0].mxu0 %v4707
        %v4743 = vpop.f32.mrb[0].mxu0
        %v4744 = vadd.f32 %v4681, %v4743
        %v4745 = vpop.f32.mrb[0].mxu0
        %v4746 = vpop.f32.mrb[0].mxu0
        %v4747 = vpop.f32.mrb[0].mxu0
        %4748 = vdwg.mxu0
        %v4749 = vadd.f32 %v4601, %v4744
        %v4750 = vld [vmem:[#allocation2 + $0x110] sm:$0x1]
        %v4751 = vld [vmem:[#allocation2 + $0x118] sm:$0x1]
        %v4752 = vsel %vm356, %v4749, 0.0
        %4753 = vadd.xlane.f32.xlu0 %v4752
        %v4754 = vpop.xlane.xlu0 %4753
        %v4755 = vmul.f32 %v4754, %v379
        %v4756 = vsub.f32 %v4749, %v4755
        %v4757 = vmul.f32 %v4756, %v4756
        %v4758 = vsel %vm356, %v4757, 0.0
        %4759 = vadd.xlane.f32.xlu0 %v4758
        %v4760 = vpop.xlane.xlu0 %4759
        %v4761 = vmul.f32 %v4760, %v379
        %v4762 = vadd.f32 %v4761, 1e-05
        %v4763 = vrsqrt.pop %v4762
        %v4764 = vmul.f32 %v4756, %v4763
        %v4765 = vlaneseq
        %v4766 = vshrl.u32 %v4765, 7
        %v4767 = vsub.s32 0, %v4766
        %v4768 = vrot.slane %v4750, %v4767
        %v4769 = vmul.f32 %v4764, %v4768
        %v4770 = vlaneseq
        %v4771 = vshrl.u32 %v4770, 7
        %v4772 = vsub.s32 0, %v4771
        %v4773 = vrot.slane %v4751, %v4772
        %v4774 = vadd.f32 %v4769, %v4773
        %v4775 = vld [vmem:[%s2 + $0x170] sm:$0xf]
        %v4776 = vld [vmem:[%s2 + $0x174] sm:$0xf]
        %v4777 = vld [vmem:[%s2 + $0x178] sm:$0xf]
        %v4778 = vld [vmem:[%s2 + $0x17c] sm:$0xf]
        %v4779 = vld [vmem:[#allocation2 + $0x120] sm:$0x1]
        %v4780 = vld [vmem:[%s2 + $0x180] sm:$0xf]
        %v4781 = vld [vmem:[%s2 + $0x184] sm:$0xf]
        %v4782 = vld [vmem:[%s2 + $0x188] sm:$0xf]
        %v4783 = vld [vmem:[%s2 + $0x18c] sm:$0xf]
        %v4784 = vld [vmem:[#allocation2 + $0x128] sm:$0x1]
        %v4785 = vld [vmem:[%s2 + $0x190] sm:$0xf]
        %v4786 = vld [vmem:[%s2 + $0x194] sm:$0xf]
        %v4787 = vld [vmem:[%s2 + $0x198] sm:$0xf]
        %v4788 = vld [vmem:[%s2 + $0x19c] sm:$0xf]
        %v4789 = vld [vmem:[#allocation2 + $0x130] sm:$0x1]
        %v4790 = vld [vmem:[%s2 + $0x1a0] sm:$0xf]
        %v4791 = vld [vmem:[%s2 + $0x1a8] sm:$0xf]
        %v4792 = vld [vmem:[%s2 + $0x1b0] sm:$0xf]
        %v4793 = vld [vmem:[%s2 + $0x1b8] sm:$0xf]
        %v4794 = vld [vmem:[#allocation2 + $0x138] sm:$0x1]
        %v4795 = vpack.c.bf16 %v4774, %v4774
        %v4796 = vlaneseq
        %v4797 = vshrl.u32 %v4796, 7
        %v4798 = vsub.s32 0, %v4797
        %v4799 = vrot.slane %v4779, %v4798
        %v4804 = vunpack.c.l.b16 %v4775
        %v4805 = vunpack.c.l.b16 %v4776
        %v4806 = vunpack.c.l.b16 %v4777
        %v4807 = vunpack.c.l.b16 %v4778
        %v4808 = vpack.c.b16 %v4805, %v4804
        %v4809 = vpack.c.b16 %v4807, %v4806
        %v4813 = vsel %vm356, %v4795, 0
        %4815 = vmatprep.subr.bf16.mxu0 0
        %4816 = vmatpush1.bf16.msra.mxu0 %v4808
        %4817 = vmatprep.subr.bf16.mxu0 0
        %4818 = vmatpush1.bf16.msra.mxu0 %v4809
        %4819 = vmatprep.subr.bf16.mxu0 0
        %4820 = vmatpush1.bf16.msra.mxu0 0
        %4821 = vmatprep.subr.bf16.mxu0 0
        %4822 = vmatpush1.bf16.msra.mxu0 0
        %4823 = vmatprep.subr.bf16.mxu0 0
        %4824 = vmatpush1.bf16.msra.mxu0 0
        %4825 = vmatprep.subr.bf16.mxu0 0
        %4826 = vmatpush1.bf16.msra.mxu0 0
        %4827 = vmatprep.subr.bf16.mxu0 0
        %4828 = vmatpush1.bf16.msra.mxu0 0
        %4829 = vmatprep.subr.bf16.mxu0 0
        %4830 = vmatpush1.bf16.msra.mxu0 0
        %4831 = vmatprep.subr.bf16.mxu0 0
        %4832 = vmatpush1.bf16.msra.mxu0 0
        %4833 = vmatprep.subr.bf16.mxu0 0
        %4834 = vmatpush1.bf16.msra.mxu0 0
        %4835 = vmatprep.subr.bf16.mxu0 0
        %4836 = vmatpush1.bf16.msra.mxu0 0
        %4837 = vmatprep.subr.bf16.mxu0 0
        %4838 = vmatpush1.bf16.msra.mxu0 0
        %4839 = vmatprep.subr.bf16.mxu0 0
        %4840 = vmatpush1.bf16.msra.mxu0 0
        %4841 = vmatprep.subr.bf16.mxu0 0
        %4842 = vmatpush1.bf16.msra.mxu0 0
        %4843 = vmatprep.subr.bf16.mxu0 0
        %4844 = vmatpush1.bf16.msra.mxu0 0
        %4845 = vmatprep.subr.bf16.mxu0 0
        %4846 = vmatpush1.bf16.msra.mxu0 0
        %4847 = vmatprep.mubr.bf16.mxu0 0
        %4848 = vmatmul.mubr.bf16.gmra.mrb[0].mxu0 %v4813
        %v4849 = vpop.f32.mrb[0].mxu0
        %v4850 = vadd.f32 %v4799, %v4849
        %v4851 = vpop.f32.mrb[0].mxu0
        %v4852 = vpop.f32.mrb[0].mxu0
        %v4853 = vpop.f32.mrb[0].mxu0
        %4854 = vdwg.mxu0
        %v4855 = vpack.c.bf16 %v4850, %v4850
        %v4856 = vlaneseq
        %v4857 = vshrl.u32 %v4856, 7
        %v4858 = vsub.s32 0, %v4857
        %v4859 = vrot.slane %v4784, %v4858
        %v4864 = vunpack.c.l.b16 %v4780
        %v4865 = vunpack.c.l.b16 %v4781
        %v4866 = vunpack.c.l.b16 %v4782
        %v4867 = vunpack.c.l.b16 %v4783
        %v4868 = vpack.c.b16 %v4865, %v4864
        %v4869 = vpack.c.b16 %v4867, %v4866
        %4872 = vmatprep.subr.bf16.mxu0 0
        %4873 = vmatpush1.bf16.msra.mxu0 %v4868
        %4874 = vmatprep.subr.bf16.mxu0 0
        %4875 = vmatpush1.bf16.msra.mxu0 %v4869
        %4876 = vmatprep.subr.bf16.mxu0 0
        %4877 = vmatpush1.bf16.msra.mxu0 0
        %4878 = vmatprep.subr.bf16.mxu0 0
        %4879 = vmatpush1.bf16.msra.mxu0 0
        %4880 = vmatprep.subr.bf16.mxu0 0
        %4881 = vmatpush1.bf16.msra.mxu0 0
        %4882 = vmatprep.subr.bf16.mxu0 0
        %4883 = vmatpush1.bf16.msra.mxu0 0
        %4884 = vmatprep.subr.bf16.mxu0 0
        %4885 = vmatpush1.bf16.msra.mxu0 0
        %4886 = vmatprep.subr.bf16.mxu0 0
        %4887 = vmatpush1.bf16.msra.mxu0 0
        %4888 = vmatprep.subr.bf16.mxu0 0
        %4889 = vmatpush1.bf16.msra.mxu0 0
        %4890 = vmatprep.subr.bf16.mxu0 0
        %4891 = vmatpush1.bf16.msra.mxu0 0
        %4892 = vmatprep.subr.bf16.mxu0 0
        %4893 = vmatpush1.bf16.msra.mxu0 0
        %4894 = vmatprep.subr.bf16.mxu0 0
        %4895 = vmatpush1.bf16.msra.mxu0 0
        %4896 = vmatprep.subr.bf16.mxu0 0
        %4897 = vmatpush1.bf16.msra.mxu0 0
        %4898 = vmatprep.subr.bf16.mxu0 0
        %4899 = vmatpush1.bf16.msra.mxu0 0
        %4900 = vmatprep.subr.bf16.mxu0 0
        %4901 = vmatpush1.bf16.msra.mxu0 0
        %4902 = vmatprep.subr.bf16.mxu0 0
        %4903 = vmatpush1.bf16.msra.mxu0 0
        %4904 = vmatprep.mubr.bf16.mxu0 0
        %4905 = vmatmul.mubr.bf16.gmra.mrb[0].mxu0 %v4813
        %v4906 = vpop.f32.mrb[0].mxu0
        %v4907 = vadd.f32 %v4859, %v4906
        %v4908 = vpop.f32.mrb[0].mxu0
        %v4909 = vpop.f32.mrb[0].mxu0
        %v4910 = vpop.f32.mrb[0].mxu0
        %4911 = vdwg.mxu0
        %v4912 = vpack.c.bf16 %v4907, %v4907
        %v4913 = vlaneseq
        %v4914 = vshrl.u32 %v4913, 7
        %v4915 = vsub.s32 0, %v4914
        %v4916 = vrot.slane %v4789, %v4915
        %v4921 = vunpack.c.l.b16 %v4785
        %v4922 = vunpack.c.l.b16 %v4786
        %v4923 = vunpack.c.l.b16 %v4787
        %v4924 = vunpack.c.l.b16 %v4788
        %v4925 = vpack.c.b16 %v4922, %v4921
        %v4926 = vpack.c.b16 %v4924, %v4923
        %4929 = vmatprep.subr.bf16.mxu0 0
        %4930 = vmatpush1.bf16.msra.mxu0 %v4925
        %4931 = vmatprep.subr.bf16.mxu0 0
        %4932 = vmatpush1.bf16.msra.mxu0 %v4926
        %4933 = vmatprep.subr.bf16.mxu0 0
        %4934 = vmatpush1.bf16.msra.mxu0 0
        %4935 = vmatprep.subr.bf16.mxu0 0
        %4936 = vmatpush1.bf16.msra.mxu0 0
        %4937 = vmatprep.subr.bf16.mxu0 0
        %4938 = vmatpush1.bf16.msra.mxu0 0
        %4939 = vmatprep.subr.bf16.mxu0 0
        %4940 = vmatpush1.bf16.msra.mxu0 0
        %4941 = vmatprep.subr.bf16.mxu0 0
        %4942 = vmatpush1.bf16.msra.mxu0 0
        %4943 = vmatprep.subr.bf16.mxu0 0
        %4944 = vmatpush1.bf16.msra.mxu0 0
        %4945 = vmatprep.subr.bf16.mxu0 0
        %4946 = vmatpush1.bf16.msra.mxu0 0
        %4947 = vmatprep.subr.bf16.mxu0 0
        %4948 = vmatpush1.bf16.msra.mxu0 0
        %4949 = vmatprep.subr.bf16.mxu0 0
        %4950 = vmatpush1.bf16.msra.mxu0 0
        %4951 = vmatprep.subr.bf16.mxu0 0
        %4952 = vmatpush1.bf16.msra.mxu0 0
        %4953 = vmatprep.subr.bf16.mxu0 0
        %4954 = vmatpush1.bf16.msra.mxu0 0
        %4955 = vmatprep.subr.bf16.mxu0 0
        %4956 = vmatpush1.bf16.msra.mxu0 0
        %4957 = vmatprep.subr.bf16.mxu0 0
        %4958 = vmatpush1.bf16.msra.mxu0 0
        %4959 = vmatprep.subr.bf16.mxu0 0
        %4960 = vmatpush1.bf16.msra.mxu0 0
        %4961 = vmatprep.mubr.bf16.mxu0 0
        %4962 = vmatmul.mubr.bf16.gmra.mrb[0].mxu0 %v4813
        %v4963 = vpop.f32.mrb[0].mxu0
        %v4964 = vadd.f32 %v4916, %v4963
        %v4965 = vpop.f32.mrb[0].mxu0
        %v4966 = vpop.f32.mrb[0].mxu0
        %v4967 = vpop.f32.mrb[0].mxu0
        %4968 = vdwg.mxu0
        %v4969 = vpack.c.bf16 %v4964, %v4964
        %v4971 = vsel %vm774, %v4855, 0
        %v4974 = vsel %vm774, %v4912, 0
        %4976 = vmatprep.subr.bf16.mxu0 0
        %4977 = vmatpush1.bf16.xpose.msra.mxu0 %v4974
        %4978 = vmatprep.subr.bf16.mxu0 0
        %4979 = vmatpush1.bf16.xpose.msra.mxu0 0
        %4980 = vmatprep.subr.bf16.mxu0 0
        %4981 = vmatpush1.bf16.xpose.msra.mxu0 0
        %4982 = vmatprep.subr.bf16.mxu0 0
        %4983 = vmatpush1.bf16.xpose.msra.mxu0 0
        %4984 = vmatprep.subr.bf16.mxu0 0
        %4985 = vmatpush1.bf16.xpose.msra.mxu0 0
        %4986 = vmatprep.subr.bf16.mxu0 0
        %4987 = vmatpush1.bf16.xpose.msra.mxu0 0
        %4988 = vmatprep.subr.bf16.mxu0 0
        %4989 = vmatpush1.bf16.xpose.msra.mxu0 0
        %4990 = vmatprep.subr.bf16.mxu0 0
        %4991 = vmatpush1.bf16.xpose.msra.mxu0 0
        %4992 = vmatprep.subr.bf16.mxu0 0
        %4993 = vmatpush1.bf16.xpose.msra.mxu0 0
        %4994 = vmatprep.subr.bf16.mxu0 0
        %4995 = vmatpush1.bf16.xpose.msra.mxu0 0
        %4996 = vmatprep.subr.bf16.mxu0 0
        %4997 = vmatpush1.bf16.xpose.msra.mxu0 0
        %4998 = vmatprep.subr.bf16.mxu0 0
        %4999 = vmatpush1.bf16.xpose.msra.mxu0 0
        %5000 = vmatprep.subr.bf16.mxu0 0
        %5001 = vmatpush1.bf16.xpose.msra.mxu0 0
        %5002 = vmatprep.subr.bf16.mxu0 0
        %5003 = vmatpush1.bf16.xpose.msra.mxu0 0
        %5004 = vmatprep.subr.bf16.mxu0 0
        %5005 = vmatpush1.bf16.xpose.msra.mxu0 0
        %5006 = vmatprep.subr.bf16.mxu0 0
        %5007 = vmatpush1.bf16.xpose.msra.mxu0 0
        %5008 = vmatprep.mubr.bf16.mxu0 0
        %5009 = vmatmul.mubr.bf16.gmra.mrb[0].mxu0 %v4971
        %v5010 = vpop.f32.mrb[0].mxu0
        %v5011 = vadd.f32 0.0, %v5010
        %v5012 = vpop.f32.mrb[0].mxu0
        %v5013 = vpop.f32.mrb[0].mxu0
        %v5014 = vpop.f32.mrb[0].mxu0
        %5015 = vdwg.mxu0
        %v5016 = vmul.f32 %v5011, 0.35355338
        %v5017 = vadd.f32 %v5016, %v2921
        %v5018 = vsel %vm774, %v5017, -inf
        %5019 = vmax.xlane.f32.xlu0 %v5018
        %v5020 = vpop.xlane.xlu0 %5019
        %v5021 = vsub.f32 %v5017, %v5020
        %v5022 = vmul.f32 %v5021, 1.442695
        %v5023 = vpow.pop %v5022
        %v5024 = vsel %vm774, %v5023, 0.0
        %5025 = vadd.xlane.f32.xlu0 %v5024
        %v5026 = vpop.xlane.xlu0 %5025
        %v5027 = vrcp.pop %v5026
        %v5028 = vmul.f32 %v5023, %v5027
        %v5029 = vpack.c.bf16 %v5028, %v5028
        %v5031 = vsel %vm774, %v5029, 0
        %v5034 = vsel %vm1349, %v4969, 0
        %5036 = vmatprep.subr.bf16.mxu0 0
        %5037 = vmatpush1.bf16.msra.mxu0 %v5034
        %5038 = vmatprep.subr.bf16.mxu0 0
        %5039 = vmatpush1.bf16.msra.mxu0 0
        %5040 = vmatprep.subr.bf16.mxu0 0
        %5041 = vmatpush1.bf16.msra.mxu0 0
        %5042 = vmatprep.subr.bf16.mxu0 0
        %5043 = vmatpush1.bf16.msra.mxu0 0
        %5044 = vmatprep.subr.bf16.mxu0 0
        %5045 = vmatpush1.bf16.msra.mxu0 0
        %5046 = vmatprep.subr.bf16.mxu0 0
        %5047 = vmatpush1.bf16.msra.mxu0 0
        %5048 = vmatprep.subr.bf16.mxu0 0
        %5049 = vmatpush1.bf16.msra.mxu0 0
        %5050 = vmatprep.subr.bf16.mxu0 0
        %5051 = vmatpush1.bf16.msra.mxu0 0
        %5052 = vmatprep.subr.bf16.mxu0 0
        %5053 = vmatpush1.bf16.msra.mxu0 0
        %5054 = vmatprep.subr.bf16.mxu0 0
        %5055 = vmatpush1.bf16.msra.mxu0 0
        %5056 = vmatprep.subr.bf16.mxu0 0
        %5057 = vmatpush1.bf16.msra.mxu0 0
        %5058 = vmatprep.subr.bf16.mxu0 0
        %5059 = vmatpush1.bf16.msra.mxu0 0
        %5060 = vmatprep.subr.bf16.mxu0 0
        %5061 = vmatpush1.bf16.msra.mxu0 0
        %5062 = vmatprep.subr.bf16.mxu0 0
        %5063 = vmatpush1.bf16.msra.mxu0 0
        %5064 = vmatprep.subr.bf16.mxu0 0
        %5065 = vmatpush1.bf16.msra.mxu0 0
        %5066 = vmatprep.subr.bf16.mxu0 0
        %5067 = vmatpush1.bf16.msra.mxu0 0
        %5068 = vmatprep.mubr.bf16.mxu0 0
        %5069 = vmatmul.mubr.bf16.gmra.mrb[0].mxu0 %v5031
        %v5070 = vpop.f32.mrb[0].mxu0
        %v5071 = vadd.f32 0.0, %v5070
        %v5072 = vpop.f32.mrb[0].mxu0
        %v5073 = vpop.f32.mrb[0].mxu0
        %v5074 = vpop.f32.mrb[0].mxu0
        %5075 = vdwg.mxu0
        %v5076 = vpack.c.bf16 %v5071, %v5071
        %5078 = vrot.lane.b32.xlu0 %v4855, 120
        %v5079 = vpop.permute.xlu0 %5078
        %5081 = vrot.lane.b32.xlu0 %v4912, 120
        %v5082 = vpop.permute.xlu0 %5081
        %v5084 = vsel %vm774, %v5079, 0
        %v5087 = vsel %vm774, %v5082, 0
        %5089 = vmatprep.subr.bf16.mxu0 0
        %5090 = vmatpush1.bf16.xpose.msra.mxu0 %v5087
        %5091 = vmatprep.subr.bf16.mxu0 0
        %5092 = vmatpush1.bf16.xpose.msra.mxu0 0
        %5093 = vmatprep.subr.bf16.mxu0 0
        %5094 = vmatpush1.bf16.xpose.msra.mxu0 0
        %5095 = vmatprep.subr.bf16.mxu0 0
        %5096 = vmatpush1.bf16.xpose.msra.mxu0 0
        %5097 = vmatprep.subr.bf16.mxu0 0
        %5098 = vmatpush1.bf16.xpose.msra.mxu0 0
        %5099 = vmatprep.subr.bf16.mxu0 0
        %5100 = vmatpush1.bf16.xpose.msra.mxu0 0
        %5101 = vmatprep.subr.bf16.mxu0 0
        %5102 = vmatpush1.bf16.xpose.msra.mxu0 0
        %5103 = vmatprep.subr.bf16.mxu0 0
        %5104 = vmatpush1.bf16.xpose.msra.mxu0 0
        %5105 = vmatprep.subr.bf16.mxu0 0
        %5106 = vmatpush1.bf16.xpose.msra.mxu0 0
        %5107 = vmatprep.subr.bf16.mxu0 0
        %5108 = vmatpush1.bf16.xpose.msra.mxu0 0
        %5109 = vmatprep.subr.bf16.mxu0 0
        %5110 = vmatpush1.bf16.xpose.msra.mxu0 0
        %5111 = vmatprep.subr.bf16.mxu0 0
        %5112 = vmatpush1.bf16.xpose.msra.mxu0 0
        %5113 = vmatprep.subr.bf16.mxu0 0
        %5114 = vmatpush1.bf16.xpose.msra.mxu0 0
        %5115 = vmatprep.subr.bf16.mxu0 0
        %5116 = vmatpush1.bf16.xpose.msra.mxu0 0
        %5117 = vmatprep.subr.bf16.mxu0 0
        %5118 = vmatpush1.bf16.xpose.msra.mxu0 0
        %5119 = vmatprep.subr.bf16.mxu0 0
        %5120 = vmatpush1.bf16.xpose.msra.mxu0 0
        %5121 = vmatprep.mubr.bf16.mxu0 0
        %5122 = vmatmul.mubr.bf16.gmra.mrb[0].mxu0 %v5084
        %v5123 = vpop.f32.mrb[0].mxu0
        %v5124 = vadd.f32 0.0, %v5123
        %v5125 = vpop.f32.mrb[0].mxu0
        %v5126 = vpop.f32.mrb[0].mxu0
        %v5127 = vpop.f32.mrb[0].mxu0
        %5128 = vdwg.mxu0
        %v5129 = vmul.f32 %v5124, 0.35355338
        %v5130 = vadd.f32 %v5129, %v2921
        %v5131 = vsel %vm774, %v5130, -inf
        %5132 = vmax.xlane.f32.xlu0 %v5131
        %v5133 = vpop.xlane.xlu0 %5132
        %v5134 = vsub.f32 %v5130, %v5133
        %v5135 = vmul.f32 %v5134, 1.442695
        %v5136 = vpow.pop %v5135
        %v5137 = vsel %vm774, %v5136, 0.0
        %5138 = vadd.xlane.f32.xlu0 %v5137
        %v5139 = vpop.xlane.xlu0 %5138
        %v5140 = vrcp.pop %v5139
        %v5141 = vmul.f32 %v5136, %v5140
        %v5142 = vpack.c.bf16 %v5141, %v5141
        %5144 = vrot.lane.b32.xlu0 %v4969, 120
        %v5145 = vpop.permute.xlu0 %5144
        %v5147 = vsel %vm774, %v5142, 0
        %v5150 = vsel %vm1349, %v5145, 0
        %5152 = vmatprep.subr.bf16.mxu0 0
        %5153 = vmatpush1.bf16.msra.mxu0 %v5150
        %5154 = vmatprep.subr.bf16.mxu0 0
        %5155 = vmatpush1.bf16.msra.mxu0 0
        %5156 = vmatprep.subr.bf16.mxu0 0
        %5157 = vmatpush1.bf16.msra.mxu0 0
        %5158 = vmatprep.subr.bf16.mxu0 0
        %5159 = vmatpush1.bf16.msra.mxu0 0
        %5160 = vmatprep.subr.bf16.mxu0 0
        %5161 = vmatpush1.bf16.msra.mxu0 0
        %5162 = vmatprep.subr.bf16.mxu0 0
        %5163 = vmatpush1.bf16.msra.mxu0 0
        %5164 = vmatprep.subr.bf16.mxu0 0
        %5165 = vmatpush1.bf16.msra.mxu0 0
        %5166 = vmatprep.subr.bf16.mxu0 0
        %5167 = vmatpush1.bf16.msra.mxu0 0
        %5168 = vmatprep.subr.bf16.mxu0 0
        %5169 = vmatpush1.bf16.msra.mxu0 0
        %5170 = vmatprep.subr.bf16.mxu0 0
        %5171 = vmatpush1.bf16.msra.mxu0 0
        %5172 = vmatprep.subr.bf16.mxu0 0
        %5173 = vmatpush1.bf16.msra.mxu0 0
        %5174 = vmatprep.subr.bf16.mxu0 0
        %5175 = vmatpush1.bf16.msra.mxu0 0
        %5176 = vmatprep.subr.bf16.mxu0 0
        %5177 = vmatpush1.bf16.msra.mxu0 0
        %5178 = vmatprep.subr.bf16.mxu0 0
        %5179 = vmatpush1.bf16.msra.mxu0 0
        %5180 = vmatprep.subr.bf16.mxu0 0
        %5181 = vmatpush1.bf16.msra.mxu0 0
        %5182 = vmatprep.subr.bf16.mxu0 0
        %5183 = vmatpush1.bf16.msra.mxu0 0
        %5184 = vmatprep.mubr.bf16.mxu0 0
        %5185 = vmatmul.mubr.bf16.gmra.mrb[0].mxu0 %v5147
        %v5186 = vpop.f32.mrb[0].mxu0
        %v5187 = vadd.f32 0.0, %v5186
        %v5188 = vpop.f32.mrb[0].mxu0
        %v5189 = vpop.f32.mrb[0].mxu0
        %v5190 = vpop.f32.mrb[0].mxu0
        %5191 = vdwg.mxu0
        %v5192 = vpack.c.bf16 %v5187, %v5187
        %v5194 = vsel %vm774, %v5192, 0
        %v5197 = vsel %vm1349, %v4791, 0
        %5199 = vmatprep.subr.bf16.mxu0 0
        %5200 = vmatpush1.bf16.msra.mxu0 %v5197
        %5201 = vmatprep.subr.bf16.mxu0 0
        %5202 = vmatpush1.bf16.msra.mxu0 0
        %5203 = vmatprep.subr.bf16.mxu0 0
        %5204 = vmatpush1.bf16.msra.mxu0 0
        %5205 = vmatprep.subr.bf16.mxu0 0
        %5206 = vmatpush1.bf16.msra.mxu0 0
        %5207 = vmatprep.subr.bf16.mxu0 0
        %5208 = vmatpush1.bf16.msra.mxu0 0
        %5209 = vmatprep.subr.bf16.mxu0 0
        %5210 = vmatpush1.bf16.msra.mxu0 0
        %5211 = vmatprep.subr.bf16.mxu0 0
        %5212 = vmatpush1.bf16.msra.mxu0 0
        %5213 = vmatprep.subr.bf16.mxu0 0
        %5214 = vmatpush1.bf16.msra.mxu0 0
        %5215 = vmatprep.subr.bf16.mxu0 0
        %5216 = vmatpush1.bf16.msra.mxu0 0
        %5217 = vmatprep.subr.bf16.mxu0 0
        %5218 = vmatpush1.bf16.msra.mxu0 0
        %5219 = vmatprep.subr.bf16.mxu0 0
        %5220 = vmatpush1.bf16.msra.mxu0 0
        %5221 = vmatprep.subr.bf16.mxu0 0
        %5222 = vmatpush1.bf16.msra.mxu0 0
        %5223 = vmatprep.subr.bf16.mxu0 0
        %5224 = vmatpush1.bf16.msra.mxu0 0
        %5225 = vmatprep.subr.bf16.mxu0 0
        %5226 = vmatpush1.bf16.msra.mxu0 0
        %5227 = vmatprep.subr.bf16.mxu0 0
        %5228 = vmatpush1.bf16.msra.mxu0 0
        %5229 = vmatprep.subr.bf16.mxu0 0
        %5230 = vmatpush1.bf16.msra.mxu0 0
        %5231 = vmatprep.mubr.bf16.mxu0 0
        %5232 = vmatmul.mubr.bf16.gmra.mrb[0].mxu0 %v5194
        %v5233 = vpop.f32.mrb[0].mxu0
        %v5234 = vadd.f32 0.0, %v5233
        %v5235 = vpop.f32.mrb[0].mxu0
        %v5236 = vpop.f32.mrb[0].mxu0
        %v5237 = vpop.f32.mrb[0].mxu0
        %5238 = vdwg.mxu0
        %v5240 = vsel %vm774, %v5076, 0
        %v5243 = vsel %vm1349, %v4790, 0
        %5245 = vmatprep.subr.bf16.mxu0 0
        %5246 = vmatpush1.bf16.msra.mxu0 %v5243
        %5247 = vmatprep.subr.bf16.mxu0 0
        %5248 = vmatpush1.bf16.msra.mxu0 0
        %5249 = vmatprep.subr.bf16.mxu0 0
        %5250 = vmatpush1.bf16.msra.mxu0 0
        %5251 = vmatprep.subr.bf16.mxu0 0
        %5252 = vmatpush1.bf16.msra.mxu0 0
        %5253 = vmatprep.subr.bf16.mxu0 0
        %5254 = vmatpush1.bf16.msra.mxu0 0
        %5255 = vmatprep.subr.bf16.mxu0 0
        %5256 = vmatpush1.bf16.msra.mxu0 0
        %5257 = vmatprep.subr.bf16.mxu0 0
        %5258 = vmatpush1.bf16.msra.mxu0 0
        %5259 = vmatprep.subr.bf16.mxu0 0
        %5260 = vmatpush1.bf16.msra.mxu0 0
        %5261 = vmatprep.subr.bf16.mxu0 0
        %5262 = vmatpush1.bf16.msra.mxu0 0
        %5263 = vmatprep.subr.bf16.mxu0 0
        %5264 = vmatpush1.bf16.msra.mxu0 0
        %5265 = vmatprep.subr.bf16.mxu0 0
        %5266 = vmatpush1.bf16.msra.mxu0 0
        %5267 = vmatprep.subr.bf16.mxu0 0
        %5268 = vmatpush1.bf16.msra.mxu0 0
        %5269 = vmatprep.subr.bf16.mxu0 0
        %5270 = vmatpush1.bf16.msra.mxu0 0
        %5271 = vmatprep.subr.bf16.mxu0 0
        %5272 = vmatpush1.bf16.msra.mxu0 0
        %5273 = vmatprep.subr.bf16.mxu0 0
        %5274 = vmatpush1.bf16.msra.mxu0 0
        %5275 = vmatprep.subr.bf16.mxu0 0
        %5276 = vmatpush1.bf16.msra.mxu0 0
        %5277 = vmatprep.mubr.bf16.mxu0 0
        %5278 = vmatmul.mubr.bf16.gmra.mrb[0].mxu0 %v5240
        %v5279 = vpop.f32.mrb[0].mxu0
        %v5280 = vadd.f32 %v5234, %v5279
        %v5281 = vpop.f32.mrb[0].mxu0
        %v5282 = vpop.f32.mrb[0].mxu0
        %v5283 = vpop.f32.mrb[0].mxu0
        %5284 = vdwg.mxu0
        %5285 = vrot.lane.b32.xlu0 %v4855, 112
        %v5286 = vpop.permute.xlu0 %5285
        %5287 = vrot.lane.b32.xlu0 %v4912, 112
        %v5288 = vpop.permute.xlu0 %5287
        %v5290 = vsel %vm774, %v5286, 0
        %v5293 = vsel %vm774, %v5288, 0
        %5295 = vmatprep.subr.bf16.mxu0 0
        %5296 = vmatpush1.bf16.xpose.msra.mxu0 %v5293
        %5297 = vmatprep.subr.bf16.mxu0 0
        %5298 = vmatpush1.bf16.xpose.msra.mxu0 0
        %5299 = vmatprep.subr.bf16.mxu0 0
        %5300 = vmatpush1.bf16.xpose.msra.mxu0 0
        %5301 = vmatprep.subr.bf16.mxu0 0
        %5302 = vmatpush1.bf16.xpose.msra.mxu0 0
        %5303 = vmatprep.subr.bf16.mxu0 0
        %5304 = vmatpush1.bf16.xpose.msra.mxu0 0
        %5305 = vmatprep.subr.bf16.mxu0 0
        %5306 = vmatpush1.bf16.xpose.msra.mxu0 0
        %5307 = vmatprep.subr.bf16.mxu0 0
        %5308 = vmatpush1.bf16.xpose.msra.mxu0 0
        %5309 = vmatprep.subr.bf16.mxu0 0
        %5310 = vmatpush1.bf16.xpose.msra.mxu0 0
        %5311 = vmatprep.subr.bf16.mxu0 0
        %5312 = vmatpush1.bf16.xpose.msra.mxu0 0
        %5313 = vmatprep.subr.bf16.mxu0 0
        %5314 = vmatpush1.bf16.xpose.msra.mxu0 0
        %5315 = vmatprep.subr.bf16.mxu0 0
        %5316 = vmatpush1.bf16.xpose.msra.mxu0 0
        %5317 = vmatprep.subr.bf16.mxu0 0
        %5318 = vmatpush1.bf16.xpose.msra.mxu0 0
        %5319 = vmatprep.subr.bf16.mxu0 0
        %5320 = vmatpush1.bf16.xpose.msra.mxu0 0
        %5321 = vmatprep.subr.bf16.mxu0 0
        %5322 = vmatpush1.bf16.xpose.msra.mxu0 0
        %5323 = vmatprep.subr.bf16.mxu0 0
        %5324 = vmatpush1.bf16.xpose.msra.mxu0 0
        %5325 = vmatprep.subr.bf16.mxu0 0
        %5326 = vmatpush1.bf16.xpose.msra.mxu0 0
        %5327 = vmatprep.mubr.bf16.mxu0 0
        %5328 = vmatmul.mubr.bf16.gmra.mrb[0].mxu0 %v5290
        %v5329 = vpop.f32.mrb[0].mxu0
        %v5330 = vadd.f32 0.0, %v5329
        %v5331 = vpop.f32.mrb[0].mxu0
        %v5332 = vpop.f32.mrb[0].mxu0
        %v5333 = vpop.f32.mrb[0].mxu0
        %5334 = vdwg.mxu0
        %v5335 = vmul.f32 %v5330, 0.35355338
        %v5336 = vadd.f32 %v5335, %v2921
        %v5337 = vsel %vm774, %v5336, -inf
        %5338 = vmax.xlane.f32.xlu0 %v5337
        %v5339 = vpop.xlane.xlu0 %5338
        %v5340 = vsub.f32 %v5336, %v5339
        %v5341 = vmul.f32 %v5340, 1.442695
        %v5342 = vpow.pop %v5341
        %v5343 = vsel %vm774, %v5342, 0.0
        %5344 = vadd.xlane.f32.xlu0 %v5343
        %v5345 = vpop.xlane.xlu0 %5344
        %v5346 = vrcp.pop %v5345
        %v5347 = vmul.f32 %v5342, %v5346
        %v5348 = vpack.c.bf16 %v5347, %v5347
        %5349 = vrot.lane.b32.xlu0 %v4969, 112
        %v5350 = vpop.permute.xlu0 %5349
        %v5352 = vsel %vm774, %v5348, 0
        %v5355 = vsel %vm1349, %v5350, 0
        %5357 = vmatprep.subr.bf16.mxu0 0
        %5358 = vmatpush1.bf16.msra.mxu0 %v5355
        %5359 = vmatprep.subr.bf16.mxu0 0
        %5360 = vmatpush1.bf16.msra.mxu0 0
        %5361 = vmatprep.subr.bf16.mxu0 0
        %5362 = vmatpush1.bf16.msra.mxu0 0
        %5363 = vmatprep.subr.bf16.mxu0 0
        %5364 = vmatpush1.bf16.msra.mxu0 0
        %5365 = vmatprep.subr.bf16.mxu0 0
        %5366 = vmatpush1.bf16.msra.mxu0 0
        %5367 = vmatprep.subr.bf16.mxu0 0
        %5368 = vmatpush1.bf16.msra.mxu0 0
        %5369 = vmatprep.subr.bf16.mxu0 0
        %5370 = vmatpush1.bf16.msra.mxu0 0
        %5371 = vmatprep.subr.bf16.mxu0 0
        %5372 = vmatpush1.bf16.msra.mxu0 0
        %5373 = vmatprep.subr.bf16.mxu0 0
        %5374 = vmatpush1.bf16.msra.mxu0 0
        %5375 = vmatprep.subr.bf16.mxu0 0
        %5376 = vmatpush1.bf16.msra.mxu0 0
        %5377 = vmatprep.subr.bf16.mxu0 0
        %5378 = vmatpush1.bf16.msra.mxu0 0
        %5379 = vmatprep.subr.bf16.mxu0 0
        %5380 = vmatpush1.bf16.msra.mxu0 0
        %5381 = vmatprep.subr.bf16.mxu0 0
        %5382 = vmatpush1.bf16.msra.mxu0 0
        %5383 = vmatprep.subr.bf16.mxu0 0
        %5384 = vmatpush1.bf16.msra.mxu0 0
        %5385 = vmatprep.subr.bf16.mxu0 0
        %5386 = vmatpush1.bf16.msra.mxu0 0
        %5387 = vmatprep.subr.bf16.mxu0 0
        %5388 = vmatpush1.bf16.msra.mxu0 0
        %5389 = vmatprep.mubr.bf16.mxu0 0
        %5390 = vmatmul.mubr.bf16.gmra.mrb[0].mxu0 %v5352
        %v5391 = vpop.f32.mrb[0].mxu0
        %v5392 = vadd.f32 0.0, %v5391
        %v5393 = vpop.f32.mrb[0].mxu0
        %v5394 = vpop.f32.mrb[0].mxu0
        %v5395 = vpop.f32.mrb[0].mxu0
        %5396 = vdwg.mxu0
        %v5397 = vpack.c.bf16 %v5392, %v5392
        %v5399 = vsel %vm774, %v5397, 0
        %v5402 = vsel %vm1349, %v4792, 0
        %5404 = vmatprep.subr.bf16.mxu0 0
        %5405 = vmatpush1.bf16.msra.mxu0 %v5402
        %5406 = vmatprep.subr.bf16.mxu0 0
        %5407 = vmatpush1.bf16.msra.mxu0 0
        %5408 = vmatprep.subr.bf16.mxu0 0
        %5409 = vmatpush1.bf16.msra.mxu0 0
        %5410 = vmatprep.subr.bf16.mxu0 0
        %5411 = vmatpush1.bf16.msra.mxu0 0
        %5412 = vmatprep.subr.bf16.mxu0 0
        %5413 = vmatpush1.bf16.msra.mxu0 0
        %5414 = vmatprep.subr.bf16.mxu0 0
        %5415 = vmatpush1.bf16.msra.mxu0 0
        %5416 = vmatprep.subr.bf16.mxu0 0
        %5417 = vmatpush1.bf16.msra.mxu0 0
        %5418 = vmatprep.subr.bf16.mxu0 0
        %5419 = vmatpush1.bf16.msra.mxu0 0
        %5420 = vmatprep.subr.bf16.mxu0 0
        %5421 = vmatpush1.bf16.msra.mxu0 0
        %5422 = vmatprep.subr.bf16.mxu0 0
        %5423 = vmatpush1.bf16.msra.mxu0 0
        %5424 = vmatprep.subr.bf16.mxu0 0
        %5425 = vmatpush1.bf16.msra.mxu0 0
        %5426 = vmatprep.subr.bf16.mxu0 0
        %5427 = vmatpush1.bf16.msra.mxu0 0
        %5428 = vmatprep.subr.bf16.mxu0 0
        %5429 = vmatpush1.bf16.msra.mxu0 0
        %5430 = vmatprep.subr.bf16.mxu0 0
        %5431 = vmatpush1.bf16.msra.mxu0 0
        %5432 = vmatprep.subr.bf16.mxu0 0
        %5433 = vmatpush1.bf16.msra.mxu0 0
        %5434 = vmatprep.subr.bf16.mxu0 0
        %5435 = vmatpush1.bf16.msra.mxu0 0
        %5436 = vmatprep.mubr.bf16.mxu0 0
        %5437 = vmatmul.mubr.bf16.gmra.mrb[0].mxu0 %v5399
        %v5438 = vpop.f32.mrb[0].mxu0
        %v5439 = vadd.f32 0.0, %v5438
        %v5440 = vpop.f32.mrb[0].mxu0
        %v5441 = vpop.f32.mrb[0].mxu0
        %v5442 = vpop.f32.mrb[0].mxu0
        %5443 = vdwg.mxu0
        %v5444 = vadd.f32 %v5280, %v5439
        %5445 = vrot.lane.b32.xlu0 %v4855, 104
        %v5446 = vpop.permute.xlu0 %5445
        %5447 = vrot.lane.b32.xlu0 %v4912, 104
        %v5448 = vpop.permute.xlu0 %5447
        %v5450 = vsel %vm774, %v5446, 0
        %v5453 = vsel %vm774, %v5448, 0
        %5455 = vmatprep.subr.bf16.mxu0 0
        %5456 = vmatpush1.bf16.xpose.msra.mxu0 %v5453
        %5457 = vmatprep.subr.bf16.mxu0 0
        %5458 = vmatpush1.bf16.xpose.msra.mxu0 0
        %5459 = vmatprep.subr.bf16.mxu0 0
        %5460 = vmatpush1.bf16.xpose.msra.mxu0 0
        %5461 = vmatprep.subr.bf16.mxu0 0
        %5462 = vmatpush1.bf16.xpose.msra.mxu0 0
        %5463 = vmatprep.subr.bf16.mxu0 0
        %5464 = vmatpush1.bf16.xpose.msra.mxu0 0
        %5465 = vmatprep.subr.bf16.mxu0 0
        %5466 = vmatpush1.bf16.xpose.msra.mxu0 0
        %5467 = vmatprep.subr.bf16.mxu0 0
        %5468 = vmatpush1.bf16.xpose.msra.mxu0 0
        %5469 = vmatprep.subr.bf16.mxu0 0
        %5470 = vmatpush1.bf16.xpose.msra.mxu0 0
        %5471 = vmatprep.subr.bf16.mxu0 0
        %5472 = vmatpush1.bf16.xpose.msra.mxu0 0
        %5473 = vmatprep.subr.bf16.mxu0 0
        %5474 = vmatpush1.bf16.xpose.msra.mxu0 0
        %5475 = vmatprep.subr.bf16.mxu0 0
        %5476 = vmatpush1.bf16.xpose.msra.mxu0 0
        %5477 = vmatprep.subr.bf16.mxu0 0
        %5478 = vmatpush1.bf16.xpose.msra.mxu0 0
        %5479 = vmatprep.subr.bf16.mxu0 0
        %5480 = vmatpush1.bf16.xpose.msra.mxu0 0
        %5481 = vmatprep.subr.bf16.mxu0 0
        %5482 = vmatpush1.bf16.xpose.msra.mxu0 0
        %5483 = vmatprep.subr.bf16.mxu0 0
        %5484 = vmatpush1.bf16.xpose.msra.mxu0 0
        %5485 = vmatprep.subr.bf16.mxu0 0
        %5486 = vmatpush1.bf16.xpose.msra.mxu0 0
        %5487 = vmatprep.mubr.bf16.mxu0 0
        %5488 = vmatmul.mubr.bf16.gmra.mrb[0].mxu0 %v5450
        %v5489 = vpop.f32.mrb[0].mxu0
        %v5490 = vadd.f32 0.0, %v5489
        %v5491 = vpop.f32.mrb[0].mxu0
        %v5492 = vpop.f32.mrb[0].mxu0
        %v5493 = vpop.f32.mrb[0].mxu0
        %5494 = vdwg.mxu0
        %v5495 = vmul.f32 %v5490, 0.35355338
        %v5496 = vadd.f32 %v5495, %v2921
        %v5497 = vsel %vm774, %v5496, -inf
        %5498 = vmax.xlane.f32.xlu0 %v5497
        %v5499 = vpop.xlane.xlu0 %5498
        %v5500 = vsub.f32 %v5496, %v5499
        %v5501 = vmul.f32 %v5500, 1.442695
        %v5502 = vpow.pop %v5501
        %v5503 = vsel %vm774, %v5502, 0.0
        %5504 = vadd.xlane.f32.xlu0 %v5503
        %v5505 = vpop.xlane.xlu0 %5504
        %v5506 = vrcp.pop %v5505
        %v5507 = vmul.f32 %v5502, %v5506
        %v5508 = vpack.c.bf16 %v5507, %v5507
        %5509 = vrot.lane.b32.xlu0 %v4969, 104
        %v5510 = vpop.permute.xlu0 %5509
        %v5512 = vsel %vm774, %v5508, 0
        %v5515 = vsel %vm1349, %v5510, 0
        %5517 = vmatprep.subr.bf16.mxu0 0
        %5518 = vmatpush1.bf16.msra.mxu0 %v5515
        %5519 = vmatprep.subr.bf16.mxu0 0
        %5520 = vmatpush1.bf16.msra.mxu0 0
        %5521 = vmatprep.subr.bf16.mxu0 0
        %5522 = vmatpush1.bf16.msra.mxu0 0
        %5523 = vmatprep.subr.bf16.mxu0 0
        %5524 = vmatpush1.bf16.msra.mxu0 0
        %5525 = vmatprep.subr.bf16.mxu0 0
        %5526 = vmatpush1.bf16.msra.mxu0 0
        %5527 = vmatprep.subr.bf16.mxu0 0
        %5528 = vmatpush1.bf16.msra.mxu0 0
        %5529 = vmatprep.subr.bf16.mxu0 0
        %5530 = vmatpush1.bf16.msra.mxu0 0
        %5531 = vmatprep.subr.bf16.mxu0 0
        %5532 = vmatpush1.bf16.msra.mxu0 0
        %5533 = vmatprep.subr.bf16.mxu0 0
        %5534 = vmatpush1.bf16.msra.mxu0 0
        %5535 = vmatprep.subr.bf16.mxu0 0
        %5536 = vmatpush1.bf16.msra.mxu0 0
        %5537 = vmatprep.subr.bf16.mxu0 0
        %5538 = vmatpush1.bf16.msra.mxu0 0
        %5539 = vmatprep.subr.bf16.mxu0 0
        %5540 = vmatpush1.bf16.msra.mxu0 0
        %5541 = vmatprep.subr.bf16.mxu0 0
        %5542 = vmatpush1.bf16.msra.mxu0 0
        %5543 = vmatprep.subr.bf16.mxu0 0
        %5544 = vmatpush1.bf16.msra.mxu0 0
        %5545 = vmatprep.subr.bf16.mxu0 0
        %5546 = vmatpush1.bf16.msra.mxu0 0
        %5547 = vmatprep.subr.bf16.mxu0 0
        %5548 = vmatpush1.bf16.msra.mxu0 0
        %5549 = vmatprep.mubr.bf16.mxu0 0
        %5550 = vmatmul.mubr.bf16.gmra.mrb[0].mxu0 %v5512
        %v5551 = vpop.f32.mrb[0].mxu0
        %v5552 = vadd.f32 0.0, %v5551
        %v5553 = vpop.f32.mrb[0].mxu0
        %v5554 = vpop.f32.mrb[0].mxu0
        %v5555 = vpop.f32.mrb[0].mxu0
        %5556 = vdwg.mxu0
        %v5557 = vpack.c.bf16 %v5552, %v5552
        %v5559 = vsel %vm774, %v5557, 0
        %v5562 = vsel %vm1349, %v4793, 0
        %5564 = vmatprep.subr.bf16.mxu0 0
        %5565 = vmatpush1.bf16.msra.mxu0 %v5562
        %5566 = vmatprep.subr.bf16.mxu0 0
        %5567 = vmatpush1.bf16.msra.mxu0 0
        %5568 = vmatprep.subr.bf16.mxu0 0
        %5569 = vmatpush1.bf16.msra.mxu0 0
        %5570 = vmatprep.subr.bf16.mxu0 0
        %5571 = vmatpush1.bf16.msra.mxu0 0
        %5572 = vmatprep.subr.bf16.mxu0 0
        %5573 = vmatpush1.bf16.msra.mxu0 0
        %5574 = vmatprep.subr.bf16.mxu0 0
        %5575 = vmatpush1.bf16.msra.mxu0 0
        %5576 = vmatprep.subr.bf16.mxu0 0
        %5577 = vmatpush1.bf16.msra.mxu0 0
        %5578 = vmatprep.subr.bf16.mxu0 0
        %5579 = vmatpush1.bf16.msra.mxu0 0
        %5580 = vmatprep.subr.bf16.mxu0 0
        %5581 = vmatpush1.bf16.msra.mxu0 0
        %5582 = vmatprep.subr.bf16.mxu0 0
        %5583 = vmatpush1.bf16.msra.mxu0 0
        %5584 = vmatprep.subr.bf16.mxu0 0
        %5585 = vmatpush1.bf16.msra.mxu0 0
        %5586 = vmatprep.subr.bf16.mxu0 0
        %5587 = vmatpush1.bf16.msra.mxu0 0
        %5588 = vmatprep.subr.bf16.mxu0 0
        %5589 = vmatpush1.bf16.msra.mxu0 0
        %5590 = vmatprep.subr.bf16.mxu0 0
        %5591 = vmatpush1.bf16.msra.mxu0 0
        %5592 = vmatprep.subr.bf16.mxu0 0
        %5593 = vmatpush1.bf16.msra.mxu0 0
        %5594 = vmatprep.subr.bf16.mxu0 0
        %5595 = vmatpush1.bf16.msra.mxu0 0
        %5596 = vmatprep.mubr.bf16.mxu0 0
        %5597 = vmatmul.mubr.bf16.gmra.mrb[0].mxu0 %v5559
        %v5598 = vpop.f32.mrb[0].mxu0
        %v5599 = vadd.f32 0.0, %v5598
        %v5600 = vpop.f32.mrb[0].mxu0
        %v5601 = vpop.f32.mrb[0].mxu0
        %v5602 = vpop.f32.mrb[0].mxu0
        %5603 = vdwg.mxu0
        %v5604 = vadd.f32 %v5444, %v5599
        %v5605 = vlaneseq
        %v5606 = vshrl.u32 %v5605, 7
        %v5607 = vsub.s32 0, %v5606
        %v5608 = vrot.slane %v4794, %v5607
        %v5609 = vadd.f32 %v5604, %v5608
        %v5610 = vadd.f32 %v4774, %v5609
        %v5611 = vld [vmem:[#allocation2 + $0x140] sm:$0x1]
        %v5612 = vld [vmem:[#allocation2 + $0x148] sm:$0x1]
        %v5613 = vsel %vm356, %v5610, 0.0
        %5614 = vadd.xlane.f32.xlu0 %v5613
        %v5615 = vpop.xlane.xlu0 %5614
        %v5616 = vmul.f32 %v5615, %v379
        %v5617 = vsub.f32 %v5610, %v5616
        %v5618 = vmul.f32 %v5617, %v5617
        %v5619 = vsel %vm356, %v5618, 0.0
        %5620 = vadd.xlane.f32.xlu0 %v5619
        %v5621 = vpop.xlane.xlu0 %5620
        %v5622 = vmul.f32 %v5621, %v379
        %v5623 = vadd.f32 %v5622, 1e-05
        %v5624 = vrsqrt.pop %v5623
        %v5625 = vmul.f32 %v5617, %v5624
        %v5626 = vlaneseq
        %v5627 = vshrl.u32 %v5626, 7
        %v5628 = vsub.s32 0, %v5627
        %v5629 = vrot.slane %v5611, %v5628
        %v5630 = vmul.f32 %v5625, %v5629
        %v5631 = vlaneseq
        %v5632 = vshrl.u32 %v5631, 7
        %v5633 = vsub.s32 0, %v5632
        %v5634 = vrot.slane %v5612, %v5633
        %v5635 = vadd.f32 %v5630, %v5634
        %v5636 = vld [vmem:[%s2 + $0x1c0] sm:$0xf]
        %v5637 = vld [vmem:[%s2 + $0x1c4] sm:$0xf]
        %v5638 = vld [vmem:[%s2 + $0x1c8] sm:$0xf]
        %v5639 = vld [vmem:[%s2 + $0x1cc] sm:$0xf]
        %v5640 = vld [vmem:[#allocation2 + $0x150] sm:$0x1]
        %v5641 = vld [vmem:[%s2 + $0x1d0] sm:$0xf]
        %v5642 = vld [vmem:[%s2 + $0x1d4] sm:$0xf]
        %v5643 = vld [vmem:[%s2 + $0x1d8] sm:$0xf]
        %v5644 = vld [vmem:[%s2 + $0x1dc] sm:$0xf]
        %v5645 = vld [vmem:[#allocation2 + $0x158] sm:$0x1]
        %v5646 = vld [vmem:[%s2 + $0x1e0] sm:$0xf]
        %v5647 = vld [vmem:[%s2 + $0x1e4] sm:$0xf]
        %v5648 = vld [vmem:[%s2 + $0x1e8] sm:$0xf]
        %v5649 = vld [vmem:[%s2 + $0x1ec] sm:$0xf]
        %v5650 = vld [vmem:[#allocation2 + $0x160] sm:$0x1]
        %v5651 = vld [vmem:[%s2 + $0x1f0] sm:$0xf]
        %v5652 = vld [vmem:[%s2 + $0x1f8] sm:$0xf]
        %v5653 = vld [vmem:[%s2 + $0x200] sm:$0xf]
        %v5654 = vld [vmem:[%s2 + $0x208] sm:$0xf]
        %v5655 = vld [vmem:[#allocation2 + $0x168] sm:$0x1]
        %v5656 = vpack.c.bf16 %v5635, %v5635
        %v5657 = vlaneseq
        %v5658 = vshrl.u32 %v5657, 7
        %v5659 = vsub.s32 0, %v5658
        %v5660 = vrot.slane %v5640, %v5659
        %v5665 = vunpack.c.l.b16 %v5636
        %v5666 = vunpack.c.l.b16 %v5637
        %v5667 = vunpack.c.l.b16 %v5638
        %v5668 = vunpack.c.l.b16 %v5639
        %v5669 = vpack.c.b16 %v5666, %v5665
        %v5670 = vpack.c.b16 %v5668, %v5667
        %v5674 = vsel %vm356, %v5656, 0
        %5676 = vmatprep.subr.bf16.mxu0 0
        %5677 = vmatpush1.bf16.msra.mxu0 %v5669
        %5678 = vmatprep.subr.bf16.mxu0 0
        %5679 = vmatpush1.bf16.msra.mxu0 %v5670
        %5680 = vmatprep.subr.bf16.mxu0 0
        %5681 = vmatpush1.bf16.msra.mxu0 0
        %5682 = vmatprep.subr.bf16.mxu0 0
        %5683 = vmatpush1.bf16.msra.mxu0 0
        %5684 = vmatprep.subr.bf16.mxu0 0
        %5685 = vmatpush1.bf16.msra.mxu0 0
        %5686 = vmatprep.subr.bf16.mxu0 0
        %5687 = vmatpush1.bf16.msra.mxu0 0
        %5688 = vmatprep.subr.bf16.mxu0 0
        %5689 = vmatpush1.bf16.msra.mxu0 0
        %5690 = vmatprep.subr.bf16.mxu0 0
        %5691 = vmatpush1.bf16.msra.mxu0 0
        %5692 = vmatprep.subr.bf16.mxu0 0
        %5693 = vmatpush1.bf16.msra.mxu0 0
        %5694 = vmatprep.subr.bf16.mxu0 0
        %5695 = vmatpush1.bf16.msra.mxu0 0
        %5696 = vmatprep.subr.bf16.mxu0 0
        %5697 = vmatpush1.bf16.msra.mxu0 0
        %5698 = vmatprep.subr.bf16.mxu0 0
        %5699 = vmatpush1.bf16.msra.mxu0 0
        %5700 = vmatprep.subr.bf16.mxu0 0
        %5701 = vmatpush1.bf16.msra.mxu0 0
        %5702 = vmatprep.subr.bf16.mxu0 0
        %5703 = vmatpush1.bf16.msra.mxu0 0
        %5704 = vmatprep.subr.bf16.mxu0 0
        %5705 = vmatpush1.bf16.msra.mxu0 0
        %5706 = vmatprep.subr.bf16.mxu0 0
        %5707 = vmatpush1.bf16.msra.mxu0 0
        %5708 = vmatprep.mubr.bf16.mxu0 0
        %5709 = vmatmul.mubr.bf16.gmra.mrb[0].mxu0 %v5674
        %v5710 = vpop.f32.mrb[0].mxu0
        %v5711 = vadd.f32 %v5660, %v5710
        %v5712 = vpop.f32.mrb[0].mxu0
        %v5713 = vpop.f32.mrb[0].mxu0
        %v5714 = vpop.f32.mrb[0].mxu0
        %5715 = vdwg.mxu0
        %v5716 = vpack.c.bf16 %v5711, %v5711
        %v5717 = vlaneseq
        %v5718 = vshrl.u32 %v5717, 7
        %v5719 = vsub.s32 0, %v5718
        %v5720 = vrot.slane %v5645, %v5719
        %v5725 = vunpack.c.l.b16 %v5641
        %v5726 = vunpack.c.l.b16 %v5642
        %v5727 = vunpack.c.l.b16 %v5643
        %v5728 = vunpack.c.l.b16 %v5644
        %v5729 = vpack.c.b16 %v5726, %v5725
        %v5730 = vpack.c.b16 %v5728, %v5727
        %5733 = vmatprep.subr.bf16.mxu0 0
        %5734 = vmatpush1.bf16.msra.mxu0 %v5729
        %5735 = vmatprep.subr.bf16.mxu0 0
        %5736 = vmatpush1.bf16.msra.mxu0 %v5730
        %5737 = vmatprep.subr.bf16.mxu0 0
        %5738 = vmatpush1.bf16.msra.mxu0 0
        %5739 = vmatprep.subr.bf16.mxu0 0
        %5740 = vmatpush1.bf16.msra.mxu0 0
        %5741 = vmatprep.subr.bf16.mxu0 0
        %5742 = vmatpush1.bf16.msra.mxu0 0
        %5743 = vmatprep.subr.bf16.mxu0 0
        %5744 = vmatpush1.bf16.msra.mxu0 0
        %5745 = vmatprep.subr.bf16.mxu0 0
        %5746 = vmatpush1.bf16.msra.mxu0 0
        %5747 = vmatprep.subr.bf16.mxu0 0
        %5748 = vmatpush1.bf16.msra.mxu0 0
        %5749 = vmatprep.subr.bf16.mxu0 0
        %5750 = vmatpush1.bf16.msra.mxu0 0
        %5751 = vmatprep.subr.bf16.mxu0 0
        %5752 = vmatpush1.bf16.msra.mxu0 0
        %5753 = vmatprep.subr.bf16.mxu0 0
        %5754 = vmatpush1.bf16.msra.mxu0 0
        %5755 = vmatprep.subr.bf16.mxu0 0
        %5756 = vmatpush1.bf16.msra.mxu0 0
        %5757 = vmatprep.subr.bf16.mxu0 0
        %5758 = vmatpush1.bf16.msra.mxu0 0
        %5759 = vmatprep.subr.bf16.mxu0 0
        %5760 = vmatpush1.bf16.msra.mxu0 0
        %5761 = vmatprep.subr.bf16.mxu0 0
        %5762 = vmatpush1.bf16.msra.mxu0 0
        %5763 = vmatprep.subr.bf16.mxu0 0
        %5764 = vmatpush1.bf16.msra.mxu0 0
        %5765 = vmatprep.mubr.bf16.mxu0 0
        %5766 = vmatmul.mubr.bf16.gmra.mrb[0].mxu0 %v3690
        %v5767 = vpop.f32.mrb[0].mxu0
        %v5768 = vadd.f32 %v5720, %v5767
        %v5769 = vpop.f32.mrb[0].mxu0
        %v5770 = vpop.f32.mrb[0].mxu0
        %v5771 = vadd.f32 %v5720, %v5770
        %v5772 = vpop.f32.mrb[0].mxu0
        %5773 = vmatprep.mubr.bf16.mxu0 0
        %5774 = vmatmul.mubr.bf16.gmra.mrb[0].mxu0 %v3693
        %v5775 = vpop.f32.mrb[0].mxu0
        %v5776 = vadd.f32 %v5720, %v5775
        %v5777 = vpop.f32.mrb[0].mxu0
        %v5778 = vpop.f32.mrb[0].mxu0
        %v5779 = vadd.f32 %v5720, %v5778
        %v5780 = vpop.f32.mrb[0].mxu0
        %5781 = vmatprep.mubr.bf16.mxu0 0
        %5782 = vmatmul.mubr.bf16.gmra.mrb[0].mxu0 %v3696
        %v5783 = vpop.f32.mrb[0].mxu0
        %v5784 = vadd.f32 %v5720, %v5783
        %v5785 = vpop.f32.mrb[0].mxu0
        %v5786 = vpop.f32.mrb[0].mxu0
        %v5787 = vadd.f32 %v5720, %v5786
        %v5788 = vpop.f32.mrb[0].mxu0
        %5789 = vmatprep.mubr.bf16.mxu0 0
        %5790 = vmatmul.mubr.bf16.gmra.mrb[0].mxu0 %v3699
        %v5791 = vpop.f32.mrb[0].mxu0
        %v5792 = vadd.f32 %v5720, %v5791
        %v5793 = vpop.f32.mrb[0].mxu0
        %v5794 = vpop.f32.mrb[0].mxu0
        %v5795 = vpop.f32.mrb[0].mxu0
        %5796 = vdwg.mxu0
        %v5797 = vpack.c.bf16 %v5771, %v5768
        %v5798 = vpack.c.bf16 %v5779, %v5776
        %v5799 = vpack.c.bf16 %v5787, %v5784
        %v5800 = vpack.c.bf16 %v5792, %v5792
        %v5801 = vlaneseq
        %v5802 = vshrl.u32 %v5801, 7
        %v5803 = vsub.s32 0, %v5802
        %v5804 = vrot.slane %v5650, %v5803
        %v5809 = vunpack.c.l.b16 %v5646
        %v5810 = vunpack.c.l.b16 %v5647
        %v5811 = vunpack.c.l.b16 %v5648
        %v5812 = vunpack.c.l.b16 %v5649
        %v5813 = vpack.c.b16 %v5810, %v5809
        %v5814 = vpack.c.b16 %v5812, %v5811
        %5817 = vmatprep.subr.bf16.mxu0 0
        %5818 = vmatpush1.bf16.msra.mxu0 %v5813
        %5819 = vmatprep.subr.bf16.mxu0 0
        %5820 = vmatpush1.bf16.msra.mxu0 %v5814
        %5821 = vmatprep.subr.bf16.mxu0 0
        %5822 = vmatpush1.bf16.msra.mxu0 0
        %5823 = vmatprep.subr.bf16.mxu0 0
        %5824 = vmatpush1.bf16.msra.mxu0 0
        %5825 = vmatprep.subr.bf16.mxu0 0
        %5826 = vmatpush1.bf16.msra.mxu0 0
        %5827 = vmatprep.subr.bf16.mxu0 0
        %5828 = vmatpush1.bf16.msra.mxu0 0
        %5829 = vmatprep.subr.bf16.mxu0 0
        %5830 = vmatpush1.bf16.msra.mxu0 0
        %5831 = vmatprep.subr.bf16.mxu0 0
        %5832 = vmatpush1.bf16.msra.mxu0 0
        %5833 = vmatprep.subr.bf16.mxu0 0
        %5834 = vmatpush1.bf16.msra.mxu0 0
        %5835 = vmatprep.subr.bf16.mxu0 0
        %5836 = vmatpush1.bf16.msra.mxu0 0
        %5837 = vmatprep.subr.bf16.mxu0 0
        %5838 = vmatpush1.bf16.msra.mxu0 0
        %5839 = vmatprep.subr.bf16.mxu0 0
        %5840 = vmatpush1.bf16.msra.mxu0 0
        %5841 = vmatprep.subr.bf16.mxu0 0
        %5842 = vmatpush1.bf16.msra.mxu0 0
        %5843 = vmatprep.subr.bf16.mxu0 0
        %5844 = vmatpush1.bf16.msra.mxu0 0
        %5845 = vmatprep.subr.bf16.mxu0 0
        %5846 = vmatpush1.bf16.msra.mxu0 0
        %5847 = vmatprep.subr.bf16.mxu0 0
        %5848 = vmatpush1.bf16.msra.mxu0 0
        %5849 = vmatprep.mubr.bf16.mxu0 0
        %5850 = vmatmul.mubr.bf16.gmra.mrb[0].mxu0 %v3690
        %v5851 = vpop.f32.mrb[0].mxu0
        %v5852 = vadd.f32 %v5804, %v5851
        %v5853 = vpop.f32.mrb[0].mxu0
        %v5854 = vpop.f32.mrb[0].mxu0
        %v5855 = vadd.f32 %v5804, %v5854
        %v5856 = vpop.f32.mrb[0].mxu0
        %5857 = vmatprep.mubr.bf16.mxu0 0
        %5858 = vmatmul.mubr.bf16.gmra.mrb[0].mxu0 %v3693
        %v5859 = vpop.f32.mrb[0].mxu0
        %v5860 = vadd.f32 %v5804, %v5859
        %v5861 = vpop.f32.mrb[0].mxu0
        %v5862 = vpop.f32.mrb[0].mxu0
        %v5863 = vadd.f32 %v5804, %v5862
        %v5864 = vpop.f32.mrb[0].mxu0
        %5865 = vmatprep.mubr.bf16.mxu0 0
        %5866 = vmatmul.mubr.bf16.gmra.mrb[0].mxu0 %v3696
        %v5867 = vpop.f32.mrb[0].mxu0
        %v5868 = vadd.f32 %v5804, %v5867
        %v5869 = vpop.f32.mrb[0].mxu0
        %v5870 = vpop.f32.mrb[0].mxu0
        %v5871 = vadd.f32 %v5804, %v5870
        %v5872 = vpop.f32.mrb[0].mxu0
        %5873 = vmatprep.mubr.bf16.mxu0 0
        %5874 = vmatmul.mubr.bf16.gmra.mrb[0].mxu0 %v3699
        %v5875 = vpop.f32.mrb[0].mxu0
        %v5876 = vadd.f32 %v5804, %v5875
        %v5877 = vpop.f32.mrb[0].mxu0
        %v5878 = vpop.f32.mrb[0].mxu0
        %v5879 = vpop.f32.mrb[0].mxu0
        %5880 = vdwg.mxu0
        %v5881 = vpack.c.bf16 %v5855, %v5852
        %v5882 = vpack.c.bf16 %v5863, %v5860
        %v5883 = vpack.c.bf16 %v5871, %v5868
        %v5884 = vpack.c.bf16 %v5876, %v5876
        %v5886 = vsel %vm774, %v5716, 0
        %v5889 = vsel %vm774, %v5797, 0
        %v5892 = vsel %vm774, %v5798, 0
        %v5895 = vsel %vm774, %v5799, 0
        %v5898 = vsel %vm774, %v5800, 0
        %5900 = vmatprep.subr.bf16.mxu0 0
        %5901 = vmatpush1.bf16.xpose.msra.mxu0 %v5889
        %5902 = vmatprep.subr.bf16.mxu0 0
        %5903 = vmatpush1.bf16.xpose.msra.mxu0 %v5892
        %5904 = vmatprep.subr.bf16.mxu0 0
        %5905 = vmatpush1.bf16.xpose.msra.mxu0 %v5895
        %5906 = vmatprep.subr.bf16.mxu0 0
        %5907 = vmatpush1.bf16.xpose.msra.mxu0 %v5898
        %5908 = vmatprep.subr.bf16.mxu0 0
        %5909 = vmatpush1.bf16.xpose.msra.mxu0 0
        %5910 = vmatprep.subr.bf16.mxu0 0
        %5911 = vmatpush1.bf16.xpose.msra.mxu0 0
        %5912 = vmatprep.subr.bf16.mxu0 0
        %5913 = vmatpush1.bf16.xpose.msra.mxu0 0
        %5914 = vmatprep.subr.bf16.mxu0 0
        %5915 = vmatpush1.bf16.xpose.msra.mxu0 0
        %5916 = vmatprep.subr.bf16.mxu0 0
        %5917 = vmatpush1.bf16.xpose.msra.mxu0 0
        %5918 = vmatprep.subr.bf16.mxu0 0
        %5919 = vmatpush1.bf16.xpose.msra.mxu0 0
        %5920 = vmatprep.subr.bf16.mxu0 0
        %5921 = vmatpush1.bf16.xpose.msra.mxu0 0
        %5922 = vmatprep.subr.bf16.mxu0 0
        %5923 = vmatpush1.bf16.xpose.msra.mxu0 0
        %5924 = vmatprep.subr.bf16.mxu0 0
        %5925 = vmatpush1.bf16.xpose.msra.mxu0 0
        %5926 = vmatprep.subr.bf16.mxu0 0
        %5927 = vmatpush1.bf16.xpose.msra.mxu0 0
        %5928 = vmatprep.subr.bf16.mxu0 0
        %5929 = vmatpush1.bf16.xpose.msra.mxu0 0
        %5930 = vmatprep.subr.bf16.mxu0 0
        %5931 = vmatpush1.bf16.xpose.msra.mxu0 0
        %5932 = vmatprep.mubr.bf16.mxu0 0
        %5933 = vmatmul.mubr.bf16.gmra.mrb[0].mxu0 %v5886
        %v5934 = vpop.f32.mrb[0].mxu0
        %v5935 = vadd.f32 0.0, %v5934
        %v5936 = vpop.f32.mrb[0].mxu0
        %v5937 = vpop.f32.mrb[0].mxu0
        %v5938 = vpop.f32.mrb[0].mxu0
        %5939 = vdwg.mxu0
        %v5940 = vmul.f32 %v5935, 0.35355338
        %v5941 = vsel %vm870, %v5940, -inf
        %5942 = vmax.xlane.f32.xlu0 %v5941
        %v5943 = vpop.xlane.xlu0 %5942
        %v5944 = vsub.f32 %v5940, %v5943
        %v5945 = vmul.f32 %v5944, 1.442695
        %v5946 = vpow.pop %v5945
        %v5947 = vsel %vm870, %v5946, 0.0
        %5948 = vadd.xlane.f32.xlu0 %v5947
        %v5949 = vpop.xlane.xlu0 %5948
        %v5950 = vrcp.pop %v5949
        %v5951 = vmul.f32 %v5946, %v5950
        %v5952 = vpack.c.bf16 %v5951, %v5951
        %v5954 = vsel %vm870, %v5952, 0
        %v5957 = vand.u32 %v5884, %v967
        %5959 = vmatprep.subr.bf16.mxu0 0
        %5960 = vmatpush1.bf16.msra.mxu0 %v5881
        %5961 = vmatprep.subr.bf16.mxu0 0
        %5962 = vmatpush1.bf16.msra.mxu0 %v5882
        %5963 = vmatprep.subr.bf16.mxu0 0
        %5964 = vmatpush1.bf16.msra.mxu0 %v5883
        %5965 = vmatprep.subr.bf16.mxu0 0
        %5966 = vmatpush1.bf16.msra.mxu0 %v5957
        %5967 = vmatprep.subr.bf16.mxu0 0
        %5968 = vmatpush1.bf16.msra.mxu0 0
        %5969 = vmatprep.subr.bf16.mxu0 0
        %5970 = vmatpush1.bf16.msra.mxu0 0
        %5971 = vmatprep.subr.bf16.mxu0 0
        %5972 = vmatpush1.bf16.msra.mxu0 0
        %5973 = vmatprep.subr.bf16.mxu0 0
        %5974 = vmatpush1.bf16.msra.mxu0 0
        %5975 = vmatprep.subr.bf16.mxu0 0
        %5976 = vmatpush1.bf16.msra.mxu0 0
        %5977 = vmatprep.subr.bf16.mxu0 0
        %5978 = vmatpush1.bf16.msra.mxu0 0
        %5979 = vmatprep.subr.bf16.mxu0 0
        %5980 = vmatpush1.bf16.msra.mxu0 0
        %5981 = vmatprep.subr.bf16.mxu0 0
        %5982 = vmatpush1.bf16.msra.mxu0 0
        %5983 = vmatprep.subr.bf16.mxu0 0
        %5984 = vmatpush1.bf16.msra.mxu0 0
        %5985 = vmatprep.subr.bf16.mxu0 0
        %5986 = vmatpush1.bf16.msra.mxu0 0
        %5987 = vmatprep.subr.bf16.mxu0 0
        %5988 = vmatpush1.bf16.msra.mxu0 0
        %5989 = vmatprep.subr.bf16.mxu0 0
        %5990 = vmatpush1.bf16.msra.mxu0 0
        %5991 = vmatprep.mubr.bf16.mxu0 0
        %5992 = vmatmul.mubr.bf16.gmra.mrb[0].mxu0 %v5954
        %v5993 = vpop.f32.mrb[0].mxu0
        %v5994 = vadd.f32 0.0, %v5993
        %v5995 = vpop.f32.mrb[0].mxu0
        %v5996 = vpop.f32.mrb[0].mxu0
        %v5997 = vpop.f32.mrb[0].mxu0
        %5998 = vdwg.mxu0
        %v5999 = vpack.c.bf16 %v5994, %v5994
        %6001 = vrot.lane.b32.xlu0 %v5716, 120
        %v6002 = vpop.permute.xlu0 %6001
        %6007 = vrot.lane.b32.xlu0 %v5797, 120
        %v6008 = vpop.permute.xlu0 %6007
        %6009 = vrot.lane.b32.xlu0 %v5798, 120
        %v6010 = vpop.permute.xlu0 %6009
        %6011 = vrot.lane.b32.xlu0 %v5799, 120
        %v6012 = vpop.permute.xlu0 %6011
        %6013 = vrot.lane.b32.xlu0 %v5800, 120
        %v6014 = vpop.permute.xlu0 %6013
        %v6016 = vsel %vm774, %v6002, 0
        %v6019 = vsel %vm774, %v6008, 0
        %v6022 = vsel %vm774, %v6010, 0
        %v6025 = vsel %vm774, %v6012, 0
        %v6028 = vsel %vm774, %v6014, 0
        %6030 = vmatprep.subr.bf16.mxu0 0
        %6031 = vmatpush1.bf16.xpose.msra.mxu0 %v6019
        %6032 = vmatprep.subr.bf16.mxu0 0
        %6033 = vmatpush1.bf16.xpose.msra.mxu0 %v6022
        %6034 = vmatprep.subr.bf16.mxu0 0
        %6035 = vmatpush1.bf16.xpose.msra.mxu0 %v6025
        %6036 = vmatprep.subr.bf16.mxu0 0
        %6037 = vmatpush1.bf16.xpose.msra.mxu0 %v6028
        %6038 = vmatprep.subr.bf16.mxu0 0
        %6039 = vmatpush1.bf16.xpose.msra.mxu0 0
        %6040 = vmatprep.subr.bf16.mxu0 0
        %6041 = vmatpush1.bf16.xpose.msra.mxu0 0
        %6042 = vmatprep.subr.bf16.mxu0 0
        %6043 = vmatpush1.bf16.xpose.msra.mxu0 0
        %6044 = vmatprep.subr.bf16.mxu0 0
        %6045 = vmatpush1.bf16.xpose.msra.mxu0 0
        %6046 = vmatprep.subr.bf16.mxu0 0
        %6047 = vmatpush1.bf16.xpose.msra.mxu0 0
        %6048 = vmatprep.subr.bf16.mxu0 0
        %6049 = vmatpush1.bf16.xpose.msra.mxu0 0
        %6050 = vmatprep.subr.bf16.mxu0 0
        %6051 = vmatpush1.bf16.xpose.msra.mxu0 0
        %6052 = vmatprep.subr.bf16.mxu0 0
        %6053 = vmatpush1.bf16.xpose.msra.mxu0 0
        %6054 = vmatprep.subr.bf16.mxu0 0
        %6055 = vmatpush1.bf16.xpose.msra.mxu0 0
        %6056 = vmatprep.subr.bf16.mxu0 0
        %6057 = vmatpush1.bf16.xpose.msra.mxu0 0
        %6058 = vmatprep.subr.bf16.mxu0 0
        %6059 = vmatpush1.bf16.xpose.msra.mxu0 0
        %6060 = vmatprep.subr.bf16.mxu0 0
        %6061 = vmatpush1.bf16.xpose.msra.mxu0 0
        %6062 = vmatprep.mubr.bf16.mxu0 0
        %6063 = vmatmul.mubr.bf16.gmra.mrb[0].mxu0 %v6016
        %v6064 = vpop.f32.mrb[0].mxu0
        %v6065 = vadd.f32 0.0, %v6064
        %v6066 = vpop.f32.mrb[0].mxu0
        %v6067 = vpop.f32.mrb[0].mxu0
        %v6068 = vpop.f32.mrb[0].mxu0
        %6069 = vdwg.mxu0
        %v6070 = vmul.f32 %v6065, 0.35355338
        %v6071 = vsel %vm870, %v6070, -inf
        %6072 = vmax.xlane.f32.xlu0 %v6071
        %v6073 = vpop.xlane.xlu0 %6072
        %v6074 = vsub.f32 %v6070, %v6073
        %v6075 = vmul.f32 %v6074, 1.442695
        %v6076 = vpow.pop %v6075
        %v6077 = vsel %vm870, %v6076, 0.0
        %6078 = vadd.xlane.f32.xlu0 %v6077
        %v6079 = vpop.xlane.xlu0 %6078
        %v6080 = vrcp.pop %v6079
        %v6081 = vmul.f32 %v6076, %v6080
        %v6082 = vpack.c.bf16 %v6081, %v6081
        %6087 = vrot.lane.b32.xlu0 %v5881, 120
        %v6088 = vpop.permute.xlu0 %6087
        %6089 = vrot.lane.b32.xlu0 %v5882, 120
        %v6090 = vpop.permute.xlu0 %6089
        %6091 = vrot.lane.b32.xlu0 %v5883, 120
        %v6092 = vpop.permute.xlu0 %6091
        %6093 = vrot.lane.b32.xlu0 %v5884, 120
        %v6094 = vpop.permute.xlu0 %6093
        %v6099 = vsel %vm870, %v6082, 0
        %v6102 = vand.u32 %v6094, %v967
        %6104 = vmatprep.subr.bf16.mxu0 0
        %6105 = vmatpush1.bf16.msra.mxu0 %v6088
        %6106 = vmatprep.subr.bf16.mxu0 0
        %6107 = vmatpush1.bf16.msra.mxu0 %v6090
        %6108 = vmatprep.subr.bf16.mxu0 0
        %6109 = vmatpush1.bf16.msra.mxu0 %v6092
        %6110 = vmatprep.subr.bf16.mxu0 0
        %6111 = vmatpush1.bf16.msra.mxu0 %v6102
        %6112 = vmatprep.subr.bf16.mxu0 0
        %6113 = vmatpush1.bf16.msra.mxu0 0
        %6114 = vmatprep.subr.bf16.mxu0 0
        %6115 = vmatpush1.bf16.msra.mxu0 0
        %6116 = vmatprep.subr.bf16.mxu0 0
        %6117 = vmatpush1.bf16.msra.mxu0 0
        %6118 = vmatprep.subr.bf16.mxu0 0
        %6119 = vmatpush1.bf16.msra.mxu0 0
        %6120 = vmatprep.subr.bf16.mxu0 0
        %6121 = vmatpush1.bf16.msra.mxu0 0
        %6122 = vmatprep.subr.bf16.mxu0 0
        %6123 = vmatpush1.bf16.msra.mxu0 0
        %6124 = vmatprep.subr.bf16.mxu0 0
        %6125 = vmatpush1.bf16.msra.mxu0 0
        %6126 = vmatprep.subr.bf16.mxu0 0
        %6127 = vmatpush1.bf16.msra.mxu0 0
        %6128 = vmatprep.subr.bf16.mxu0 0
        %6129 = vmatpush1.bf16.msra.mxu0 0
        %6130 = vmatprep.subr.bf16.mxu0 0
        %6131 = vmatpush1.bf16.msra.mxu0 0
        %6132 = vmatprep.subr.bf16.mxu0 0
        %6133 = vmatpush1.bf16.msra.mxu0 0
        %6134 = vmatprep.subr.bf16.mxu0 0
        %6135 = vmatpush1.bf16.msra.mxu0 0
        %6136 = vmatprep.mubr.bf16.mxu0 0
        %6137 = vmatmul.mubr.bf16.gmra.mrb[0].mxu0 %v6099
        %v6138 = vpop.f32.mrb[0].mxu0
        %v6139 = vadd.f32 0.0, %v6138
        %v6140 = vpop.f32.mrb[0].mxu0
        %v6141 = vpop.f32.mrb[0].mxu0
        %v6142 = vpop.f32.mrb[0].mxu0
        %6143 = vdwg.mxu0
        %v6144 = vpack.c.bf16 %v6139, %v6139
        %v6146 = vsel %vm774, %v6144, 0
        %v6149 = vsel %vm1349, %v5652, 0
        %6151 = vmatprep.subr.bf16.mxu0 0
        %6152 = vmatpush1.bf16.msra.mxu0 %v6149
        %6153 = vmatprep.subr.bf16.mxu0 0
        %6154 = vmatpush1.bf16.msra.mxu0 0
        %6155 = vmatprep.subr.bf16.mxu0 0
        %6156 = vmatpush1.bf16.msra.mxu0 0
        %6157 = vmatprep.subr.bf16.mxu0 0
        %6158 = vmatpush1.bf16.msra.mxu0 0
        %6159 = vmatprep.subr.bf16.mxu0 0
        %6160 = vmatpush1.bf16.msra.mxu0 0
        %6161 = vmatprep.subr.bf16.mxu0 0
        %6162 = vmatpush1.bf16.msra.mxu0 0
        %6163 = vmatprep.subr.bf16.mxu0 0
        %6164 = vmatpush1.bf16.msra.mxu0 0
        %6165 = vmatprep.subr.bf16.mxu0 0
        %6166 = vmatpush1.bf16.msra.mxu0 0
        %6167 = vmatprep.subr.bf16.mxu0 0
        %6168 = vmatpush1.bf16.msra.mxu0 0
        %6169 = vmatprep.subr.bf16.mxu0 0
        %6170 = vmatpush1.bf16.msra.mxu0 0
        %6171 = vmatprep.subr.bf16.mxu0 0
        %6172 = vmatpush1.bf16.msra.mxu0 0
        %6173 = vmatprep.subr.bf16.mxu0 0
        %6174 = vmatpush1.bf16.msra.mxu0 0
        %6175 = vmatprep.subr.bf16.mxu0 0
        %6176 = vmatpush1.bf16.msra.mxu0 0
        %6177 = vmatprep.subr.bf16.mxu0 0
        %6178 = vmatpush1.bf16.msra.mxu0 0
        %6179 = vmatprep.subr.bf16.mxu0 0
        %6180 = vmatpush1.bf16.msra.mxu0 0
        %6181 = vmatprep.subr.bf16.mxu0 0
        %6182 = vmatpush1.bf16.msra.mxu0 0
        %6183 = vmatprep.mubr.bf16.mxu0 0
        %6184 = vmatmul.mubr.bf16.gmra.mrb[0].mxu0 %v6146
        %v6185 = vpop.f32.mrb[0].mxu0
        %v6186 = vadd.f32 0.0, %v6185
        %v6187 = vpop.f32.mrb[0].mxu0
        %v6188 = vpop.f32.mrb[0].mxu0
        %v6189 = vpop.f32.mrb[0].mxu0
        %6190 = vdwg.mxu0
        %v6192 = vsel %vm774, %v5999, 0
        %v6195 = vsel %vm1349, %v5651, 0
        %6197 = vmatprep.subr.bf16.mxu0 0
        %6198 = vmatpush1.bf16.msra.mxu0 %v6195
        %6199 = vmatprep.subr.bf16.mxu0 0
        %6200 = vmatpush1.bf16.msra.mxu0 0
        %6201 = vmatprep.subr.bf16.mxu0 0
        %6202 = vmatpush1.bf16.msra.mxu0 0
        %6203 = vmatprep.subr.bf16.mxu0 0
        %6204 = vmatpush1.bf16.msra.mxu0 0
        %6205 = vmatprep.subr.bf16.mxu0 0
        %6206 = vmatpush1.bf16.msra.mxu0 0
        %6207 = vmatprep.subr.bf16.mxu0 0
        %6208 = vmatpush1.bf16.msra.mxu0 0
        %6209 = vmatprep.subr.bf16.mxu0 0
        %6210 = vmatpush1.bf16.msra.mxu0 0
        %6211 = vmatprep.subr.bf16.mxu0 0
        %6212 = vmatpush1.bf16.msra.mxu0 0
        %6213 = vmatprep.subr.bf16.mxu0 0
        %6214 = vmatpush1.bf16.msra.mxu0 0
        %6215 = vmatprep.subr.bf16.mxu0 0
        %6216 = vmatpush1.bf16.msra.mxu0 0
        %6217 = vmatprep.subr.bf16.mxu0 0
        %6218 = vmatpush1.bf16.msra.mxu0 0
        %6219 = vmatprep.subr.bf16.mxu0 0
        %6220 = vmatpush1.bf16.msra.mxu0 0
        %6221 = vmatprep.subr.bf16.mxu0 0
        %6222 = vmatpush1.bf16.msra.mxu0 0
        %6223 = vmatprep.subr.bf16.mxu0 0
        %6224 = vmatpush1.bf16.msra.mxu0 0
        %6225 = vmatprep.subr.bf16.mxu0 0
        %6226 = vmatpush1.bf16.msra.mxu0 0
        %6227 = vmatprep.subr.bf16.mxu0 0
        %6228 = vmatpush1.bf16.msra.mxu0 0
        %6229 = vmatprep.mubr.bf16.mxu0 0
        %6230 = vmatmul.mubr.bf16.gmra.mrb[0].mxu0 %v6192
        %v6231 = vpop.f32.mrb[0].mxu0
        %v6232 = vadd.f32 %v6186, %v6231
        %v6233 = vpop.f32.mrb[0].mxu0
        %v6234 = vpop.f32.mrb[0].mxu0
        %v6235 = vpop.f32.mrb[0].mxu0
        %6236 = vdwg.mxu0
        %6237 = vrot.lane.b32.xlu0 %v5716, 112
        %v6238 = vpop.permute.xlu0 %6237
        %6239 = vrot.lane.b32.xlu0 %v5797, 112
        %v6240 = vpop.permute.xlu0 %6239
        %6241 = vrot.lane.b32.xlu0 %v5798, 112
        %v6242 = vpop.permute.xlu0 %6241
        %6243 = vrot.lane.b32.xlu0 %v5799, 112
        %v6244 = vpop.permute.xlu0 %6243
        %6245 = vrot.lane.b32.xlu0 %v5800, 112
        %v6246 = vpop.permute.xlu0 %6245
        %v6248 = vsel %vm774, %v6238, 0
        %v6251 = vsel %vm774, %v6240, 0
        %v6254 = vsel %vm774, %v6242, 0
        %v6257 = vsel %vm774, %v6244, 0
        %v6260 = vsel %vm774, %v6246, 0
        %6262 = vmatprep.subr.bf16.mxu0 0
        %6263 = vmatpush1.bf16.xpose.msra.mxu0 %v6251
        %6264 = vmatprep.subr.bf16.mxu0 0
        %6265 = vmatpush1.bf16.xpose.msra.mxu0 %v6254
        %6266 = vmatprep.subr.bf16.mxu0 0
        %6267 = vmatpush1.bf16.xpose.msra.mxu0 %v6257
        %6268 = vmatprep.subr.bf16.mxu0 0
        %6269 = vmatpush1.bf16.xpose.msra.mxu0 %v6260
        %6270 = vmatprep.subr.bf16.mxu0 0
        %6271 = vmatpush1.bf16.xpose.msra.mxu0 0
        %6272 = vmatprep.subr.bf16.mxu0 0
        %6273 = vmatpush1.bf16.xpose.msra.mxu0 0
        %6274 = vmatprep.subr.bf16.mxu0 0
        %6275 = vmatpush1.bf16.xpose.msra.mxu0 0
        %6276 = vmatprep.subr.bf16.mxu0 0
        %6277 = vmatpush1.bf16.xpose.msra.mxu0 0
        %6278 = vmatprep.subr.bf16.mxu0 0
        %6279 = vmatpush1.bf16.xpose.msra.mxu0 0
        %6280 = vmatprep.subr.bf16.mxu0 0
        %6281 = vmatpush1.bf16.xpose.msra.mxu0 0
        %6282 = vmatprep.subr.bf16.mxu0 0
        %6283 = vmatpush1.bf16.xpose.msra.mxu0 0
        %6284 = vmatprep.subr.bf16.mxu0 0
        %6285 = vmatpush1.bf16.xpose.msra.mxu0 0
        %6286 = vmatprep.subr.bf16.mxu0 0
        %6287 = vmatpush1.bf16.xpose.msra.mxu0 0
        %6288 = vmatprep.subr.bf16.mxu0 0
        %6289 = vmatpush1.bf16.xpose.msra.mxu0 0
        %6290 = vmatprep.subr.bf16.mxu0 0
        %6291 = vmatpush1.bf16.xpose.msra.mxu0 0
        %6292 = vmatprep.subr.bf16.mxu0 0
        %6293 = vmatpush1.bf16.xpose.msra.mxu0 0
        %6294 = vmatprep.mubr.bf16.mxu0 0
        %6295 = vmatmul.mubr.bf16.gmra.mrb[0].mxu0 %v6248
        %v6296 = vpop.f32.mrb[0].mxu0
        %v6297 = vadd.f32 0.0, %v6296
        %v6298 = vpop.f32.mrb[0].mxu0
        %v6299 = vpop.f32.mrb[0].mxu0
        %v6300 = vpop.f32.mrb[0].mxu0
        %6301 = vdwg.mxu0
        %v6302 = vmul.f32 %v6297, 0.35355338
        %v6303 = vsel %vm870, %v6302, -inf
        %6304 = vmax.xlane.f32.xlu0 %v6303
        %v6305 = vpop.xlane.xlu0 %6304
        %v6306 = vsub.f32 %v6302, %v6305
        %v6307 = vmul.f32 %v6306, 1.442695
        %v6308 = vpow.pop %v6307
        %v6309 = vsel %vm870, %v6308, 0.0
        %6310 = vadd.xlane.f32.xlu0 %v6309
        %v6311 = vpop.xlane.xlu0 %6310
        %v6312 = vrcp.pop %v6311
        %v6313 = vmul.f32 %v6308, %v6312
        %v6314 = vpack.c.bf16 %v6313, %v6313
        %6315 = vrot.lane.b32.xlu0 %v5881, 112
        %v6316 = vpop.permute.xlu0 %6315
        %6317 = vrot.lane.b32.xlu0 %v5882, 112
        %v6318 = vpop.permute.xlu0 %6317
        %6319 = vrot.lane.b32.xlu0 %v5883, 112
        %v6320 = vpop.permute.xlu0 %6319
        %6321 = vrot.lane.b32.xlu0 %v5884, 112
        %v6322 = vpop.permute.xlu0 %6321
        %v6327 = vsel %vm870, %v6314, 0
        %v6330 = vand.u32 %v6322, %v967
        %6332 = vmatprep.subr.bf16.mxu0 0
        %6333 = vmatpush1.bf16.msra.mxu0 %v6316
        %6334 = vmatprep.subr.bf16.mxu0 0
        %6335 = vmatpush1.bf16.msra.mxu0 %v6318
        %6336 = vmatprep.subr.bf16.mxu0 0
        %6337 = vmatpush1.bf16.msra.mxu0 %v6320
        %6338 = vmatprep.subr.bf16.mxu0 0
        %6339 = vmatpush1.bf16.msra.mxu0 %v6330
        %6340 = vmatprep.subr.bf16.mxu0 0
        %6341 = vmatpush1.bf16.msra.mxu0 0
        %6342 = vmatprep.subr.bf16.mxu0 0
        %6343 = vmatpush1.bf16.msra.mxu0 0
        %6344 = vmatprep.subr.bf16.mxu0 0
        %6345 = vmatpush1.bf16.msra.mxu0 0
        %6346 = vmatprep.subr.bf16.mxu0 0
        %6347 = vmatpush1.bf16.msra.mxu0 0
        %6348 = vmatprep.subr.bf16.mxu0 0
        %6349 = vmatpush1.bf16.msra.mxu0 0
        %6350 = vmatprep.subr.bf16.mxu0 0
        %6351 = vmatpush1.bf16.msra.mxu0 0
        %6352 = vmatprep.subr.bf16.mxu0 0
        %6353 = vmatpush1.bf16.msra.mxu0 0
        %6354 = vmatprep.subr.bf16.mxu0 0
        %6355 = vmatpush1.bf16.msra.mxu0 0
        %6356 = vmatprep.subr.bf16.mxu0 0
        %6357 = vmatpush1.bf16.msra.mxu0 0
        %6358 = vmatprep.subr.bf16.mxu0 0
        %6359 = vmatpush1.bf16.msra.mxu0 0
        %6360 = vmatprep.subr.bf16.mxu0 0
        %6361 = vmatpush1.bf16.msra.mxu0 0
        %6362 = vmatprep.subr.bf16.mxu0 0
        %6363 = vmatpush1.bf16.msra.mxu0 0
        %6364 = vmatprep.mubr.bf16.mxu0 0
        %6365 = vmatmul.mubr.bf16.gmra.mrb[0].mxu0 %v6327
        %v6366 = vpop.f32.mrb[0].mxu0
        %v6367 = vadd.f32 0.0, %v6366
        %v6368 = vpop.f32.mrb[0].mxu0
        %v6369 = vpop.f32.mrb[0].mxu0
        %v6370 = vpop.f32.mrb[0].mxu0
        %6371 = vdwg.mxu0
        %v6372 = vpack.c.bf16 %v6367, %v6367
        %v6374 = vsel %vm774, %v6372, 0
        %v6377 = vsel %vm1349, %v5653, 0
        %6379 = vmatprep.subr.bf16.mxu0 0
        %6380 = vmatpush1.bf16.msra.mxu0 %v6377
        %6381 = vmatprep.subr.bf16.mxu0 0
        %6382 = vmatpush1.bf16.msra.mxu0 0
        %6383 = vmatprep.subr.bf16.mxu0 0
        %6384 = vmatpush1.bf16.msra.mxu0 0
        %6385 = vmatprep.subr.bf16.mxu0 0
        %6386 = vmatpush1.bf16.msra.mxu0 0
        %6387 = vmatprep.subr.bf16.mxu0 0
        %6388 = vmatpush1.bf16.msra.mxu0 0
        %6389 = vmatprep.subr.bf16.mxu0 0
        %6390 = vmatpush1.bf16.msra.mxu0 0
        %6391 = vmatprep.subr.bf16.mxu0 0
        %6392 = vmatpush1.bf16.msra.mxu0 0
        %6393 = vmatprep.subr.bf16.mxu0 0
        %6394 = vmatpush1.bf16.msra.mxu0 0
        %6395 = vmatprep.subr.bf16.mxu0 0
        %6396 = vmatpush1.bf16.msra.mxu0 0
        %6397 = vmatprep.subr.bf16.mxu0 0
        %6398 = vmatpush1.bf16.msra.mxu0 0
        %6399 = vmatprep.subr.bf16.mxu0 0
        %6400 = vmatpush1.bf16.msra.mxu0 0
        %6401 = vmatprep.subr.bf16.mxu0 0
        %6402 = vmatpush1.bf16.msra.mxu0 0
        %6403 = vmatprep.subr.bf16.mxu0 0
        %6404 = vmatpush1.bf16.msra.mxu0 0
        %6405 = vmatprep.subr.bf16.mxu0 0
        %6406 = vmatpush1.bf16.msra.mxu0 0
        %6407 = vmatprep.subr.bf16.mxu0 0
        %6408 = vmatpush1.bf16.msra.mxu0 0
        %6409 = vmatprep.subr.bf16.mxu0 0
        %6410 = vmatpush1.bf16.msra.mxu0 0
        %6411 = vmatprep.mubr.bf16.mxu0 0
        %6412 = vmatmul.mubr.bf16.gmra.mrb[0].mxu0 %v6374
        %v6413 = vpop.f32.mrb[0].mxu0
        %v6414 = vadd.f32 0.0, %v6413
        %v6415 = vpop.f32.mrb[0].mxu0
        %v6416 = vpop.f32.mrb[0].mxu0
        %v6417 = vpop.f32.mrb[0].mxu0
        %6418 = vdwg.mxu0
        %v6419 = vadd.f32 %v6232, %v6414
        %6420 = vrot.lane.b32.xlu0 %v5716, 104
        %v6421 = vpop.permute.xlu0 %6420
        %6422 = vrot.lane.b32.xlu0 %v5797, 104
        %v6423 = vpop.permute.xlu0 %6422
        %6424 = vrot.lane.b32.xlu0 %v5798, 104
        %v6425 = vpop.permute.xlu0 %6424
        %6426 = vrot.lane.b32.xlu0 %v5799, 104
        %v6427 = vpop.permute.xlu0 %6426
        %6428 = vrot.lane.b32.xlu0 %v5800, 104
        %v6429 = vpop.permute.xlu0 %6428
        %v6431 = vsel %vm774, %v6421, 0
        %v6434 = vsel %vm774, %v6423, 0
        %v6437 = vsel %vm774, %v6425, 0
        %v6440 = vsel %vm774, %v6427, 0
        %v6443 = vsel %vm774, %v6429, 0
        %6445 = vmatprep.subr.bf16.mxu0 0
        %6446 = vmatpush1.bf16.xpose.msra.mxu0 %v6434
        %6447 = vmatprep.subr.bf16.mxu0 0
        %6448 = vmatpush1.bf16.xpose.msra.mxu0 %v6437
        %6449 = vmatprep.subr.bf16.mxu0 0
        %6450 = vmatpush1.bf16.xpose.msra.mxu0 %v6440
        %6451 = vmatprep.subr.bf16.mxu0 0
        %6452 = vmatpush1.bf16.xpose.msra.mxu0 %v6443
        %6453 = vmatprep.subr.bf16.mxu0 0
        %6454 = vmatpush1.bf16.xpose.msra.mxu0 0
        %6455 = vmatprep.subr.bf16.mxu0 0
        %6456 = vmatpush1.bf16.xpose.msra.mxu0 0
        %6457 = vmatprep.subr.bf16.mxu0 0
        %6458 = vmatpush1.bf16.xpose.msra.mxu0 0
        %6459 = vmatprep.subr.bf16.mxu0 0
        %6460 = vmatpush1.bf16.xpose.msra.mxu0 0
        %6461 = vmatprep.subr.bf16.mxu0 0
        %6462 = vmatpush1.bf16.xpose.msra.mxu0 0
        %6463 = vmatprep.subr.bf16.mxu0 0
        %6464 = vmatpush1.bf16.xpose.msra.mxu0 0
        %6465 = vmatprep.subr.bf16.mxu0 0
        %6466 = vmatpush1.bf16.xpose.msra.mxu0 0
        %6467 = vmatprep.subr.bf16.mxu0 0
        %6468 = vmatpush1.bf16.xpose.msra.mxu0 0
        %6469 = vmatprep.subr.bf16.mxu0 0
        %6470 = vmatpush1.bf16.xpose.msra.mxu0 0
        %6471 = vmatprep.subr.bf16.mxu0 0
        %6472 = vmatpush1.bf16.xpose.msra.mxu0 0
        %6473 = vmatprep.subr.bf16.mxu0 0
        %6474 = vmatpush1.bf16.xpose.msra.mxu0 0
        %6475 = vmatprep.subr.bf16.mxu0 0
        %6476 = vmatpush1.bf16.xpose.msra.mxu0 0
        %6477 = vmatprep.mubr.bf16.mxu0 0
        %6478 = vmatmul.mubr.bf16.gmra.mrb[0].mxu0 %v6431
        %v6479 = vpop.f32.mrb[0].mxu0
        %v6480 = vadd.f32 0.0, %v6479
        %v6481 = vpop.f32.mrb[0].mxu0
        %v6482 = vpop.f32.mrb[0].mxu0
        %v6483 = vpop.f32.mrb[0].mxu0
        %6484 = vdwg.mxu0
        %v6485 = vmul.f32 %v6480, 0.35355338
        %v6486 = vsel %vm870, %v6485, -inf
        %6487 = vmax.xlane.f32.xlu0 %v6486
        %v6488 = vpop.xlane.xlu0 %6487
        %v6489 = vsub.f32 %v6485, %v6488
        %v6490 = vmul.f32 %v6489, 1.442695
        %v6491 = vpow.pop %v6490
        %v6492 = vsel %vm870, %v6491, 0.0
        %6493 = vadd.xlane.f32.xlu0 %v6492
        %v6494 = vpop.xlane.xlu0 %6493
        %v6495 = vrcp.pop %v6494
        %v6496 = vmul.f32 %v6491, %v6495
        %v6497 = vpack.c.bf16 %v6496, %v6496
        %6498 = vrot.lane.b32.xlu0 %v5881, 104
        %v6499 = vpop.permute.xlu0 %6498
        %6500 = vrot.lane.b32.xlu0 %v5882, 104
        %v6501 = vpop.permute.xlu0 %6500
        %6502 = vrot.lane.b32.xlu0 %v5883, 104
        %v6503 = vpop.permute.xlu0 %6502
        %6504 = vrot.lane.b32.xlu0 %v5884, 104
        %v6505 = vpop.permute.xlu0 %6504
        %v6510 = vsel %vm870, %v6497, 0
        %v6513 = vand.u32 %v6505, %v967
        %6515 = vmatprep.subr.bf16.mxu0 0
        %6516 = vmatpush1.bf16.msra.mxu0 %v6499
        %6517 = vmatprep.subr.bf16.mxu0 0
        %6518 = vmatpush1.bf16.msra.mxu0 %v6501
        %6519 = vmatprep.subr.bf16.mxu0 0
        %6520 = vmatpush1.bf16.msra.mxu0 %v6503
        %6521 = vmatprep.subr.bf16.mxu0 0
        %6522 = vmatpush1.bf16.msra.mxu0 %v6513
        %6523 = vmatprep.subr.bf16.mxu0 0
        %6524 = vmatpush1.bf16.msra.mxu0 0
        %6525 = vmatprep.subr.bf16.mxu0 0
        %6526 = vmatpush1.bf16.msra.mxu0 0
        %6527 = vmatprep.subr.bf16.mxu0 0
        %6528 = vmatpush1.bf16.msra.mxu0 0
        %6529 = vmatprep.subr.bf16.mxu0 0
        %6530 = vmatpush1.bf16.msra.mxu0 0
        %6531 = vmatprep.subr.bf16.mxu0 0
        %6532 = vmatpush1.bf16.msra.mxu0 0
        %6533 = vmatprep.subr.bf16.mxu0 0
        %6534 = vmatpush1.bf16.msra.mxu0 0
        %6535 = vmatprep.subr.bf16.mxu0 0
        %6536 = vmatpush1.bf16.msra.mxu0 0
        %6537 = vmatprep.subr.bf16.mxu0 0
        %6538 = vmatpush1.bf16.msra.mxu0 0
        %6539 = vmatprep.subr.bf16.mxu0 0
        %6540 = vmatpush1.bf16.msra.mxu0 0
        %6541 = vmatprep.subr.bf16.mxu0 0
        %6542 = vmatpush1.bf16.msra.mxu0 0
        %6543 = vmatprep.subr.bf16.mxu0 0
        %6544 = vmatpush1.bf16.msra.mxu0 0
        %6545 = vmatprep.subr.bf16.mxu0 0
        %6546 = vmatpush1.bf16.msra.mxu0 0
        %6547 = vmatprep.mubr.bf16.mxu0 0
        %6548 = vmatmul.mubr.bf16.gmra.mrb[0].mxu0 %v6510
        %v6549 = vpop.f32.mrb[0].mxu0
        %v6550 = vadd.f32 0.0, %v6549
        %v6551 = vpop.f32.mrb[0].mxu0
        %v6552 = vpop.f32.mrb[0].mxu0
        %v6553 = vpop.f32.mrb[0].mxu0
        %6554 = vdwg.mxu0
        %v6555 = vpack.c.bf16 %v6550, %v6550
        %v6557 = vsel %vm774, %v6555, 0
        %v6560 = vsel %vm1349, %v5654, 0
        %6562 = vmatprep.subr.bf16.mxu0 0
        %6563 = vmatpush1.bf16.msra.mxu0 %v6560
        %6564 = vmatprep.subr.bf16.mxu0 0
        %6565 = vmatpush1.bf16.msra.mxu0 0
        %6566 = vmatprep.subr.bf16.mxu0 0
        %6567 = vmatpush1.bf16.msra.mxu0 0
        %6568 = vmatprep.subr.bf16.mxu0 0
        %6569 = vmatpush1.bf16.msra.mxu0 0
        %6570 = vmatprep.subr.bf16.mxu0 0
        %6571 = vmatpush1.bf16.msra.mxu0 0
        %6572 = vmatprep.subr.bf16.mxu0 0
        %6573 = vmatpush1.bf16.msra.mxu0 0
        %6574 = vmatprep.subr.bf16.mxu0 0
        %6575 = vmatpush1.bf16.msra.mxu0 0
        %6576 = vmatprep.subr.bf16.mxu0 0
        %6577 = vmatpush1.bf16.msra.mxu0 0
        %6578 = vmatprep.subr.bf16.mxu0 0
        %6579 = vmatpush1.bf16.msra.mxu0 0
        %6580 = vmatprep.subr.bf16.mxu0 0
        %6581 = vmatpush1.bf16.msra.mxu0 0
        %6582 = vmatprep.subr.bf16.mxu0 0
        %6583 = vmatpush1.bf16.msra.mxu0 0
        %6584 = vmatprep.subr.bf16.mxu0 0
        %6585 = vmatpush1.bf16.msra.mxu0 0
        %6586 = vmatprep.subr.bf16.mxu0 0
        %6587 = vmatpush1.bf16.msra.mxu0 0
        %6588 = vmatprep.subr.bf16.mxu0 0
        %6589 = vmatpush1.bf16.msra.mxu0 0
        %6590 = vmatprep.subr.bf16.mxu0 0
        %6591 = vmatpush1.bf16.msra.mxu0 0
        %6592 = vmatprep.subr.bf16.mxu0 0
        %6593 = vmatpush1.bf16.msra.mxu0 0
        %6594 = vmatprep.mubr.bf16.mxu0 0
        %6595 = vmatmul.mubr.bf16.gmra.mrb[0].mxu0 %v6557
        %v6596 = vpop.f32.mrb[0].mxu0
        %v6597 = vadd.f32 0.0, %v6596
        %v6598 = vpop.f32.mrb[0].mxu0
        %v6599 = vpop.f32.mrb[0].mxu0
        %v6600 = vpop.f32.mrb[0].mxu0
        %6601 = vdwg.mxu0
        %v6602 = vadd.f32 %v6419, %v6597
        %v6603 = vlaneseq
        %v6604 = vshrl.u32 %v6603, 7
        %v6605 = vsub.s32 0, %v6604
        %v6606 = vrot.slane %v5655, %v6605
        %v6607 = vadd.f32 %v6602, %v6606
        %v6608 = vadd.f32 %v5635, %v6607
        %v6609 = vld [vmem:[#allocation2 + $0x170] sm:$0x1]
        %v6610 = vld [vmem:[#allocation2 + $0x178] sm:$0x1]
        %v6611 = vsel %vm356, %v6608, 0.0
        %6612 = vadd.xlane.f32.xlu0 %v6611
        %v6613 = vpop.xlane.xlu0 %6612
        %v6614 = vmul.f32 %v6613, %v379
        %v6615 = vsub.f32 %v6608, %v6614
        %v6616 = vmul.f32 %v6615, %v6615
        %v6617 = vsel %vm356, %v6616, 0.0
        %6618 = vadd.xlane.f32.xlu0 %v6617
        %v6619 = vpop.xlane.xlu0 %6618
        %v6620 = vmul.f32 %v6619, %v379
        %v6621 = vadd.f32 %v6620, 1e-05
        %v6622 = vrsqrt.pop %v6621
        %v6623 = vmul.f32 %v6615, %v6622
        %v6624 = vlaneseq
        %v6625 = vshrl.u32 %v6624, 7
        %v6626 = vsub.s32 0, %v6625
        %v6627 = vrot.slane %v6609, %v6626
        %v6628 = vmul.f32 %v6623, %v6627
        %v6629 = vlaneseq
        %v6630 = vshrl.u32 %v6629, 7
        %v6631 = vsub.s32 0, %v6630
        %v6632 = vrot.slane %v6610, %v6631
        %v6633 = vadd.f32 %v6628, %v6632
        %v6634 = vld [vmem:[%s2 + $0x210] sm:$0xf]
        %v6635 = vld [vmem:[%s2 + $0x214] sm:$0xf]
        %v6636 = vld [vmem:[%s2 + $0x218] sm:$0xf]
        %v6637 = vld [vmem:[%s2 + $0x21c] sm:$0xf]
        %v6638 = vld [vmem:[#allocation2 + $0x180] sm:$0x1]
        %v6639 = vpack.c.bf16 %v6633, %v6633
        %v6640 = vlaneseq
        %v6641 = vshrl.u32 %v6640, 7
        %v6642 = vsub.s32 0, %v6641
        %v6643 = vrot.slane %v6638, %v6642
        %v6648 = vunpack.c.l.b16 %v6634
        %v6649 = vunpack.c.l.b16 %v6635
        %v6650 = vunpack.c.l.b16 %v6636
        %v6651 = vunpack.c.l.b16 %v6637
        %v6652 = vpack.c.b16 %v6649, %v6648
        %v6653 = vpack.c.b16 %v6651, %v6650
        %v6657 = vsel %vm356, %v6639, 0
        %6659 = vmatprep.subr.bf16.mxu0 0
        %6660 = vmatpush1.bf16.msra.mxu0 %v6652
        %6661 = vmatprep.subr.bf16.mxu0 0
        %6662 = vmatpush1.bf16.msra.mxu0 %v6653
        %6663 = vmatprep.subr.bf16.mxu0 0
        %6664 = vmatpush1.bf16.msra.mxu0 0
        %6665 = vmatprep.subr.bf16.mxu0 0
        %6666 = vmatpush1.bf16.msra.mxu0 0
        %6667 = vmatprep.subr.bf16.mxu0 0
        %6668 = vmatpush1.bf16.msra.mxu0 0
        %6669 = vmatprep.subr.bf16.mxu0 0
        %6670 = vmatpush1.bf16.msra.mxu0 0
        %6671 = vmatprep.subr.bf16.mxu0 0
        %6672 = vmatpush1.bf16.msra.mxu0 0
        %6673 = vmatprep.subr.bf16.mxu0 0
        %6674 = vmatpush1.bf16.msra.mxu0 0
        %6675 = vmatprep.subr.bf16.mxu0 0
        %6676 = vmatpush1.bf16.msra.mxu0 0
        %6677 = vmatprep.subr.bf16.mxu0 0
        %6678 = vmatpush1.bf16.msra.mxu0 0
        %6679 = vmatprep.subr.bf16.mxu0 0
        %6680 = vmatpush1.bf16.msra.mxu0 0
        %6681 = vmatprep.subr.bf16.mxu0 0
        %6682 = vmatpush1.bf16.msra.mxu0 0
        %6683 = vmatprep.subr.bf16.mxu0 0
        %6684 = vmatpush1.bf16.msra.mxu0 0
        %6685 = vmatprep.subr.bf16.mxu0 0
        %6686 = vmatpush1.bf16.msra.mxu0 0
        %6687 = vmatprep.subr.bf16.mxu0 0
        %6688 = vmatpush1.bf16.msra.mxu0 0
        %6689 = vmatprep.subr.bf16.mxu0 0
        %6690 = vmatpush1.bf16.msra.mxu0 0
        %6691 = vmatprep.mubr.bf16.mxu0 0
        %6692 = vmatmul.mubr.bf16.gmra.mrb[0].mxu0 %v6657
        %v6693 = vpop.f32.mrb[0].mxu0
        %v6694 = vadd.f32 %v6643, %v6693
        %v6695 = vpop.f32.mrb[0].mxu0
        %v6696 = vpop.f32.mrb[0].mxu0
        %v6697 = vpop.f32.mrb[0].mxu0
        %6698 = vdwg.mxu0
        %v6699 = vmax.f32 %v6694, 0.0
        %v6700 = vld [vmem:[%s2 + $0x220] sm:$0xf]
        %v6701 = vld [vmem:[%s2 + $0x224] sm:$0xf]
        %v6702 = vld [vmem:[%s2 + $0x228] sm:$0xf]
        %v6703 = vld [vmem:[%s2 + $0x22c] sm:$0xf]
        %v6704 = vld [vmem:[%s2 + $0x230] sm:$0xf]
        %v6705 = vld [vmem:[%s2 + $0x234] sm:$0xf]
        %v6706 = vld [vmem:[%s2 + $0x238] sm:$0xf]
        %v6707 = vld [vmem:[%s2 + $0x23c] sm:$0xf]
        %v6708 = vld [vmem:[#allocation2 + $0x188] sm:$0x1]
        %v6709 = vpack.c.bf16 %v6699, %v6699
        %v6710 = vlaneseq
        %v6711 = vshrl.u32 %v6710, 7
        %v6712 = vsub.s32 0, %v6711
        %v6713 = vrot.slane %v6708, %v6712
        %v6722 = vunpack.c.l.b16 %v6700
        %v6723 = vunpack.c.l.b16 %v6701
        %v6724 = vunpack.c.l.b16 %v6702
        %v6725 = vunpack.c.l.b16 %v6703
        %v6726 = vunpack.c.l.b16 %v6704
        %v6727 = vunpack.c.l.b16 %v6705
        %v6728 = vunpack.c.l.b16 %v6706
        %v6729 = vunpack.c.l.b16 %v6707
        %v6730 = vpack.c.b16 %v6723, %v6722
        %v6731 = vpack.c.b16 %v6725, %v6724
        %v6732 = vpack.c.b16 %v6727, %v6726
        %v6733 = vpack.c.b16 %v6729, %v6728
        %v6739 = vsel %vm277, %v6709, 0
        %6741 = vmatprep.subr.bf16.mxu0 0
        %6742 = vmatpush1.bf16.msra.mxu0 %v6730
        %6743 = vmatprep.subr.bf16.mxu0 0
        %6744 = vmatpush1.bf16.msra.mxu0 %v6731
        %6745 = vmatprep.subr.bf16.mxu0 0
        %6746 = vmatpush1.bf16.msra.mxu0 %v6732
        %6747 = vmatprep.subr.bf16.mxu0 0
        %6748 = vmatpush1.bf16.msra.mxu0 %v6733
        %6749 = vmatprep.subr.bf16.mxu0 0
        %6750 = vmatpush1.bf16.msra.mxu0 0
        %6751 = vmatprep.subr.bf16.mxu0 0
        %6752 = vmatpush1.bf16.msra.mxu0 0
        %6753 = vmatprep.subr.bf16.mxu0 0
        %6754 = vmatpush1.bf16.msra.mxu0 0
        %6755 = vmatprep.subr.bf16.mxu0 0
        %6756 = vmatpush1.bf16.msra.mxu0 0
        %6757 = vmatprep.subr.bf16.mxu0 0
        %6758 = vmatpush1.bf16.msra.mxu0 0
        %6759 = vmatprep.subr.bf16.mxu0 0
        %6760 = vmatpush1.bf16.msra.mxu0 0
        %6761 = vmatprep.subr.bf16.mxu0 0
        %6762 = vmatpush1.bf16.msra.mxu0 0
        %6763 = vmatprep.subr.bf16.mxu0 0
        %6764 = vmatpush1.bf16.msra.mxu0 0
        %6765 = vmatprep.subr.bf16.mxu0 0
        %6766 = vmatpush1.bf16.msra.mxu0 0
        %6767 = vmatprep.subr.bf16.mxu0 0
        %6768 = vmatpush1.bf16.msra.mxu0 0
        %6769 = vmatprep.subr.bf16.mxu0 0
        %6770 = vmatpush1.bf16.msra.mxu0 0
        %6771 = vmatprep.subr.bf16.mxu0 0
        %6772 = vmatpush1.bf16.msra.mxu0 0
        %6773 = vmatprep.mubr.bf16.mxu0 0
        %6774 = vmatmul.mubr.bf16.gmra.mrb[0].mxu0 %v6739
        %v6775 = vpop.f32.mrb[0].mxu0
        %v6776 = vadd.f32 %v6713, %v6775
        %v6777 = vpop.f32.mrb[0].mxu0
        %v6778 = vpop.f32.mrb[0].mxu0
        %v6779 = vpop.f32.mrb[0].mxu0
        %6780 = vdwg.mxu0
        %v6781 = vadd.f32 %v6633, %v6776
        %v6782 = vld [vmem:[#allocation2 + $0x190] sm:$0x1]
        %v6783 = vld [vmem:[#allocation2 + $0x198] sm:$0x1]
        %v6784 = vsel %vm356, %v6781, 0.0
        %6785 = vadd.xlane.f32.xlu0 %v6784
        %v6786 = vpop.xlane.xlu0 %6785
        %v6787 = vmul.f32 %v6786, %v379
        %v6788 = vsub.f32 %v6781, %v6787
        %v6789 = vmul.f32 %v6788, %v6788
        %v6790 = vsel %vm356, %v6789, 0.0
        %6791 = vadd.xlane.f32.xlu0 %v6790
        %v6792 = vpop.xlane.xlu0 %6791
        %v6793 = vmul.f32 %v6792, %v379
        %v6794 = vadd.f32 %v6793, 1e-05
        %v6795 = vrsqrt.pop %v6794
        %v6796 = vmul.f32 %v6788, %v6795
        %v6797 = vlaneseq
        %v6798 = vshrl.u32 %v6797, 7
        %v6799 = vsub.s32 0, %v6798
        %v6800 = vrot.slane %v6782, %v6799
        %v6801 = vmul.f32 %v6796, %v6800
        %v6802 = vlaneseq
        %v6803 = vshrl.u32 %v6802, 7
        %v6804 = vsub.s32 0, %v6803
        %v6805 = vrot.slane %v6783, %v6804
        %v6806 = vadd.f32 %v6801, %v6805
        %v6807 = vld [vmem:[#allocation2 + $0x1a0] sm:$0x1]
        %v6808 = vld [vmem:[#allocation2 + $0x1a8] sm:$0x1]
        %v6809 = vsel %vm356, %v6806, 0.0
        %6810 = vadd.xlane.f32.xlu0 %v6809
        %v6811 = vpop.xlane.xlu0 %6810
        %v6812 = vmul.f32 %v6811, %v379
        %v6813 = vsub.f32 %v6806, %v6812
        %v6814 = vmul.f32 %v6813, %v6813
        %v6815 = vsel %vm356, %v6814, 0.0
        %6816 = vadd.xlane.f32.xlu0 %v6815
        %v6817 = vpop.xlane.xlu0 %6816
        %v6818 = vmul.f32 %v6817, %v379
        %v6819 = vadd.f32 %v6818, 1e-05
        %v6820 = vrsqrt.pop %v6819
        %v6821 = vmul.f32 %v6813, %v6820
        %v6822 = vlaneseq
        %v6823 = vshrl.u32 %v6822, 7
        %v6824 = vsub.s32 0, %v6823
        %v6825 = vrot.slane %v6807, %v6824
        %v6826 = vmul.f32 %v6821, %v6825
        %v6827 = vlaneseq
        %v6828 = vshrl.u32 %v6827, 7
        %v6829 = vsub.s32 0, %v6828
        %v6830 = vrot.slane %v6808, %v6829
        %v6831 = vadd.f32 %v6826, %v6830
        %v6832 = vld [vmem:[%s2 + $0x240] sm:$0xf]
        %v6833 = vld [vmem:[%s2 + $0x244] sm:$0xf]
        %v6834 = vld [vmem:[%s2 + $0x248] sm:$0xf]
        %v6835 = vld [vmem:[%s2 + $0x24c] sm:$0xf]
        %v6836 = vld [vmem:[#allocation2 + $0x1b0] sm:$0x1]
        %v6837 = vpack.c.bf16 %v6831, %v6831
        %v6838 = vlaneseq
        %v6839 = vshrl.u32 %v6838, 7
        %v6840 = vsub.s32 0, %v6839
        %v6841 = vrot.slane %v6836, %v6840
        %v6846 = vunpack.c.l.b16 %v6832
        %v6847 = vunpack.c.l.b16 %v6833
        %v6848 = vunpack.c.l.b16 %v6834
        %v6849 = vunpack.c.l.b16 %v6835
        %v6850 = vpack.c.b16 %v6847, %v6846
        %v6851 = vpack.c.b16 %v6849, %v6848
        %v6855 = vsel %vm356, %v6837, 0
        %6857 = vmatprep.subr.bf16.mxu0 0
        %6858 = vmatpush1.bf16.msra.mxu0 %v6850
        %6859 = vmatprep.subr.bf16.mxu0 0
        %6860 = vmatpush1.bf16.msra.mxu0 %v6851
        %6861 = vmatprep.subr.bf16.mxu0 0
        %6862 = vmatpush1.bf16.msra.mxu0 0
        %6863 = vmatprep.subr.bf16.mxu0 0
        %6864 = vmatpush1.bf16.msra.mxu0 0
        %6865 = vmatprep.subr.bf16.mxu0 0
        %6866 = vmatpush1.bf16.msra.mxu0 0
        %6867 = vmatprep.subr.bf16.mxu0 0
        %6868 = vmatpush1.bf16.msra.mxu0 0
        %6869 = vmatprep.subr.bf16.mxu0 0
        %6870 = vmatpush1.bf16.msra.mxu0 0
        %6871 = vmatprep.subr.bf16.mxu0 0
        %6872 = vmatpush1.bf16.msra.mxu0 0
        %6873 = vmatprep.subr.bf16.mxu0 0
        %6874 = vmatpush1.bf16.msra.mxu0 0
        %6875 = vmatprep.subr.bf16.mxu0 0
        %6876 = vmatpush1.bf16.msra.mxu0 0
        %6877 = vmatprep.subr.bf16.mxu0 0
        %6878 = vmatpush1.bf16.msra.mxu0 0
        %6879 = vmatprep.subr.bf16.mxu0 0
        %6880 = vmatpush1.bf16.msra.mxu0 0
        %6881 = vmatprep.subr.bf16.mxu0 0
        %6882 = vmatpush1.bf16.msra.mxu0 0
        %6883 = vmatprep.subr.bf16.mxu0 0
        %6884 = vmatpush1.bf16.msra.mxu0 0
        %6885 = vmatprep.subr.bf16.mxu0 0
        %6886 = vmatpush1.bf16.msra.mxu0 0
        %6887 = vmatprep.subr.bf16.mxu0 0
        %6888 = vmatpush1.bf16.msra.mxu0 0
        %6889 = vmatprep.mubr.bf16.mxu0 0
        %6890 = vmatmul.mubr.bf16.gmra.mrb[0].mxu0 %v6855
        %v6891 = vpop.f32.mrb[0].mxu0
        %v6892 = vadd.f32 %v6841, %v6891
        %v6893 = vpop.f32.mrb[0].mxu0
        %v6894 = vpop.f32.mrb[0].mxu0
        %v6895 = vpop.f32.mrb[0].mxu0
        %6896 = vdwg.mxu0
        %6897 = vst [vmem:[%s218] sm:$0xff] %v6892
        %s6898 = sand.u32 %s121, 1
        %s6899 = scalar_lea.sflag [#allocation4], %s6898
        %s6900 = sand.u32 %s121, 1
        %s6901 = smul.addr %s6900, 8
        %s6902 = scalar_lea.vmem [#allocation5], %s6901
        // Predicated region
        $region41: #{transformer_decoder_forward.1} parent=35 // pred_check
          %p6903 = pneg %p131
        $region42: #{transformer_decoder_forward.1} parent=35 // pred_check_branch
          %6905 = sbr.rel (%p6903) target = $region44
        $region43: #{transformer_decoder_forward.1} parent=35 // pred_region
          %s6907 = ssub.s32 128, 128
          %6908 = vsyncadd %s6899, %s6907
          %s6909 = smul.addr %s19, 128
          %s6910 = scalar_lea.hbm %s4, %s6909
          %s6912 = sshll.u32 %s6902, 4
          %s6913 = int_to_ptr.vmem [resolvable:$true] %s6912
          %6915 = dma.vmem_to_hbm [thread:$0]  %s6913, 128, %s6910, %s6899
        $region44: #{transformer_decoder_forward.1} parent=35 // pred_fallthru
          _
      $region36: #{transformer_decoder_forward.1} parent=5 // pred_fallthru
        _
      %p6916 = scmp.le.s32.totalorder 2, %s14
      // Predicated region
      $region45: #{transformer_decoder_forward.1} parent=5 // pred_check
        %p6917 = pneg %p6916
      $region46: #{transformer_decoder_forward.1} parent=5 // pred_check_branch
        %6919 = sbr.rel (%p6917) target = $region48
      $region47: #{transformer_decoder_forward.1} parent=5 // pred_region
        %s6920 = ssub.s32 %s14, 2
        // Predicated region
        $region49: #{transformer_decoder_forward.1} parent=47 // pred_check
          %p6921 = pneg %p137
        $region50: #{transformer_decoder_forward.1} parent=47 // pred_check_branch
          %6923 = sbr.rel (%p6921) target = $region52
        $region51: #{transformer_decoder_forward.1} parent=47 // pred_region
          %s6924 = sand.u32 %s122, 1
          %s6925 = scalar_lea.sflag [#allocation4], %s6924
          %s6926 = sand.u32 %s122, 1
          %s6927 = smul.addr %s6926, 8
          %s6928 = scalar_lea.vmem [#allocation5], %s6927
          %6929 = dma.done %s6925, 128
        $region52: #{transformer_decoder_forward.1} parent=47 // pred_fallthru
          _
      $region48: #{transformer_decoder_forward.1} parent=5 // pred_fallthru
        _
    $region6: #{transformer_decoder_forward.1} parent=1 // loop_footer
      %s18 = sadd.s32 1, %s14
    $region7: #{transformer_decoder_forward.1} parent=1 // loop_footer_branch
      %13 = sbr.rel target = $region3
    $region8: #{transformer_decoder_forward.1} parent=1 // loop_exit
      _
    %6930 = vsyncpa [#allocation3], 1
    %s6931 = scalar_lea.sflag [#allocation3], 1
    %6932 = vsyncpa %s6931, 1
    %6933 = vsyncpa [#allocation4], 1
    %s6934 = scalar_lea.sflag [#allocation4], 1
    %6935 = vsyncpa %s6934, 1

</llo_original>
